<compile_context>
chip_gen: v7x
topology: tpu7x:2x2x1
jax: 0.10.0
libtpu: 0.0.40
codegen_flags: <defaults>
</compile_context>

<pallas_src>
import jax
import jax.numpy as jnp
from jax.experimental import pallas as pl
from jax.experimental.pallas import tpu as pltpu

C_IN, C_OUT, H, W = 3, 16, 30, 16
HW = H * W
HID1, HID2, OUTPUTS = 64, 32, 3
BN_EPS = 1e-5


def _fused_forward_kernel(x_ref, wc_ref, gamma_ref, beta_ref, w1c_ref, b1_ref,
                          w2_ref, b2_ref, w3_ref, b3_ref, o_ref):
    x = x_ref[...]                                   # (B, 3, HW), HW on lanes
    wc = wc_ref[...]                                 # (3, 16, 1, 1)

    # ---- 1x1 conv, channel-major output: 3 VPU multiply-adds ---------------
    # y[o, b, n] = sum_c W[o, c] * x[b, c, n].  Conv bias omitted: it cancels
    # exactly under training-mode BatchNorm's batch-mean subtraction.
    y = wc[0] * x[:, 0, :][None]                     # (16, B, HW)
    y = y + wc[1] * x[:, 1, :][None]
    y = y + wc[2] * x[:, 2, :][None]

    # ---- BatchNorm2d (training mode: per-channel stats over (B, H*W)) ------
    n_red = float(y.shape[1] * y.shape[2])
    mean = jnp.sum(jnp.sum(y, axis=2, keepdims=True), axis=1, keepdims=True) / n_red
    d = y - mean
    var = jnp.sum(jnp.sum(d * d, axis=2, keepdims=True), axis=1, keepdims=True) / n_red
    scale = gamma_ref[...] * jax.lax.rsqrt(var + BN_EPS)     # (16,1,1) folded scale
    shift = beta_ref[...] - mean * scale                     # (16,1,1) folded shift
    a = jnp.maximum(y * scale + shift, 0.0)                  # (16, B, HW) fused affine+ReLU

    # ---- fc1: channel-batched matmul + cross-channel reduce ----------------
    # w1c[c, n, h] == fc1_w[h, c*HW + n]  ==> identical to PyTorch's Flatten order.
    partial = jnp.einsum('cbn,cnh->cbh', a, w1c_ref[...],
                         preferred_element_type=jnp.float32)  # (16, B, 64)
    h1 = jnp.maximum(jnp.sum(partial, axis=0) + b1_ref[...], 0.0)   # (B, 64)

    # ---- fc2 / fc3 / log-softmax --------------------------------------------
    h2 = jnp.maximum(
        jnp.dot(h1, w2_ref[...], preferred_element_type=jnp.float32) + b2_ref[...], 0.0)
    z = jnp.dot(h2, w3_ref[...], preferred_element_type=jnp.float32) + b3_ref[...]
    m = jnp.max(z, axis=-1, keepdims=True)
    lse = m + jnp.log(jnp.sum(jnp.exp(z - m), axis=-1, keepdims=True))
    o_ref[...] = z - lse


def prepare_params(params):
    """One-time weight preparation — runs OUTSIDE the jitted forward path."""
    wc = params["conv_w"].reshape(C_OUT, C_IN).T.reshape(C_IN, C_OUT, 1, 1)
    w1c = params["fc1_w"].reshape(HID1, C_OUT, HW).transpose(1, 2, 0)   # (16, HW, 64)
    return {
        "wc": wc,                                            # (3, 16, 1, 1)
        "gamma": params["bn_gamma"].reshape(C_OUT, 1, 1),
        "beta": params["bn_beta"].reshape(C_OUT, 1, 1),
        "w1c": w1c,
        "b1": params["fc1_b"].reshape(1, HID1),
        "w2t": params["fc2_w"].T,                            # (64, 32)
        "b2": params["fc2_b"].reshape(1, HID2),
        "w3t": params["fc3_w"].T,                            # (32, 3)
        "b3": params["fc3_b"].reshape(1, OUTPUTS),
        # conv_b intentionally unused: it cancels under training-mode BatchNorm.
    }


def pong_forward(x, prep):
    B = x.shape[0]
    xr = x.reshape(B, C_IN, HW).astype(jnp.float32)   # free reshape, stays channel-major
    vmem = pl.BlockSpec(memory_space=pltpu.MemorySpace.VMEM)
    return pl.pallas_call(
        _fused_forward_kernel,
        out_shape=jax.ShapeDtypeStruct((B, OUTPUTS), jnp.float32),
        in_specs=[vmem] * 10,
        out_specs=vmem,
    )(xr, prep["wc"], prep["gamma"], prep["beta"], prep["w1c"], prep["b1"],
      prep["w2t"], prep["b2"], prep["w3t"], prep["b3"])


def reference_forward(x, params):
    """Pure-JAX re-implementation of PONG_PyTorchNet.forward (training-mode BN)."""
    B = x.shape[0]
    w = params["conv_w"].reshape(C_OUT, C_IN)
    y = jnp.einsum('oc,bchw->bohw', w, x) + params["conv_b"].reshape(1, C_OUT, 1, 1)
    mean = jnp.mean(y, axis=(0, 2, 3), keepdims=True)
    var = jnp.mean((y - mean) ** 2, axis=(0, 2, 3), keepdims=True)
    yn = ((y - mean) * jax.lax.rsqrt(var + BN_EPS)
          * params["bn_gamma"].reshape(1, C_OUT, 1, 1)
          + params["bn_beta"].reshape(1, C_OUT, 1, 1))
    a = jnp.maximum(yn, 0.0)
    f = a.reshape(B, C_OUT * HW)                      # PyTorch Flatten: channel-major
    h1 = jnp.maximum(f @ params["fc1_w"].T + params["fc1_b"], 0.0)
    h2 = jnp.maximum(h1 @ params["fc2_w"].T + params["fc2_b"], 0.0)
    z = h2 @ params["fc3_w"].T + params["fc3_b"]
    return jax.nn.log_softmax(z, axis=-1)


def init_params(key):
    ks = jax.random.split(key, 8)

    def u(k, shape, fan_in):
        bound = 1.0 / jnp.sqrt(float(fan_in))
        return jax.random.uniform(k, shape, jnp.float32, -bound, bound)

    return {
        "conv_w": u(ks[0], (C_OUT, C_IN, 1, 1), C_IN),
        "conv_b": u(ks[1], (C_OUT,), C_IN),
        "bn_gamma": jnp.ones((C_OUT,), jnp.float32),
        "bn_beta": jnp.zeros((C_OUT,), jnp.float32),
        "fc1_w": u(ks[2], (HID1, C_OUT * HW), C_OUT * HW),
        "fc1_b": u(ks[3], (HID1,), C_OUT * HW),
        "fc2_w": u(ks[4], (HID2, HID1), HID1),
        "fc2_b": u(ks[5], (HID2,), HID1),
        "fc3_w": u(ks[6], (OUTPUTS, HID2), HID2),
        "fc3_b": u(ks[7], (OUTPUTS,), HID2),
    }


if __name__ == "__main__":
    key = jax.random.PRNGKey(0)
    kx, kp = jax.random.split(key)
    B = 2
    # NCHW input just like the PyTorch module expects: (B, 3, 30, 16)
    x = jax.random.normal(kx, (B, C_IN, H, W), jnp.float32)
    params = init_params(kp)
    prep = prepare_params(params)        # one-time weight prep, NOT per forward call

    fwd = jax.jit(pong_forward)
    out = jax.block_until_ready(fwd(x, prep))

    assert out.shape == (B, OUTPUTS)
    # log-softmax rows must exponentiate-sum to 1
    assert jnp.allclose(jnp.sum(jnp.exp(out), axis=-1), 1.0, atol=1e-4)
    # match the PyTorch-semantics pure-JAX reference
    ref = reference_forward(x, params)
    assert jnp.allclose(out, ref, atol=1e-3, rtol=1e-3), (
        "max abs diff vs reference: %s" % jnp.max(jnp.abs(out - ref)))
    print("KERNEL_OK")
</pallas_src>

<mosaic_0001>
module attributes {stable_mosaic.version = 11 : i64} {
  func.func @_fused_forward_kernel(%arg0: memref<2x3x480xf32, #tpu.memory_space<vmem>>, %arg1: memref<3x16x1x1xf32, #tpu.memory_space<vmem>>, %arg2: memref<16x1x1xf32, #tpu.memory_space<vmem>>, %arg3: memref<16x1x1xf32, #tpu.memory_space<vmem>>, %arg4: memref<16x480x64xf32, #tpu.memory_space<vmem>>, %arg5: memref<1x64xf32, #tpu.memory_space<vmem>>, %arg6: memref<64x32xf32, #tpu.memory_space<vmem>>, %arg7: memref<1x32xf32, #tpu.memory_space<vmem>>, %arg8: memref<32x3xf32, #tpu.memory_space<vmem>>, %arg9: memref<1x3xf32, #tpu.memory_space<vmem>>, %arg10: memref<2x3xf32, #tpu.memory_space<vmem>>) attributes {dimension_semantics = [], scalar_prefetch = 0 : i64, scratch_operands = 0 : i64, tpu.core_type = #tpu.core_type<tc>} {
    %c0 = arith.constant 0 : index
    %c0_0 = arith.constant 0 : index
    %c0_1 = arith.constant 0 : index
    %0 = vector.load %arg0[%c0, %c0_0, %c0_1] : memref<2x3x480xf32, #tpu.memory_space<vmem>>, vector<2x3x480xf32>
    %c0_2 = arith.constant 0 : index
    %c0_3 = arith.constant 0 : index
    %c0_4 = arith.constant 0 : index
    %c0_5 = arith.constant 0 : index
    %1 = vector.load %arg1[%c0_2, %c0_3, %c0_4, %c0_5] : memref<3x16x1x1xf32, #tpu.memory_space<vmem>>, vector<3x16x1x1xf32>
    %2 = vector.extract_strided_slice %1 {offsets = [0, 0, 0, 0], sizes = [1, 16, 1, 1], strides = [1, 1, 1, 1]} : vector<3x16x1x1xf32> to vector<1x16x1x1xf32>
    %3 = vector.shape_cast %2 : vector<1x16x1x1xf32> to vector<16x1x1xf32>
    %4 = vector.extract_strided_slice %0 {offsets = [0, 0, 0], sizes = [2, 1, 480], strides = [1, 1, 1]} : vector<2x3x480xf32> to vector<2x1x480xf32>
    %5 = vector.shape_cast %4 : vector<2x1x480xf32> to vector<2x480xf32>
    %6 = vector.shape_cast %5 : vector<2x480xf32> to vector<1x2x480xf32>
    %7 = vector.broadcast %3 : vector<16x1x1xf32> to vector<16x2x480xf32>
    %8 = vector.broadcast %6 : vector<1x2x480xf32> to vector<16x2x480xf32>
    %9 = arith.mulf %7, %8 : vector<16x2x480xf32>
    %10 = vector.extract_strided_slice %1 {offsets = [1, 0, 0, 0], sizes = [1, 16, 1, 1], strides = [1, 1, 1, 1]} : vector<3x16x1x1xf32> to vector<1x16x1x1xf32>
    %11 = vector.shape_cast %10 : vector<1x16x1x1xf32> to vector<16x1x1xf32>
    %12 = vector.extract_strided_slice %0 {offsets = [0, 1, 0], sizes = [2, 1, 480], strides = [1, 1, 1]} : vector<2x3x480xf32> to vector<2x1x480xf32>
    %13 = vector.shape_cast %12 : vector<2x1x480xf32> to vector<2x480xf32>
    %14 = vector.shape_cast %13 : vector<2x480xf32> to vector<1x2x480xf32>
    %15 = vector.broadcast %11 : vector<16x1x1xf32> to vector<16x2x480xf32>
    %16 = vector.broadcast %14 : vector<1x2x480xf32> to vector<16x2x480xf32>
    %17 = arith.mulf %15, %16 : vector<16x2x480xf32>
    %18 = arith.addf %9, %17 : vector<16x2x480xf32>
    %19 = vector.extract_strided_slice %1 {offsets = [2, 0, 0, 0], sizes = [1, 16, 1, 1], strides = [1, 1, 1, 1]} : vector<3x16x1x1xf32> to vector<1x16x1x1xf32>
    %20 = vector.shape_cast %19 : vector<1x16x1x1xf32> to vector<16x1x1xf32>
    %21 = vector.extract_strided_slice %0 {offsets = [0, 2, 0], sizes = [2, 1, 480], strides = [1, 1, 1]} : vector<2x3x480xf32> to vector<2x1x480xf32>
    %22 = vector.shape_cast %21 : vector<2x1x480xf32> to vector<2x480xf32>
    %23 = vector.shape_cast %22 : vector<2x480xf32> to vector<1x2x480xf32>
    %24 = vector.broadcast %20 : vector<16x1x1xf32> to vector<16x2x480xf32>
    %25 = vector.broadcast %23 : vector<1x2x480xf32> to vector<16x2x480xf32>
    %26 = arith.mulf %24, %25 : vector<16x2x480xf32>
    %27 = arith.addf %18, %26 : vector<16x2x480xf32>
    %cst = arith.constant dense<0.000000e+00> : vector<16x2xf32>
    %28 = vector.multi_reduction <add>, %27, %cst [2] : vector<16x2x480xf32> to vector<16x2xf32>
    %29 = vector.shape_cast %28 : vector<16x2xf32> to vector<16x2x1xf32>
    %cst_6 = arith.constant dense<0.000000e+00> : vector<16x1xf32>
    %30 = vector.multi_reduction <add>, %29, %cst_6 [1] : vector<16x2x1xf32> to vector<16x1xf32>
    %31 = vector.shape_cast %30 : vector<16x1xf32> to vector<16x1x1xf32>
    %cst_7 = arith.constant 9.600000e+02 : f32
    %32 = vector.broadcast %cst_7 : f32 to vector<16x1x1xf32>
    %33 = arith.divf %31, %32 : vector<16x1x1xf32>
    %34 = vector.broadcast %33 : vector<16x1x1xf32> to vector<16x2x480xf32>
    %35 = arith.subf %27, %34 : vector<16x2x480xf32>
    %36 = arith.mulf %35, %35 : vector<16x2x480xf32>
    %cst_8 = arith.constant dense<0.000000e+00> : vector<16x2xf32>
    %37 = vector.multi_reduction <add>, %36, %cst_8 [2] : vector<16x2x480xf32> to vector<16x2xf32>
    %38 = vector.shape_cast %37 : vector<16x2xf32> to vector<16x2x1xf32>
    %cst_9 = arith.constant dense<0.000000e+00> : vector<16x1xf32>
    %39 = vector.multi_reduction <add>, %38, %cst_9 [1] : vector<16x2x1xf32> to vector<16x1xf32>
    %40 = vector.shape_cast %39 : vector<16x1xf32> to vector<16x1x1xf32>
    %cst_10 = arith.constant 9.600000e+02 : f32
    %41 = vector.broadcast %cst_10 : f32 to vector<16x1x1xf32>
    %42 = arith.divf %40, %41 : vector<16x1x1xf32>
    %c0_11 = arith.constant 0 : index
    %c0_12 = arith.constant 0 : index
    %c0_13 = arith.constant 0 : index
    %43 = vector.load %arg2[%c0_11, %c0_12, %c0_13] : memref<16x1x1xf32, #tpu.memory_space<vmem>>, vector<16x1x1xf32>
    %cst_14 = arith.constant 9.99999974E-6 : f32
    %44 = vector.broadcast %cst_14 : f32 to vector<16x1x1xf32>
    %45 = arith.addf %42, %44 : vector<16x1x1xf32>
    %46 = math.rsqrt %45 : vector<16x1x1xf32>
    %47 = arith.mulf %43, %46 : vector<16x1x1xf32>
    %c0_15 = arith.constant 0 : index
    %c0_16 = arith.constant 0 : index
    %c0_17 = arith.constant 0 : index
    %48 = vector.load %arg3[%c0_15, %c0_16, %c0_17] : memref<16x1x1xf32, #tpu.memory_space<vmem>>, vector<16x1x1xf32>
    %49 = arith.mulf %33, %47 : vector<16x1x1xf32>
    %50 = arith.subf %48, %49 : vector<16x1x1xf32>
    %51 = vector.broadcast %47 : vector<16x1x1xf32> to vector<16x2x480xf32>
    %52 = arith.mulf %27, %51 : vector<16x2x480xf32>
    %53 = vector.broadcast %50 : vector<16x1x1xf32> to vector<16x2x480xf32>
    %54 = arith.addf %52, %53 : vector<16x2x480xf32>
    %cst_18 = arith.constant 0.000000e+00 : f32
    %55 = vector.broadcast %cst_18 : f32 to vector<16x2x480xf32>
    %56 = arith.maximumf %54, %55 : vector<16x2x480xf32>
    %c0_19 = arith.constant 0 : index
    %c0_20 = arith.constant 0 : index
    %c0_21 = arith.constant 0 : index
    %57 = vector.load %arg4[%c0_19, %c0_20, %c0_21] : memref<16x480x64xf32, #tpu.memory_space<vmem>>, vector<16x480x64xf32>
    "tpu.trace_start"() <{level = 10 : i32, message = "cbn,cnh->cbh"}> : () -> ()
    %cst_22 = arith.constant dense<0.000000e+00> : vector<16x2x64xf32>
    %58 = tpu.matmul %56, %57, %cst_22 {dimension_numbers = #tpu.dot_dimension_numbers<[2], [1], [1], [2], [0, 0, 0, 1, 1, 2], [0], [0]>} : vector<16x2x480xf32>, vector<16x480x64xf32>, vector<16x2x64xf32> -> vector<16x2x64xf32>
    "tpu.trace_stop"() : () -> ()
    %cst_23 = arith.constant dense<0.000000e+00> : vector<2x64xf32>
    %59 = vector.multi_reduction <add>, %58, %cst_23 [0] : vector<16x2x64xf32> to vector<2x64xf32>
    %c0_24 = arith.constant 0 : index
    %c0_25 = arith.constant 0 : index
    %60 = vector.load %arg5[%c0_24, %c0_25] : memref<1x64xf32, #tpu.memory_space<vmem>>, vector<1x64xf32>
    %61 = vector.broadcast %60 : vector<1x64xf32> to vector<2x64xf32>
    %62 = arith.addf %59, %61 : vector<2x64xf32>
    %cst_26 = arith.constant 0.000000e+00 : f32
    %63 = vector.broadcast %cst_26 : f32 to vector<2x64xf32>
    %64 = arith.maximumf %62, %63 : vector<2x64xf32>
    %c0_27 = arith.constant 0 : index
    %c0_28 = arith.constant 0 : index
    %65 = vector.load %arg6[%c0_27, %c0_28] : memref<64x32xf32, #tpu.memory_space<vmem>>, vector<64x32xf32>
    %cst_29 = arith.constant dense<0.000000e+00> : vector<2x32xf32>
    %66 = tpu.matmul %64, %65, %cst_29 {dimension_numbers = #tpu.dot_dimension_numbers<[1], [0], [0], [1], [0, 0, 1, 1], [], []>} : vector<2x64xf32>, vector<64x32xf32>, vector<2x32xf32> -> vector<2x32xf32>
    %c0_30 = arith.constant 0 : index
    %c0_31 = arith.constant 0 : index
    %67 = vector.load %arg7[%c0_30, %c0_31] : memref<1x32xf32, #tpu.memory_space<vmem>>, vector<1x32xf32>
    %68 = vector.broadcast %67 : vector<1x32xf32> to vector<2x32xf32>
    %69 = arith.addf %66, %68 : vector<2x32xf32>
    %cst_32 = arith.constant 0.000000e+00 : f32
    %70 = vector.broadcast %cst_32 : f32 to vector<2x32xf32>
    %71 = arith.maximumf %69, %70 : vector<2x32xf32>
    %c0_33 = arith.constant 0 : index
    %c0_34 = arith.constant 0 : index
    %72 = vector.load %arg8[%c0_33, %c0_34] : memref<32x3xf32, #tpu.memory_space<vmem>>, vector<32x3xf32>
    %cst_35 = arith.constant dense<0.000000e+00> : vector<2x3xf32>
    %73 = tpu.matmul %71, %72, %cst_35 {dimension_numbers = #tpu.dot_dimension_numbers<[1], [0], [0], [1], [0, 0, 1, 1], [], []>} : vector<2x32xf32>, vector<32x3xf32>, vector<2x3xf32> -> vector<2x3xf32>
    %c0_36 = arith.constant 0 : index
    %c0_37 = arith.constant 0 : index
    %74 = vector.load %arg9[%c0_36, %c0_37] : memref<1x3xf32, #tpu.memory_space<vmem>>, vector<1x3xf32>
    %75 = vector.broadcast %74 : vector<1x3xf32> to vector<2x3xf32>
    %76 = arith.addf %73, %75 : vector<2x3xf32>
    %cst_38 = arith.constant dense<0xFF800000> : vector<2xf32>
    %77 = vector.multi_reduction <maximumf>, %76, %cst_38 [1] : vector<2x3xf32> to vector<2xf32>
    %78 = vector.shape_cast %77 : vector<2xf32> to vector<2x1xf32>
    %79 = vector.broadcast %78 : vector<2x1xf32> to vector<2x3xf32>
    %80 = arith.subf %76, %79 : vector<2x3xf32>
    %81 = math.exp %80 : vector<2x3xf32>
    %cst_39 = arith.constant dense<0.000000e+00> : vector<2xf32>
    %82 = vector.multi_reduction <add>, %81, %cst_39 [1] : vector<2x3xf32> to vector<2xf32>
    %83 = vector.shape_cast %82 : vector<2xf32> to vector<2x1xf32>
    %84 = math.log %83 : vector<2x1xf32>
    %85 = arith.addf %78, %84 : vector<2x1xf32>
    %86 = vector.broadcast %85 : vector<2x1xf32> to vector<2x3xf32>
    %87 = arith.subf %76, %86 : vector<2x3xf32>
    %c0_40 = arith.constant 0 : index
    %c0_41 = arith.constant 0 : index
    %88 = vector.load %arg10[%c0_40, %c0_41] : memref<2x3xf32, #tpu.memory_space<vmem>>, vector<2x3xf32>
    tpu.vector_store %arg10[%c0_40, %c0_41], %87 {strides = array<i32>} : memref<2x3xf32, #tpu.memory_space<vmem>>, vector<2x3xf32>,
    return
  }
}

</mosaic_0001>

<llo_original>
// kernel: pong_forward.1
$region0: #{pong_forward.1}
  #allocation0 [shape = 'u32[]', space=smem, size = 0x4, offset = 0x4, fixed_abs, tag = 'smem constant byte address 0x4 - core index']
  #allocation1 [shape = 'u32[144,128]{1,0:T(1,128)}', space=vmem, size = 0x12000, scoped, tag = 'internal scratch']
  %s0 = inlined_call_operand.vmem [shape: f32[2,3,480], index: 0, kind: input, shape index: {}]
  %s1 = inlined_call_operand.vmem [shape: f32[3,16,1,1], index: 1, kind: input, shape index: {}]
  %s2 = inlined_call_operand.vmem [shape: f32[16,1,1], index: 2, kind: input, shape index: {}]
  %s3 = inlined_call_operand.vmem [shape: f32[16,1,1], index: 3, kind: input, shape index: {}]
  %s4 = inlined_call_operand.vmem [shape: f32[16,480,64], index: 4, kind: input, shape index: {}]
  %s5 = inlined_call_operand.vmem [shape: f32[1,64], index: 5, kind: input, shape index: {}]
  %s6 = inlined_call_operand.vmem [shape: f32[64,32], index: 6, kind: input, shape index: {}]
  %s7 = inlined_call_operand.vmem [shape: f32[1,32], index: 7, kind: input, shape index: {}]
  %s8 = inlined_call_operand.vmem [shape: f32[32,3], index: 8, kind: input, shape index: {}]
  %s9 = inlined_call_operand.vmem [shape: f32[1,3], index: 9, kind: input, shape index: {}]
  %s10 = inlined_call_operand.hbm [shape: f32[2,3], index: 10, kind: output, shape index: {}]
  %s11 = sld [smem:[#allocation0]]
  $region50: #{pong_forward.1} parent=0
    _
  %s13 = ssub.s32 1, %s11
  %s14 = scalar_select 0, %s13, %s11
  $region1: #{pong_forward.1} parent=0
    #allocation2 [shape = 'u8[1024]{0}', space=vmem, size = 0x400, scoped, tag = 'output window, operand 0, single buffered']
    #allocation3 [shape = 's32[1]{0}', space=sflag, size = 0x4, scoped, tag = 'scoped memory for pong_forward.1']
    %15 = vsyncpa [#allocation3], 0
    // Predicated region
    $region2: #{pong_forward.1} parent=1 // pred_check
      _
    $region3: #{pong_forward.1} parent=1 // pred_check_branch
      %17 = sbr.rel (0) target = $region5
    $region4: #{pong_forward.1} parent=1 // pred_region
      _
    $region5: #{pong_forward.1} parent=1 // pred_fallthru
      _
    // Predicated region
    $region6: #{pong_forward.1} parent=1 // pred_check
      _
    $region7: #{pong_forward.1} parent=1 // pred_check_branch
      %19 = sbr.rel (0) target = $region9
    $region8: #{pong_forward.1} parent=1 // pred_region
      _
    $region9: #{pong_forward.1} parent=1 // pred_fallthru
      _
    // Predicated region
    $region10: #{pong_forward.1} parent=1 // pred_check
      _
    $region11: #{pong_forward.1} parent=1 // pred_check_branch
      %21 = sbr.rel (0) target = $region13
    $region12: #{pong_forward.1} parent=1 // pred_region
      _
    $region13: #{pong_forward.1} parent=1 // pred_fallthru
      _
    // Predicated region
    $region14: #{pong_forward.1} parent=1 // pred_check
      _
    $region15: #{pong_forward.1} parent=1 // pred_check_branch
      %23 = sbr.rel (0) target = $region17
    $region16: #{pong_forward.1} parent=1 // pred_region
      _
    $region17: #{pong_forward.1} parent=1 // pred_fallthru
      _
    // Predicated region
    $region18: #{pong_forward.1} parent=1 // pred_check
      _
    $region19: #{pong_forward.1} parent=1 // pred_check_branch
      %25 = sbr.rel (0) target = $region21
    $region20: #{pong_forward.1} parent=1 // pred_region
      _
    $region21: #{pong_forward.1} parent=1 // pred_fallthru
      _
    // Predicated region
    $region22: #{pong_forward.1} parent=1 // pred_check
      _
    $region23: #{pong_forward.1} parent=1 // pred_check_branch
      %27 = sbr.rel (0) target = $region25
    $region24: #{pong_forward.1} parent=1 // pred_region
      _
    $region25: #{pong_forward.1} parent=1 // pred_fallthru
      _
    // Predicated region
    $region26: #{pong_forward.1} parent=1 // pred_check
      _
    $region27: #{pong_forward.1} parent=1 // pred_check_branch
      %29 = sbr.rel (0) target = $region29
    $region28: #{pong_forward.1} parent=1 // pred_region
      _
    $region29: #{pong_forward.1} parent=1 // pred_fallthru
      _
    // Predicated region
    $region30: #{pong_forward.1} parent=1 // pred_check
      _
    $region31: #{pong_forward.1} parent=1 // pred_check_branch
      %31 = sbr.rel (0) target = $region33
    $region32: #{pong_forward.1} parent=1 // pred_region
      _
    $region33: #{pong_forward.1} parent=1 // pred_fallthru
      _
    // Predicated region
    $region34: #{pong_forward.1} parent=1 // pred_check
      _
    $region35: #{pong_forward.1} parent=1 // pred_check_branch
      %33 = sbr.rel (0) target = $region37
    $region36: #{pong_forward.1} parent=1 // pred_region
      _
    $region37: #{pong_forward.1} parent=1 // pred_fallthru
      _
    // Predicated region
    $region38: #{pong_forward.1} parent=1 // pred_check
      _
    $region39: #{pong_forward.1} parent=1 // pred_check_branch
      %35 = sbr.rel (0) target = $region41
    $region40: #{pong_forward.1} parent=1 // pred_region
      _
    $region41: #{pong_forward.1} parent=1 // pred_fallthru
      _
    %v36 = vld [vmem:[%s0] sm:$0x77]
    %v37 = vld [vmem:[%s0 + $0x8] sm:$0x77]
    %v38 = vld [vmem:[%s0 + $0x10] sm:$0x77]
    %v39 = vld [vmem:[%s0 + $0x18] sm:$0x77]
    %v40 = vld [vmem:[%s1] sm:$0x1]
    %v41 = vld [vmem:[%s1 + $0x1] sm:$0x1]
    %v42 = vld [vmem:[%s1 + $0x2] sm:$0x1]
    %v43 = vld [vmem:[%s1 + $0x3] sm:$0x1]
    %v44 = vld [vmem:[%s1 + $0x4] sm:$0x1]
    %v45 = vld [vmem:[%s1 + $0x5] sm:$0x1]
    %v46 = vld [vmem:[%s1 + $0x6] sm:$0x1]
    %v47 = vld [vmem:[%s1 + $0x7] sm:$0x1]
    %v48 = vld [vmem:[%s1 + $0x8] sm:$0x1]
    %v49 = vld [vmem:[%s1 + $0x9] sm:$0x1]
    %v50 = vld [vmem:[%s1 + $0xa] sm:$0x1]
    %v51 = vld [vmem:[%s1 + $0xb] sm:$0x1]
    %v52 = vld [vmem:[%s1 + $0xc] sm:$0x1]
    %v53 = vld [vmem:[%s1 + $0xd] sm:$0x1]
    %v54 = vld [vmem:[%s1 + $0xe] sm:$0x1]
    %v55 = vld [vmem:[%s1 + $0xf] sm:$0x1]
    %v56 = vld [vmem:[%s1 + $0x10] sm:$0x1]
    %v57 = vld [vmem:[%s1 + $0x11] sm:$0x1]
    %v58 = vld [vmem:[%s1 + $0x12] sm:$0x1]
    %v59 = vld [vmem:[%s1 + $0x13] sm:$0x1]
    %v60 = vld [vmem:[%s1 + $0x14] sm:$0x1]
    %v61 = vld [vmem:[%s1 + $0x15] sm:$0x1]
    %v62 = vld [vmem:[%s1 + $0x16] sm:$0x1]
    %v63 = vld [vmem:[%s1 + $0x17] sm:$0x1]
    %v64 = vld [vmem:[%s1 + $0x18] sm:$0x1]
    %v65 = vld [vmem:[%s1 + $0x19] sm:$0x1]
    %v66 = vld [vmem:[%s1 + $0x1a] sm:$0x1]
    %v67 = vld [vmem:[%s1 + $0x1b] sm:$0x1]
    %v68 = vld [vmem:[%s1 + $0x1c] sm:$0x1]
    %v69 = vld [vmem:[%s1 + $0x1d] sm:$0x1]
    %v70 = vld [vmem:[%s1 + $0x1e] sm:$0x1]
    %v71 = vld [vmem:[%s1 + $0x1f] sm:$0x1]
    %v72 = vld [vmem:[%s1 + $0x20] sm:$0x1]
    %v73 = vld [vmem:[%s1 + $0x21] sm:$0x1]
    %v74 = vld [vmem:[%s1 + $0x22] sm:$0x1]
    %v75 = vld [vmem:[%s1 + $0x23] sm:$0x1]
    %v76 = vld [vmem:[%s1 + $0x24] sm:$0x1]
    %v77 = vld [vmem:[%s1 + $0x25] sm:$0x1]
    %v78 = vld [vmem:[%s1 + $0x26] sm:$0x1]
    %v79 = vld [vmem:[%s1 + $0x27] sm:$0x1]
    %v80 = vld [vmem:[%s1 + $0x28] sm:$0x1]
    %v81 = vld [vmem:[%s1 + $0x29] sm:$0x1]
    %v82 = vld [vmem:[%s1 + $0x2a] sm:$0x1]
    %v83 = vld [vmem:[%s1 + $0x2b] sm:$0x1]
    %v84 = vld [vmem:[%s1 + $0x2c] sm:$0x1]
    %v85 = vld [vmem:[%s1 + $0x2d] sm:$0x1]
    %v86 = vld [vmem:[%s1 + $0x2e] sm:$0x1]
    %v87 = vld [vmem:[%s1 + $0x2f] sm:$0x1]
    %v104 = vlaneseq
    %v105 = vshrl.u32 %v104, 7
    %v106 = vsub.s32 0, %v105
    %v107 = vrot.slane %v40, %v106
    %v108 = vlaneseq
    %v109 = vshrl.u32 %v108, 7
    %v110 = vsub.s32 0, %v109
    %v111 = vrot.slane %v41, %v110
    %v112 = vlaneseq
    %v113 = vshrl.u32 %v112, 7
    %v114 = vsub.s32 0, %v113
    %v115 = vrot.slane %v42, %v114
    %v116 = vlaneseq
    %v117 = vshrl.u32 %v116, 7
    %v118 = vsub.s32 0, %v117
    %v119 = vrot.slane %v43, %v118
    %v120 = vlaneseq
    %v121 = vshrl.u32 %v120, 7
    %v122 = vsub.s32 0, %v121
    %v123 = vrot.slane %v44, %v122
    %v124 = vlaneseq
    %v125 = vshrl.u32 %v124, 7
    %v126 = vsub.s32 0, %v125
    %v127 = vrot.slane %v45, %v126
    %v128 = vlaneseq
    %v129 = vshrl.u32 %v128, 7
    %v130 = vsub.s32 0, %v129
    %v131 = vrot.slane %v46, %v130
    %v132 = vlaneseq
    %v133 = vshrl.u32 %v132, 7
    %v134 = vsub.s32 0, %v133
    %v135 = vrot.slane %v47, %v134
    %v136 = vlaneseq
    %v137 = vshrl.u32 %v136, 7
    %v138 = vsub.s32 0, %v137
    %v139 = vrot.slane %v48, %v138
    %v140 = vlaneseq
    %v141 = vshrl.u32 %v140, 7
    %v142 = vsub.s32 0, %v141
    %v143 = vrot.slane %v49, %v142
    %v144 = vlaneseq
    %v145 = vshrl.u32 %v144, 7
    %v146 = vsub.s32 0, %v145
    %v147 = vrot.slane %v50, %v146
    %v148 = vlaneseq
    %v149 = vshrl.u32 %v148, 7
    %v150 = vsub.s32 0, %v149
    %v151 = vrot.slane %v51, %v150
    %v152 = vlaneseq
    %v153 = vshrl.u32 %v152, 7
    %v154 = vsub.s32 0, %v153
    %v155 = vrot.slane %v52, %v154
    %v156 = vlaneseq
    %v157 = vshrl.u32 %v156, 7
    %v158 = vsub.s32 0, %v157
    %v159 = vrot.slane %v53, %v158
    %v160 = vlaneseq
    %v161 = vshrl.u32 %v160, 7
    %v162 = vsub.s32 0, %v161
    %v163 = vrot.slane %v54, %v162
    %v164 = vlaneseq
    %v165 = vshrl.u32 %v164, 7
    %v166 = vsub.s32 0, %v165
    %v167 = vrot.slane %v55, %v166
    %168 = vset.pattern.permute.xlu0 0
    %169 = vperm.xlu0 %168, %v107
    %v170 = vpop.permute.xlu0 %169
    %172 = vset.pattern.permute.xlu0 0
    %173 = vperm.xlu0 %172, %v111
    %v174 = vpop.permute.xlu0 %173
    %176 = vset.pattern.permute.xlu0 0
    %177 = vperm.xlu0 %176, %v115
    %v178 = vpop.permute.xlu0 %177
    %180 = vset.pattern.permute.xlu0 0
    %181 = vperm.xlu0 %180, %v119
    %v182 = vpop.permute.xlu0 %181
    %184 = vset.pattern.permute.xlu0 0
    %185 = vperm.xlu0 %184, %v123
    %v186 = vpop.permute.xlu0 %185
    %188 = vset.pattern.permute.xlu0 0
    %189 = vperm.xlu0 %188, %v127
    %v190 = vpop.permute.xlu0 %189
    %192 = vset.pattern.permute.xlu0 0
    %193 = vperm.xlu0 %192, %v131
    %v194 = vpop.permute.xlu0 %193
    %196 = vset.pattern.permute.xlu0 0
    %197 = vperm.xlu0 %196, %v135
    %v198 = vpop.permute.xlu0 %197
    %200 = vset.pattern.permute.xlu0 0
    %201 = vperm.xlu0 %200, %v139
    %v202 = vpop.permute.xlu0 %201
    %204 = vset.pattern.permute.xlu0 0
    %205 = vperm.xlu0 %204, %v143
    %v206 = vpop.permute.xlu0 %205
    %208 = vset.pattern.permute.xlu0 0
    %209 = vperm.xlu0 %208, %v147
    %v210 = vpop.permute.xlu0 %209
    %212 = vset.pattern.permute.xlu0 0
    %213 = vperm.xlu0 %212, %v151
    %v214 = vpop.permute.xlu0 %213
    %216 = vset.pattern.permute.xlu0 0
    %217 = vperm.xlu0 %216, %v155
    %v218 = vpop.permute.xlu0 %217
    %220 = vset.pattern.permute.xlu0 0
    %221 = vperm.xlu0 %220, %v159
    %v222 = vpop.permute.xlu0 %221
    %224 = vset.pattern.permute.xlu0 0
    %225 = vperm.xlu0 %224, %v163
    %v226 = vpop.permute.xlu0 %225
    %228 = vset.pattern.permute.xlu0 0
    %229 = vperm.xlu0 %228, %v167
    %v230 = vpop.permute.xlu0 %229
    %v232 = vmul.f32 %v170, %v36
    %v233 = vmul.f32 %v170, %v37
    %v234 = vmul.f32 %v170, %v38
    %v235 = vmul.f32 %v170, %v39
    %v236 = vmul.f32 %v174, %v36
    %v237 = vmul.f32 %v174, %v37
    %v238 = vmul.f32 %v174, %v38
    %v239 = vmul.f32 %v174, %v39
    %v240 = vmul.f32 %v178, %v36
    %v241 = vmul.f32 %v178, %v37
    %v242 = vmul.f32 %v178, %v38
    %v243 = vmul.f32 %v178, %v39
    %v244 = vmul.f32 %v182, %v36
    %v245 = vmul.f32 %v182, %v37
    %v246 = vmul.f32 %v182, %v38
    %v247 = vmul.f32 %v182, %v39
    %v248 = vmul.f32 %v186, %v36
    %v249 = vmul.f32 %v186, %v37
    %v250 = vmul.f32 %v186, %v38
    %v251 = vmul.f32 %v186, %v39
    %v252 = vmul.f32 %v190, %v36
    %v253 = vmul.f32 %v190, %v37
    %v254 = vmul.f32 %v190, %v38
    %v255 = vmul.f32 %v190, %v39
    %v256 = vmul.f32 %v194, %v36
    %v257 = vmul.f32 %v194, %v37
    %v258 = vmul.f32 %v194, %v38
    %v259 = vmul.f32 %v194, %v39
    %v260 = vmul.f32 %v198, %v36
    %v261 = vmul.f32 %v198, %v37
    %v262 = vmul.f32 %v198, %v38
    %v263 = vmul.f32 %v198, %v39
    %v264 = vmul.f32 %v202, %v36
    %v265 = vmul.f32 %v202, %v37
    %v266 = vmul.f32 %v202, %v38
    %v267 = vmul.f32 %v202, %v39
    %v268 = vmul.f32 %v206, %v36
    %v269 = vmul.f32 %v206, %v37
    %v270 = vmul.f32 %v206, %v38
    %v271 = vmul.f32 %v206, %v39
    %v272 = vmul.f32 %v210, %v36
    %v273 = vmul.f32 %v210, %v37
    %v274 = vmul.f32 %v210, %v38
    %v275 = vmul.f32 %v210, %v39
    %v276 = vmul.f32 %v214, %v36
    %v277 = vmul.f32 %v214, %v37
    %v278 = vmul.f32 %v214, %v38
    %v279 = vmul.f32 %v214, %v39
    %v280 = vmul.f32 %v218, %v36
    %v281 = vmul.f32 %v218, %v37
    %v282 = vmul.f32 %v218, %v38
    %v283 = vmul.f32 %v218, %v39
    %v284 = vmul.f32 %v222, %v36
    %v285 = vmul.f32 %v222, %v37
    %v286 = vmul.f32 %v222, %v38
    %v287 = vmul.f32 %v222, %v39
    %v288 = vmul.f32 %v226, %v36
    %v289 = vmul.f32 %v226, %v37
    %v290 = vmul.f32 %v226, %v38
    %v291 = vmul.f32 %v226, %v39
    %v292 = vmul.f32 %v230, %v36
    %v293 = vmul.f32 %v230, %v37
    %v294 = vmul.f32 %v230, %v38
    %v295 = vmul.f32 %v230, %v39
    %v312 = vlaneseq
    %v313 = vshrl.u32 %v312, 7
    %v314 = vsub.s32 0, %v313
    %v315 = vrot.slane %v56, %v314
    %v316 = vlaneseq
    %v317 = vshrl.u32 %v316, 7
    %v318 = vsub.s32 0, %v317
    %v319 = vrot.slane %v57, %v318
    %v320 = vlaneseq
    %v321 = vshrl.u32 %v320, 7
    %v322 = vsub.s32 0, %v321
    %v323 = vrot.slane %v58, %v322
    %v324 = vlaneseq
    %v325 = vshrl.u32 %v324, 7
    %v326 = vsub.s32 0, %v325
    %v327 = vrot.slane %v59, %v326
    %v328 = vlaneseq
    %v329 = vshrl.u32 %v328, 7
    %v330 = vsub.s32 0, %v329
    %v331 = vrot.slane %v60, %v330
    %v332 = vlaneseq
    %v333 = vshrl.u32 %v332, 7
    %v334 = vsub.s32 0, %v333
    %v335 = vrot.slane %v61, %v334
    %v336 = vlaneseq
    %v337 = vshrl.u32 %v336, 7
    %v338 = vsub.s32 0, %v337
    %v339 = vrot.slane %v62, %v338
    %v340 = vlaneseq
    %v341 = vshrl.u32 %v340, 7
    %v342 = vsub.s32 0, %v341
    %v343 = vrot.slane %v63, %v342
    %v344 = vlaneseq
    %v345 = vshrl.u32 %v344, 7
    %v346 = vsub.s32 0, %v345
    %v347 = vrot.slane %v64, %v346
    %v348 = vlaneseq
    %v349 = vshrl.u32 %v348, 7
    %v350 = vsub.s32 0, %v349
    %v351 = vrot.slane %v65, %v350
    %v352 = vlaneseq
    %v353 = vshrl.u32 %v352, 7
    %v354 = vsub.s32 0, %v353
    %v355 = vrot.slane %v66, %v354
    %v356 = vlaneseq
    %v357 = vshrl.u32 %v356, 7
    %v358 = vsub.s32 0, %v357
    %v359 = vrot.slane %v67, %v358
    %v360 = vlaneseq
    %v361 = vshrl.u32 %v360, 7
    %v362 = vsub.s32 0, %v361
    %v363 = vrot.slane %v68, %v362
    %v364 = vlaneseq
    %v365 = vshrl.u32 %v364, 7
    %v366 = vsub.s32 0, %v365
    %v367 = vrot.slane %v69, %v366
    %v368 = vlaneseq
    %v369 = vshrl.u32 %v368, 7
    %v370 = vsub.s32 0, %v369
    %v371 = vrot.slane %v70, %v370
    %v372 = vlaneseq
    %v373 = vshrl.u32 %v372, 7
    %v374 = vsub.s32 0, %v373
    %v375 = vrot.slane %v71, %v374
    %376 = vset.pattern.permute.xlu0 0
    %377 = vperm.xlu0 %376, %v315
    %v378 = vpop.permute.xlu0 %377
    %380 = vset.pattern.permute.xlu0 0
    %381 = vperm.xlu0 %380, %v319
    %v382 = vpop.permute.xlu0 %381
    %384 = vset.pattern.permute.xlu0 0
    %385 = vperm.xlu0 %384, %v323
    %v386 = vpop.permute.xlu0 %385
    %388 = vset.pattern.permute.xlu0 0
    %389 = vperm.xlu0 %388, %v327
    %v390 = vpop.permute.xlu0 %389
    %392 = vset.pattern.permute.xlu0 0
    %393 = vperm.xlu0 %392, %v331
    %v394 = vpop.permute.xlu0 %393
    %396 = vset.pattern.permute.xlu0 0
    %397 = vperm.xlu0 %396, %v335
    %v398 = vpop.permute.xlu0 %397
    %400 = vset.pattern.permute.xlu0 0
    %401 = vperm.xlu0 %400, %v339
    %v402 = vpop.permute.xlu0 %401
    %404 = vset.pattern.permute.xlu0 0
    %405 = vperm.xlu0 %404, %v343
    %v406 = vpop.permute.xlu0 %405
    %408 = vset.pattern.permute.xlu0 0
    %409 = vperm.xlu0 %408, %v347
    %v410 = vpop.permute.xlu0 %409
    %412 = vset.pattern.permute.xlu0 0
    %413 = vperm.xlu0 %412, %v351
    %v414 = vpop.permute.xlu0 %413
    %416 = vset.pattern.permute.xlu0 0
    %417 = vperm.xlu0 %416, %v355
    %v418 = vpop.permute.xlu0 %417
    %420 = vset.pattern.permute.xlu0 0
    %421 = vperm.xlu0 %420, %v359
    %v422 = vpop.permute.xlu0 %421
    %424 = vset.pattern.permute.xlu0 0
    %425 = vperm.xlu0 %424, %v363
    %v426 = vpop.permute.xlu0 %425
    %428 = vset.pattern.permute.xlu0 0
    %429 = vperm.xlu0 %428, %v367
    %v430 = vpop.permute.xlu0 %429
    %432 = vset.pattern.permute.xlu0 0
    %433 = vperm.xlu0 %432, %v371
    %v434 = vpop.permute.xlu0 %433
    %436 = vset.pattern.permute.xlu0 0
    %437 = vperm.xlu0 %436, %v375
    %v438 = vpop.permute.xlu0 %437
    %v440 = vmul.f32 %v378, %v36
    %v441 = vmul.f32 %v378, %v37
    %v442 = vmul.f32 %v378, %v38
    %v443 = vmul.f32 %v378, %v39
    %v444 = vmul.f32 %v382, %v36
    %v445 = vmul.f32 %v382, %v37
    %v446 = vmul.f32 %v382, %v38
    %v447 = vmul.f32 %v382, %v39
    %v448 = vmul.f32 %v386, %v36
    %v449 = vmul.f32 %v386, %v37
    %v450 = vmul.f32 %v386, %v38
    %v451 = vmul.f32 %v386, %v39
    %v452 = vmul.f32 %v390, %v36
    %v453 = vmul.f32 %v390, %v37
    %v454 = vmul.f32 %v390, %v38
    %v455 = vmul.f32 %v390, %v39
    %v456 = vmul.f32 %v394, %v36
    %v457 = vmul.f32 %v394, %v37
    %v458 = vmul.f32 %v394, %v38
    %v459 = vmul.f32 %v394, %v39
    %v460 = vmul.f32 %v398, %v36
    %v461 = vmul.f32 %v398, %v37
    %v462 = vmul.f32 %v398, %v38
    %v463 = vmul.f32 %v398, %v39
    %v464 = vmul.f32 %v402, %v36
    %v465 = vmul.f32 %v402, %v37
    %v466 = vmul.f32 %v402, %v38
    %v467 = vmul.f32 %v402, %v39
    %v468 = vmul.f32 %v406, %v36
    %v469 = vmul.f32 %v406, %v37
    %v470 = vmul.f32 %v406, %v38
    %v471 = vmul.f32 %v406, %v39
    %v472 = vmul.f32 %v410, %v36
    %v473 = vmul.f32 %v410, %v37
    %v474 = vmul.f32 %v410, %v38
    %v475 = vmul.f32 %v410, %v39
    %v476 = vmul.f32 %v414, %v36
    %v477 = vmul.f32 %v414, %v37
    %v478 = vmul.f32 %v414, %v38
    %v479 = vmul.f32 %v414, %v39
    %v480 = vmul.f32 %v418, %v36
    %v481 = vmul.f32 %v418, %v37
    %v482 = vmul.f32 %v418, %v38
    %v483 = vmul.f32 %v418, %v39
    %v484 = vmul.f32 %v422, %v36
    %v485 = vmul.f32 %v422, %v37
    %v486 = vmul.f32 %v422, %v38
    %v487 = vmul.f32 %v422, %v39
    %v488 = vmul.f32 %v426, %v36
    %v489 = vmul.f32 %v426, %v37
    %v490 = vmul.f32 %v426, %v38
    %v491 = vmul.f32 %v426, %v39
    %v492 = vmul.f32 %v430, %v36
    %v493 = vmul.f32 %v430, %v37
    %v494 = vmul.f32 %v430, %v38
    %v495 = vmul.f32 %v430, %v39
    %v496 = vmul.f32 %v434, %v36
    %v497 = vmul.f32 %v434, %v37
    %v498 = vmul.f32 %v434, %v38
    %v499 = vmul.f32 %v434, %v39
    %v500 = vmul.f32 %v438, %v36
    %v501 = vmul.f32 %v438, %v37
    %v502 = vmul.f32 %v438, %v38
    %v503 = vmul.f32 %v438, %v39
    %v568 = vrot.slane %v440, 5
    %v569 = vrot.slane %v568, 4
    %v570 = vrot.slane %v441, 5
    %v571 = vrot.slane %v570, 4
    %v572 = vrot.slane %v442, 5
    %v573 = vrot.slane %v572, 4
    %v574 = vrot.slane %v443, 5
    %v575 = vrot.slane %v574, 4
    %v576 = vrot.slane %v444, 5
    %v577 = vrot.slane %v576, 4
    %v578 = vrot.slane %v445, 5
    %v579 = vrot.slane %v578, 4
    %v580 = vrot.slane %v446, 5
    %v581 = vrot.slane %v580, 4
    %v582 = vrot.slane %v447, 5
    %v583 = vrot.slane %v582, 4
    %v584 = vrot.slane %v448, 5
    %v585 = vrot.slane %v584, 4
    %v586 = vrot.slane %v449, 5
    %v587 = vrot.slane %v586, 4
    %v588 = vrot.slane %v450, 5
    %v589 = vrot.slane %v588, 4
    %v590 = vrot.slane %v451, 5
    %v591 = vrot.slane %v590, 4
    %v592 = vrot.slane %v452, 5
    %v593 = vrot.slane %v592, 4
    %v594 = vrot.slane %v453, 5
    %v595 = vrot.slane %v594, 4
    %v596 = vrot.slane %v454, 5
    %v597 = vrot.slane %v596, 4
    %v598 = vrot.slane %v455, 5
    %v599 = vrot.slane %v598, 4
    %v600 = vrot.slane %v456, 5
    %v601 = vrot.slane %v600, 4
    %v602 = vrot.slane %v457, 5
    %v603 = vrot.slane %v602, 4
    %v604 = vrot.slane %v458, 5
    %v605 = vrot.slane %v604, 4
    %v606 = vrot.slane %v459, 5
    %v607 = vrot.slane %v606, 4
    %v608 = vrot.slane %v460, 5
    %v609 = vrot.slane %v608, 4
    %v610 = vrot.slane %v461, 5
    %v611 = vrot.slane %v610, 4
    %v612 = vrot.slane %v462, 5
    %v613 = vrot.slane %v612, 4
    %v614 = vrot.slane %v463, 5
    %v615 = vrot.slane %v614, 4
    %v616 = vrot.slane %v464, 5
    %v617 = vrot.slane %v616, 4
    %v618 = vrot.slane %v465, 5
    %v619 = vrot.slane %v618, 4
    %v620 = vrot.slane %v466, 5
    %v621 = vrot.slane %v620, 4
    %v622 = vrot.slane %v467, 5
    %v623 = vrot.slane %v622, 4
    %v624 = vrot.slane %v468, 5
    %v625 = vrot.slane %v624, 4
    %v626 = vrot.slane %v469, 5
    %v627 = vrot.slane %v626, 4
    %v628 = vrot.slane %v470, 5
    %v629 = vrot.slane %v628, 4
    %v630 = vrot.slane %v471, 5
    %v631 = vrot.slane %v630, 4
    %v632 = vrot.slane %v472, 5
    %v633 = vrot.slane %v632, 4
    %v634 = vrot.slane %v473, 5
    %v635 = vrot.slane %v634, 4
    %v636 = vrot.slane %v474, 5
    %v637 = vrot.slane %v636, 4
    %v638 = vrot.slane %v475, 5
    %v639 = vrot.slane %v638, 4
    %v640 = vrot.slane %v476, 5
    %v641 = vrot.slane %v640, 4
    %v642 = vrot.slane %v477, 5
    %v643 = vrot.slane %v642, 4
    %v644 = vrot.slane %v478, 5
    %v645 = vrot.slane %v644, 4
    %v646 = vrot.slane %v479, 5
    %v647 = vrot.slane %v646, 4
    %v648 = vrot.slane %v480, 5
    %v649 = vrot.slane %v648, 4
    %v650 = vrot.slane %v481, 5
    %v651 = vrot.slane %v650, 4
    %v652 = vrot.slane %v482, 5
    %v653 = vrot.slane %v652, 4
    %v654 = vrot.slane %v483, 5
    %v655 = vrot.slane %v654, 4
    %v656 = vrot.slane %v484, 5
    %v657 = vrot.slane %v656, 4
    %v658 = vrot.slane %v485, 5
    %v659 = vrot.slane %v658, 4
    %v660 = vrot.slane %v486, 5
    %v661 = vrot.slane %v660, 4
    %v662 = vrot.slane %v487, 5
    %v663 = vrot.slane %v662, 4
    %v664 = vrot.slane %v488, 5
    %v665 = vrot.slane %v664, 4
    %v666 = vrot.slane %v489, 5
    %v667 = vrot.slane %v666, 4
    %v668 = vrot.slane %v490, 5
    %v669 = vrot.slane %v668, 4
    %v670 = vrot.slane %v491, 5
    %v671 = vrot.slane %v670, 4
    %v672 = vrot.slane %v492, 5
    %v673 = vrot.slane %v672, 4
    %v674 = vrot.slane %v493, 5
    %v675 = vrot.slane %v674, 4
    %v676 = vrot.slane %v494, 5
    %v677 = vrot.slane %v676, 4
    %v678 = vrot.slane %v495, 5
    %v679 = vrot.slane %v678, 4
    %v680 = vrot.slane %v496, 5
    %v681 = vrot.slane %v680, 4
    %v682 = vrot.slane %v497, 5
    %v683 = vrot.slane %v682, 4
    %v684 = vrot.slane %v498, 5
    %v685 = vrot.slane %v684, 4
    %v686 = vrot.slane %v499, 5
    %v687 = vrot.slane %v686, 4
    %v688 = vrot.slane %v500, 5
    %v689 = vrot.slane %v688, 4
    %v690 = vrot.slane %v501, 5
    %v691 = vrot.slane %v690, 4
    %v692 = vrot.slane %v502, 5
    %v693 = vrot.slane %v692, 4
    %v694 = vrot.slane %v503, 5
    %v695 = vrot.slane %v694, 4
    %v760 = vadd.f32 %v232, %v569
    %v761 = vadd.f32 %v233, %v571
    %v762 = vadd.f32 %v234, %v573
    %v763 = vadd.f32 %v235, %v575
    %v764 = vadd.f32 %v236, %v577
    %v765 = vadd.f32 %v237, %v579
    %v766 = vadd.f32 %v238, %v581
    %v767 = vadd.f32 %v239, %v583
    %v768 = vadd.f32 %v240, %v585
    %v769 = vadd.f32 %v241, %v587
    %v770 = vadd.f32 %v242, %v589
    %v771 = vadd.f32 %v243, %v591
    %v772 = vadd.f32 %v244, %v593
    %v773 = vadd.f32 %v245, %v595
    %v774 = vadd.f32 %v246, %v597
    %v775 = vadd.f32 %v247, %v599
    %v776 = vadd.f32 %v248, %v601
    %v777 = vadd.f32 %v249, %v603
    %v778 = vadd.f32 %v250, %v605
    %v779 = vadd.f32 %v251, %v607
    %v780 = vadd.f32 %v252, %v609
    %v781 = vadd.f32 %v253, %v611
    %v782 = vadd.f32 %v254, %v613
    %v783 = vadd.f32 %v255, %v615
    %v784 = vadd.f32 %v256, %v617
    %v785 = vadd.f32 %v257, %v619
    %v786 = vadd.f32 %v258, %v621
    %v787 = vadd.f32 %v259, %v623
    %v788 = vadd.f32 %v260, %v625
    %v789 = vadd.f32 %v261, %v627
    %v790 = vadd.f32 %v262, %v629
    %v791 = vadd.f32 %v263, %v631
    %v792 = vadd.f32 %v264, %v633
    %v793 = vadd.f32 %v265, %v635
    %v794 = vadd.f32 %v266, %v637
    %v795 = vadd.f32 %v267, %v639
    %v796 = vadd.f32 %v268, %v641
    %v797 = vadd.f32 %v269, %v643
    %v798 = vadd.f32 %v270, %v645
    %v799 = vadd.f32 %v271, %v647
    %v800 = vadd.f32 %v272, %v649
    %v801 = vadd.f32 %v273, %v651
    %v802 = vadd.f32 %v274, %v653
    %v803 = vadd.f32 %v275, %v655
    %v804 = vadd.f32 %v276, %v657
    %v805 = vadd.f32 %v277, %v659
    %v806 = vadd.f32 %v278, %v661
    %v807 = vadd.f32 %v279, %v663
    %v808 = vadd.f32 %v280, %v665
    %v809 = vadd.f32 %v281, %v667
    %v810 = vadd.f32 %v282, %v669
    %v811 = vadd.f32 %v283, %v671
    %v812 = vadd.f32 %v284, %v673
    %v813 = vadd.f32 %v285, %v675
    %v814 = vadd.f32 %v286, %v677
    %v815 = vadd.f32 %v287, %v679
    %v816 = vadd.f32 %v288, %v681
    %v817 = vadd.f32 %v289, %v683
    %v818 = vadd.f32 %v290, %v685
    %v819 = vadd.f32 %v291, %v687
    %v820 = vadd.f32 %v292, %v689
    %v821 = vadd.f32 %v293, %v691
    %v822 = vadd.f32 %v294, %v693
    %v823 = vadd.f32 %v295, %v695
    %v840 = vlaneseq
    %v841 = vshrl.u32 %v840, 7
    %v842 = vsub.s32 0, %v841
    %v843 = vrot.slane %v72, %v842
    %v844 = vlaneseq
    %v845 = vshrl.u32 %v844, 7
    %v846 = vsub.s32 0, %v845
    %v847 = vrot.slane %v73, %v846
    %v848 = vlaneseq
    %v849 = vshrl.u32 %v848, 7
    %v850 = vsub.s32 0, %v849
    %v851 = vrot.slane %v74, %v850
    %v852 = vlaneseq
    %v853 = vshrl.u32 %v852, 7
    %v854 = vsub.s32 0, %v853
    %v855 = vrot.slane %v75, %v854
    %v856 = vlaneseq
    %v857 = vshrl.u32 %v856, 7
    %v858 = vsub.s32 0, %v857
    %v859 = vrot.slane %v76, %v858
    %v860 = vlaneseq
    %v861 = vshrl.u32 %v860, 7
    %v862 = vsub.s32 0, %v861
    %v863 = vrot.slane %v77, %v862
    %v864 = vlaneseq
    %v865 = vshrl.u32 %v864, 7
    %v866 = vsub.s32 0, %v865
    %v867 = vrot.slane %v78, %v866
    %v868 = vlaneseq
    %v869 = vshrl.u32 %v868, 7
    %v870 = vsub.s32 0, %v869
    %v871 = vrot.slane %v79, %v870
    %v872 = vlaneseq
    %v873 = vshrl.u32 %v872, 7
    %v874 = vsub.s32 0, %v873
    %v875 = vrot.slane %v80, %v874
    %v876 = vlaneseq
    %v877 = vshrl.u32 %v876, 7
    %v878 = vsub.s32 0, %v877
    %v879 = vrot.slane %v81, %v878
    %v880 = vlaneseq
    %v881 = vshrl.u32 %v880, 7
    %v882 = vsub.s32 0, %v881
    %v883 = vrot.slane %v82, %v882
    %v884 = vlaneseq
    %v885 = vshrl.u32 %v884, 7
    %v886 = vsub.s32 0, %v885
    %v887 = vrot.slane %v83, %v886
    %v888 = vlaneseq
    %v889 = vshrl.u32 %v888, 7
    %v890 = vsub.s32 0, %v889
    %v891 = vrot.slane %v84, %v890
    %v892 = vlaneseq
    %v893 = vshrl.u32 %v892, 7
    %v894 = vsub.s32 0, %v893
    %v895 = vrot.slane %v85, %v894
    %v896 = vlaneseq
    %v897 = vshrl.u32 %v896, 7
    %v898 = vsub.s32 0, %v897
    %v899 = vrot.slane %v86, %v898
    %v900 = vlaneseq
    %v901 = vshrl.u32 %v900, 7
    %v902 = vsub.s32 0, %v901
    %v903 = vrot.slane %v87, %v902
    %904 = vset.pattern.permute.xlu0 0
    %905 = vperm.xlu0 %904, %v843
    %v906 = vpop.permute.xlu0 %905
    %908 = vset.pattern.permute.xlu0 0
    %909 = vperm.xlu0 %908, %v847
    %v910 = vpop.permute.xlu0 %909
    %912 = vset.pattern.permute.xlu0 0
    %913 = vperm.xlu0 %912, %v851
    %v914 = vpop.permute.xlu0 %913
    %916 = vset.pattern.permute.xlu0 0
    %917 = vperm.xlu0 %916, %v855
    %v918 = vpop.permute.xlu0 %917
    %920 = vset.pattern.permute.xlu0 0
    %921 = vperm.xlu0 %920, %v859
    %v922 = vpop.permute.xlu0 %921
    %924 = vset.pattern.permute.xlu0 0
    %925 = vperm.xlu0 %924, %v863
    %v926 = vpop.permute.xlu0 %925
    %928 = vset.pattern.permute.xlu0 0
    %929 = vperm.xlu0 %928, %v867
    %v930 = vpop.permute.xlu0 %929
    %932 = vset.pattern.permute.xlu0 0
    %933 = vperm.xlu0 %932, %v871
    %v934 = vpop.permute.xlu0 %933
    %936 = vset.pattern.permute.xlu0 0
    %937 = vperm.xlu0 %936, %v875
    %v938 = vpop.permute.xlu0 %937
    %940 = vset.pattern.permute.xlu0 0
    %941 = vperm.xlu0 %940, %v879
    %v942 = vpop.permute.xlu0 %941
    %944 = vset.pattern.permute.xlu0 0
    %945 = vperm.xlu0 %944, %v883
    %v946 = vpop.permute.xlu0 %945
    %948 = vset.pattern.permute.xlu0 0
    %949 = vperm.xlu0 %948, %v887
    %v950 = vpop.permute.xlu0 %949
    %952 = vset.pattern.permute.xlu0 0
    %953 = vperm.xlu0 %952, %v891
    %v954 = vpop.permute.xlu0 %953
    %956 = vset.pattern.permute.xlu0 0
    %957 = vperm.xlu0 %956, %v895
    %v958 = vpop.permute.xlu0 %957
    %960 = vset.pattern.permute.xlu0 0
    %961 = vperm.xlu0 %960, %v899
    %v962 = vpop.permute.xlu0 %961
    %964 = vset.pattern.permute.xlu0 0
    %965 = vperm.xlu0 %964, %v903
    %v966 = vpop.permute.xlu0 %965
    %v968 = vmul.f32 %v906, %v36
    %v969 = vmul.f32 %v906, %v37
    %v970 = vmul.f32 %v906, %v38
    %v971 = vmul.f32 %v906, %v39
    %v972 = vmul.f32 %v910, %v36
    %v973 = vmul.f32 %v910, %v37
    %v974 = vmul.f32 %v910, %v38
    %v975 = vmul.f32 %v910, %v39
    %v976 = vmul.f32 %v914, %v36
    %v977 = vmul.f32 %v914, %v37
    %v978 = vmul.f32 %v914, %v38
    %v979 = vmul.f32 %v914, %v39
    %v980 = vmul.f32 %v918, %v36
    %v981 = vmul.f32 %v918, %v37
    %v982 = vmul.f32 %v918, %v38
    %v983 = vmul.f32 %v918, %v39
    %v984 = vmul.f32 %v922, %v36
    %v985 = vmul.f32 %v922, %v37
    %v986 = vmul.f32 %v922, %v38
    %v987 = vmul.f32 %v922, %v39
    %v988 = vmul.f32 %v926, %v36
    %v989 = vmul.f32 %v926, %v37
    %v990 = vmul.f32 %v926, %v38
    %v991 = vmul.f32 %v926, %v39
    %v992 = vmul.f32 %v930, %v36
    %v993 = vmul.f32 %v930, %v37
    %v994 = vmul.f32 %v930, %v38
    %v995 = vmul.f32 %v930, %v39
    %v996 = vmul.f32 %v934, %v36
    %v997 = vmul.f32 %v934, %v37
    %v998 = vmul.f32 %v934, %v38
    %v999 = vmul.f32 %v934, %v39
    %v1000 = vmul.f32 %v938, %v36
    %v1001 = vmul.f32 %v938, %v37
    %v1002 = vmul.f32 %v938, %v38
    %v1003 = vmul.f32 %v938, %v39
    %v1004 = vmul.f32 %v942, %v36
    %v1005 = vmul.f32 %v942, %v37
    %v1006 = vmul.f32 %v942, %v38
    %v1007 = vmul.f32 %v942, %v39
    %v1008 = vmul.f32 %v946, %v36
    %v1009 = vmul.f32 %v946, %v37
    %v1010 = vmul.f32 %v946, %v38
    %v1011 = vmul.f32 %v946, %v39
    %v1012 = vmul.f32 %v950, %v36
    %v1013 = vmul.f32 %v950, %v37
    %v1014 = vmul.f32 %v950, %v38
    %v1015 = vmul.f32 %v950, %v39
    %v1016 = vmul.f32 %v954, %v36
    %v1017 = vmul.f32 %v954, %v37
    %v1018 = vmul.f32 %v954, %v38
    %v1019 = vmul.f32 %v954, %v39
    %v1020 = vmul.f32 %v958, %v36
    %v1021 = vmul.f32 %v958, %v37
    %v1022 = vmul.f32 %v958, %v38
    %v1023 = vmul.f32 %v958, %v39
    %v1024 = vmul.f32 %v962, %v36
    %v1025 = vmul.f32 %v962, %v37
    %v1026 = vmul.f32 %v962, %v38
    %v1027 = vmul.f32 %v962, %v39
    %v1028 = vmul.f32 %v966, %v36
    %v1029 = vmul.f32 %v966, %v37
    %v1030 = vmul.f32 %v966, %v38
    %v1031 = vmul.f32 %v966, %v39
    %v1096 = vrot.slane %v968, 6
    %v1097 = vrot.slane %v1096, 4
    %v1098 = vrot.slane %v969, 6
    %v1099 = vrot.slane %v1098, 4
    %v1100 = vrot.slane %v970, 6
    %v1101 = vrot.slane %v1100, 4
    %v1102 = vrot.slane %v971, 6
    %v1103 = vrot.slane %v1102, 4
    %v1104 = vrot.slane %v972, 6
    %v1105 = vrot.slane %v1104, 4
    %v1106 = vrot.slane %v973, 6
    %v1107 = vrot.slane %v1106, 4
    %v1108 = vrot.slane %v974, 6
    %v1109 = vrot.slane %v1108, 4
    %v1110 = vrot.slane %v975, 6
    %v1111 = vrot.slane %v1110, 4
    %v1112 = vrot.slane %v976, 6
    %v1113 = vrot.slane %v1112, 4
    %v1114 = vrot.slane %v977, 6
    %v1115 = vrot.slane %v1114, 4
    %v1116 = vrot.slane %v978, 6
    %v1117 = vrot.slane %v1116, 4
    %v1118 = vrot.slane %v979, 6
    %v1119 = vrot.slane %v1118, 4
    %v1120 = vrot.slane %v980, 6
    %v1121 = vrot.slane %v1120, 4
    %v1122 = vrot.slane %v981, 6
    %v1123 = vrot.slane %v1122, 4
    %v1124 = vrot.slane %v982, 6
    %v1125 = vrot.slane %v1124, 4
    %v1126 = vrot.slane %v983, 6
    %v1127 = vrot.slane %v1126, 4
    %v1128 = vrot.slane %v984, 6
    %v1129 = vrot.slane %v1128, 4
    %v1130 = vrot.slane %v985, 6
    %v1131 = vrot.slane %v1130, 4
    %v1132 = vrot.slane %v986, 6
    %v1133 = vrot.slane %v1132, 4
    %v1134 = vrot.slane %v987, 6
    %v1135 = vrot.slane %v1134, 4
    %v1136 = vrot.slane %v988, 6
    %v1137 = vrot.slane %v1136, 4
    %v1138 = vrot.slane %v989, 6
    %v1139 = vrot.slane %v1138, 4
    %v1140 = vrot.slane %v990, 6
    %v1141 = vrot.slane %v1140, 4
    %v1142 = vrot.slane %v991, 6
    %v1143 = vrot.slane %v1142, 4
    %v1144 = vrot.slane %v992, 6
    %v1145 = vrot.slane %v1144, 4
    %v1146 = vrot.slane %v993, 6
    %v1147 = vrot.slane %v1146, 4
    %v1148 = vrot.slane %v994, 6
    %v1149 = vrot.slane %v1148, 4
    %v1150 = vrot.slane %v995, 6
    %v1151 = vrot.slane %v1150, 4
    %v1152 = vrot.slane %v996, 6
    %v1153 = vrot.slane %v1152, 4
    %v1154 = vrot.slane %v997, 6
    %v1155 = vrot.slane %v1154, 4
    %v1156 = vrot.slane %v998, 6
    %v1157 = vrot.slane %v1156, 4
    %v1158 = vrot.slane %v999, 6
    %v1159 = vrot.slane %v1158, 4
    %v1160 = vrot.slane %v1000, 6
    %v1161 = vrot.slane %v1160, 4
    %v1162 = vrot.slane %v1001, 6
    %v1163 = vrot.slane %v1162, 4
    %v1164 = vrot.slane %v1002, 6
    %v1165 = vrot.slane %v1164, 4
    %v1166 = vrot.slane %v1003, 6
    %v1167 = vrot.slane %v1166, 4
    %v1168 = vrot.slane %v1004, 6
    %v1169 = vrot.slane %v1168, 4
    %v1170 = vrot.slane %v1005, 6
    %v1171 = vrot.slane %v1170, 4
    %v1172 = vrot.slane %v1006, 6
    %v1173 = vrot.slane %v1172, 4
    %v1174 = vrot.slane %v1007, 6
    %v1175 = vrot.slane %v1174, 4
    %v1176 = vrot.slane %v1008, 6
    %v1177 = vrot.slane %v1176, 4
    %v1178 = vrot.slane %v1009, 6
    %v1179 = vrot.slane %v1178, 4
    %v1180 = vrot.slane %v1010, 6
    %v1181 = vrot.slane %v1180, 4
    %v1182 = vrot.slane %v1011, 6
    %v1183 = vrot.slane %v1182, 4
    %v1184 = vrot.slane %v1012, 6
    %v1185 = vrot.slane %v1184, 4
    %v1186 = vrot.slane %v1013, 6
    %v1187 = vrot.slane %v1186, 4
    %v1188 = vrot.slane %v1014, 6
    %v1189 = vrot.slane %v1188, 4
    %v1190 = vrot.slane %v1015, 6
    %v1191 = vrot.slane %v1190, 4
    %v1192 = vrot.slane %v1016, 6
    %v1193 = vrot.slane %v1192, 4
    %v1194 = vrot.slane %v1017, 6
    %v1195 = vrot.slane %v1194, 4
    %v1196 = vrot.slane %v1018, 6
    %v1197 = vrot.slane %v1196, 4
    %v1198 = vrot.slane %v1019, 6
    %v1199 = vrot.slane %v1198, 4
    %v1200 = vrot.slane %v1020, 6
    %v1201 = vrot.slane %v1200, 4
    %v1202 = vrot.slane %v1021, 6
    %v1203 = vrot.slane %v1202, 4
    %v1204 = vrot.slane %v1022, 6
    %v1205 = vrot.slane %v1204, 4
    %v1206 = vrot.slane %v1023, 6
    %v1207 = vrot.slane %v1206, 4
    %v1208 = vrot.slane %v1024, 6
    %v1209 = vrot.slane %v1208, 4
    %v1210 = vrot.slane %v1025, 6
    %v1211 = vrot.slane %v1210, 4
    %v1212 = vrot.slane %v1026, 6
    %v1213 = vrot.slane %v1212, 4
    %v1214 = vrot.slane %v1027, 6
    %v1215 = vrot.slane %v1214, 4
    %v1216 = vrot.slane %v1028, 6
    %v1217 = vrot.slane %v1216, 4
    %v1218 = vrot.slane %v1029, 6
    %v1219 = vrot.slane %v1218, 4
    %v1220 = vrot.slane %v1030, 6
    %v1221 = vrot.slane %v1220, 4
    %v1222 = vrot.slane %v1031, 6
    %v1223 = vrot.slane %v1222, 4
    %v1288 = vadd.f32 %v760, %v1097
    %v1289 = vadd.f32 %v761, %v1099
    %v1290 = vadd.f32 %v762, %v1101
    %v1291 = vadd.f32 %v763, %v1103
    %v1292 = vadd.f32 %v764, %v1105
    %v1293 = vadd.f32 %v765, %v1107
    %v1294 = vadd.f32 %v766, %v1109
    %v1295 = vadd.f32 %v767, %v1111
    %v1296 = vadd.f32 %v768, %v1113
    %v1297 = vadd.f32 %v769, %v1115
    %v1298 = vadd.f32 %v770, %v1117
    %v1299 = vadd.f32 %v771, %v1119
    %v1300 = vadd.f32 %v772, %v1121
    %v1301 = vadd.f32 %v773, %v1123
    %v1302 = vadd.f32 %v774, %v1125
    %v1303 = vadd.f32 %v775, %v1127
    %v1304 = vadd.f32 %v776, %v1129
    %v1305 = vadd.f32 %v777, %v1131
    %v1306 = vadd.f32 %v778, %v1133
    %v1307 = vadd.f32 %v779, %v1135
    %v1308 = vadd.f32 %v780, %v1137
    %v1309 = vadd.f32 %v781, %v1139
    %v1310 = vadd.f32 %v782, %v1141
    %v1311 = vadd.f32 %v783, %v1143
    %v1312 = vadd.f32 %v784, %v1145
    %v1313 = vadd.f32 %v785, %v1147
    %v1314 = vadd.f32 %v786, %v1149
    %v1315 = vadd.f32 %v787, %v1151
    %v1316 = vadd.f32 %v788, %v1153
    %v1317 = vadd.f32 %v789, %v1155
    %v1318 = vadd.f32 %v790, %v1157
    %v1319 = vadd.f32 %v791, %v1159
    %v1320 = vadd.f32 %v792, %v1161
    %v1321 = vadd.f32 %v793, %v1163
    %v1322 = vadd.f32 %v794, %v1165
    %v1323 = vadd.f32 %v795, %v1167
    %v1324 = vadd.f32 %v796, %v1169
    %v1325 = vadd.f32 %v797, %v1171
    %v1326 = vadd.f32 %v798, %v1173
    %v1327 = vadd.f32 %v799, %v1175
    %v1328 = vadd.f32 %v800, %v1177
    %v1329 = vadd.f32 %v801, %v1179
    %v1330 = vadd.f32 %v802, %v1181
    %v1331 = vadd.f32 %v803, %v1183
    %v1332 = vadd.f32 %v804, %v1185
    %v1333 = vadd.f32 %v805, %v1187
    %v1334 = vadd.f32 %v806, %v1189
    %v1335 = vadd.f32 %v807, %v1191
    %v1336 = vadd.f32 %v808, %v1193
    %v1337 = vadd.f32 %v809, %v1195
    %v1338 = vadd.f32 %v810, %v1197
    %v1339 = vadd.f32 %v811, %v1199
    %v1340 = vadd.f32 %v812, %v1201
    %v1341 = vadd.f32 %v813, %v1203
    %v1342 = vadd.f32 %v814, %v1205
    %v1343 = vadd.f32 %v815, %v1207
    %v1344 = vadd.f32 %v816, %v1209
    %v1345 = vadd.f32 %v817, %v1211
    %v1346 = vadd.f32 %v818, %v1213
    %v1347 = vadd.f32 %v819, %v1215
    %v1348 = vadd.f32 %v820, %v1217
    %v1349 = vadd.f32 %v821, %v1219
    %v1350 = vadd.f32 %v822, %v1221
    %v1351 = vadd.f32 %v823, %v1223
    %v1416 = vlaneseq
    %v1417 = vshrl.u32 %v1416, 7
    %v1418 = vsub.s32 0, %v1417
    %v1419 = vrot.slane %v1288, %v1418
    %v1420 = vlaneseq
    %v1421 = vshrl.u32 %v1420, 7
    %v1422 = vsub.s32 4, %v1421
    %v1423 = vrot.slane %v1288, %v1422
    %v1424 = vlaneseq
    %v1425 = vshrl.u32 %v1424, 7
    %v1426 = vsub.s32 0, %v1425
    %v1427 = vrot.slane %v1289, %v1426
    %v1428 = vlaneseq
    %v1429 = vshrl.u32 %v1428, 7
    %v1430 = vsub.s32 4, %v1429
    %v1431 = vrot.slane %v1289, %v1430
    %v1432 = vlaneseq
    %v1433 = vshrl.u32 %v1432, 7
    %v1434 = vsub.s32 0, %v1433
    %v1435 = vrot.slane %v1290, %v1434
    %v1436 = vlaneseq
    %v1437 = vshrl.u32 %v1436, 7
    %v1438 = vsub.s32 4, %v1437
    %v1439 = vrot.slane %v1290, %v1438
    %v1440 = vlaneseq
    %v1441 = vshrl.u32 %v1440, 7
    %v1442 = vsub.s32 0, %v1441
    %v1443 = vrot.slane %v1291, %v1442
    %v1444 = vlaneseq
    %v1445 = vshrl.u32 %v1444, 7
    %v1446 = vsub.s32 4, %v1445
    %v1447 = vrot.slane %v1291, %v1446
    %v1448 = vlaneseq
    %v1449 = vshrl.u32 %v1448, 7
    %v1450 = vsub.s32 0, %v1449
    %v1451 = vrot.slane %v1292, %v1450
    %v1452 = vlaneseq
    %v1453 = vshrl.u32 %v1452, 7
    %v1454 = vsub.s32 4, %v1453
    %v1455 = vrot.slane %v1292, %v1454
    %v1456 = vlaneseq
    %v1457 = vshrl.u32 %v1456, 7
    %v1458 = vsub.s32 0, %v1457
    %v1459 = vrot.slane %v1293, %v1458
    %v1460 = vlaneseq
    %v1461 = vshrl.u32 %v1460, 7
    %v1462 = vsub.s32 4, %v1461
    %v1463 = vrot.slane %v1293, %v1462
    %v1464 = vlaneseq
    %v1465 = vshrl.u32 %v1464, 7
    %v1466 = vsub.s32 0, %v1465
    %v1467 = vrot.slane %v1294, %v1466
    %v1468 = vlaneseq
    %v1469 = vshrl.u32 %v1468, 7
    %v1470 = vsub.s32 4, %v1469
    %v1471 = vrot.slane %v1294, %v1470
    %v1472 = vlaneseq
    %v1473 = vshrl.u32 %v1472, 7
    %v1474 = vsub.s32 0, %v1473
    %v1475 = vrot.slane %v1295, %v1474
    %v1476 = vlaneseq
    %v1477 = vshrl.u32 %v1476, 7
    %v1478 = vsub.s32 4, %v1477
    %v1479 = vrot.slane %v1295, %v1478
    %v1480 = vlaneseq
    %v1481 = vshrl.u32 %v1480, 7
    %v1482 = vsub.s32 0, %v1481
    %v1483 = vrot.slane %v1296, %v1482
    %v1484 = vlaneseq
    %v1485 = vshrl.u32 %v1484, 7
    %v1486 = vsub.s32 4, %v1485
    %v1487 = vrot.slane %v1296, %v1486
    %v1488 = vlaneseq
    %v1489 = vshrl.u32 %v1488, 7
    %v1490 = vsub.s32 0, %v1489
    %v1491 = vrot.slane %v1297, %v1490
    %v1492 = vlaneseq
    %v1493 = vshrl.u32 %v1492, 7
    %v1494 = vsub.s32 4, %v1493
    %v1495 = vrot.slane %v1297, %v1494
    %v1496 = vlaneseq
    %v1497 = vshrl.u32 %v1496, 7
    %v1498 = vsub.s32 0, %v1497
    %v1499 = vrot.slane %v1298, %v1498
    %v1500 = vlaneseq
    %v1501 = vshrl.u32 %v1500, 7
    %v1502 = vsub.s32 4, %v1501
    %v1503 = vrot.slane %v1298, %v1502
    %v1504 = vlaneseq
    %v1505 = vshrl.u32 %v1504, 7
    %v1506 = vsub.s32 0, %v1505
    %v1507 = vrot.slane %v1299, %v1506
    %v1508 = vlaneseq
    %v1509 = vshrl.u32 %v1508, 7
    %v1510 = vsub.s32 4, %v1509
    %v1511 = vrot.slane %v1299, %v1510
    %v1512 = vlaneseq
    %v1513 = vshrl.u32 %v1512, 7
    %v1514 = vsub.s32 0, %v1513
    %v1515 = vrot.slane %v1300, %v1514
    %v1516 = vlaneseq
    %v1517 = vshrl.u32 %v1516, 7
    %v1518 = vsub.s32 4, %v1517
    %v1519 = vrot.slane %v1300, %v1518
    %v1520 = vlaneseq
    %v1521 = vshrl.u32 %v1520, 7
    %v1522 = vsub.s32 0, %v1521
    %v1523 = vrot.slane %v1301, %v1522
    %v1524 = vlaneseq
    %v1525 = vshrl.u32 %v1524, 7
    %v1526 = vsub.s32 4, %v1525
    %v1527 = vrot.slane %v1301, %v1526
    %v1528 = vlaneseq
    %v1529 = vshrl.u32 %v1528, 7
    %v1530 = vsub.s32 0, %v1529
    %v1531 = vrot.slane %v1302, %v1530
    %v1532 = vlaneseq
    %v1533 = vshrl.u32 %v1532, 7
    %v1534 = vsub.s32 4, %v1533
    %v1535 = vrot.slane %v1302, %v1534
    %v1536 = vlaneseq
    %v1537 = vshrl.u32 %v1536, 7
    %v1538 = vsub.s32 0, %v1537
    %v1539 = vrot.slane %v1303, %v1538
    %v1540 = vlaneseq
    %v1541 = vshrl.u32 %v1540, 7
    %v1542 = vsub.s32 4, %v1541
    %v1543 = vrot.slane %v1303, %v1542
    %v1544 = vlaneseq
    %v1545 = vshrl.u32 %v1544, 7
    %v1546 = vsub.s32 0, %v1545
    %v1547 = vrot.slane %v1304, %v1546
    %v1548 = vlaneseq
    %v1549 = vshrl.u32 %v1548, 7
    %v1550 = vsub.s32 4, %v1549
    %v1551 = vrot.slane %v1304, %v1550
    %v1552 = vlaneseq
    %v1553 = vshrl.u32 %v1552, 7
    %v1554 = vsub.s32 0, %v1553
    %v1555 = vrot.slane %v1305, %v1554
    %v1556 = vlaneseq
    %v1557 = vshrl.u32 %v1556, 7
    %v1558 = vsub.s32 4, %v1557
    %v1559 = vrot.slane %v1305, %v1558
    %v1560 = vlaneseq
    %v1561 = vshrl.u32 %v1560, 7
    %v1562 = vsub.s32 0, %v1561
    %v1563 = vrot.slane %v1306, %v1562
    %v1564 = vlaneseq
    %v1565 = vshrl.u32 %v1564, 7
    %v1566 = vsub.s32 4, %v1565
    %v1567 = vrot.slane %v1306, %v1566
    %v1568 = vlaneseq
    %v1569 = vshrl.u32 %v1568, 7
    %v1570 = vsub.s32 0, %v1569
    %v1571 = vrot.slane %v1307, %v1570
    %v1572 = vlaneseq
    %v1573 = vshrl.u32 %v1572, 7
    %v1574 = vsub.s32 4, %v1573
    %v1575 = vrot.slane %v1307, %v1574
    %v1576 = vlaneseq
    %v1577 = vshrl.u32 %v1576, 7
    %v1578 = vsub.s32 0, %v1577
    %v1579 = vrot.slane %v1308, %v1578
    %v1580 = vlaneseq
    %v1581 = vshrl.u32 %v1580, 7
    %v1582 = vsub.s32 4, %v1581
    %v1583 = vrot.slane %v1308, %v1582
    %v1584 = vlaneseq
    %v1585 = vshrl.u32 %v1584, 7
    %v1586 = vsub.s32 0, %v1585
    %v1587 = vrot.slane %v1309, %v1586
    %v1588 = vlaneseq
    %v1589 = vshrl.u32 %v1588, 7
    %v1590 = vsub.s32 4, %v1589
    %v1591 = vrot.slane %v1309, %v1590
    %v1592 = vlaneseq
    %v1593 = vshrl.u32 %v1592, 7
    %v1594 = vsub.s32 0, %v1593
    %v1595 = vrot.slane %v1310, %v1594
    %v1596 = vlaneseq
    %v1597 = vshrl.u32 %v1596, 7
    %v1598 = vsub.s32 4, %v1597
    %v1599 = vrot.slane %v1310, %v1598
    %v1600 = vlaneseq
    %v1601 = vshrl.u32 %v1600, 7
    %v1602 = vsub.s32 0, %v1601
    %v1603 = vrot.slane %v1311, %v1602
    %v1604 = vlaneseq
    %v1605 = vshrl.u32 %v1604, 7
    %v1606 = vsub.s32 4, %v1605
    %v1607 = vrot.slane %v1311, %v1606
    %v1608 = vlaneseq
    %v1609 = vshrl.u32 %v1608, 7
    %v1610 = vsub.s32 0, %v1609
    %v1611 = vrot.slane %v1312, %v1610
    %v1612 = vlaneseq
    %v1613 = vshrl.u32 %v1612, 7
    %v1614 = vsub.s32 4, %v1613
    %v1615 = vrot.slane %v1312, %v1614
    %v1616 = vlaneseq
    %v1617 = vshrl.u32 %v1616, 7
    %v1618 = vsub.s32 0, %v1617
    %v1619 = vrot.slane %v1313, %v1618
    %v1620 = vlaneseq
    %v1621 = vshrl.u32 %v1620, 7
    %v1622 = vsub.s32 4, %v1621
    %v1623 = vrot.slane %v1313, %v1622
    %v1624 = vlaneseq
    %v1625 = vshrl.u32 %v1624, 7
    %v1626 = vsub.s32 0, %v1625
    %v1627 = vrot.slane %v1314, %v1626
    %v1628 = vlaneseq
    %v1629 = vshrl.u32 %v1628, 7
    %v1630 = vsub.s32 4, %v1629
    %v1631 = vrot.slane %v1314, %v1630
    %v1632 = vlaneseq
    %v1633 = vshrl.u32 %v1632, 7
    %v1634 = vsub.s32 0, %v1633
    %v1635 = vrot.slane %v1315, %v1634
    %v1636 = vlaneseq
    %v1637 = vshrl.u32 %v1636, 7
    %v1638 = vsub.s32 4, %v1637
    %v1639 = vrot.slane %v1315, %v1638
    %v1640 = vlaneseq
    %v1641 = vshrl.u32 %v1640, 7
    %v1642 = vsub.s32 0, %v1641
    %v1643 = vrot.slane %v1316, %v1642
    %v1644 = vlaneseq
    %v1645 = vshrl.u32 %v1644, 7
    %v1646 = vsub.s32 4, %v1645
    %v1647 = vrot.slane %v1316, %v1646
    %v1648 = vlaneseq
    %v1649 = vshrl.u32 %v1648, 7
    %v1650 = vsub.s32 0, %v1649
    %v1651 = vrot.slane %v1317, %v1650
    %v1652 = vlaneseq
    %v1653 = vshrl.u32 %v1652, 7
    %v1654 = vsub.s32 4, %v1653
    %v1655 = vrot.slane %v1317, %v1654
    %v1656 = vlaneseq
    %v1657 = vshrl.u32 %v1656, 7
    %v1658 = vsub.s32 0, %v1657
    %v1659 = vrot.slane %v1318, %v1658
    %v1660 = vlaneseq
    %v1661 = vshrl.u32 %v1660, 7
    %v1662 = vsub.s32 4, %v1661
    %v1663 = vrot.slane %v1318, %v1662
    %v1664 = vlaneseq
    %v1665 = vshrl.u32 %v1664, 7
    %v1666 = vsub.s32 0, %v1665
    %v1667 = vrot.slane %v1319, %v1666
    %v1668 = vlaneseq
    %v1669 = vshrl.u32 %v1668, 7
    %v1670 = vsub.s32 4, %v1669
    %v1671 = vrot.slane %v1319, %v1670
    %v1672 = vlaneseq
    %v1673 = vshrl.u32 %v1672, 7
    %v1674 = vsub.s32 0, %v1673
    %v1675 = vrot.slane %v1320, %v1674
    %v1676 = vlaneseq
    %v1677 = vshrl.u32 %v1676, 7
    %v1678 = vsub.s32 4, %v1677
    %v1679 = vrot.slane %v1320, %v1678
    %v1680 = vlaneseq
    %v1681 = vshrl.u32 %v1680, 7
    %v1682 = vsub.s32 0, %v1681
    %v1683 = vrot.slane %v1321, %v1682
    %v1684 = vlaneseq
    %v1685 = vshrl.u32 %v1684, 7
    %v1686 = vsub.s32 4, %v1685
    %v1687 = vrot.slane %v1321, %v1686
    %v1688 = vlaneseq
    %v1689 = vshrl.u32 %v1688, 7
    %v1690 = vsub.s32 0, %v1689
    %v1691 = vrot.slane %v1322, %v1690
    %v1692 = vlaneseq
    %v1693 = vshrl.u32 %v1692, 7
    %v1694 = vsub.s32 4, %v1693
    %v1695 = vrot.slane %v1322, %v1694
    %v1696 = vlaneseq
    %v1697 = vshrl.u32 %v1696, 7
    %v1698 = vsub.s32 0, %v1697
    %v1699 = vrot.slane %v1323, %v1698
    %v1700 = vlaneseq
    %v1701 = vshrl.u32 %v1700, 7
    %v1702 = vsub.s32 4, %v1701
    %v1703 = vrot.slane %v1323, %v1702
    %v1704 = vlaneseq
    %v1705 = vshrl.u32 %v1704, 7
    %v1706 = vsub.s32 0, %v1705
    %v1707 = vrot.slane %v1324, %v1706
    %v1708 = vlaneseq
    %v1709 = vshrl.u32 %v1708, 7
    %v1710 = vsub.s32 4, %v1709
    %v1711 = vrot.slane %v1324, %v1710
    %v1712 = vlaneseq
    %v1713 = vshrl.u32 %v1712, 7
    %v1714 = vsub.s32 0, %v1713
    %v1715 = vrot.slane %v1325, %v1714
    %v1716 = vlaneseq
    %v1717 = vshrl.u32 %v1716, 7
    %v1718 = vsub.s32 4, %v1717
    %v1719 = vrot.slane %v1325, %v1718
    %v1720 = vlaneseq
    %v1721 = vshrl.u32 %v1720, 7
    %v1722 = vsub.s32 0, %v1721
    %v1723 = vrot.slane %v1326, %v1722
    %v1724 = vlaneseq
    %v1725 = vshrl.u32 %v1724, 7
    %v1726 = vsub.s32 4, %v1725
    %v1727 = vrot.slane %v1326, %v1726
    %v1728 = vlaneseq
    %v1729 = vshrl.u32 %v1728, 7
    %v1730 = vsub.s32 0, %v1729
    %v1731 = vrot.slane %v1327, %v1730
    %v1732 = vlaneseq
    %v1733 = vshrl.u32 %v1732, 7
    %v1734 = vsub.s32 4, %v1733
    %v1735 = vrot.slane %v1327, %v1734
    %v1736 = vlaneseq
    %v1737 = vshrl.u32 %v1736, 7
    %v1738 = vsub.s32 0, %v1737
    %v1739 = vrot.slane %v1328, %v1738
    %v1740 = vlaneseq
    %v1741 = vshrl.u32 %v1740, 7
    %v1742 = vsub.s32 4, %v1741
    %v1743 = vrot.slane %v1328, %v1742
    %v1744 = vlaneseq
    %v1745 = vshrl.u32 %v1744, 7
    %v1746 = vsub.s32 0, %v1745
    %v1747 = vrot.slane %v1329, %v1746
    %v1748 = vlaneseq
    %v1749 = vshrl.u32 %v1748, 7
    %v1750 = vsub.s32 4, %v1749
    %v1751 = vrot.slane %v1329, %v1750
    %v1752 = vlaneseq
    %v1753 = vshrl.u32 %v1752, 7
    %v1754 = vsub.s32 0, %v1753
    %v1755 = vrot.slane %v1330, %v1754
    %v1756 = vlaneseq
    %v1757 = vshrl.u32 %v1756, 7
    %v1758 = vsub.s32 4, %v1757
    %v1759 = vrot.slane %v1330, %v1758
    %v1760 = vlaneseq
    %v1761 = vshrl.u32 %v1760, 7
    %v1762 = vsub.s32 0, %v1761
    %v1763 = vrot.slane %v1331, %v1762
    %v1764 = vlaneseq
    %v1765 = vshrl.u32 %v1764, 7
    %v1766 = vsub.s32 4, %v1765
    %v1767 = vrot.slane %v1331, %v1766
    %v1768 = vlaneseq
    %v1769 = vshrl.u32 %v1768, 7
    %v1770 = vsub.s32 0, %v1769
    %v1771 = vrot.slane %v1332, %v1770
    %v1772 = vlaneseq
    %v1773 = vshrl.u32 %v1772, 7
    %v1774 = vsub.s32 4, %v1773
    %v1775 = vrot.slane %v1332, %v1774
    %v1776 = vlaneseq
    %v1777 = vshrl.u32 %v1776, 7
    %v1778 = vsub.s32 0, %v1777
    %v1779 = vrot.slane %v1333, %v1778
    %v1780 = vlaneseq
    %v1781 = vshrl.u32 %v1780, 7
    %v1782 = vsub.s32 4, %v1781
    %v1783 = vrot.slane %v1333, %v1782
    %v1784 = vlaneseq
    %v1785 = vshrl.u32 %v1784, 7
    %v1786 = vsub.s32 0, %v1785
    %v1787 = vrot.slane %v1334, %v1786
    %v1788 = vlaneseq
    %v1789 = vshrl.u32 %v1788, 7
    %v1790 = vsub.s32 4, %v1789
    %v1791 = vrot.slane %v1334, %v1790
    %v1792 = vlaneseq
    %v1793 = vshrl.u32 %v1792, 7
    %v1794 = vsub.s32 0, %v1793
    %v1795 = vrot.slane %v1335, %v1794
    %v1796 = vlaneseq
    %v1797 = vshrl.u32 %v1796, 7
    %v1798 = vsub.s32 4, %v1797
    %v1799 = vrot.slane %v1335, %v1798
    %v1800 = vlaneseq
    %v1801 = vshrl.u32 %v1800, 7
    %v1802 = vsub.s32 0, %v1801
    %v1803 = vrot.slane %v1336, %v1802
    %v1804 = vlaneseq
    %v1805 = vshrl.u32 %v1804, 7
    %v1806 = vsub.s32 4, %v1805
    %v1807 = vrot.slane %v1336, %v1806
    %v1808 = vlaneseq
    %v1809 = vshrl.u32 %v1808, 7
    %v1810 = vsub.s32 0, %v1809
    %v1811 = vrot.slane %v1337, %v1810
    %v1812 = vlaneseq
    %v1813 = vshrl.u32 %v1812, 7
    %v1814 = vsub.s32 4, %v1813
    %v1815 = vrot.slane %v1337, %v1814
    %v1816 = vlaneseq
    %v1817 = vshrl.u32 %v1816, 7
    %v1818 = vsub.s32 0, %v1817
    %v1819 = vrot.slane %v1338, %v1818
    %v1820 = vlaneseq
    %v1821 = vshrl.u32 %v1820, 7
    %v1822 = vsub.s32 4, %v1821
    %v1823 = vrot.slane %v1338, %v1822
    %v1824 = vlaneseq
    %v1825 = vshrl.u32 %v1824, 7
    %v1826 = vsub.s32 0, %v1825
    %v1827 = vrot.slane %v1339, %v1826
    %v1828 = vlaneseq
    %v1829 = vshrl.u32 %v1828, 7
    %v1830 = vsub.s32 4, %v1829
    %v1831 = vrot.slane %v1339, %v1830
    %v1832 = vlaneseq
    %v1833 = vshrl.u32 %v1832, 7
    %v1834 = vsub.s32 0, %v1833
    %v1835 = vrot.slane %v1340, %v1834
    %v1836 = vlaneseq
    %v1837 = vshrl.u32 %v1836, 7
    %v1838 = vsub.s32 4, %v1837
    %v1839 = vrot.slane %v1340, %v1838
    %v1840 = vlaneseq
    %v1841 = vshrl.u32 %v1840, 7
    %v1842 = vsub.s32 0, %v1841
    %v1843 = vrot.slane %v1341, %v1842
    %v1844 = vlaneseq
    %v1845 = vshrl.u32 %v1844, 7
    %v1846 = vsub.s32 4, %v1845
    %v1847 = vrot.slane %v1341, %v1846
    %v1848 = vlaneseq
    %v1849 = vshrl.u32 %v1848, 7
    %v1850 = vsub.s32 0, %v1849
    %v1851 = vrot.slane %v1342, %v1850
    %v1852 = vlaneseq
    %v1853 = vshrl.u32 %v1852, 7
    %v1854 = vsub.s32 4, %v1853
    %v1855 = vrot.slane %v1342, %v1854
    %v1856 = vlaneseq
    %v1857 = vshrl.u32 %v1856, 7
    %v1858 = vsub.s32 0, %v1857
    %v1859 = vrot.slane %v1343, %v1858
    %v1860 = vlaneseq
    %v1861 = vshrl.u32 %v1860, 7
    %v1862 = vsub.s32 4, %v1861
    %v1863 = vrot.slane %v1343, %v1862
    %v1864 = vlaneseq
    %v1865 = vshrl.u32 %v1864, 7
    %v1866 = vsub.s32 0, %v1865
    %v1867 = vrot.slane %v1344, %v1866
    %v1868 = vlaneseq
    %v1869 = vshrl.u32 %v1868, 7
    %v1870 = vsub.s32 4, %v1869
    %v1871 = vrot.slane %v1344, %v1870
    %v1872 = vlaneseq
    %v1873 = vshrl.u32 %v1872, 7
    %v1874 = vsub.s32 0, %v1873
    %v1875 = vrot.slane %v1345, %v1874
    %v1876 = vlaneseq
    %v1877 = vshrl.u32 %v1876, 7
    %v1878 = vsub.s32 4, %v1877
    %v1879 = vrot.slane %v1345, %v1878
    %v1880 = vlaneseq
    %v1881 = vshrl.u32 %v1880, 7
    %v1882 = vsub.s32 0, %v1881
    %v1883 = vrot.slane %v1346, %v1882
    %v1884 = vlaneseq
    %v1885 = vshrl.u32 %v1884, 7
    %v1886 = vsub.s32 4, %v1885
    %v1887 = vrot.slane %v1346, %v1886
    %v1888 = vlaneseq
    %v1889 = vshrl.u32 %v1888, 7
    %v1890 = vsub.s32 0, %v1889
    %v1891 = vrot.slane %v1347, %v1890
    %v1892 = vlaneseq
    %v1893 = vshrl.u32 %v1892, 7
    %v1894 = vsub.s32 4, %v1893
    %v1895 = vrot.slane %v1347, %v1894
    %v1896 = vlaneseq
    %v1897 = vshrl.u32 %v1896, 7
    %v1898 = vsub.s32 0, %v1897
    %v1899 = vrot.slane %v1348, %v1898
    %v1900 = vlaneseq
    %v1901 = vshrl.u32 %v1900, 7
    %v1902 = vsub.s32 4, %v1901
    %v1903 = vrot.slane %v1348, %v1902
    %v1904 = vlaneseq
    %v1905 = vshrl.u32 %v1904, 7
    %v1906 = vsub.s32 0, %v1905
    %v1907 = vrot.slane %v1349, %v1906
    %v1908 = vlaneseq
    %v1909 = vshrl.u32 %v1908, 7
    %v1910 = vsub.s32 4, %v1909
    %v1911 = vrot.slane %v1349, %v1910
    %v1912 = vlaneseq
    %v1913 = vshrl.u32 %v1912, 7
    %v1914 = vsub.s32 0, %v1913
    %v1915 = vrot.slane %v1350, %v1914
    %v1916 = vlaneseq
    %v1917 = vshrl.u32 %v1916, 7
    %v1918 = vsub.s32 4, %v1917
    %v1919 = vrot.slane %v1350, %v1918
    %v1920 = vlaneseq
    %v1921 = vshrl.u32 %v1920, 7
    %v1922 = vsub.s32 0, %v1921
    %v1923 = vrot.slane %v1351, %v1922
    %v1924 = vlaneseq
    %v1925 = vshrl.u32 %v1924, 7
    %v1926 = vsub.s32 4, %v1925
    %v1927 = vrot.slane %v1351, %v1926
    %vm1928 = vcmask 1041409
    %v1929 = vsel %vm1928, %v1435, %v1419
    %v1930 = vsel %vm1928, %v1439, %v1423
    %v1931 = vsel %vm1928, %v1443, %v1427
    %v1932 = vsel %vm1928, %v1447, %v1431
    %v1933 = vsel %vm1928, %v1467, %v1451
    %v1934 = vsel %vm1928, %v1471, %v1455
    %v1935 = vsel %vm1928, %v1475, %v1459
    %v1936 = vsel %vm1928, %v1479, %v1463
    %v1937 = vsel %vm1928, %v1499, %v1483
    %v1938 = vsel %vm1928, %v1503, %v1487
    %v1939 = vsel %vm1928, %v1507, %v1491
    %v1940 = vsel %vm1928, %v1511, %v1495
    %v1941 = vsel %vm1928, %v1531, %v1515
    %v1942 = vsel %vm1928, %v1535, %v1519
    %v1943 = vsel %vm1928, %v1539, %v1523
    %v1944 = vsel %vm1928, %v1543, %v1527
    %v1945 = vsel %vm1928, %v1563, %v1547
    %v1946 = vsel %vm1928, %v1567, %v1551
    %v1947 = vsel %vm1928, %v1571, %v1555
    %v1948 = vsel %vm1928, %v1575, %v1559
    %v1949 = vsel %vm1928, %v1595, %v1579
    %v1950 = vsel %vm1928, %v1599, %v1583
    %v1951 = vsel %vm1928, %v1603, %v1587
    %v1952 = vsel %vm1928, %v1607, %v1591
    %v1953 = vsel %vm1928, %v1627, %v1611
    %v1954 = vsel %vm1928, %v1631, %v1615
    %v1955 = vsel %vm1928, %v1635, %v1619
    %v1956 = vsel %vm1928, %v1639, %v1623
    %v1957 = vsel %vm1928, %v1659, %v1643
    %v1958 = vsel %vm1928, %v1663, %v1647
    %v1959 = vsel %vm1928, %v1667, %v1651
    %v1960 = vsel %vm1928, %v1671, %v1655
    %v1961 = vsel %vm1928, %v1691, %v1675
    %v1962 = vsel %vm1928, %v1695, %v1679
    %v1963 = vsel %vm1928, %v1699, %v1683
    %v1964 = vsel %vm1928, %v1703, %v1687
    %v1965 = vsel %vm1928, %v1723, %v1707
    %v1966 = vsel %vm1928, %v1727, %v1711
    %v1967 = vsel %vm1928, %v1731, %v1715
    %v1968 = vsel %vm1928, %v1735, %v1719
    %v1969 = vsel %vm1928, %v1755, %v1739
    %v1970 = vsel %vm1928, %v1759, %v1743
    %v1971 = vsel %vm1928, %v1763, %v1747
    %v1972 = vsel %vm1928, %v1767, %v1751
    %v1973 = vsel %vm1928, %v1787, %v1771
    %v1974 = vsel %vm1928, %v1791, %v1775
    %v1975 = vsel %vm1928, %v1795, %v1779
    %v1976 = vsel %vm1928, %v1799, %v1783
    %v1977 = vsel %vm1928, %v1819, %v1803
    %v1978 = vsel %vm1928, %v1823, %v1807
    %v1979 = vsel %vm1928, %v1827, %v1811
    %v1980 = vsel %vm1928, %v1831, %v1815
    %v1981 = vsel %vm1928, %v1851, %v1835
    %v1982 = vsel %vm1928, %v1855, %v1839
    %v1983 = vsel %vm1928, %v1859, %v1843
    %v1984 = vsel %vm1928, %v1863, %v1847
    %v1985 = vsel %vm1928, %v1883, %v1867
    %v1986 = vsel %vm1928, %v1887, %v1871
    %v1987 = vsel %vm1928, %v1891, %v1875
    %v1988 = vsel %vm1928, %v1895, %v1879
    %v1989 = vsel %vm1928, %v1915, %v1899
    %v1990 = vsel %vm1928, %v1919, %v1903
    %v1991 = vsel %vm1928, %v1923, %v1907
    %v1992 = vsel %vm1928, %v1927, %v1911
    %vm2057 = vcmask 1041408
    %v2058 = vsel %vm2057, %v1929, 0.0
    %v2059 = vsel %vm2057, %v1930, 0.0
    %v2060 = vadd.f32 %v2058, %v2059
    %v2061 = vsel %vm2057, %v1931, 0.0
    %v2062 = vadd.f32 %v2060, %v2061
    %vm2063 = vcmask 779264
    %v2064 = vsel %vm2063, %v1932, 0.0
    %v2065 = vadd.f32 %v2062, %v2064
    %2066 = vadd.xlane.f32.xlu0 %v2065
    %v2067 = vpop.xlane.xlu0 %2066
    %v2068 = vsel %vm2057, %v1933, 0.0
    %v2069 = vsel %vm2057, %v1934, 0.0
    %v2070 = vadd.f32 %v2068, %v2069
    %v2071 = vsel %vm2057, %v1935, 0.0
    %v2072 = vadd.f32 %v2070, %v2071
    %v2073 = vsel %vm2063, %v1936, 0.0
    %v2074 = vadd.f32 %v2072, %v2073
    %2075 = vadd.xlane.f32.xlu0 %v2074
    %v2076 = vpop.xlane.xlu0 %2075
    %v2077 = vsel %vm2057, %v1937, 0.0
    %v2078 = vsel %vm2057, %v1938, 0.0
    %v2079 = vadd.f32 %v2077, %v2078
    %v2080 = vsel %vm2057, %v1939, 0.0
    %v2081 = vadd.f32 %v2079, %v2080
    %v2082 = vsel %vm2063, %v1940, 0.0
    %v2083 = vadd.f32 %v2081, %v2082
    %2084 = vadd.xlane.f32.xlu0 %v2083
    %v2085 = vpop.xlane.xlu0 %2084
    %v2086 = vsel %vm2057, %v1941, 0.0
    %v2087 = vsel %vm2057, %v1942, 0.0
    %v2088 = vadd.f32 %v2086, %v2087
    %v2089 = vsel %vm2057, %v1943, 0.0
    %v2090 = vadd.f32 %v2088, %v2089
    %v2091 = vsel %vm2063, %v1944, 0.0
    %v2092 = vadd.f32 %v2090, %v2091
    %2093 = vadd.xlane.f32.xlu0 %v2092
    %v2094 = vpop.xlane.xlu0 %2093
    %v2095 = vsel %vm2057, %v1945, 0.0
    %v2096 = vsel %vm2057, %v1946, 0.0
    %v2097 = vadd.f32 %v2095, %v2096
    %v2098 = vsel %vm2057, %v1947, 0.0
    %v2099 = vadd.f32 %v2097, %v2098
    %v2100 = vsel %vm2063, %v1948, 0.0
    %v2101 = vadd.f32 %v2099, %v2100
    %2102 = vadd.xlane.f32.xlu0 %v2101
    %v2103 = vpop.xlane.xlu0 %2102
    %v2104 = vsel %vm2057, %v1949, 0.0
    %v2105 = vsel %vm2057, %v1950, 0.0
    %v2106 = vadd.f32 %v2104, %v2105
    %v2107 = vsel %vm2057, %v1951, 0.0
    %v2108 = vadd.f32 %v2106, %v2107
    %v2109 = vsel %vm2063, %v1952, 0.0
    %v2110 = vadd.f32 %v2108, %v2109
    %2111 = vadd.xlane.f32.xlu0 %v2110
    %v2112 = vpop.xlane.xlu0 %2111
    %v2113 = vsel %vm2057, %v1953, 0.0
    %v2114 = vsel %vm2057, %v1954, 0.0
    %v2115 = vadd.f32 %v2113, %v2114
    %v2116 = vsel %vm2057, %v1955, 0.0
    %v2117 = vadd.f32 %v2115, %v2116
    %v2118 = vsel %vm2063, %v1956, 0.0
    %v2119 = vadd.f32 %v2117, %v2118
    %2120 = vadd.xlane.f32.xlu0 %v2119
    %v2121 = vpop.xlane.xlu0 %2120
    %v2122 = vsel %vm2057, %v1957, 0.0
    %v2123 = vsel %vm2057, %v1958, 0.0
    %v2124 = vadd.f32 %v2122, %v2123
    %v2125 = vsel %vm2057, %v1959, 0.0
    %v2126 = vadd.f32 %v2124, %v2125
    %v2127 = vsel %vm2063, %v1960, 0.0
    %v2128 = vadd.f32 %v2126, %v2127
    %2129 = vadd.xlane.f32.xlu0 %v2128
    %v2130 = vpop.xlane.xlu0 %2129
    %v2131 = vsel %vm2057, %v1961, 0.0
    %v2132 = vsel %vm2057, %v1962, 0.0
    %v2133 = vadd.f32 %v2131, %v2132
    %v2134 = vsel %vm2057, %v1963, 0.0
    %v2135 = vadd.f32 %v2133, %v2134
    %v2136 = vsel %vm2063, %v1964, 0.0
    %v2137 = vadd.f32 %v2135, %v2136
    %2138 = vadd.xlane.f32.xlu0 %v2137
    %v2139 = vpop.xlane.xlu0 %2138
    %v2140 = vsel %vm2057, %v1965, 0.0
    %v2141 = vsel %vm2057, %v1966, 0.0
    %v2142 = vadd.f32 %v2140, %v2141
    %v2143 = vsel %vm2057, %v1967, 0.0
    %v2144 = vadd.f32 %v2142, %v2143
    %v2145 = vsel %vm2063, %v1968, 0.0
    %v2146 = vadd.f32 %v2144, %v2145
    %2147 = vadd.xlane.f32.xlu0 %v2146
    %v2148 = vpop.xlane.xlu0 %2147
    %v2149 = vsel %vm2057, %v1969, 0.0
    %v2150 = vsel %vm2057, %v1970, 0.0
    %v2151 = vadd.f32 %v2149, %v2150
    %v2152 = vsel %vm2057, %v1971, 0.0
    %v2153 = vadd.f32 %v2151, %v2152
    %v2154 = vsel %vm2063, %v1972, 0.0
    %v2155 = vadd.f32 %v2153, %v2154
    %2156 = vadd.xlane.f32.xlu0 %v2155
    %v2157 = vpop.xlane.xlu0 %2156
    %v2158 = vsel %vm2057, %v1973, 0.0
    %v2159 = vsel %vm2057, %v1974, 0.0
    %v2160 = vadd.f32 %v2158, %v2159
    %v2161 = vsel %vm2057, %v1975, 0.0
    %v2162 = vadd.f32 %v2160, %v2161
    %v2163 = vsel %vm2063, %v1976, 0.0
    %v2164 = vadd.f32 %v2162, %v2163
    %2165 = vadd.xlane.f32.xlu0 %v2164
    %v2166 = vpop.xlane.xlu0 %2165
    %v2167 = vsel %vm2057, %v1977, 0.0
    %v2168 = vsel %vm2057, %v1978, 0.0
    %v2169 = vadd.f32 %v2167, %v2168
    %v2170 = vsel %vm2057, %v1979, 0.0
    %v2171 = vadd.f32 %v2169, %v2170
    %v2172 = vsel %vm2063, %v1980, 0.0
    %v2173 = vadd.f32 %v2171, %v2172
    %2174 = vadd.xlane.f32.xlu0 %v2173
    %v2175 = vpop.xlane.xlu0 %2174
    %v2176 = vsel %vm2057, %v1981, 0.0
    %v2177 = vsel %vm2057, %v1982, 0.0
    %v2178 = vadd.f32 %v2176, %v2177
    %v2179 = vsel %vm2057, %v1983, 0.0
    %v2180 = vadd.f32 %v2178, %v2179
    %v2181 = vsel %vm2063, %v1984, 0.0
    %v2182 = vadd.f32 %v2180, %v2181
    %2183 = vadd.xlane.f32.xlu0 %v2182
    %v2184 = vpop.xlane.xlu0 %2183
    %v2185 = vsel %vm2057, %v1985, 0.0
    %v2186 = vsel %vm2057, %v1986, 0.0
    %v2187 = vadd.f32 %v2185, %v2186
    %v2188 = vsel %vm2057, %v1987, 0.0
    %v2189 = vadd.f32 %v2187, %v2188
    %v2190 = vsel %vm2063, %v1988, 0.0
    %v2191 = vadd.f32 %v2189, %v2190
    %2192 = vadd.xlane.f32.xlu0 %v2191
    %v2193 = vpop.xlane.xlu0 %2192
    %v2194 = vsel %vm2057, %v1989, 0.0
    %v2195 = vsel %vm2057, %v1990, 0.0
    %v2196 = vadd.f32 %v2194, %v2195
    %v2197 = vsel %vm2057, %v1991, 0.0
    %v2198 = vadd.f32 %v2196, %v2197
    %v2199 = vsel %vm2063, %v1992, 0.0
    %v2200 = vadd.f32 %v2198, %v2199
    %2201 = vadd.xlane.f32.xlu0 %v2200
    %v2202 = vpop.xlane.xlu0 %2201
    %v2203 = vsel %vm2057, %v2067, 0.0
    %v2204 = vrot.slane %v2203, 4
    %v2205 = vadd.f32 %v2203, %v2204
    %v2206 = vrot.slane %v2205, 2
    %v2207 = vadd.f32 %v2205, %v2206
    %v2208 = vrot.slane %v2207, 1
    %v2209 = vadd.f32 %v2207, %v2208
    %v2210 = vsel %vm2057, %v2076, 0.0
    %v2211 = vrot.slane %v2210, 4
    %v2212 = vadd.f32 %v2210, %v2211
    %v2213 = vrot.slane %v2212, 2
    %v2214 = vadd.f32 %v2212, %v2213
    %v2215 = vrot.slane %v2214, 1
    %v2216 = vadd.f32 %v2214, %v2215
    %v2217 = vsel %vm2057, %v2085, 0.0
    %v2218 = vrot.slane %v2217, 4
    %v2219 = vadd.f32 %v2217, %v2218
    %v2220 = vrot.slane %v2219, 2
    %v2221 = vadd.f32 %v2219, %v2220
    %v2222 = vrot.slane %v2221, 1
    %v2223 = vadd.f32 %v2221, %v2222
    %v2224 = vsel %vm2057, %v2094, 0.0
    %v2225 = vrot.slane %v2224, 4
    %v2226 = vadd.f32 %v2224, %v2225
    %v2227 = vrot.slane %v2226, 2
    %v2228 = vadd.f32 %v2226, %v2227
    %v2229 = vrot.slane %v2228, 1
    %v2230 = vadd.f32 %v2228, %v2229
    %v2231 = vsel %vm2057, %v2103, 0.0
    %v2232 = vrot.slane %v2231, 4
    %v2233 = vadd.f32 %v2231, %v2232
    %v2234 = vrot.slane %v2233, 2
    %v2235 = vadd.f32 %v2233, %v2234
    %v2236 = vrot.slane %v2235, 1
    %v2237 = vadd.f32 %v2235, %v2236
    %v2238 = vsel %vm2057, %v2112, 0.0
    %v2239 = vrot.slane %v2238, 4
    %v2240 = vadd.f32 %v2238, %v2239
    %v2241 = vrot.slane %v2240, 2
    %v2242 = vadd.f32 %v2240, %v2241
    %v2243 = vrot.slane %v2242, 1
    %v2244 = vadd.f32 %v2242, %v2243
    %v2245 = vsel %vm2057, %v2121, 0.0
    %v2246 = vrot.slane %v2245, 4
    %v2247 = vadd.f32 %v2245, %v2246
    %v2248 = vrot.slane %v2247, 2
    %v2249 = vadd.f32 %v2247, %v2248
    %v2250 = vrot.slane %v2249, 1
    %v2251 = vadd.f32 %v2249, %v2250
    %v2252 = vsel %vm2057, %v2130, 0.0
    %v2253 = vrot.slane %v2252, 4
    %v2254 = vadd.f32 %v2252, %v2253
    %v2255 = vrot.slane %v2254, 2
    %v2256 = vadd.f32 %v2254, %v2255
    %v2257 = vrot.slane %v2256, 1
    %v2258 = vadd.f32 %v2256, %v2257
    %v2259 = vsel %vm2057, %v2139, 0.0
    %v2260 = vrot.slane %v2259, 4
    %v2261 = vadd.f32 %v2259, %v2260
    %v2262 = vrot.slane %v2261, 2
    %v2263 = vadd.f32 %v2261, %v2262
    %v2264 = vrot.slane %v2263, 1
    %v2265 = vadd.f32 %v2263, %v2264
    %v2266 = vsel %vm2057, %v2148, 0.0
    %v2267 = vrot.slane %v2266, 4
    %v2268 = vadd.f32 %v2266, %v2267
    %v2269 = vrot.slane %v2268, 2
    %v2270 = vadd.f32 %v2268, %v2269
    %v2271 = vrot.slane %v2270, 1
    %v2272 = vadd.f32 %v2270, %v2271
    %v2273 = vsel %vm2057, %v2157, 0.0
    %v2274 = vrot.slane %v2273, 4
    %v2275 = vadd.f32 %v2273, %v2274
    %v2276 = vrot.slane %v2275, 2
    %v2277 = vadd.f32 %v2275, %v2276
    %v2278 = vrot.slane %v2277, 1
    %v2279 = vadd.f32 %v2277, %v2278
    %v2280 = vsel %vm2057, %v2166, 0.0
    %v2281 = vrot.slane %v2280, 4
    %v2282 = vadd.f32 %v2280, %v2281
    %v2283 = vrot.slane %v2282, 2
    %v2284 = vadd.f32 %v2282, %v2283
    %v2285 = vrot.slane %v2284, 1
    %v2286 = vadd.f32 %v2284, %v2285
    %v2287 = vsel %vm2057, %v2175, 0.0
    %v2288 = vrot.slane %v2287, 4
    %v2289 = vadd.f32 %v2287, %v2288
    %v2290 = vrot.slane %v2289, 2
    %v2291 = vadd.f32 %v2289, %v2290
    %v2292 = vrot.slane %v2291, 1
    %v2293 = vadd.f32 %v2291, %v2292
    %v2294 = vsel %vm2057, %v2184, 0.0
    %v2295 = vrot.slane %v2294, 4
    %v2296 = vadd.f32 %v2294, %v2295
    %v2297 = vrot.slane %v2296, 2
    %v2298 = vadd.f32 %v2296, %v2297
    %v2299 = vrot.slane %v2298, 1
    %v2300 = vadd.f32 %v2298, %v2299
    %v2301 = vsel %vm2057, %v2193, 0.0
    %v2302 = vrot.slane %v2301, 4
    %v2303 = vadd.f32 %v2301, %v2302
    %v2304 = vrot.slane %v2303, 2
    %v2305 = vadd.f32 %v2303, %v2304
    %v2306 = vrot.slane %v2305, 1
    %v2307 = vadd.f32 %v2305, %v2306
    %v2308 = vsel %vm2057, %v2202, 0.0
    %v2309 = vrot.slane %v2308, 4
    %v2310 = vadd.f32 %v2308, %v2309
    %v2311 = vrot.slane %v2310, 2
    %v2312 = vadd.f32 %v2310, %v2311
    %v2313 = vrot.slane %v2312, 1
    %v2314 = vadd.f32 %v2312, %v2313
    %v2315 = vrcp.pop 960.0
    %v2316 = vmul.f32 %v2209, %v2315
    %v2317 = vmul.f32 %v2216, %v2315
    %v2318 = vmul.f32 %v2223, %v2315
    %v2319 = vmul.f32 %v2230, %v2315
    %v2320 = vmul.f32 %v2237, %v2315
    %v2321 = vmul.f32 %v2244, %v2315
    %v2322 = vmul.f32 %v2251, %v2315
    %v2323 = vmul.f32 %v2258, %v2315
    %v2324 = vmul.f32 %v2265, %v2315
    %v2325 = vmul.f32 %v2272, %v2315
    %v2326 = vmul.f32 %v2279, %v2315
    %v2327 = vmul.f32 %v2286, %v2315
    %v2328 = vmul.f32 %v2293, %v2315
    %v2329 = vmul.f32 %v2300, %v2315
    %v2330 = vmul.f32 %v2307, %v2315
    %v2331 = vmul.f32 %v2314, %v2315
    %v2332 = vsub.f32 %v1288, %v2316
    %v2333 = vsub.f32 %v1289, %v2316
    %v2334 = vsub.f32 %v1290, %v2316
    %v2335 = vsub.f32 %v1291, %v2316
    %v2336 = vsub.f32 %v1292, %v2317
    %v2337 = vsub.f32 %v1293, %v2317
    %v2338 = vsub.f32 %v1294, %v2317
    %v2339 = vsub.f32 %v1295, %v2317
    %v2340 = vsub.f32 %v1296, %v2318
    %v2341 = vsub.f32 %v1297, %v2318
    %v2342 = vsub.f32 %v1298, %v2318
    %v2343 = vsub.f32 %v1299, %v2318
    %v2344 = vsub.f32 %v1300, %v2319
    %v2345 = vsub.f32 %v1301, %v2319
    %v2346 = vsub.f32 %v1302, %v2319
    %v2347 = vsub.f32 %v1303, %v2319
    %v2348 = vsub.f32 %v1304, %v2320
    %v2349 = vsub.f32 %v1305, %v2320
    %v2350 = vsub.f32 %v1306, %v2320
    %v2351 = vsub.f32 %v1307, %v2320
    %v2352 = vsub.f32 %v1308, %v2321
    %v2353 = vsub.f32 %v1309, %v2321
    %v2354 = vsub.f32 %v1310, %v2321
    %v2355 = vsub.f32 %v1311, %v2321
    %v2356 = vsub.f32 %v1312, %v2322
    %v2357 = vsub.f32 %v1313, %v2322
    %v2358 = vsub.f32 %v1314, %v2322
    %v2359 = vsub.f32 %v1315, %v2322
    %v2360 = vsub.f32 %v1316, %v2323
    %v2361 = vsub.f32 %v1317, %v2323
    %v2362 = vsub.f32 %v1318, %v2323
    %v2363 = vsub.f32 %v1319, %v2323
    %v2364 = vsub.f32 %v1320, %v2324
    %v2365 = vsub.f32 %v1321, %v2324
    %v2366 = vsub.f32 %v1322, %v2324
    %v2367 = vsub.f32 %v1323, %v2324
    %v2368 = vsub.f32 %v1324, %v2325
    %v2369 = vsub.f32 %v1325, %v2325
    %v2370 = vsub.f32 %v1326, %v2325
    %v2371 = vsub.f32 %v1327, %v2325
    %v2372 = vsub.f32 %v1328, %v2326
    %v2373 = vsub.f32 %v1329, %v2326
    %v2374 = vsub.f32 %v1330, %v2326
    %v2375 = vsub.f32 %v1331, %v2326
    %v2376 = vsub.f32 %v1332, %v2327
    %v2377 = vsub.f32 %v1333, %v2327
    %v2378 = vsub.f32 %v1334, %v2327
    %v2379 = vsub.f32 %v1335, %v2327
    %v2380 = vsub.f32 %v1336, %v2328
    %v2381 = vsub.f32 %v1337, %v2328
    %v2382 = vsub.f32 %v1338, %v2328
    %v2383 = vsub.f32 %v1339, %v2328
    %v2384 = vsub.f32 %v1340, %v2329
    %v2385 = vsub.f32 %v1341, %v2329
    %v2386 = vsub.f32 %v1342, %v2329
    %v2387 = vsub.f32 %v1343, %v2329
    %v2388 = vsub.f32 %v1344, %v2330
    %v2389 = vsub.f32 %v1345, %v2330
    %v2390 = vsub.f32 %v1346, %v2330
    %v2391 = vsub.f32 %v1347, %v2330
    %v2392 = vsub.f32 %v1348, %v2331
    %v2393 = vsub.f32 %v1349, %v2331
    %v2394 = vsub.f32 %v1350, %v2331
    %v2395 = vsub.f32 %v1351, %v2331
    %v2396 = vmul.f32 %v2332, %v2332
    %v2397 = vmul.f32 %v2333, %v2333
    %v2398 = vmul.f32 %v2334, %v2334
    %v2399 = vmul.f32 %v2335, %v2335
    %v2400 = vmul.f32 %v2336, %v2336
    %v2401 = vmul.f32 %v2337, %v2337
    %v2402 = vmul.f32 %v2338, %v2338
    %v2403 = vmul.f32 %v2339, %v2339
    %v2404 = vmul.f32 %v2340, %v2340
    %v2405 = vmul.f32 %v2341, %v2341
    %v2406 = vmul.f32 %v2342, %v2342
    %v2407 = vmul.f32 %v2343, %v2343
    %v2408 = vmul.f32 %v2344, %v2344
    %v2409 = vmul.f32 %v2345, %v2345
    %v2410 = vmul.f32 %v2346, %v2346
    %v2411 = vmul.f32 %v2347, %v2347
    %v2412 = vmul.f32 %v2348, %v2348
    %v2413 = vmul.f32 %v2349, %v2349
    %v2414 = vmul.f32 %v2350, %v2350
    %v2415 = vmul.f32 %v2351, %v2351
    %v2416 = vmul.f32 %v2352, %v2352
    %v2417 = vmul.f32 %v2353, %v2353
    %v2418 = vmul.f32 %v2354, %v2354
    %v2419 = vmul.f32 %v2355, %v2355
    %v2420 = vmul.f32 %v2356, %v2356
    %v2421 = vmul.f32 %v2357, %v2357
    %v2422 = vmul.f32 %v2358, %v2358
    %v2423 = vmul.f32 %v2359, %v2359
    %v2424 = vmul.f32 %v2360, %v2360
    %v2425 = vmul.f32 %v2361, %v2361
    %v2426 = vmul.f32 %v2362, %v2362
    %v2427 = vmul.f32 %v2363, %v2363
    %v2428 = vmul.f32 %v2364, %v2364
    %v2429 = vmul.f32 %v2365, %v2365
    %v2430 = vmul.f32 %v2366, %v2366
    %v2431 = vmul.f32 %v2367, %v2367
    %v2432 = vmul.f32 %v2368, %v2368
    %v2433 = vmul.f32 %v2369, %v2369
    %v2434 = vmul.f32 %v2370, %v2370
    %v2435 = vmul.f32 %v2371, %v2371
    %v2436 = vmul.f32 %v2372, %v2372
    %v2437 = vmul.f32 %v2373, %v2373
    %v2438 = vmul.f32 %v2374, %v2374
    %v2439 = vmul.f32 %v2375, %v2375
    %v2440 = vmul.f32 %v2376, %v2376
    %v2441 = vmul.f32 %v2377, %v2377
    %v2442 = vmul.f32 %v2378, %v2378
    %v2443 = vmul.f32 %v2379, %v2379
    %v2444 = vmul.f32 %v2380, %v2380
    %v2445 = vmul.f32 %v2381, %v2381
    %v2446 = vmul.f32 %v2382, %v2382
    %v2447 = vmul.f32 %v2383, %v2383
    %v2448 = vmul.f32 %v2384, %v2384
    %v2449 = vmul.f32 %v2385, %v2385
    %v2450 = vmul.f32 %v2386, %v2386
    %v2451 = vmul.f32 %v2387, %v2387
    %v2452 = vmul.f32 %v2388, %v2388
    %v2453 = vmul.f32 %v2389, %v2389
    %v2454 = vmul.f32 %v2390, %v2390
    %v2455 = vmul.f32 %v2391, %v2391
    %v2456 = vmul.f32 %v2392, %v2392
    %v2457 = vmul.f32 %v2393, %v2393
    %v2458 = vmul.f32 %v2394, %v2394
    %v2459 = vmul.f32 %v2395, %v2395
    %v2524 = vlaneseq
    %v2525 = vshrl.u32 %v2524, 7
    %v2526 = vsub.s32 0, %v2525
    %v2527 = vrot.slane %v2396, %v2526
    %v2528 = vlaneseq
    %v2529 = vshrl.u32 %v2528, 7
    %v2530 = vsub.s32 4, %v2529
    %v2531 = vrot.slane %v2396, %v2530
    %v2532 = vlaneseq
    %v2533 = vshrl.u32 %v2532, 7
    %v2534 = vsub.s32 0, %v2533
    %v2535 = vrot.slane %v2397, %v2534
    %v2536 = vlaneseq
    %v2537 = vshrl.u32 %v2536, 7
    %v2538 = vsub.s32 4, %v2537
    %v2539 = vrot.slane %v2397, %v2538
    %v2540 = vlaneseq
    %v2541 = vshrl.u32 %v2540, 7
    %v2542 = vsub.s32 0, %v2541
    %v2543 = vrot.slane %v2398, %v2542
    %v2544 = vlaneseq
    %v2545 = vshrl.u32 %v2544, 7
    %v2546 = vsub.s32 4, %v2545
    %v2547 = vrot.slane %v2398, %v2546
    %v2548 = vlaneseq
    %v2549 = vshrl.u32 %v2548, 7
    %v2550 = vsub.s32 0, %v2549
    %v2551 = vrot.slane %v2399, %v2550
    %v2552 = vlaneseq
    %v2553 = vshrl.u32 %v2552, 7
    %v2554 = vsub.s32 4, %v2553
    %v2555 = vrot.slane %v2399, %v2554
    %v2556 = vlaneseq
    %v2557 = vshrl.u32 %v2556, 7
    %v2558 = vsub.s32 0, %v2557
    %v2559 = vrot.slane %v2400, %v2558
    %v2560 = vlaneseq
    %v2561 = vshrl.u32 %v2560, 7
    %v2562 = vsub.s32 4, %v2561
    %v2563 = vrot.slane %v2400, %v2562
    %v2564 = vlaneseq
    %v2565 = vshrl.u32 %v2564, 7
    %v2566 = vsub.s32 0, %v2565
    %v2567 = vrot.slane %v2401, %v2566
    %v2568 = vlaneseq
    %v2569 = vshrl.u32 %v2568, 7
    %v2570 = vsub.s32 4, %v2569
    %v2571 = vrot.slane %v2401, %v2570
    %v2572 = vlaneseq
    %v2573 = vshrl.u32 %v2572, 7
    %v2574 = vsub.s32 0, %v2573
    %v2575 = vrot.slane %v2402, %v2574
    %v2576 = vlaneseq
    %v2577 = vshrl.u32 %v2576, 7
    %v2578 = vsub.s32 4, %v2577
    %v2579 = vrot.slane %v2402, %v2578
    %v2580 = vlaneseq
    %v2581 = vshrl.u32 %v2580, 7
    %v2582 = vsub.s32 0, %v2581
    %v2583 = vrot.slane %v2403, %v2582
    %v2584 = vlaneseq
    %v2585 = vshrl.u32 %v2584, 7
    %v2586 = vsub.s32 4, %v2585
    %v2587 = vrot.slane %v2403, %v2586
    %v2588 = vlaneseq
    %v2589 = vshrl.u32 %v2588, 7
    %v2590 = vsub.s32 0, %v2589
    %v2591 = vrot.slane %v2404, %v2590
    %v2592 = vlaneseq
    %v2593 = vshrl.u32 %v2592, 7
    %v2594 = vsub.s32 4, %v2593
    %v2595 = vrot.slane %v2404, %v2594
    %v2596 = vlaneseq
    %v2597 = vshrl.u32 %v2596, 7
    %v2598 = vsub.s32 0, %v2597
    %v2599 = vrot.slane %v2405, %v2598
    %v2600 = vlaneseq
    %v2601 = vshrl.u32 %v2600, 7
    %v2602 = vsub.s32 4, %v2601
    %v2603 = vrot.slane %v2405, %v2602
    %v2604 = vlaneseq
    %v2605 = vshrl.u32 %v2604, 7
    %v2606 = vsub.s32 0, %v2605
    %v2607 = vrot.slane %v2406, %v2606
    %v2608 = vlaneseq
    %v2609 = vshrl.u32 %v2608, 7
    %v2610 = vsub.s32 4, %v2609
    %v2611 = vrot.slane %v2406, %v2610
    %v2612 = vlaneseq
    %v2613 = vshrl.u32 %v2612, 7
    %v2614 = vsub.s32 0, %v2613
    %v2615 = vrot.slane %v2407, %v2614
    %v2616 = vlaneseq
    %v2617 = vshrl.u32 %v2616, 7
    %v2618 = vsub.s32 4, %v2617
    %v2619 = vrot.slane %v2407, %v2618
    %v2620 = vlaneseq
    %v2621 = vshrl.u32 %v2620, 7
    %v2622 = vsub.s32 0, %v2621
    %v2623 = vrot.slane %v2408, %v2622
    %v2624 = vlaneseq
    %v2625 = vshrl.u32 %v2624, 7
    %v2626 = vsub.s32 4, %v2625
    %v2627 = vrot.slane %v2408, %v2626
    %v2628 = vlaneseq
    %v2629 = vshrl.u32 %v2628, 7
    %v2630 = vsub.s32 0, %v2629
    %v2631 = vrot.slane %v2409, %v2630
    %v2632 = vlaneseq
    %v2633 = vshrl.u32 %v2632, 7
    %v2634 = vsub.s32 4, %v2633
    %v2635 = vrot.slane %v2409, %v2634
    %v2636 = vlaneseq
    %v2637 = vshrl.u32 %v2636, 7
    %v2638 = vsub.s32 0, %v2637
    %v2639 = vrot.slane %v2410, %v2638
    %v2640 = vlaneseq
    %v2641 = vshrl.u32 %v2640, 7
    %v2642 = vsub.s32 4, %v2641
    %v2643 = vrot.slane %v2410, %v2642
    %v2644 = vlaneseq
    %v2645 = vshrl.u32 %v2644, 7
    %v2646 = vsub.s32 0, %v2645
    %v2647 = vrot.slane %v2411, %v2646
    %v2648 = vlaneseq
    %v2649 = vshrl.u32 %v2648, 7
    %v2650 = vsub.s32 4, %v2649
    %v2651 = vrot.slane %v2411, %v2650
    %v2652 = vlaneseq
    %v2653 = vshrl.u32 %v2652, 7
    %v2654 = vsub.s32 0, %v2653
    %v2655 = vrot.slane %v2412, %v2654
    %v2656 = vlaneseq
    %v2657 = vshrl.u32 %v2656, 7
    %v2658 = vsub.s32 4, %v2657
    %v2659 = vrot.slane %v2412, %v2658
    %v2660 = vlaneseq
    %v2661 = vshrl.u32 %v2660, 7
    %v2662 = vsub.s32 0, %v2661
    %v2663 = vrot.slane %v2413, %v2662
    %v2664 = vlaneseq
    %v2665 = vshrl.u32 %v2664, 7
    %v2666 = vsub.s32 4, %v2665
    %v2667 = vrot.slane %v2413, %v2666
    %v2668 = vlaneseq
    %v2669 = vshrl.u32 %v2668, 7
    %v2670 = vsub.s32 0, %v2669
    %v2671 = vrot.slane %v2414, %v2670
    %v2672 = vlaneseq
    %v2673 = vshrl.u32 %v2672, 7
    %v2674 = vsub.s32 4, %v2673
    %v2675 = vrot.slane %v2414, %v2674
    %v2676 = vlaneseq
    %v2677 = vshrl.u32 %v2676, 7
    %v2678 = vsub.s32 0, %v2677
    %v2679 = vrot.slane %v2415, %v2678
    %v2680 = vlaneseq
    %v2681 = vshrl.u32 %v2680, 7
    %v2682 = vsub.s32 4, %v2681
    %v2683 = vrot.slane %v2415, %v2682
    %v2684 = vlaneseq
    %v2685 = vshrl.u32 %v2684, 7
    %v2686 = vsub.s32 0, %v2685
    %v2687 = vrot.slane %v2416, %v2686
    %v2688 = vlaneseq
    %v2689 = vshrl.u32 %v2688, 7
    %v2690 = vsub.s32 4, %v2689
    %v2691 = vrot.slane %v2416, %v2690
    %v2692 = vlaneseq
    %v2693 = vshrl.u32 %v2692, 7
    %v2694 = vsub.s32 0, %v2693
    %v2695 = vrot.slane %v2417, %v2694
    %v2696 = vlaneseq
    %v2697 = vshrl.u32 %v2696, 7
    %v2698 = vsub.s32 4, %v2697
    %v2699 = vrot.slane %v2417, %v2698
    %v2700 = vlaneseq
    %v2701 = vshrl.u32 %v2700, 7
    %v2702 = vsub.s32 0, %v2701
    %v2703 = vrot.slane %v2418, %v2702
    %v2704 = vlaneseq
    %v2705 = vshrl.u32 %v2704, 7
    %v2706 = vsub.s32 4, %v2705
    %v2707 = vrot.slane %v2418, %v2706
    %v2708 = vlaneseq
    %v2709 = vshrl.u32 %v2708, 7
    %v2710 = vsub.s32 0, %v2709
    %v2711 = vrot.slane %v2419, %v2710
    %v2712 = vlaneseq
    %v2713 = vshrl.u32 %v2712, 7
    %v2714 = vsub.s32 4, %v2713
    %v2715 = vrot.slane %v2419, %v2714
    %v2716 = vlaneseq
    %v2717 = vshrl.u32 %v2716, 7
    %v2718 = vsub.s32 0, %v2717
    %v2719 = vrot.slane %v2420, %v2718
    %v2720 = vlaneseq
    %v2721 = vshrl.u32 %v2720, 7
    %v2722 = vsub.s32 4, %v2721
    %v2723 = vrot.slane %v2420, %v2722
    %v2724 = vlaneseq
    %v2725 = vshrl.u32 %v2724, 7
    %v2726 = vsub.s32 0, %v2725
    %v2727 = vrot.slane %v2421, %v2726
    %v2728 = vlaneseq
    %v2729 = vshrl.u32 %v2728, 7
    %v2730 = vsub.s32 4, %v2729
    %v2731 = vrot.slane %v2421, %v2730
    %v2732 = vlaneseq
    %v2733 = vshrl.u32 %v2732, 7
    %v2734 = vsub.s32 0, %v2733
    %v2735 = vrot.slane %v2422, %v2734
    %v2736 = vlaneseq
    %v2737 = vshrl.u32 %v2736, 7
    %v2738 = vsub.s32 4, %v2737
    %v2739 = vrot.slane %v2422, %v2738
    %v2740 = vlaneseq
    %v2741 = vshrl.u32 %v2740, 7
    %v2742 = vsub.s32 0, %v2741
    %v2743 = vrot.slane %v2423, %v2742
    %v2744 = vlaneseq
    %v2745 = vshrl.u32 %v2744, 7
    %v2746 = vsub.s32 4, %v2745
    %v2747 = vrot.slane %v2423, %v2746
    %v2748 = vlaneseq
    %v2749 = vshrl.u32 %v2748, 7
    %v2750 = vsub.s32 0, %v2749
    %v2751 = vrot.slane %v2424, %v2750
    %v2752 = vlaneseq
    %v2753 = vshrl.u32 %v2752, 7
    %v2754 = vsub.s32 4, %v2753
    %v2755 = vrot.slane %v2424, %v2754
    %v2756 = vlaneseq
    %v2757 = vshrl.u32 %v2756, 7
    %v2758 = vsub.s32 0, %v2757
    %v2759 = vrot.slane %v2425, %v2758
    %v2760 = vlaneseq
    %v2761 = vshrl.u32 %v2760, 7
    %v2762 = vsub.s32 4, %v2761
    %v2763 = vrot.slane %v2425, %v2762
    %v2764 = vlaneseq
    %v2765 = vshrl.u32 %v2764, 7
    %v2766 = vsub.s32 0, %v2765
    %v2767 = vrot.slane %v2426, %v2766
    %v2768 = vlaneseq
    %v2769 = vshrl.u32 %v2768, 7
    %v2770 = vsub.s32 4, %v2769
    %v2771 = vrot.slane %v2426, %v2770
    %v2772 = vlaneseq
    %v2773 = vshrl.u32 %v2772, 7
    %v2774 = vsub.s32 0, %v2773
    %v2775 = vrot.slane %v2427, %v2774
    %v2776 = vlaneseq
    %v2777 = vshrl.u32 %v2776, 7
    %v2778 = vsub.s32 4, %v2777
    %v2779 = vrot.slane %v2427, %v2778
    %v2780 = vlaneseq
    %v2781 = vshrl.u32 %v2780, 7
    %v2782 = vsub.s32 0, %v2781
    %v2783 = vrot.slane %v2428, %v2782
    %v2784 = vlaneseq
    %v2785 = vshrl.u32 %v2784, 7
    %v2786 = vsub.s32 4, %v2785
    %v2787 = vrot.slane %v2428, %v2786
    %v2788 = vlaneseq
    %v2789 = vshrl.u32 %v2788, 7
    %v2790 = vsub.s32 0, %v2789
    %v2791 = vrot.slane %v2429, %v2790
    %v2792 = vlaneseq
    %v2793 = vshrl.u32 %v2792, 7
    %v2794 = vsub.s32 4, %v2793
    %v2795 = vrot.slane %v2429, %v2794
    %v2796 = vlaneseq
    %v2797 = vshrl.u32 %v2796, 7
    %v2798 = vsub.s32 0, %v2797
    %v2799 = vrot.slane %v2430, %v2798
    %v2800 = vlaneseq
    %v2801 = vshrl.u32 %v2800, 7
    %v2802 = vsub.s32 4, %v2801
    %v2803 = vrot.slane %v2430, %v2802
    %v2804 = vlaneseq
    %v2805 = vshrl.u32 %v2804, 7
    %v2806 = vsub.s32 0, %v2805
    %v2807 = vrot.slane %v2431, %v2806
    %v2808 = vlaneseq
    %v2809 = vshrl.u32 %v2808, 7
    %v2810 = vsub.s32 4, %v2809
    %v2811 = vrot.slane %v2431, %v2810
    %v2812 = vlaneseq
    %v2813 = vshrl.u32 %v2812, 7
    %v2814 = vsub.s32 0, %v2813
    %v2815 = vrot.slane %v2432, %v2814
    %v2816 = vlaneseq
    %v2817 = vshrl.u32 %v2816, 7
    %v2818 = vsub.s32 4, %v2817
    %v2819 = vrot.slane %v2432, %v2818
    %v2820 = vlaneseq
    %v2821 = vshrl.u32 %v2820, 7
    %v2822 = vsub.s32 0, %v2821
    %v2823 = vrot.slane %v2433, %v2822
    %v2824 = vlaneseq
    %v2825 = vshrl.u32 %v2824, 7
    %v2826 = vsub.s32 4, %v2825
    %v2827 = vrot.slane %v2433, %v2826
    %v2828 = vlaneseq
    %v2829 = vshrl.u32 %v2828, 7
    %v2830 = vsub.s32 0, %v2829
    %v2831 = vrot.slane %v2434, %v2830
    %v2832 = vlaneseq
    %v2833 = vshrl.u32 %v2832, 7
    %v2834 = vsub.s32 4, %v2833
    %v2835 = vrot.slane %v2434, %v2834
    %v2836 = vlaneseq
    %v2837 = vshrl.u32 %v2836, 7
    %v2838 = vsub.s32 0, %v2837
    %v2839 = vrot.slane %v2435, %v2838
    %v2840 = vlaneseq
    %v2841 = vshrl.u32 %v2840, 7
    %v2842 = vsub.s32 4, %v2841
    %v2843 = vrot.slane %v2435, %v2842
    %v2844 = vlaneseq
    %v2845 = vshrl.u32 %v2844, 7
    %v2846 = vsub.s32 0, %v2845
    %v2847 = vrot.slane %v2436, %v2846
    %v2848 = vlaneseq
    %v2849 = vshrl.u32 %v2848, 7
    %v2850 = vsub.s32 4, %v2849
    %v2851 = vrot.slane %v2436, %v2850
    %v2852 = vlaneseq
    %v2853 = vshrl.u32 %v2852, 7
    %v2854 = vsub.s32 0, %v2853
    %v2855 = vrot.slane %v2437, %v2854
    %v2856 = vlaneseq
    %v2857 = vshrl.u32 %v2856, 7
    %v2858 = vsub.s32 4, %v2857
    %v2859 = vrot.slane %v2437, %v2858
    %v2860 = vlaneseq
    %v2861 = vshrl.u32 %v2860, 7
    %v2862 = vsub.s32 0, %v2861
    %v2863 = vrot.slane %v2438, %v2862
    %v2864 = vlaneseq
    %v2865 = vshrl.u32 %v2864, 7
    %v2866 = vsub.s32 4, %v2865
    %v2867 = vrot.slane %v2438, %v2866
    %v2868 = vlaneseq
    %v2869 = vshrl.u32 %v2868, 7
    %v2870 = vsub.s32 0, %v2869
    %v2871 = vrot.slane %v2439, %v2870
    %v2872 = vlaneseq
    %v2873 = vshrl.u32 %v2872, 7
    %v2874 = vsub.s32 4, %v2873
    %v2875 = vrot.slane %v2439, %v2874
    %v2876 = vlaneseq
    %v2877 = vshrl.u32 %v2876, 7
    %v2878 = vsub.s32 0, %v2877
    %v2879 = vrot.slane %v2440, %v2878
    %v2880 = vlaneseq
    %v2881 = vshrl.u32 %v2880, 7
    %v2882 = vsub.s32 4, %v2881
    %v2883 = vrot.slane %v2440, %v2882
    %v2884 = vlaneseq
    %v2885 = vshrl.u32 %v2884, 7
    %v2886 = vsub.s32 0, %v2885
    %v2887 = vrot.slane %v2441, %v2886
    %v2888 = vlaneseq
    %v2889 = vshrl.u32 %v2888, 7
    %v2890 = vsub.s32 4, %v2889
    %v2891 = vrot.slane %v2441, %v2890
    %v2892 = vlaneseq
    %v2893 = vshrl.u32 %v2892, 7
    %v2894 = vsub.s32 0, %v2893
    %v2895 = vrot.slane %v2442, %v2894
    %v2896 = vlaneseq
    %v2897 = vshrl.u32 %v2896, 7
    %v2898 = vsub.s32 4, %v2897
    %v2899 = vrot.slane %v2442, %v2898
    %v2900 = vlaneseq
    %v2901 = vshrl.u32 %v2900, 7
    %v2902 = vsub.s32 0, %v2901
    %v2903 = vrot.slane %v2443, %v2902
    %v2904 = vlaneseq
    %v2905 = vshrl.u32 %v2904, 7
    %v2906 = vsub.s32 4, %v2905
    %v2907 = vrot.slane %v2443, %v2906
    %v2908 = vlaneseq
    %v2909 = vshrl.u32 %v2908, 7
    %v2910 = vsub.s32 0, %v2909
    %v2911 = vrot.slane %v2444, %v2910
    %v2912 = vlaneseq
    %v2913 = vshrl.u32 %v2912, 7
    %v2914 = vsub.s32 4, %v2913
    %v2915 = vrot.slane %v2444, %v2914
    %v2916 = vlaneseq
    %v2917 = vshrl.u32 %v2916, 7
    %v2918 = vsub.s32 0, %v2917
    %v2919 = vrot.slane %v2445, %v2918
    %v2920 = vlaneseq
    %v2921 = vshrl.u32 %v2920, 7
    %v2922 = vsub.s32 4, %v2921
    %v2923 = vrot.slane %v2445, %v2922
    %v2924 = vlaneseq
    %v2925 = vshrl.u32 %v2924, 7
    %v2926 = vsub.s32 0, %v2925
    %v2927 = vrot.slane %v2446, %v2926
    %v2928 = vlaneseq
    %v2929 = vshrl.u32 %v2928, 7
    %v2930 = vsub.s32 4, %v2929
    %v2931 = vrot.slane %v2446, %v2930
    %v2932 = vlaneseq
    %v2933 = vshrl.u32 %v2932, 7
    %v2934 = vsub.s32 0, %v2933
    %v2935 = vrot.slane %v2447, %v2934
    %v2936 = vlaneseq
    %v2937 = vshrl.u32 %v2936, 7
    %v2938 = vsub.s32 4, %v2937
    %v2939 = vrot.slane %v2447, %v2938
    %v2940 = vlaneseq
    %v2941 = vshrl.u32 %v2940, 7
    %v2942 = vsub.s32 0, %v2941
    %v2943 = vrot.slane %v2448, %v2942
    %v2944 = vlaneseq
    %v2945 = vshrl.u32 %v2944, 7
    %v2946 = vsub.s32 4, %v2945
    %v2947 = vrot.slane %v2448, %v2946
    %v2948 = vlaneseq
    %v2949 = vshrl.u32 %v2948, 7
    %v2950 = vsub.s32 0, %v2949
    %v2951 = vrot.slane %v2449, %v2950
    %v2952 = vlaneseq
    %v2953 = vshrl.u32 %v2952, 7
    %v2954 = vsub.s32 4, %v2953
    %v2955 = vrot.slane %v2449, %v2954
    %v2956 = vlaneseq
    %v2957 = vshrl.u32 %v2956, 7
    %v2958 = vsub.s32 0, %v2957
    %v2959 = vrot.slane %v2450, %v2958
    %v2960 = vlaneseq
    %v2961 = vshrl.u32 %v2960, 7
    %v2962 = vsub.s32 4, %v2961
    %v2963 = vrot.slane %v2450, %v2962
    %v2964 = vlaneseq
    %v2965 = vshrl.u32 %v2964, 7
    %v2966 = vsub.s32 0, %v2965
    %v2967 = vrot.slane %v2451, %v2966
    %v2968 = vlaneseq
    %v2969 = vshrl.u32 %v2968, 7
    %v2970 = vsub.s32 4, %v2969
    %v2971 = vrot.slane %v2451, %v2970
    %v2972 = vlaneseq
    %v2973 = vshrl.u32 %v2972, 7
    %v2974 = vsub.s32 0, %v2973
    %v2975 = vrot.slane %v2452, %v2974
    %v2976 = vlaneseq
    %v2977 = vshrl.u32 %v2976, 7
    %v2978 = vsub.s32 4, %v2977
    %v2979 = vrot.slane %v2452, %v2978
    %v2980 = vlaneseq
    %v2981 = vshrl.u32 %v2980, 7
    %v2982 = vsub.s32 0, %v2981
    %v2983 = vrot.slane %v2453, %v2982
    %v2984 = vlaneseq
    %v2985 = vshrl.u32 %v2984, 7
    %v2986 = vsub.s32 4, %v2985
    %v2987 = vrot.slane %v2453, %v2986
    %v2988 = vlaneseq
    %v2989 = vshrl.u32 %v2988, 7
    %v2990 = vsub.s32 0, %v2989
    %v2991 = vrot.slane %v2454, %v2990
    %v2992 = vlaneseq
    %v2993 = vshrl.u32 %v2992, 7
    %v2994 = vsub.s32 4, %v2993
    %v2995 = vrot.slane %v2454, %v2994
    %v2996 = vlaneseq
    %v2997 = vshrl.u32 %v2996, 7
    %v2998 = vsub.s32 0, %v2997
    %v2999 = vrot.slane %v2455, %v2998
    %v3000 = vlaneseq
    %v3001 = vshrl.u32 %v3000, 7
    %v3002 = vsub.s32 4, %v3001
    %v3003 = vrot.slane %v2455, %v3002
    %v3004 = vlaneseq
    %v3005 = vshrl.u32 %v3004, 7
    %v3006 = vsub.s32 0, %v3005
    %v3007 = vrot.slane %v2456, %v3006
    %v3008 = vlaneseq
    %v3009 = vshrl.u32 %v3008, 7
    %v3010 = vsub.s32 4, %v3009
    %v3011 = vrot.slane %v2456, %v3010
    %v3012 = vlaneseq
    %v3013 = vshrl.u32 %v3012, 7
    %v3014 = vsub.s32 0, %v3013
    %v3015 = vrot.slane %v2457, %v3014
    %v3016 = vlaneseq
    %v3017 = vshrl.u32 %v3016, 7
    %v3018 = vsub.s32 4, %v3017
    %v3019 = vrot.slane %v2457, %v3018
    %v3020 = vlaneseq
    %v3021 = vshrl.u32 %v3020, 7
    %v3022 = vsub.s32 0, %v3021
    %v3023 = vrot.slane %v2458, %v3022
    %v3024 = vlaneseq
    %v3025 = vshrl.u32 %v3024, 7
    %v3026 = vsub.s32 4, %v3025
    %v3027 = vrot.slane %v2458, %v3026
    %v3028 = vlaneseq
    %v3029 = vshrl.u32 %v3028, 7
    %v3030 = vsub.s32 0, %v3029
    %v3031 = vrot.slane %v2459, %v3030
    %v3032 = vlaneseq
    %v3033 = vshrl.u32 %v3032, 7
    %v3034 = vsub.s32 4, %v3033
    %v3035 = vrot.slane %v2459, %v3034
    %v3036 = vsel %vm1928, %v2543, %v2527
    %v3037 = vsel %vm1928, %v2547, %v2531
    %v3038 = vsel %vm1928, %v2551, %v2535
    %v3039 = vsel %vm1928, %v2555, %v2539
    %v3040 = vsel %vm1928, %v2575, %v2559
    %v3041 = vsel %vm1928, %v2579, %v2563
    %v3042 = vsel %vm1928, %v2583, %v2567
    %v3043 = vsel %vm1928, %v2587, %v2571
    %v3044 = vsel %vm1928, %v2607, %v2591
    %v3045 = vsel %vm1928, %v2611, %v2595
    %v3046 = vsel %vm1928, %v2615, %v2599
    %v3047 = vsel %vm1928, %v2619, %v2603
    %v3048 = vsel %vm1928, %v2639, %v2623
    %v3049 = vsel %vm1928, %v2643, %v2627
    %v3050 = vsel %vm1928, %v2647, %v2631
    %v3051 = vsel %vm1928, %v2651, %v2635
    %v3052 = vsel %vm1928, %v2671, %v2655
    %v3053 = vsel %vm1928, %v2675, %v2659
    %v3054 = vsel %vm1928, %v2679, %v2663
    %v3055 = vsel %vm1928, %v2683, %v2667
    %v3056 = vsel %vm1928, %v2703, %v2687
    %v3057 = vsel %vm1928, %v2707, %v2691
    %v3058 = vsel %vm1928, %v2711, %v2695
    %v3059 = vsel %vm1928, %v2715, %v2699
    %v3060 = vsel %vm1928, %v2735, %v2719
    %v3061 = vsel %vm1928, %v2739, %v2723
    %v3062 = vsel %vm1928, %v2743, %v2727
    %v3063 = vsel %vm1928, %v2747, %v2731
    %v3064 = vsel %vm1928, %v2767, %v2751
    %v3065 = vsel %vm1928, %v2771, %v2755
    %v3066 = vsel %vm1928, %v2775, %v2759
    %v3067 = vsel %vm1928, %v2779, %v2763
    %v3068 = vsel %vm1928, %v2799, %v2783
    %v3069 = vsel %vm1928, %v2803, %v2787
    %v3070 = vsel %vm1928, %v2807, %v2791
    %v3071 = vsel %vm1928, %v2811, %v2795
    %v3072 = vsel %vm1928, %v2831, %v2815
    %v3073 = vsel %vm1928, %v2835, %v2819
    %v3074 = vsel %vm1928, %v2839, %v2823
    %v3075 = vsel %vm1928, %v2843, %v2827
    %v3076 = vsel %vm1928, %v2863, %v2847
    %v3077 = vsel %vm1928, %v2867, %v2851
    %v3078 = vsel %vm1928, %v2871, %v2855
    %v3079 = vsel %vm1928, %v2875, %v2859
    %v3080 = vsel %vm1928, %v2895, %v2879
    %v3081 = vsel %vm1928, %v2899, %v2883
    %v3082 = vsel %vm1928, %v2903, %v2887
    %v3083 = vsel %vm1928, %v2907, %v2891
    %v3084 = vsel %vm1928, %v2927, %v2911
    %v3085 = vsel %vm1928, %v2931, %v2915
    %v3086 = vsel %vm1928, %v2935, %v2919
    %v3087 = vsel %vm1928, %v2939, %v2923
    %v3088 = vsel %vm1928, %v2959, %v2943
    %v3089 = vsel %vm1928, %v2963, %v2947
    %v3090 = vsel %vm1928, %v2967, %v2951
    %v3091 = vsel %vm1928, %v2971, %v2955
    %v3092 = vsel %vm1928, %v2991, %v2975
    %v3093 = vsel %vm1928, %v2995, %v2979
    %v3094 = vsel %vm1928, %v2999, %v2983
    %v3095 = vsel %vm1928, %v3003, %v2987
    %v3096 = vsel %vm1928, %v3023, %v3007
    %v3097 = vsel %vm1928, %v3027, %v3011
    %v3098 = vsel %vm1928, %v3031, %v3015
    %v3099 = vsel %vm1928, %v3035, %v3019
    %v3164 = vsel %vm2057, %v3036, 0.0
    %v3165 = vsel %vm2057, %v3037, 0.0
    %v3166 = vadd.f32 %v3164, %v3165
    %v3167 = vsel %vm2057, %v3038, 0.0
    %v3168 = vadd.f32 %v3166, %v3167
    %v3169 = vsel %vm2063, %v3039, 0.0
    %v3170 = vadd.f32 %v3168, %v3169
    %3171 = vadd.xlane.f32.xlu0 %v3170
    %v3172 = vpop.xlane.xlu0 %3171
    %v3173 = vsel %vm2057, %v3040, 0.0
    %v3174 = vsel %vm2057, %v3041, 0.0
    %v3175 = vadd.f32 %v3173, %v3174
    %v3176 = vsel %vm2057, %v3042, 0.0
    %v3177 = vadd.f32 %v3175, %v3176
    %v3178 = vsel %vm2063, %v3043, 0.0
    %v3179 = vadd.f32 %v3177, %v3178
    %3180 = vadd.xlane.f32.xlu0 %v3179
    %v3181 = vpop.xlane.xlu0 %3180
    %v3182 = vsel %vm2057, %v3044, 0.0
    %v3183 = vsel %vm2057, %v3045, 0.0
    %v3184 = vadd.f32 %v3182, %v3183
    %v3185 = vsel %vm2057, %v3046, 0.0
    %v3186 = vadd.f32 %v3184, %v3185
    %v3187 = vsel %vm2063, %v3047, 0.0
    %v3188 = vadd.f32 %v3186, %v3187
    %3189 = vadd.xlane.f32.xlu0 %v3188
    %v3190 = vpop.xlane.xlu0 %3189
    %v3191 = vsel %vm2057, %v3048, 0.0
    %v3192 = vsel %vm2057, %v3049, 0.0
    %v3193 = vadd.f32 %v3191, %v3192
    %v3194 = vsel %vm2057, %v3050, 0.0
    %v3195 = vadd.f32 %v3193, %v3194
    %v3196 = vsel %vm2063, %v3051, 0.0
    %v3197 = vadd.f32 %v3195, %v3196
    %3198 = vadd.xlane.f32.xlu0 %v3197
    %v3199 = vpop.xlane.xlu0 %3198
    %v3200 = vsel %vm2057, %v3052, 0.0
    %v3201 = vsel %vm2057, %v3053, 0.0
    %v3202 = vadd.f32 %v3200, %v3201
    %v3203 = vsel %vm2057, %v3054, 0.0
    %v3204 = vadd.f32 %v3202, %v3203
    %v3205 = vsel %vm2063, %v3055, 0.0
    %v3206 = vadd.f32 %v3204, %v3205
    %3207 = vadd.xlane.f32.xlu0 %v3206
    %v3208 = vpop.xlane.xlu0 %3207
    %v3209 = vsel %vm2057, %v3056, 0.0
    %v3210 = vsel %vm2057, %v3057, 0.0
    %v3211 = vadd.f32 %v3209, %v3210
    %v3212 = vsel %vm2057, %v3058, 0.0
    %v3213 = vadd.f32 %v3211, %v3212
    %v3214 = vsel %vm2063, %v3059, 0.0
    %v3215 = vadd.f32 %v3213, %v3214
    %3216 = vadd.xlane.f32.xlu0 %v3215
    %v3217 = vpop.xlane.xlu0 %3216
    %v3218 = vsel %vm2057, %v3060, 0.0
    %v3219 = vsel %vm2057, %v3061, 0.0
    %v3220 = vadd.f32 %v3218, %v3219
    %v3221 = vsel %vm2057, %v3062, 0.0
    %v3222 = vadd.f32 %v3220, %v3221
    %v3223 = vsel %vm2063, %v3063, 0.0
    %v3224 = vadd.f32 %v3222, %v3223
    %3225 = vadd.xlane.f32.xlu0 %v3224
    %v3226 = vpop.xlane.xlu0 %3225
    %v3227 = vsel %vm2057, %v3064, 0.0
    %v3228 = vsel %vm2057, %v3065, 0.0
    %v3229 = vadd.f32 %v3227, %v3228
    %v3230 = vsel %vm2057, %v3066, 0.0
    %v3231 = vadd.f32 %v3229, %v3230
    %v3232 = vsel %vm2063, %v3067, 0.0
    %v3233 = vadd.f32 %v3231, %v3232
    %3234 = vadd.xlane.f32.xlu0 %v3233
    %v3235 = vpop.xlane.xlu0 %3234
    %v3236 = vsel %vm2057, %v3068, 0.0
    %v3237 = vsel %vm2057, %v3069, 0.0
    %v3238 = vadd.f32 %v3236, %v3237
    %v3239 = vsel %vm2057, %v3070, 0.0
    %v3240 = vadd.f32 %v3238, %v3239
    %v3241 = vsel %vm2063, %v3071, 0.0
    %v3242 = vadd.f32 %v3240, %v3241
    %3243 = vadd.xlane.f32.xlu0 %v3242
    %v3244 = vpop.xlane.xlu0 %3243
    %v3245 = vsel %vm2057, %v3072, 0.0
    %v3246 = vsel %vm2057, %v3073, 0.0
    %v3247 = vadd.f32 %v3245, %v3246
    %v3248 = vsel %vm2057, %v3074, 0.0
    %v3249 = vadd.f32 %v3247, %v3248
    %v3250 = vsel %vm2063, %v3075, 0.0
    %v3251 = vadd.f32 %v3249, %v3250
    %3252 = vadd.xlane.f32.xlu0 %v3251
    %v3253 = vpop.xlane.xlu0 %3252
    %v3254 = vsel %vm2057, %v3076, 0.0
    %v3255 = vsel %vm2057, %v3077, 0.0
    %v3256 = vadd.f32 %v3254, %v3255
    %v3257 = vsel %vm2057, %v3078, 0.0
    %v3258 = vadd.f32 %v3256, %v3257
    %v3259 = vsel %vm2063, %v3079, 0.0
    %v3260 = vadd.f32 %v3258, %v3259
    %3261 = vadd.xlane.f32.xlu0 %v3260
    %v3262 = vpop.xlane.xlu0 %3261
    %v3263 = vsel %vm2057, %v3080, 0.0
    %v3264 = vsel %vm2057, %v3081, 0.0
    %v3265 = vadd.f32 %v3263, %v3264
    %v3266 = vsel %vm2057, %v3082, 0.0
    %v3267 = vadd.f32 %v3265, %v3266
    %v3268 = vsel %vm2063, %v3083, 0.0
    %v3269 = vadd.f32 %v3267, %v3268
    %3270 = vadd.xlane.f32.xlu0 %v3269
    %v3271 = vpop.xlane.xlu0 %3270
    %v3272 = vsel %vm2057, %v3084, 0.0
    %v3273 = vsel %vm2057, %v3085, 0.0
    %v3274 = vadd.f32 %v3272, %v3273
    %v3275 = vsel %vm2057, %v3086, 0.0
    %v3276 = vadd.f32 %v3274, %v3275
    %v3277 = vsel %vm2063, %v3087, 0.0
    %v3278 = vadd.f32 %v3276, %v3277
    %3279 = vadd.xlane.f32.xlu0 %v3278
    %v3280 = vpop.xlane.xlu0 %3279
    %v3281 = vsel %vm2057, %v3088, 0.0
    %v3282 = vsel %vm2057, %v3089, 0.0
    %v3283 = vadd.f32 %v3281, %v3282
    %v3284 = vsel %vm2057, %v3090, 0.0
    %v3285 = vadd.f32 %v3283, %v3284
    %v3286 = vsel %vm2063, %v3091, 0.0
    %v3287 = vadd.f32 %v3285, %v3286
    %3288 = vadd.xlane.f32.xlu0 %v3287
    %v3289 = vpop.xlane.xlu0 %3288
    %v3290 = vsel %vm2057, %v3092, 0.0
    %v3291 = vsel %vm2057, %v3093, 0.0
    %v3292 = vadd.f32 %v3290, %v3291
    %v3293 = vsel %vm2057, %v3094, 0.0
    %v3294 = vadd.f32 %v3292, %v3293
    %v3295 = vsel %vm2063, %v3095, 0.0
    %v3296 = vadd.f32 %v3294, %v3295
    %3297 = vadd.xlane.f32.xlu0 %v3296
    %v3298 = vpop.xlane.xlu0 %3297
    %v3299 = vsel %vm2057, %v3096, 0.0
    %v3300 = vsel %vm2057, %v3097, 0.0
    %v3301 = vadd.f32 %v3299, %v3300
    %v3302 = vsel %vm2057, %v3098, 0.0
    %v3303 = vadd.f32 %v3301, %v3302
    %v3304 = vsel %vm2063, %v3099, 0.0
    %v3305 = vadd.f32 %v3303, %v3304
    %3306 = vadd.xlane.f32.xlu0 %v3305
    %v3307 = vpop.xlane.xlu0 %3306
    %v3308 = vsel %vm2057, %v3172, 0.0
    %v3309 = vrot.slane %v3308, 4
    %v3310 = vadd.f32 %v3308, %v3309
    %v3311 = vrot.slane %v3310, 2
    %v3312 = vadd.f32 %v3310, %v3311
    %v3313 = vrot.slane %v3312, 1
    %v3314 = vadd.f32 %v3312, %v3313
    %v3315 = vsel %vm2057, %v3181, 0.0
    %v3316 = vrot.slane %v3315, 4
    %v3317 = vadd.f32 %v3315, %v3316
    %v3318 = vrot.slane %v3317, 2
    %v3319 = vadd.f32 %v3317, %v3318
    %v3320 = vrot.slane %v3319, 1
    %v3321 = vadd.f32 %v3319, %v3320
    %v3322 = vsel %vm2057, %v3190, 0.0
    %v3323 = vrot.slane %v3322, 4
    %v3324 = vadd.f32 %v3322, %v3323
    %v3325 = vrot.slane %v3324, 2
    %v3326 = vadd.f32 %v3324, %v3325
    %v3327 = vrot.slane %v3326, 1
    %v3328 = vadd.f32 %v3326, %v3327
    %v3329 = vsel %vm2057, %v3199, 0.0
    %v3330 = vrot.slane %v3329, 4
    %v3331 = vadd.f32 %v3329, %v3330
    %v3332 = vrot.slane %v3331, 2
    %v3333 = vadd.f32 %v3331, %v3332
    %v3334 = vrot.slane %v3333, 1
    %v3335 = vadd.f32 %v3333, %v3334
    %v3336 = vsel %vm2057, %v3208, 0.0
    %v3337 = vrot.slane %v3336, 4
    %v3338 = vadd.f32 %v3336, %v3337
    %v3339 = vrot.slane %v3338, 2
    %v3340 = vadd.f32 %v3338, %v3339
    %v3341 = vrot.slane %v3340, 1
    %v3342 = vadd.f32 %v3340, %v3341
    %v3343 = vsel %vm2057, %v3217, 0.0
    %v3344 = vrot.slane %v3343, 4
    %v3345 = vadd.f32 %v3343, %v3344
    %v3346 = vrot.slane %v3345, 2
    %v3347 = vadd.f32 %v3345, %v3346
    %v3348 = vrot.slane %v3347, 1
    %v3349 = vadd.f32 %v3347, %v3348
    %v3350 = vsel %vm2057, %v3226, 0.0
    %v3351 = vrot.slane %v3350, 4
    %v3352 = vadd.f32 %v3350, %v3351
    %v3353 = vrot.slane %v3352, 2
    %v3354 = vadd.f32 %v3352, %v3353
    %v3355 = vrot.slane %v3354, 1
    %v3356 = vadd.f32 %v3354, %v3355
    %v3357 = vsel %vm2057, %v3235, 0.0
    %v3358 = vrot.slane %v3357, 4
    %v3359 = vadd.f32 %v3357, %v3358
    %v3360 = vrot.slane %v3359, 2
    %v3361 = vadd.f32 %v3359, %v3360
    %v3362 = vrot.slane %v3361, 1
    %v3363 = vadd.f32 %v3361, %v3362
    %v3364 = vsel %vm2057, %v3244, 0.0
    %v3365 = vrot.slane %v3364, 4
    %v3366 = vadd.f32 %v3364, %v3365
    %v3367 = vrot.slane %v3366, 2
    %v3368 = vadd.f32 %v3366, %v3367
    %v3369 = vrot.slane %v3368, 1
    %v3370 = vadd.f32 %v3368, %v3369
    %v3371 = vsel %vm2057, %v3253, 0.0
    %v3372 = vrot.slane %v3371, 4
    %v3373 = vadd.f32 %v3371, %v3372
    %v3374 = vrot.slane %v3373, 2
    %v3375 = vadd.f32 %v3373, %v3374
    %v3376 = vrot.slane %v3375, 1
    %v3377 = vadd.f32 %v3375, %v3376
    %v3378 = vsel %vm2057, %v3262, 0.0
    %v3379 = vrot.slane %v3378, 4
    %v3380 = vadd.f32 %v3378, %v3379
    %v3381 = vrot.slane %v3380, 2
    %v3382 = vadd.f32 %v3380, %v3381
    %v3383 = vrot.slane %v3382, 1
    %v3384 = vadd.f32 %v3382, %v3383
    %v3385 = vsel %vm2057, %v3271, 0.0
    %v3386 = vrot.slane %v3385, 4
    %v3387 = vadd.f32 %v3385, %v3386
    %v3388 = vrot.slane %v3387, 2
    %v3389 = vadd.f32 %v3387, %v3388
    %v3390 = vrot.slane %v3389, 1
    %v3391 = vadd.f32 %v3389, %v3390
    %v3392 = vsel %vm2057, %v3280, 0.0
    %v3393 = vrot.slane %v3392, 4
    %v3394 = vadd.f32 %v3392, %v3393
    %v3395 = vrot.slane %v3394, 2
    %v3396 = vadd.f32 %v3394, %v3395
    %v3397 = vrot.slane %v3396, 1
    %v3398 = vadd.f32 %v3396, %v3397
    %v3399 = vsel %vm2057, %v3289, 0.0
    %v3400 = vrot.slane %v3399, 4
    %v3401 = vadd.f32 %v3399, %v3400
    %v3402 = vrot.slane %v3401, 2
    %v3403 = vadd.f32 %v3401, %v3402
    %v3404 = vrot.slane %v3403, 1
    %v3405 = vadd.f32 %v3403, %v3404
    %v3406 = vsel %vm2057, %v3298, 0.0
    %v3407 = vrot.slane %v3406, 4
    %v3408 = vadd.f32 %v3406, %v3407
    %v3409 = vrot.slane %v3408, 2
    %v3410 = vadd.f32 %v3408, %v3409
    %v3411 = vrot.slane %v3410, 1
    %v3412 = vadd.f32 %v3410, %v3411
    %v3413 = vsel %vm2057, %v3307, 0.0
    %v3414 = vrot.slane %v3413, 4
    %v3415 = vadd.f32 %v3413, %v3414
    %v3416 = vrot.slane %v3415, 2
    %v3417 = vadd.f32 %v3415, %v3416
    %v3418 = vrot.slane %v3417, 1
    %v3419 = vadd.f32 %v3417, %v3418
    %v3420 = vmul.f32 %v3314, %v2315
    %v3421 = vmul.f32 %v3321, %v2315
    %v3422 = vmul.f32 %v3328, %v2315
    %v3423 = vmul.f32 %v3335, %v2315
    %v3424 = vmul.f32 %v3342, %v2315
    %v3425 = vmul.f32 %v3349, %v2315
    %v3426 = vmul.f32 %v3356, %v2315
    %v3427 = vmul.f32 %v3363, %v2315
    %v3428 = vmul.f32 %v3370, %v2315
    %v3429 = vmul.f32 %v3377, %v2315
    %v3430 = vmul.f32 %v3384, %v2315
    %v3431 = vmul.f32 %v3391, %v2315
    %v3432 = vmul.f32 %v3398, %v2315
    %v3433 = vmul.f32 %v3405, %v2315
    %v3434 = vmul.f32 %v3412, %v2315
    %v3435 = vmul.f32 %v3419, %v2315
    %v3436 = vld [vmem:[%s2] sm:$0x1]
    %v3437 = vld [vmem:[%s2 + $0x1] sm:$0x1]
    %v3438 = vld [vmem:[%s2 + $0x2] sm:$0x1]
    %v3439 = vld [vmem:[%s2 + $0x3] sm:$0x1]
    %v3440 = vld [vmem:[%s2 + $0x4] sm:$0x1]
    %v3441 = vld [vmem:[%s2 + $0x5] sm:$0x1]
    %v3442 = vld [vmem:[%s2 + $0x6] sm:$0x1]
    %v3443 = vld [vmem:[%s2 + $0x7] sm:$0x1]
    %v3444 = vld [vmem:[%s2 + $0x8] sm:$0x1]
    %v3445 = vld [vmem:[%s2 + $0x9] sm:$0x1]
    %v3446 = vld [vmem:[%s2 + $0xa] sm:$0x1]
    %v3447 = vld [vmem:[%s2 + $0xb] sm:$0x1]
    %v3448 = vld [vmem:[%s2 + $0xc] sm:$0x1]
    %v3449 = vld [vmem:[%s2 + $0xd] sm:$0x1]
    %v3450 = vld [vmem:[%s2 + $0xe] sm:$0x1]
    %v3451 = vld [vmem:[%s2 + $0xf] sm:$0x1]
    %v3452 = vadd.f32 %v3420, 1e-05
    %v3453 = vadd.f32 %v3421, 1e-05
    %v3454 = vadd.f32 %v3422, 1e-05
    %v3455 = vadd.f32 %v3423, 1e-05
    %v3456 = vadd.f32 %v3424, 1e-05
    %v3457 = vadd.f32 %v3425, 1e-05
    %v3458 = vadd.f32 %v3426, 1e-05
    %v3459 = vadd.f32 %v3427, 1e-05
    %v3460 = vadd.f32 %v3428, 1e-05
    %v3461 = vadd.f32 %v3429, 1e-05
    %v3462 = vadd.f32 %v3430, 1e-05
    %v3463 = vadd.f32 %v3431, 1e-05
    %v3464 = vadd.f32 %v3432, 1e-05
    %v3465 = vadd.f32 %v3433, 1e-05
    %v3466 = vadd.f32 %v3434, 1e-05
    %v3467 = vadd.f32 %v3435, 1e-05
    %v3468 = vrsqrt.pop %v3452
    %v3469 = vrsqrt.pop %v3453
    %v3470 = vrsqrt.pop %v3454
    %v3471 = vrsqrt.pop %v3455
    %v3472 = vrsqrt.pop %v3456
    %v3473 = vrsqrt.pop %v3457
    %v3474 = vrsqrt.pop %v3458
    %v3475 = vrsqrt.pop %v3459
    %v3476 = vrsqrt.pop %v3460
    %v3477 = vrsqrt.pop %v3461
    %v3478 = vrsqrt.pop %v3462
    %v3479 = vrsqrt.pop %v3463
    %v3480 = vrsqrt.pop %v3464
    %v3481 = vrsqrt.pop %v3465
    %v3482 = vrsqrt.pop %v3466
    %v3483 = vrsqrt.pop %v3467
    %v3484 = vmul.f32 %v3436, %v3468
    %v3485 = vmul.f32 %v3437, %v3469
    %v3486 = vmul.f32 %v3438, %v3470
    %v3487 = vmul.f32 %v3439, %v3471
    %v3488 = vmul.f32 %v3440, %v3472
    %v3489 = vmul.f32 %v3441, %v3473
    %v3490 = vmul.f32 %v3442, %v3474
    %v3491 = vmul.f32 %v3443, %v3475
    %v3492 = vmul.f32 %v3444, %v3476
    %v3493 = vmul.f32 %v3445, %v3477
    %v3494 = vmul.f32 %v3446, %v3478
    %v3495 = vmul.f32 %v3447, %v3479
    %v3496 = vmul.f32 %v3448, %v3480
    %v3497 = vmul.f32 %v3449, %v3481
    %v3498 = vmul.f32 %v3450, %v3482
    %v3499 = vmul.f32 %v3451, %v3483
    %v3500 = vld [vmem:[%s3] sm:$0x1]
    %v3501 = vld [vmem:[%s3 + $0x1] sm:$0x1]
    %v3502 = vld [vmem:[%s3 + $0x2] sm:$0x1]
    %v3503 = vld [vmem:[%s3 + $0x3] sm:$0x1]
    %v3504 = vld [vmem:[%s3 + $0x4] sm:$0x1]
    %v3505 = vld [vmem:[%s3 + $0x5] sm:$0x1]
    %v3506 = vld [vmem:[%s3 + $0x6] sm:$0x1]
    %v3507 = vld [vmem:[%s3 + $0x7] sm:$0x1]
    %v3508 = vld [vmem:[%s3 + $0x8] sm:$0x1]
    %v3509 = vld [vmem:[%s3 + $0x9] sm:$0x1]
    %v3510 = vld [vmem:[%s3 + $0xa] sm:$0x1]
    %v3511 = vld [vmem:[%s3 + $0xb] sm:$0x1]
    %v3512 = vld [vmem:[%s3 + $0xc] sm:$0x1]
    %v3513 = vld [vmem:[%s3 + $0xd] sm:$0x1]
    %v3514 = vld [vmem:[%s3 + $0xe] sm:$0x1]
    %v3515 = vld [vmem:[%s3 + $0xf] sm:$0x1]
    %v3516 = vmul.f32 %v2316, %v3484
    %v3517 = vmul.f32 %v2317, %v3485
    %v3518 = vmul.f32 %v2318, %v3486
    %v3519 = vmul.f32 %v2319, %v3487
    %v3520 = vmul.f32 %v2320, %v3488
    %v3521 = vmul.f32 %v2321, %v3489
    %v3522 = vmul.f32 %v2322, %v3490
    %v3523 = vmul.f32 %v2323, %v3491
    %v3524 = vmul.f32 %v2324, %v3492
    %v3525 = vmul.f32 %v2325, %v3493
    %v3526 = vmul.f32 %v2326, %v3494
    %v3527 = vmul.f32 %v2327, %v3495
    %v3528 = vmul.f32 %v2328, %v3496
    %v3529 = vmul.f32 %v2329, %v3497
    %v3530 = vmul.f32 %v2330, %v3498
    %v3531 = vmul.f32 %v2331, %v3499
    %v3532 = vsub.f32 %v3500, %v3516
    %v3533 = vsub.f32 %v3501, %v3517
    %v3534 = vsub.f32 %v3502, %v3518
    %v3535 = vsub.f32 %v3503, %v3519
    %v3536 = vsub.f32 %v3504, %v3520
    %v3537 = vsub.f32 %v3505, %v3521
    %v3538 = vsub.f32 %v3506, %v3522
    %v3539 = vsub.f32 %v3507, %v3523
    %v3540 = vsub.f32 %v3508, %v3524
    %v3541 = vsub.f32 %v3509, %v3525
    %v3542 = vsub.f32 %v3510, %v3526
    %v3543 = vsub.f32 %v3511, %v3527
    %v3544 = vsub.f32 %v3512, %v3528
    %v3545 = vsub.f32 %v3513, %v3529
    %v3546 = vsub.f32 %v3514, %v3530
    %v3547 = vsub.f32 %v3515, %v3531
    %v3564 = vlaneseq
    %v3565 = vshrl.u32 %v3564, 7
    %v3566 = vsub.s32 0, %v3565
    %v3567 = vrot.slane %v3484, %v3566
    %v3568 = vlaneseq
    %v3569 = vshrl.u32 %v3568, 7
    %v3570 = vsub.s32 0, %v3569
    %v3571 = vrot.slane %v3485, %v3570
    %v3572 = vlaneseq
    %v3573 = vshrl.u32 %v3572, 7
    %v3574 = vsub.s32 0, %v3573
    %v3575 = vrot.slane %v3486, %v3574
    %v3576 = vlaneseq
    %v3577 = vshrl.u32 %v3576, 7
    %v3578 = vsub.s32 0, %v3577
    %v3579 = vrot.slane %v3487, %v3578
    %v3580 = vlaneseq
    %v3581 = vshrl.u32 %v3580, 7
    %v3582 = vsub.s32 0, %v3581
    %v3583 = vrot.slane %v3488, %v3582
    %v3584 = vlaneseq
    %v3585 = vshrl.u32 %v3584, 7
    %v3586 = vsub.s32 0, %v3585
    %v3587 = vrot.slane %v3489, %v3586
    %v3588 = vlaneseq
    %v3589 = vshrl.u32 %v3588, 7
    %v3590 = vsub.s32 0, %v3589
    %v3591 = vrot.slane %v3490, %v3590
    %v3592 = vlaneseq
    %v3593 = vshrl.u32 %v3592, 7
    %v3594 = vsub.s32 0, %v3593
    %v3595 = vrot.slane %v3491, %v3594
    %v3596 = vlaneseq
    %v3597 = vshrl.u32 %v3596, 7
    %v3598 = vsub.s32 0, %v3597
    %v3599 = vrot.slane %v3492, %v3598
    %v3600 = vlaneseq
    %v3601 = vshrl.u32 %v3600, 7
    %v3602 = vsub.s32 0, %v3601
    %v3603 = vrot.slane %v3493, %v3602
    %v3604 = vlaneseq
    %v3605 = vshrl.u32 %v3604, 7
    %v3606 = vsub.s32 0, %v3605
    %v3607 = vrot.slane %v3494, %v3606
    %v3608 = vlaneseq
    %v3609 = vshrl.u32 %v3608, 7
    %v3610 = vsub.s32 0, %v3609
    %v3611 = vrot.slane %v3495, %v3610
    %v3612 = vlaneseq
    %v3613 = vshrl.u32 %v3612, 7
    %v3614 = vsub.s32 0, %v3613
    %v3615 = vrot.slane %v3496, %v3614
    %v3616 = vlaneseq
    %v3617 = vshrl.u32 %v3616, 7
    %v3618 = vsub.s32 0, %v3617
    %v3619 = vrot.slane %v3497, %v3618
    %v3620 = vlaneseq
    %v3621 = vshrl.u32 %v3620, 7
    %v3622 = vsub.s32 0, %v3621
    %v3623 = vrot.slane %v3498, %v3622
    %v3624 = vlaneseq
    %v3625 = vshrl.u32 %v3624, 7
    %v3626 = vsub.s32 0, %v3625
    %v3627 = vrot.slane %v3499, %v3626
    %3628 = vset.pattern.permute.xlu0 0
    %3629 = vperm.xlu0 %3628, %v3567
    %v3630 = vpop.permute.xlu0 %3629
    %3632 = vset.pattern.permute.xlu0 0
    %3633 = vperm.xlu0 %3632, %v3571
    %v3634 = vpop.permute.xlu0 %3633
    %3636 = vset.pattern.permute.xlu0 0
    %3637 = vperm.xlu0 %3636, %v3575
    %v3638 = vpop.permute.xlu0 %3637
    %3640 = vset.pattern.permute.xlu0 0
    %3641 = vperm.xlu0 %3640, %v3579
    %v3642 = vpop.permute.xlu0 %3641
    %3644 = vset.pattern.permute.xlu0 0
    %3645 = vperm.xlu0 %3644, %v3583
    %v3646 = vpop.permute.xlu0 %3645
    %3648 = vset.pattern.permute.xlu0 0
    %3649 = vperm.xlu0 %3648, %v3587
    %v3650 = vpop.permute.xlu0 %3649
    %3652 = vset.pattern.permute.xlu0 0
    %3653 = vperm.xlu0 %3652, %v3591
    %v3654 = vpop.permute.xlu0 %3653
    %3656 = vset.pattern.permute.xlu0 0
    %3657 = vperm.xlu0 %3656, %v3595
    %v3658 = vpop.permute.xlu0 %3657
    %3660 = vset.pattern.permute.xlu0 0
    %3661 = vperm.xlu0 %3660, %v3599
    %v3662 = vpop.permute.xlu0 %3661
    %3664 = vset.pattern.permute.xlu0 0
    %3665 = vperm.xlu0 %3664, %v3603
    %v3666 = vpop.permute.xlu0 %3665
    %3668 = vset.pattern.permute.xlu0 0
    %3669 = vperm.xlu0 %3668, %v3607
    %v3670 = vpop.permute.xlu0 %3669
    %3672 = vset.pattern.permute.xlu0 0
    %3673 = vperm.xlu0 %3672, %v3611
    %v3674 = vpop.permute.xlu0 %3673
    %3676 = vset.pattern.permute.xlu0 0
    %3677 = vperm.xlu0 %3676, %v3615
    %v3678 = vpop.permute.xlu0 %3677
    %3680 = vset.pattern.permute.xlu0 0
    %3681 = vperm.xlu0 %3680, %v3619
    %v3682 = vpop.permute.xlu0 %3681
    %3684 = vset.pattern.permute.xlu0 0
    %3685 = vperm.xlu0 %3684, %v3623
    %v3686 = vpop.permute.xlu0 %3685
    %3688 = vset.pattern.permute.xlu0 0
    %3689 = vperm.xlu0 %3688, %v3627
    %v3690 = vpop.permute.xlu0 %3689
    %v3692 = vmul.f32 %v1288, %v3630
    %v3693 = vmul.f32 %v1289, %v3630
    %v3694 = vmul.f32 %v1290, %v3630
    %v3695 = vmul.f32 %v1291, %v3630
    %v3696 = vmul.f32 %v1292, %v3634
    %v3697 = vmul.f32 %v1293, %v3634
    %v3698 = vmul.f32 %v1294, %v3634
    %v3699 = vmul.f32 %v1295, %v3634
    %v3700 = vmul.f32 %v1296, %v3638
    %v3701 = vmul.f32 %v1297, %v3638
    %v3702 = vmul.f32 %v1298, %v3638
    %v3703 = vmul.f32 %v1299, %v3638
    %v3704 = vmul.f32 %v1300, %v3642
    %v3705 = vmul.f32 %v1301, %v3642
    %v3706 = vmul.f32 %v1302, %v3642
    %v3707 = vmul.f32 %v1303, %v3642
    %v3708 = vmul.f32 %v1304, %v3646
    %v3709 = vmul.f32 %v1305, %v3646
    %v3710 = vmul.f32 %v1306, %v3646
    %v3711 = vmul.f32 %v1307, %v3646
    %v3712 = vmul.f32 %v1308, %v3650
    %v3713 = vmul.f32 %v1309, %v3650
    %v3714 = vmul.f32 %v1310, %v3650
    %v3715 = vmul.f32 %v1311, %v3650
    %v3716 = vmul.f32 %v1312, %v3654
    %v3717 = vmul.f32 %v1313, %v3654
    %v3718 = vmul.f32 %v1314, %v3654
    %v3719 = vmul.f32 %v1315, %v3654
    %v3720 = vmul.f32 %v1316, %v3658
    %v3721 = vmul.f32 %v1317, %v3658
    %v3722 = vmul.f32 %v1318, %v3658
    %v3723 = vmul.f32 %v1319, %v3658
    %v3724 = vmul.f32 %v1320, %v3662
    %v3725 = vmul.f32 %v1321, %v3662
    %v3726 = vmul.f32 %v1322, %v3662
    %v3727 = vmul.f32 %v1323, %v3662
    %v3728 = vmul.f32 %v1324, %v3666
    %v3729 = vmul.f32 %v1325, %v3666
    %v3730 = vmul.f32 %v1326, %v3666
    %v3731 = vmul.f32 %v1327, %v3666
    %v3732 = vmul.f32 %v1328, %v3670
    %v3733 = vmul.f32 %v1329, %v3670
    %v3734 = vmul.f32 %v1330, %v3670
    %v3735 = vmul.f32 %v1331, %v3670
    %v3736 = vmul.f32 %v1332, %v3674
    %v3737 = vmul.f32 %v1333, %v3674
    %v3738 = vmul.f32 %v1334, %v3674
    %v3739 = vmul.f32 %v1335, %v3674
    %v3740 = vmul.f32 %v1336, %v3678
    %v3741 = vmul.f32 %v1337, %v3678
    %v3742 = vmul.f32 %v1338, %v3678
    %v3743 = vmul.f32 %v1339, %v3678
    %v3744 = vmul.f32 %v1340, %v3682
    %v3745 = vmul.f32 %v1341, %v3682
    %v3746 = vmul.f32 %v1342, %v3682
    %v3747 = vmul.f32 %v1343, %v3682
    %v3748 = vmul.f32 %v1344, %v3686
    %v3749 = vmul.f32 %v1345, %v3686
    %v3750 = vmul.f32 %v1346, %v3686
    %v3751 = vmul.f32 %v1347, %v3686
    %v3752 = vmul.f32 %v1348, %v3690
    %v3753 = vmul.f32 %v1349, %v3690
    %v3754 = vmul.f32 %v1350, %v3690
    %v3755 = vmul.f32 %v1351, %v3690
    %v3772 = vlaneseq
    %v3773 = vshrl.u32 %v3772, 7
    %v3774 = vsub.s32 0, %v3773
    %v3775 = vrot.slane %v3532, %v3774
    %v3776 = vlaneseq
    %v3777 = vshrl.u32 %v3776, 7
    %v3778 = vsub.s32 0, %v3777
    %v3779 = vrot.slane %v3533, %v3778
    %v3780 = vlaneseq
    %v3781 = vshrl.u32 %v3780, 7
    %v3782 = vsub.s32 0, %v3781
    %v3783 = vrot.slane %v3534, %v3782
    %v3784 = vlaneseq
    %v3785 = vshrl.u32 %v3784, 7
    %v3786 = vsub.s32 0, %v3785
    %v3787 = vrot.slane %v3535, %v3786
    %v3788 = vlaneseq
    %v3789 = vshrl.u32 %v3788, 7
    %v3790 = vsub.s32 0, %v3789
    %v3791 = vrot.slane %v3536, %v3790
    %v3792 = vlaneseq
    %v3793 = vshrl.u32 %v3792, 7
    %v3794 = vsub.s32 0, %v3793
    %v3795 = vrot.slane %v3537, %v3794
    %v3796 = vlaneseq
    %v3797 = vshrl.u32 %v3796, 7
    %v3798 = vsub.s32 0, %v3797
    %v3799 = vrot.slane %v3538, %v3798
    %v3800 = vlaneseq
    %v3801 = vshrl.u32 %v3800, 7
    %v3802 = vsub.s32 0, %v3801
    %v3803 = vrot.slane %v3539, %v3802
    %v3804 = vlaneseq
    %v3805 = vshrl.u32 %v3804, 7
    %v3806 = vsub.s32 0, %v3805
    %v3807 = vrot.slane %v3540, %v3806
    %v3808 = vlaneseq
    %v3809 = vshrl.u32 %v3808, 7
    %v3810 = vsub.s32 0, %v3809
    %v3811 = vrot.slane %v3541, %v3810
    %v3812 = vlaneseq
    %v3813 = vshrl.u32 %v3812, 7
    %v3814 = vsub.s32 0, %v3813
    %v3815 = vrot.slane %v3542, %v3814
    %v3816 = vlaneseq
    %v3817 = vshrl.u32 %v3816, 7
    %v3818 = vsub.s32 0, %v3817
    %v3819 = vrot.slane %v3543, %v3818
    %v3820 = vlaneseq
    %v3821 = vshrl.u32 %v3820, 7
    %v3822 = vsub.s32 0, %v3821
    %v3823 = vrot.slane %v3544, %v3822
    %v3824 = vlaneseq
    %v3825 = vshrl.u32 %v3824, 7
    %v3826 = vsub.s32 0, %v3825
    %v3827 = vrot.slane %v3545, %v3826
    %v3828 = vlaneseq
    %v3829 = vshrl.u32 %v3828, 7
    %v3830 = vsub.s32 0, %v3829
    %v3831 = vrot.slane %v3546, %v3830
    %v3832 = vlaneseq
    %v3833 = vshrl.u32 %v3832, 7
    %v3834 = vsub.s32 0, %v3833
    %v3835 = vrot.slane %v3547, %v3834
    %3836 = vset.pattern.permute.xlu0 0
    %3837 = vperm.xlu0 %3836, %v3775
    %v3838 = vpop.permute.xlu0 %3837
    %3840 = vset.pattern.permute.xlu0 0
    %3841 = vperm.xlu0 %3840, %v3779
    %v3842 = vpop.permute.xlu0 %3841
    %3844 = vset.pattern.permute.xlu0 0
    %3845 = vperm.xlu0 %3844, %v3783
    %v3846 = vpop.permute.xlu0 %3845
    %3848 = vset.pattern.permute.xlu0 0
    %3849 = vperm.xlu0 %3848, %v3787
    %v3850 = vpop.permute.xlu0 %3849
    %3852 = vset.pattern.permute.xlu0 0
    %3853 = vperm.xlu0 %3852, %v3791
    %v3854 = vpop.permute.xlu0 %3853
    %3856 = vset.pattern.permute.xlu0 0
    %3857 = vperm.xlu0 %3856, %v3795
    %v3858 = vpop.permute.xlu0 %3857
    %3860 = vset.pattern.permute.xlu0 0
    %3861 = vperm.xlu0 %3860, %v3799
    %v3862 = vpop.permute.xlu0 %3861
    %3864 = vset.pattern.permute.xlu0 0
    %3865 = vperm.xlu0 %3864, %v3803
    %v3866 = vpop.permute.xlu0 %3865
    %3868 = vset.pattern.permute.xlu0 0
    %3869 = vperm.xlu0 %3868, %v3807
    %v3870 = vpop.permute.xlu0 %3869
    %3872 = vset.pattern.permute.xlu0 0
    %3873 = vperm.xlu0 %3872, %v3811
    %v3874 = vpop.permute.xlu0 %3873
    %3876 = vset.pattern.permute.xlu0 0
    %3877 = vperm.xlu0 %3876, %v3815
    %v3878 = vpop.permute.xlu0 %3877
    %3880 = vset.pattern.permute.xlu0 0
    %3881 = vperm.xlu0 %3880, %v3819
    %v3882 = vpop.permute.xlu0 %3881
    %3884 = vset.pattern.permute.xlu0 0
    %3885 = vperm.xlu0 %3884, %v3823
    %v3886 = vpop.permute.xlu0 %3885
    %3888 = vset.pattern.permute.xlu0 0
    %3889 = vperm.xlu0 %3888, %v3827
    %v3890 = vpop.permute.xlu0 %3889
    %3892 = vset.pattern.permute.xlu0 0
    %3893 = vperm.xlu0 %3892, %v3831
    %v3894 = vpop.permute.xlu0 %3893
    %3896 = vset.pattern.permute.xlu0 0
    %3897 = vperm.xlu0 %3896, %v3835
    %v3898 = vpop.permute.xlu0 %3897
    %v3900 = vadd.f32 %v3692, %v3838
    %v3901 = vadd.f32 %v3693, %v3838
    %v3902 = vadd.f32 %v3694, %v3838
    %v3903 = vadd.f32 %v3695, %v3838
    %v3904 = vadd.f32 %v3696, %v3842
    %v3905 = vadd.f32 %v3697, %v3842
    %v3906 = vadd.f32 %v3698, %v3842
    %v3907 = vadd.f32 %v3699, %v3842
    %v3908 = vadd.f32 %v3700, %v3846
    %v3909 = vadd.f32 %v3701, %v3846
    %v3910 = vadd.f32 %v3702, %v3846
    %v3911 = vadd.f32 %v3703, %v3846
    %v3912 = vadd.f32 %v3704, %v3850
    %v3913 = vadd.f32 %v3705, %v3850
    %v3914 = vadd.f32 %v3706, %v3850
    %v3915 = vadd.f32 %v3707, %v3850
    %v3916 = vadd.f32 %v3708, %v3854
    %v3917 = vadd.f32 %v3709, %v3854
    %v3918 = vadd.f32 %v3710, %v3854
    %v3919 = vadd.f32 %v3711, %v3854
    %v3920 = vadd.f32 %v3712, %v3858
    %v3921 = vadd.f32 %v3713, %v3858
    %v3922 = vadd.f32 %v3714, %v3858
    %v3923 = vadd.f32 %v3715, %v3858
    %v3924 = vadd.f32 %v3716, %v3862
    %v3925 = vadd.f32 %v3717, %v3862
    %v3926 = vadd.f32 %v3718, %v3862
    %v3927 = vadd.f32 %v3719, %v3862
    %v3928 = vadd.f32 %v3720, %v3866
    %v3929 = vadd.f32 %v3721, %v3866
    %v3930 = vadd.f32 %v3722, %v3866
    %v3931 = vadd.f32 %v3723, %v3866
    %v3932 = vadd.f32 %v3724, %v3870
    %v3933 = vadd.f32 %v3725, %v3870
    %v3934 = vadd.f32 %v3726, %v3870
    %v3935 = vadd.f32 %v3727, %v3870
    %v3936 = vadd.f32 %v3728, %v3874
    %v3937 = vadd.f32 %v3729, %v3874
    %v3938 = vadd.f32 %v3730, %v3874
    %v3939 = vadd.f32 %v3731, %v3874
    %v3940 = vadd.f32 %v3732, %v3878
    %v3941 = vadd.f32 %v3733, %v3878
    %v3942 = vadd.f32 %v3734, %v3878
    %v3943 = vadd.f32 %v3735, %v3878
    %v3944 = vadd.f32 %v3736, %v3882
    %v3945 = vadd.f32 %v3737, %v3882
    %v3946 = vadd.f32 %v3738, %v3882
    %v3947 = vadd.f32 %v3739, %v3882
    %v3948 = vadd.f32 %v3740, %v3886
    %v3949 = vadd.f32 %v3741, %v3886
    %v3950 = vadd.f32 %v3742, %v3886
    %v3951 = vadd.f32 %v3743, %v3886
    %v3952 = vadd.f32 %v3744, %v3890
    %v3953 = vadd.f32 %v3745, %v3890
    %v3954 = vadd.f32 %v3746, %v3890
    %v3955 = vadd.f32 %v3747, %v3890
    %v3956 = vadd.f32 %v3748, %v3894
    %v3957 = vadd.f32 %v3749, %v3894
    %v3958 = vadd.f32 %v3750, %v3894
    %v3959 = vadd.f32 %v3751, %v3894
    %v3960 = vadd.f32 %v3752, %v3898
    %v3961 = vadd.f32 %v3753, %v3898
    %v3962 = vadd.f32 %v3754, %v3898
    %v3963 = vadd.f32 %v3755, %v3898
    %v3964 = vmax.f32 %v3900, 0.0
    %v3965 = vmax.f32 %v3901, 0.0
    %v3966 = vmax.f32 %v3902, 0.0
    %v3967 = vmax.f32 %v3903, 0.0
    %v3968 = vmax.f32 %v3904, 0.0
    %v3969 = vmax.f32 %v3905, 0.0
    %v3970 = vmax.f32 %v3906, 0.0
    %v3971 = vmax.f32 %v3907, 0.0
    %v3972 = vmax.f32 %v3908, 0.0
    %v3973 = vmax.f32 %v3909, 0.0
    %v3974 = vmax.f32 %v3910, 0.0
    %v3975 = vmax.f32 %v3911, 0.0
    %v3976 = vmax.f32 %v3912, 0.0
    %v3977 = vmax.f32 %v3913, 0.0
    %v3978 = vmax.f32 %v3914, 0.0
    %v3979 = vmax.f32 %v3915, 0.0
    %v3980 = vmax.f32 %v3916, 0.0
    %v3981 = vmax.f32 %v3917, 0.0
    %v3982 = vmax.f32 %v3918, 0.0
    %v3983 = vmax.f32 %v3919, 0.0
    %v3984 = vmax.f32 %v3920, 0.0
    %v3985 = vmax.f32 %v3921, 0.0
    %v3986 = vmax.f32 %v3922, 0.0
    %v3987 = vmax.f32 %v3923, 0.0
    %v3988 = vmax.f32 %v3924, 0.0
    %v3989 = vmax.f32 %v3925, 0.0
    %v3990 = vmax.f32 %v3926, 0.0
    %v3991 = vmax.f32 %v3927, 0.0
    %v3992 = vmax.f32 %v3928, 0.0
    %v3993 = vmax.f32 %v3929, 0.0
    %v3994 = vmax.f32 %v3930, 0.0
    %v3995 = vmax.f32 %v3931, 0.0
    %v3996 = vmax.f32 %v3932, 0.0
    %v3997 = vmax.f32 %v3933, 0.0
    %v3998 = vmax.f32 %v3934, 0.0
    %v3999 = vmax.f32 %v3935, 0.0
    %v4000 = vmax.f32 %v3936, 0.0
    %v4001 = vmax.f32 %v3937, 0.0
    %v4002 = vmax.f32 %v3938, 0.0
    %v4003 = vmax.f32 %v3939, 0.0
    %v4004 = vmax.f32 %v3940, 0.0
    %v4005 = vmax.f32 %v3941, 0.0
    %v4006 = vmax.f32 %v3942, 0.0
    %v4007 = vmax.f32 %v3943, 0.0
    %v4008 = vmax.f32 %v3944, 0.0
    %v4009 = vmax.f32 %v3945, 0.0
    %v4010 = vmax.f32 %v3946, 0.0
    %v4011 = vmax.f32 %v3947, 0.0
    %v4012 = vmax.f32 %v3948, 0.0
    %v4013 = vmax.f32 %v3949, 0.0
    %v4014 = vmax.f32 %v3950, 0.0
    %v4015 = vmax.f32 %v3951, 0.0
    %v4016 = vmax.f32 %v3952, 0.0
    %v4017 = vmax.f32 %v3953, 0.0
    %v4018 = vmax.f32 %v3954, 0.0
    %v4019 = vmax.f32 %v3955, 0.0
    %v4020 = vmax.f32 %v3956, 0.0
    %v4021 = vmax.f32 %v3957, 0.0
    %v4022 = vmax.f32 %v3958, 0.0
    %v4023 = vmax.f32 %v3959, 0.0
    %v4024 = vmax.f32 %v3960, 0.0
    %v4025 = vmax.f32 %v3961, 0.0
    %v4026 = vmax.f32 %v3962, 0.0
    %v4027 = vmax.f32 %v3963, 0.0
    %v4028 = vld [vmem:[%s4] sm:$0xff]
    %v4029 = vld [vmem:[%s4 + $0x8] sm:$0xff]
    %v4030 = vld [vmem:[%s4 + $0x10] sm:$0xff]
    %v4031 = vld [vmem:[%s4 + $0x18] sm:$0xff]
    %v4032 = vld [vmem:[%s4 + $0x20] sm:$0xff]
    %v4033 = vld [vmem:[%s4 + $0x28] sm:$0xff]
    %v4034 = vld [vmem:[%s4 + $0x30] sm:$0xff]
    %v4035 = vld [vmem:[%s4 + $0x38] sm:$0xff]
    %v4036 = vld [vmem:[%s4 + $0x40] sm:$0xff]
    %v4037 = vld [vmem:[%s4 + $0x48] sm:$0xff]
    %v4038 = vld [vmem:[%s4 + $0x50] sm:$0xff]
    %v4039 = vld [vmem:[%s4 + $0x58] sm:$0xff]
    %v4040 = vld [vmem:[%s4 + $0x60] sm:$0xff]
    %v4041 = vld [vmem:[%s4 + $0x68] sm:$0xff]
    %v4042 = vld [vmem:[%s4 + $0x70] sm:$0xff]
    %v4043 = vld [vmem:[%s4 + $0x78] sm:$0xff]
    %v4044 = vld [vmem:[%s4 + $0x80] sm:$0xff]
    %v4045 = vld [vmem:[%s4 + $0x88] sm:$0xff]
    %v4046 = vld [vmem:[%s4 + $0x90] sm:$0xff]
    %v4047 = vld [vmem:[%s4 + $0x98] sm:$0xff]
    %v4048 = vld [vmem:[%s4 + $0xa0] sm:$0xff]
    %v4049 = vld [vmem:[%s4 + $0xa8] sm:$0xff]
    %v4050 = vld [vmem:[%s4 + $0xb0] sm:$0xff]
    %v4051 = vld [vmem:[%s4 + $0xb8] sm:$0xff]
    %v4052 = vld [vmem:[%s4 + $0xc0] sm:$0xff]
    %v4053 = vld [vmem:[%s4 + $0xc8] sm:$0xff]
    %v4054 = vld [vmem:[%s4 + $0xd0] sm:$0xff]
    %v4055 = vld [vmem:[%s4 + $0xd8] sm:$0xff]
    %v4056 = vld [vmem:[%s4 + $0xe0] sm:$0xff]
    %v4057 = vld [vmem:[%s4 + $0xe8] sm:$0xff]
    %v4058 = vld [vmem:[%s4 + $0xf0] sm:$0xff]
    %v4059 = vld [vmem:[%s4 + $0xf8] sm:$0xff]
    %v4060 = vld [vmem:[%s4 + $0x100] sm:$0xff]
    %v4061 = vld [vmem:[%s4 + $0x108] sm:$0xff]
    %v4062 = vld [vmem:[%s4 + $0x110] sm:$0xff]
    %v4063 = vld [vmem:[%s4 + $0x118] sm:$0xff]
    %v4064 = vld [vmem:[%s4 + $0x120] sm:$0xff]
    %v4065 = vld [vmem:[%s4 + $0x128] sm:$0xff]
    %v4066 = vld [vmem:[%s4 + $0x130] sm:$0xff]
    %v4067 = vld [vmem:[%s4 + $0x138] sm:$0xff]
    %v4068 = vld [vmem:[%s4 + $0x140] sm:$0xff]
    %v4069 = vld [vmem:[%s4 + $0x148] sm:$0xff]
    %v4070 = vld [vmem:[%s4 + $0x150] sm:$0xff]
    %v4071 = vld [vmem:[%s4 + $0x158] sm:$0xff]
    %v4072 = vld [vmem:[%s4 + $0x160] sm:$0xff]
    %v4073 = vld [vmem:[%s4 + $0x168] sm:$0xff]
    %v4074 = vld [vmem:[%s4 + $0x170] sm:$0xff]
    %v4075 = vld [vmem:[%s4 + $0x178] sm:$0xff]
    %v4076 = vld [vmem:[%s4 + $0x180] sm:$0xff]
    %v4077 = vld [vmem:[%s4 + $0x188] sm:$0xff]
    %v4078 = vld [vmem:[%s4 + $0x190] sm:$0xff]
    %v4079 = vld [vmem:[%s4 + $0x198] sm:$0xff]
    %v4080 = vld [vmem:[%s4 + $0x1a0] sm:$0xff]
    %v4081 = vld [vmem:[%s4 + $0x1a8] sm:$0xff]
    %v4082 = vld [vmem:[%s4 + $0x1b0] sm:$0xff]
    %v4083 = vld [vmem:[%s4 + $0x1b8] sm:$0xff]
    %v4084 = vld [vmem:[%s4 + $0x1c0] sm:$0xff]
    %v4085 = vld [vmem:[%s4 + $0x1c8] sm:$0xff]
    %v4086 = vld [vmem:[%s4 + $0x1d0] sm:$0xff]
    %v4087 = vld [vmem:[%s4 + $0x1d8] sm:$0xff]
    %v4088 = vld [vmem:[%s4 + $0x1e0] sm:$0xff]
    %v4089 = vld [vmem:[%s4 + $0x1e8] sm:$0xff]
    %v4090 = vld [vmem:[%s4 + $0x1f0] sm:$0xff]
    %v4091 = vld [vmem:[%s4 + $0x1f8] sm:$0xff]
    %v4092 = vld [vmem:[%s4 + $0x200] sm:$0xff]
    %v4093 = vld [vmem:[%s4 + $0x208] sm:$0xff]
    %v4094 = vld [vmem:[%s4 + $0x210] sm:$0xff]
    %v4095 = vld [vmem:[%s4 + $0x218] sm:$0xff]
    %v4096 = vld [vmem:[%s4 + $0x220] sm:$0xff]
    %v4097 = vld [vmem:[%s4 + $0x228] sm:$0xff]
    %v4098 = vld [vmem:[%s4 + $0x230] sm:$0xff]
    %v4099 = vld [vmem:[%s4 + $0x238] sm:$0xff]
    %v4100 = vld [vmem:[%s4 + $0x240] sm:$0xff]
    %v4101 = vld [vmem:[%s4 + $0x248] sm:$0xff]
    %v4102 = vld [vmem:[%s4 + $0x250] sm:$0xff]
    %v4103 = vld [vmem:[%s4 + $0x258] sm:$0xff]
    %v4104 = vld [vmem:[%s4 + $0x260] sm:$0xff]
    %v4105 = vld [vmem:[%s4 + $0x268] sm:$0xff]
    %v4106 = vld [vmem:[%s4 + $0x270] sm:$0xff]
    %v4107 = vld [vmem:[%s4 + $0x278] sm:$0xff]
    %v4108 = vld [vmem:[%s4 + $0x280] sm:$0xff]
    %v4109 = vld [vmem:[%s4 + $0x288] sm:$0xff]
    %v4110 = vld [vmem:[%s4 + $0x290] sm:$0xff]
    %v4111 = vld [vmem:[%s4 + $0x298] sm:$0xff]
    %v4112 = vld [vmem:[%s4 + $0x2a0] sm:$0xff]
    %v4113 = vld [vmem:[%s4 + $0x2a8] sm:$0xff]
    %v4114 = vld [vmem:[%s4 + $0x2b0] sm:$0xff]
    %v4115 = vld [vmem:[%s4 + $0x2b8] sm:$0xff]
    %v4116 = vld [vmem:[%s4 + $0x2c0] sm:$0xff]
    %v4117 = vld [vmem:[%s4 + $0x2c8] sm:$0xff]
    %v4118 = vld [vmem:[%s4 + $0x2d0] sm:$0xff]
    %v4119 = vld [vmem:[%s4 + $0x2d8] sm:$0xff]
    %v4120 = vld [vmem:[%s4 + $0x2e0] sm:$0xff]
    %v4121 = vld [vmem:[%s4 + $0x2e8] sm:$0xff]
    %v4122 = vld [vmem:[%s4 + $0x2f0] sm:$0xff]
    %v4123 = vld [vmem:[%s4 + $0x2f8] sm:$0xff]
    %v4124 = vld [vmem:[%s4 + $0x300] sm:$0xff]
    %v4125 = vld [vmem:[%s4 + $0x308] sm:$0xff]
    %v4126 = vld [vmem:[%s4 + $0x310] sm:$0xff]
    %v4127 = vld [vmem:[%s4 + $0x318] sm:$0xff]
    %v4128 = vld [vmem:[%s4 + $0x320] sm:$0xff]
    %v4129 = vld [vmem:[%s4 + $0x328] sm:$0xff]
    %v4130 = vld [vmem:[%s4 + $0x330] sm:$0xff]
    %v4131 = vld [vmem:[%s4 + $0x338] sm:$0xff]
    %v4132 = vld [vmem:[%s4 + $0x340] sm:$0xff]
    %v4133 = vld [vmem:[%s4 + $0x348] sm:$0xff]
    %v4134 = vld [vmem:[%s4 + $0x350] sm:$0xff]
    %v4135 = vld [vmem:[%s4 + $0x358] sm:$0xff]
    %v4136 = vld [vmem:[%s4 + $0x360] sm:$0xff]
    %v4137 = vld [vmem:[%s4 + $0x368] sm:$0xff]
    %v4138 = vld [vmem:[%s4 + $0x370] sm:$0xff]
    %v4139 = vld [vmem:[%s4 + $0x378] sm:$0xff]
    %v4140 = vld [vmem:[%s4 + $0x380] sm:$0xff]
    %v4141 = vld [vmem:[%s4 + $0x388] sm:$0xff]
    %v4142 = vld [vmem:[%s4 + $0x390] sm:$0xff]
    %v4143 = vld [vmem:[%s4 + $0x398] sm:$0xff]
    %v4144 = vld [vmem:[%s4 + $0x3a0] sm:$0xff]
    %v4145 = vld [vmem:[%s4 + $0x3a8] sm:$0xff]
    %v4146 = vld [vmem:[%s4 + $0x3b0] sm:$0xff]
    %v4147 = vld [vmem:[%s4 + $0x3b8] sm:$0xff]
    %v4148 = vld [vmem:[%s4 + $0x3c0] sm:$0xff]
    %v4149 = vld [vmem:[%s4 + $0x3c8] sm:$0xff]
    %v4150 = vld [vmem:[%s4 + $0x3d0] sm:$0xff]
    %v4151 = vld [vmem:[%s4 + $0x3d8] sm:$0xff]
    %v4152 = vld [vmem:[%s4 + $0x3e0] sm:$0xff]
    %v4153 = vld [vmem:[%s4 + $0x3e8] sm:$0xff]
    %v4154 = vld [vmem:[%s4 + $0x3f0] sm:$0xff]
    %v4155 = vld [vmem:[%s4 + $0x3f8] sm:$0xff]
    %v4156 = vld [vmem:[%s4 + $0x400] sm:$0xff]
    %v4157 = vld [vmem:[%s4 + $0x408] sm:$0xff]
    %v4158 = vld [vmem:[%s4 + $0x410] sm:$0xff]
    %v4159 = vld [vmem:[%s4 + $0x418] sm:$0xff]
    %v4160 = vld [vmem:[%s4 + $0x420] sm:$0xff]
    %v4161 = vld [vmem:[%s4 + $0x428] sm:$0xff]
    %v4162 = vld [vmem:[%s4 + $0x430] sm:$0xff]
    %v4163 = vld [vmem:[%s4 + $0x438] sm:$0xff]
    %v4164 = vld [vmem:[%s4 + $0x440] sm:$0xff]
    %v4165 = vld [vmem:[%s4 + $0x448] sm:$0xff]
    %v4166 = vld [vmem:[%s4 + $0x450] sm:$0xff]
    %v4167 = vld [vmem:[%s4 + $0x458] sm:$0xff]
    %v4168 = vld [vmem:[%s4 + $0x460] sm:$0xff]
    %v4169 = vld [vmem:[%s4 + $0x468] sm:$0xff]
    %v4170 = vld [vmem:[%s4 + $0x470] sm:$0xff]
    %v4171 = vld [vmem:[%s4 + $0x478] sm:$0xff]
    %v4172 = vld [vmem:[%s4 + $0x480] sm:$0xff]
    %v4173 = vld [vmem:[%s4 + $0x488] sm:$0xff]
    %v4174 = vld [vmem:[%s4 + $0x490] sm:$0xff]
    %v4175 = vld [vmem:[%s4 + $0x498] sm:$0xff]
    %v4176 = vld [vmem:[%s4 + $0x4a0] sm:$0xff]
    %v4177 = vld [vmem:[%s4 + $0x4a8] sm:$0xff]
    %v4178 = vld [vmem:[%s4 + $0x4b0] sm:$0xff]
    %v4179 = vld [vmem:[%s4 + $0x4b8] sm:$0xff]
    %v4180 = vld [vmem:[%s4 + $0x4c0] sm:$0xff]
    %v4181 = vld [vmem:[%s4 + $0x4c8] sm:$0xff]
    %v4182 = vld [vmem:[%s4 + $0x4d0] sm:$0xff]
    %v4183 = vld [vmem:[%s4 + $0x4d8] sm:$0xff]
    %v4184 = vld [vmem:[%s4 + $0x4e0] sm:$0xff]
    %v4185 = vld [vmem:[%s4 + $0x4e8] sm:$0xff]
    %v4186 = vld [vmem:[%s4 + $0x4f0] sm:$0xff]
    %v4187 = vld [vmem:[%s4 + $0x4f8] sm:$0xff]
    %v4188 = vld [vmem:[%s4 + $0x500] sm:$0xff]
    %v4189 = vld [vmem:[%s4 + $0x508] sm:$0xff]
    %v4190 = vld [vmem:[%s4 + $0x510] sm:$0xff]
    %v4191 = vld [vmem:[%s4 + $0x518] sm:$0xff]
    %v4192 = vld [vmem:[%s4 + $0x520] sm:$0xff]
    %v4193 = vld [vmem:[%s4 + $0x528] sm:$0xff]
    %v4194 = vld [vmem:[%s4 + $0x530] sm:$0xff]
    %v4195 = vld [vmem:[%s4 + $0x538] sm:$0xff]
    %v4196 = vld [vmem:[%s4 + $0x540] sm:$0xff]
    %v4197 = vld [vmem:[%s4 + $0x548] sm:$0xff]
    %v4198 = vld [vmem:[%s4 + $0x550] sm:$0xff]
    %v4199 = vld [vmem:[%s4 + $0x558] sm:$0xff]
    %v4200 = vld [vmem:[%s4 + $0x560] sm:$0xff]
    %v4201 = vld [vmem:[%s4 + $0x568] sm:$0xff]
    %v4202 = vld [vmem:[%s4 + $0x570] sm:$0xff]
    %v4203 = vld [vmem:[%s4 + $0x578] sm:$0xff]
    %v4204 = vld [vmem:[%s4 + $0x580] sm:$0xff]
    %v4205 = vld [vmem:[%s4 + $0x588] sm:$0xff]
    %v4206 = vld [vmem:[%s4 + $0x590] sm:$0xff]
    %v4207 = vld [vmem:[%s4 + $0x598] sm:$0xff]
    %v4208 = vld [vmem:[%s4 + $0x5a0] sm:$0xff]
    %v4209 = vld [vmem:[%s4 + $0x5a8] sm:$0xff]
    %v4210 = vld [vmem:[%s4 + $0x5b0] sm:$0xff]
    %v4211 = vld [vmem:[%s4 + $0x5b8] sm:$0xff]
    %v4212 = vld [vmem:[%s4 + $0x5c0] sm:$0xff]
    %v4213 = vld [vmem:[%s4 + $0x5c8] sm:$0xff]
    %v4214 = vld [vmem:[%s4 + $0x5d0] sm:$0xff]
    %v4215 = vld [vmem:[%s4 + $0x5d8] sm:$0xff]
    %v4216 = vld [vmem:[%s4 + $0x5e0] sm:$0xff]
    %v4217 = vld [vmem:[%s4 + $0x5e8] sm:$0xff]
    %v4218 = vld [vmem:[%s4 + $0x5f0] sm:$0xff]
    %v4219 = vld [vmem:[%s4 + $0x5f8] sm:$0xff]
    %v4220 = vld [vmem:[%s4 + $0x600] sm:$0xff]
    %v4221 = vld [vmem:[%s4 + $0x608] sm:$0xff]
    %v4222 = vld [vmem:[%s4 + $0x610] sm:$0xff]
    %v4223 = vld [vmem:[%s4 + $0x618] sm:$0xff]
    %v4224 = vld [vmem:[%s4 + $0x620] sm:$0xff]
    %v4225 = vld [vmem:[%s4 + $0x628] sm:$0xff]
    %v4226 = vld [vmem:[%s4 + $0x630] sm:$0xff]
    %v4227 = vld [vmem:[%s4 + $0x638] sm:$0xff]
    %v4228 = vld [vmem:[%s4 + $0x640] sm:$0xff]
    %v4229 = vld [vmem:[%s4 + $0x648] sm:$0xff]
    %v4230 = vld [vmem:[%s4 + $0x650] sm:$0xff]
    %v4231 = vld [vmem:[%s4 + $0x658] sm:$0xff]
    %v4232 = vld [vmem:[%s4 + $0x660] sm:$0xff]
    %v4233 = vld [vmem:[%s4 + $0x668] sm:$0xff]
    %v4234 = vld [vmem:[%s4 + $0x670] sm:$0xff]
    %v4235 = vld [vmem:[%s4 + $0x678] sm:$0xff]
    %v4236 = vld [vmem:[%s4 + $0x680] sm:$0xff]
    %v4237 = vld [vmem:[%s4 + $0x688] sm:$0xff]
    %v4238 = vld [vmem:[%s4 + $0x690] sm:$0xff]
    %v4239 = vld [vmem:[%s4 + $0x698] sm:$0xff]
    %v4240 = vld [vmem:[%s4 + $0x6a0] sm:$0xff]
    %v4241 = vld [vmem:[%s4 + $0x6a8] sm:$0xff]
    %v4242 = vld [vmem:[%s4 + $0x6b0] sm:$0xff]
    %v4243 = vld [vmem:[%s4 + $0x6b8] sm:$0xff]
    %v4244 = vld [vmem:[%s4 + $0x6c0] sm:$0xff]
    %v4245 = vld [vmem:[%s4 + $0x6c8] sm:$0xff]
    %v4246 = vld [vmem:[%s4 + $0x6d0] sm:$0xff]
    %v4247 = vld [vmem:[%s4 + $0x6d8] sm:$0xff]
    %v4248 = vld [vmem:[%s4 + $0x6e0] sm:$0xff]
    %v4249 = vld [vmem:[%s4 + $0x6e8] sm:$0xff]
    %v4250 = vld [vmem:[%s4 + $0x6f0] sm:$0xff]
    %v4251 = vld [vmem:[%s4 + $0x6f8] sm:$0xff]
    %v4252 = vld [vmem:[%s4 + $0x700] sm:$0xff]
    %v4253 = vld [vmem:[%s4 + $0x708] sm:$0xff]
    %v4254 = vld [vmem:[%s4 + $0x710] sm:$0xff]
    %v4255 = vld [vmem:[%s4 + $0x718] sm:$0xff]
    %v4256 = vld [vmem:[%s4 + $0x720] sm:$0xff]
    %v4257 = vld [vmem:[%s4 + $0x728] sm:$0xff]
    %v4258 = vld [vmem:[%s4 + $0x730] sm:$0xff]
    %v4259 = vld [vmem:[%s4 + $0x738] sm:$0xff]
    %v4260 = vld [vmem:[%s4 + $0x740] sm:$0xff]
    %v4261 = vld [vmem:[%s4 + $0x748] sm:$0xff]
    %v4262 = vld [vmem:[%s4 + $0x750] sm:$0xff]
    %v4263 = vld [vmem:[%s4 + $0x758] sm:$0xff]
    %v4264 = vld [vmem:[%s4 + $0x760] sm:$0xff]
    %v4265 = vld [vmem:[%s4 + $0x768] sm:$0xff]
    %v4266 = vld [vmem:[%s4 + $0x770] sm:$0xff]
    %v4267 = vld [vmem:[%s4 + $0x778] sm:$0xff]
    %v4268 = vld [vmem:[%s4 + $0x780] sm:$0xff]
    %v4269 = vld [vmem:[%s4 + $0x788] sm:$0xff]
    %v4270 = vld [vmem:[%s4 + $0x790] sm:$0xff]
    %v4271 = vld [vmem:[%s4 + $0x798] sm:$0xff]
    %v4272 = vld [vmem:[%s4 + $0x7a0] sm:$0xff]
    %v4273 = vld [vmem:[%s4 + $0x7a8] sm:$0xff]
    %v4274 = vld [vmem:[%s4 + $0x7b0] sm:$0xff]
    %v4275 = vld [vmem:[%s4 + $0x7b8] sm:$0xff]
    %v4276 = vld [vmem:[%s4 + $0x7c0] sm:$0xff]
    %v4277 = vld [vmem:[%s4 + $0x7c8] sm:$0xff]
    %v4278 = vld [vmem:[%s4 + $0x7d0] sm:$0xff]
    %v4279 = vld [vmem:[%s4 + $0x7d8] sm:$0xff]
    %v4280 = vld [vmem:[%s4 + $0x7e0] sm:$0xff]
    %v4281 = vld [vmem:[%s4 + $0x7e8] sm:$0xff]
    %v4282 = vld [vmem:[%s4 + $0x7f0] sm:$0xff]
    %v4283 = vld [vmem:[%s4 + $0x7f8] sm:$0xff]
    %v4284 = vld [vmem:[%s4 + $0x800] sm:$0xff]
    %v4285 = vld [vmem:[%s4 + $0x808] sm:$0xff]
    %v4286 = vld [vmem:[%s4 + $0x810] sm:$0xff]
    %v4287 = vld [vmem:[%s4 + $0x818] sm:$0xff]
    %v4288 = vld [vmem:[%s4 + $0x820] sm:$0xff]
    %v4289 = vld [vmem:[%s4 + $0x828] sm:$0xff]
    %v4290 = vld [vmem:[%s4 + $0x830] sm:$0xff]
    %v4291 = vld [vmem:[%s4 + $0x838] sm:$0xff]
    %v4292 = vld [vmem:[%s4 + $0x840] sm:$0xff]
    %v4293 = vld [vmem:[%s4 + $0x848] sm:$0xff]
    %v4294 = vld [vmem:[%s4 + $0x850] sm:$0xff]
    %v4295 = vld [vmem:[%s4 + $0x858] sm:$0xff]
    %v4296 = vld [vmem:[%s4 + $0x860] sm:$0xff]
    %v4297 = vld [vmem:[%s4 + $0x868] sm:$0xff]
    %v4298 = vld [vmem:[%s4 + $0x870] sm:$0xff]
    %v4299 = vld [vmem:[%s4 + $0x878] sm:$0xff]
    %v4300 = vld [vmem:[%s4 + $0x880] sm:$0xff]
    %v4301 = vld [vmem:[%s4 + $0x888] sm:$0xff]
    %v4302 = vld [vmem:[%s4 + $0x890] sm:$0xff]
    %v4303 = vld [vmem:[%s4 + $0x898] sm:$0xff]
    %v4304 = vld [vmem:[%s4 + $0x8a0] sm:$0xff]
    %v4305 = vld [vmem:[%s4 + $0x8a8] sm:$0xff]
    %v4306 = vld [vmem:[%s4 + $0x8b0] sm:$0xff]
    %v4307 = vld [vmem:[%s4 + $0x8b8] sm:$0xff]
    %v4308 = vld [vmem:[%s4 + $0x8c0] sm:$0xff]
    %v4309 = vld [vmem:[%s4 + $0x8c8] sm:$0xff]
    %v4310 = vld [vmem:[%s4 + $0x8d0] sm:$0xff]
    %v4311 = vld [vmem:[%s4 + $0x8d8] sm:$0xff]
    %v4312 = vld [vmem:[%s4 + $0x8e0] sm:$0xff]
    %v4313 = vld [vmem:[%s4 + $0x8e8] sm:$0xff]
    %v4314 = vld [vmem:[%s4 + $0x8f0] sm:$0xff]
    %v4315 = vld [vmem:[%s4 + $0x8f8] sm:$0xff]
    %v4316 = vld [vmem:[%s4 + $0x900] sm:$0xff]
    %v4317 = vld [vmem:[%s4 + $0x908] sm:$0xff]
    %v4318 = vld [vmem:[%s4 + $0x910] sm:$0xff]
    %v4319 = vld [vmem:[%s4 + $0x918] sm:$0xff]
    %v4320 = vld [vmem:[%s4 + $0x920] sm:$0xff]
    %v4321 = vld [vmem:[%s4 + $0x928] sm:$0xff]
    %v4322 = vld [vmem:[%s4 + $0x930] sm:$0xff]
    %v4323 = vld [vmem:[%s4 + $0x938] sm:$0xff]
    %v4324 = vld [vmem:[%s4 + $0x940] sm:$0xff]
    %v4325 = vld [vmem:[%s4 + $0x948] sm:$0xff]
    %v4326 = vld [vmem:[%s4 + $0x950] sm:$0xff]
    %v4327 = vld [vmem:[%s4 + $0x958] sm:$0xff]
    %v4328 = vld [vmem:[%s4 + $0x960] sm:$0xff]
    %v4329 = vld [vmem:[%s4 + $0x968] sm:$0xff]
    %v4330 = vld [vmem:[%s4 + $0x970] sm:$0xff]
    %v4331 = vld [vmem:[%s4 + $0x978] sm:$0xff]
    %v4332 = vld [vmem:[%s4 + $0x980] sm:$0xff]
    %v4333 = vld [vmem:[%s4 + $0x988] sm:$0xff]
    %v4334 = vld [vmem:[%s4 + $0x990] sm:$0xff]
    %v4335 = vld [vmem:[%s4 + $0x998] sm:$0xff]
    %v4336 = vld [vmem:[%s4 + $0x9a0] sm:$0xff]
    %v4337 = vld [vmem:[%s4 + $0x9a8] sm:$0xff]
    %v4338 = vld [vmem:[%s4 + $0x9b0] sm:$0xff]
    %v4339 = vld [vmem:[%s4 + $0x9b8] sm:$0xff]
    %v4340 = vld [vmem:[%s4 + $0x9c0] sm:$0xff]
    %v4341 = vld [vmem:[%s4 + $0x9c8] sm:$0xff]
    %v4342 = vld [vmem:[%s4 + $0x9d0] sm:$0xff]
    %v4343 = vld [vmem:[%s4 + $0x9d8] sm:$0xff]
    %v4344 = vld [vmem:[%s4 + $0x9e0] sm:$0xff]
    %v4345 = vld [vmem:[%s4 + $0x9e8] sm:$0xff]
    %v4346 = vld [vmem:[%s4 + $0x9f0] sm:$0xff]
    %v4347 = vld [vmem:[%s4 + $0x9f8] sm:$0xff]
    %v4348 = vld [vmem:[%s4 + $0xa00] sm:$0xff]
    %v4349 = vld [vmem:[%s4 + $0xa08] sm:$0xff]
    %v4350 = vld [vmem:[%s4 + $0xa10] sm:$0xff]
    %v4351 = vld [vmem:[%s4 + $0xa18] sm:$0xff]
    %v4352 = vld [vmem:[%s4 + $0xa20] sm:$0xff]
    %v4353 = vld [vmem:[%s4 + $0xa28] sm:$0xff]
    %v4354 = vld [vmem:[%s4 + $0xa30] sm:$0xff]
    %v4355 = vld [vmem:[%s4 + $0xa38] sm:$0xff]
    %v4356 = vld [vmem:[%s4 + $0xa40] sm:$0xff]
    %v4357 = vld [vmem:[%s4 + $0xa48] sm:$0xff]
    %v4358 = vld [vmem:[%s4 + $0xa50] sm:$0xff]
    %v4359 = vld [vmem:[%s4 + $0xa58] sm:$0xff]
    %v4360 = vld [vmem:[%s4 + $0xa60] sm:$0xff]
    %v4361 = vld [vmem:[%s4 + $0xa68] sm:$0xff]
    %v4362 = vld [vmem:[%s4 + $0xa70] sm:$0xff]
    %v4363 = vld [vmem:[%s4 + $0xa78] sm:$0xff]
    %v4364 = vld [vmem:[%s4 + $0xa80] sm:$0xff]
    %v4365 = vld [vmem:[%s4 + $0xa88] sm:$0xff]
    %v4366 = vld [vmem:[%s4 + $0xa90] sm:$0xff]
    %v4367 = vld [vmem:[%s4 + $0xa98] sm:$0xff]
    %v4368 = vld [vmem:[%s4 + $0xaa0] sm:$0xff]
    %v4369 = vld [vmem:[%s4 + $0xaa8] sm:$0xff]
    %v4370 = vld [vmem:[%s4 + $0xab0] sm:$0xff]
    %v4371 = vld [vmem:[%s4 + $0xab8] sm:$0xff]
    %v4372 = vld [vmem:[%s4 + $0xac0] sm:$0xff]
    %v4373 = vld [vmem:[%s4 + $0xac8] sm:$0xff]
    %v4374 = vld [vmem:[%s4 + $0xad0] sm:$0xff]
    %v4375 = vld [vmem:[%s4 + $0xad8] sm:$0xff]
    %v4376 = vld [vmem:[%s4 + $0xae0] sm:$0xff]
    %v4377 = vld [vmem:[%s4 + $0xae8] sm:$0xff]
    %v4378 = vld [vmem:[%s4 + $0xaf0] sm:$0xff]
    %v4379 = vld [vmem:[%s4 + $0xaf8] sm:$0xff]
    %v4380 = vld [vmem:[%s4 + $0xb00] sm:$0xff]
    %v4381 = vld [vmem:[%s4 + $0xb08] sm:$0xff]
    %v4382 = vld [vmem:[%s4 + $0xb10] sm:$0xff]
    %v4383 = vld [vmem:[%s4 + $0xb18] sm:$0xff]
    %v4384 = vld [vmem:[%s4 + $0xb20] sm:$0xff]
    %v4385 = vld [vmem:[%s4 + $0xb28] sm:$0xff]
    %v4386 = vld [vmem:[%s4 + $0xb30] sm:$0xff]
    %v4387 = vld [vmem:[%s4 + $0xb38] sm:$0xff]
    %v4388 = vld [vmem:[%s4 + $0xb40] sm:$0xff]
    %v4389 = vld [vmem:[%s4 + $0xb48] sm:$0xff]
    %v4390 = vld [vmem:[%s4 + $0xb50] sm:$0xff]
    %v4391 = vld [vmem:[%s4 + $0xb58] sm:$0xff]
    %v4392 = vld [vmem:[%s4 + $0xb60] sm:$0xff]
    %v4393 = vld [vmem:[%s4 + $0xb68] sm:$0xff]
    %v4394 = vld [vmem:[%s4 + $0xb70] sm:$0xff]
    %v4395 = vld [vmem:[%s4 + $0xb78] sm:$0xff]
    %v4396 = vld [vmem:[%s4 + $0xb80] sm:$0xff]
    %v4397 = vld [vmem:[%s4 + $0xb88] sm:$0xff]
    %v4398 = vld [vmem:[%s4 + $0xb90] sm:$0xff]
    %v4399 = vld [vmem:[%s4 + $0xb98] sm:$0xff]
    %v4400 = vld [vmem:[%s4 + $0xba0] sm:$0xff]
    %v4401 = vld [vmem:[%s4 + $0xba8] sm:$0xff]
    %v4402 = vld [vmem:[%s4 + $0xbb0] sm:$0xff]
    %v4403 = vld [vmem:[%s4 + $0xbb8] sm:$0xff]
    %v4404 = vld [vmem:[%s4 + $0xbc0] sm:$0xff]
    %v4405 = vld [vmem:[%s4 + $0xbc8] sm:$0xff]
    %v4406 = vld [vmem:[%s4 + $0xbd0] sm:$0xff]
    %v4407 = vld [vmem:[%s4 + $0xbd8] sm:$0xff]
    %v4408 = vld [vmem:[%s4 + $0xbe0] sm:$0xff]
    %v4409 = vld [vmem:[%s4 + $0xbe8] sm:$0xff]
    %v4410 = vld [vmem:[%s4 + $0xbf0] sm:$0xff]
    %v4411 = vld [vmem:[%s4 + $0xbf8] sm:$0xff]
    %v4412 = vld [vmem:[%s4 + $0xc00] sm:$0xff]
    %v4413 = vld [vmem:[%s4 + $0xc08] sm:$0xff]
    %v4414 = vld [vmem:[%s4 + $0xc10] sm:$0xff]
    %v4415 = vld [vmem:[%s4 + $0xc18] sm:$0xff]
    %v4416 = vld [vmem:[%s4 + $0xc20] sm:$0xff]
    %v4417 = vld [vmem:[%s4 + $0xc28] sm:$0xff]
    %v4418 = vld [vmem:[%s4 + $0xc30] sm:$0xff]
    %v4419 = vld [vmem:[%s4 + $0xc38] sm:$0xff]
    %v4420 = vld [vmem:[%s4 + $0xc40] sm:$0xff]
    %v4421 = vld [vmem:[%s4 + $0xc48] sm:$0xff]
    %v4422 = vld [vmem:[%s4 + $0xc50] sm:$0xff]
    %v4423 = vld [vmem:[%s4 + $0xc58] sm:$0xff]
    %v4424 = vld [vmem:[%s4 + $0xc60] sm:$0xff]
    %v4425 = vld [vmem:[%s4 + $0xc68] sm:$0xff]
    %v4426 = vld [vmem:[%s4 + $0xc70] sm:$0xff]
    %v4427 = vld [vmem:[%s4 + $0xc78] sm:$0xff]
    %v4428 = vld [vmem:[%s4 + $0xc80] sm:$0xff]
    %v4429 = vld [vmem:[%s4 + $0xc88] sm:$0xff]
    %v4430 = vld [vmem:[%s4 + $0xc90] sm:$0xff]
    %v4431 = vld [vmem:[%s4 + $0xc98] sm:$0xff]
    %v4432 = vld [vmem:[%s4 + $0xca0] sm:$0xff]
    %v4433 = vld [vmem:[%s4 + $0xca8] sm:$0xff]
    %v4434 = vld [vmem:[%s4 + $0xcb0] sm:$0xff]
    %v4435 = vld [vmem:[%s4 + $0xcb8] sm:$0xff]
    %v4436 = vld [vmem:[%s4 + $0xcc0] sm:$0xff]
    %v4437 = vld [vmem:[%s4 + $0xcc8] sm:$0xff]
    %v4438 = vld [vmem:[%s4 + $0xcd0] sm:$0xff]
    %v4439 = vld [vmem:[%s4 + $0xcd8] sm:$0xff]
    %v4440 = vld [vmem:[%s4 + $0xce0] sm:$0xff]
    %v4441 = vld [vmem:[%s4 + $0xce8] sm:$0xff]
    %v4442 = vld [vmem:[%s4 + $0xcf0] sm:$0xff]
    %v4443 = vld [vmem:[%s4 + $0xcf8] sm:$0xff]
    %v4444 = vld [vmem:[%s4 + $0xd00] sm:$0xff]
    %v4445 = vld [vmem:[%s4 + $0xd08] sm:$0xff]
    %v4446 = vld [vmem:[%s4 + $0xd10] sm:$0xff]
    %v4447 = vld [vmem:[%s4 + $0xd18] sm:$0xff]
    %v4448 = vld [vmem:[%s4 + $0xd20] sm:$0xff]
    %v4449 = vld [vmem:[%s4 + $0xd28] sm:$0xff]
    %v4450 = vld [vmem:[%s4 + $0xd30] sm:$0xff]
    %v4451 = vld [vmem:[%s4 + $0xd38] sm:$0xff]
    %v4452 = vld [vmem:[%s4 + $0xd40] sm:$0xff]
    %v4453 = vld [vmem:[%s4 + $0xd48] sm:$0xff]
    %v4454 = vld [vmem:[%s4 + $0xd50] sm:$0xff]
    %v4455 = vld [vmem:[%s4 + $0xd58] sm:$0xff]
    %v4456 = vld [vmem:[%s4 + $0xd60] sm:$0xff]
    %v4457 = vld [vmem:[%s4 + $0xd68] sm:$0xff]
    %v4458 = vld [vmem:[%s4 + $0xd70] sm:$0xff]
    %v4459 = vld [vmem:[%s4 + $0xd78] sm:$0xff]
    %v4460 = vld [vmem:[%s4 + $0xd80] sm:$0xff]
    %v4461 = vld [vmem:[%s4 + $0xd88] sm:$0xff]
    %v4462 = vld [vmem:[%s4 + $0xd90] sm:$0xff]
    %v4463 = vld [vmem:[%s4 + $0xd98] sm:$0xff]
    %v4464 = vld [vmem:[%s4 + $0xda0] sm:$0xff]
    %v4465 = vld [vmem:[%s4 + $0xda8] sm:$0xff]
    %v4466 = vld [vmem:[%s4 + $0xdb0] sm:$0xff]
    %v4467 = vld [vmem:[%s4 + $0xdb8] sm:$0xff]
    %v4468 = vld [vmem:[%s4 + $0xdc0] sm:$0xff]
    %v4469 = vld [vmem:[%s4 + $0xdc8] sm:$0xff]
    %v4470 = vld [vmem:[%s4 + $0xdd0] sm:$0xff]
    %v4471 = vld [vmem:[%s4 + $0xdd8] sm:$0xff]
    %v4472 = vld [vmem:[%s4 + $0xde0] sm:$0xff]
    %v4473 = vld [vmem:[%s4 + $0xde8] sm:$0xff]
    %v4474 = vld [vmem:[%s4 + $0xdf0] sm:$0xff]
    %v4475 = vld [vmem:[%s4 + $0xdf8] sm:$0xff]
    %v4476 = vld [vmem:[%s4 + $0xe00] sm:$0xff]
    %v4477 = vld [vmem:[%s4 + $0xe08] sm:$0xff]
    %v4478 = vld [vmem:[%s4 + $0xe10] sm:$0xff]
    %v4479 = vld [vmem:[%s4 + $0xe18] sm:$0xff]
    %v4480 = vld [vmem:[%s4 + $0xe20] sm:$0xff]
    %v4481 = vld [vmem:[%s4 + $0xe28] sm:$0xff]
    %v4482 = vld [vmem:[%s4 + $0xe30] sm:$0xff]
    %v4483 = vld [vmem:[%s4 + $0xe38] sm:$0xff]
    %v4484 = vld [vmem:[%s4 + $0xe40] sm:$0xff]
    %v4485 = vld [vmem:[%s4 + $0xe48] sm:$0xff]
    %v4486 = vld [vmem:[%s4 + $0xe50] sm:$0xff]
    %v4487 = vld [vmem:[%s4 + $0xe58] sm:$0xff]
    %v4488 = vld [vmem:[%s4 + $0xe60] sm:$0xff]
    %v4489 = vld [vmem:[%s4 + $0xe68] sm:$0xff]
    %v4490 = vld [vmem:[%s4 + $0xe70] sm:$0xff]
    %v4491 = vld [vmem:[%s4 + $0xe78] sm:$0xff]
    %v4492 = vld [vmem:[%s4 + $0xe80] sm:$0xff]
    %v4493 = vld [vmem:[%s4 + $0xe88] sm:$0xff]
    %v4494 = vld [vmem:[%s4 + $0xe90] sm:$0xff]
    %v4495 = vld [vmem:[%s4 + $0xe98] sm:$0xff]
    %v4496 = vld [vmem:[%s4 + $0xea0] sm:$0xff]
    %v4497 = vld [vmem:[%s4 + $0xea8] sm:$0xff]
    %v4498 = vld [vmem:[%s4 + $0xeb0] sm:$0xff]
    %v4499 = vld [vmem:[%s4 + $0xeb8] sm:$0xff]
    %v4500 = vld [vmem:[%s4 + $0xec0] sm:$0xff]
    %v4501 = vld [vmem:[%s4 + $0xec8] sm:$0xff]
    %v4502 = vld [vmem:[%s4 + $0xed0] sm:$0xff]
    %v4503 = vld [vmem:[%s4 + $0xed8] sm:$0xff]
    %v4504 = vld [vmem:[%s4 + $0xee0] sm:$0xff]
    %v4505 = vld [vmem:[%s4 + $0xee8] sm:$0xff]
    %v4506 = vld [vmem:[%s4 + $0xef0] sm:$0xff]
    %v4507 = vld [vmem:[%s4 + $0xef8] sm:$0xff]
    %v4508 = vld [vmem:[%s4 + $0xf00] sm:$0xff]
    %v4509 = vld [vmem:[%s4 + $0xf08] sm:$0xff]
    %v4510 = vld [vmem:[%s4 + $0xf10] sm:$0xff]
    %v4511 = vld [vmem:[%s4 + $0xf18] sm:$0xff]
    %v4512 = vld [vmem:[%s4 + $0xf20] sm:$0xff]
    %v4513 = vld [vmem:[%s4 + $0xf28] sm:$0xff]
    %v4514 = vld [vmem:[%s4 + $0xf30] sm:$0xff]
    %v4515 = vld [vmem:[%s4 + $0xf38] sm:$0xff]
    %v4516 = vld [vmem:[%s4 + $0xf40] sm:$0xff]
    %v4517 = vld [vmem:[%s4 + $0xf48] sm:$0xff]
    %v4518 = vld [vmem:[%s4 + $0xf50] sm:$0xff]
    %v4519 = vld [vmem:[%s4 + $0xf58] sm:$0xff]
    %v4520 = vld [vmem:[%s4 + $0xf60] sm:$0xff]
    %v4521 = vld [vmem:[%s4 + $0xf68] sm:$0xff]
    %v4522 = vld [vmem:[%s4 + $0xf70] sm:$0xff]
    %v4523 = vld [vmem:[%s4 + $0xf78] sm:$0xff]
    %v4524 = vld [vmem:[%s4 + $0xf80] sm:$0xff]
    %v4525 = vld [vmem:[%s4 + $0xf88] sm:$0xff]
    %v4526 = vld [vmem:[%s4 + $0xf90] sm:$0xff]
    %v4527 = vld [vmem:[%s4 + $0xf98] sm:$0xff]
    %v4528 = vld [vmem:[%s4 + $0xfa0] sm:$0xff]
    %v4529 = vld [vmem:[%s4 + $0xfa8] sm:$0xff]
    %v4530 = vld [vmem:[%s4 + $0xfb0] sm:$0xff]
    %v4531 = vld [vmem:[%s4 + $0xfb8] sm:$0xff]
    %v4532 = vld [vmem:[%s4 + $0xfc0] sm:$0xff]
    %v4533 = vld [vmem:[%s4 + $0xfc8] sm:$0xff]
    %v4534 = vld [vmem:[%s4 + $0xfd0] sm:$0xff]
    %v4535 = vld [vmem:[%s4 + $0xfd8] sm:$0xff]
    %v4536 = vld [vmem:[%s4 + $0xfe0] sm:$0xff]
    %v4537 = vld [vmem:[%s4 + $0xfe8] sm:$0xff]
    %v4538 = vld [vmem:[%s4 + $0xff0] sm:$0xff]
    %v4539 = vld [vmem:[%s4 + $0xff8] sm:$0xff]
    %v4540 = vld [vmem:[%s4 + $0x1000] sm:$0xff]
    %v4541 = vld [vmem:[%s4 + $0x1008] sm:$0xff]
    %v4542 = vld [vmem:[%s4 + $0x1010] sm:$0xff]
    %v4543 = vld [vmem:[%s4 + $0x1018] sm:$0xff]
    %v4544 = vld [vmem:[%s4 + $0x1020] sm:$0xff]
    %v4545 = vld [vmem:[%s4 + $0x1028] sm:$0xff]
    %v4546 = vld [vmem:[%s4 + $0x1030] sm:$0xff]
    %v4547 = vld [vmem:[%s4 + $0x1038] sm:$0xff]
    %v4548 = vld [vmem:[%s4 + $0x1040] sm:$0xff]
    %v4549 = vld [vmem:[%s4 + $0x1048] sm:$0xff]
    %v4550 = vld [vmem:[%s4 + $0x1050] sm:$0xff]
    %v4551 = vld [vmem:[%s4 + $0x1058] sm:$0xff]
    %v4552 = vld [vmem:[%s4 + $0x1060] sm:$0xff]
    %v4553 = vld [vmem:[%s4 + $0x1068] sm:$0xff]
    %v4554 = vld [vmem:[%s4 + $0x1070] sm:$0xff]
    %v4555 = vld [vmem:[%s4 + $0x1078] sm:$0xff]
    %v4556 = vld [vmem:[%s4 + $0x1080] sm:$0xff]
    %v4557 = vld [vmem:[%s4 + $0x1088] sm:$0xff]
    %v4558 = vld [vmem:[%s4 + $0x1090] sm:$0xff]
    %v4559 = vld [vmem:[%s4 + $0x1098] sm:$0xff]
    %v4560 = vld [vmem:[%s4 + $0x10a0] sm:$0xff]
    %v4561 = vld [vmem:[%s4 + $0x10a8] sm:$0xff]
    %v4562 = vld [vmem:[%s4 + $0x10b0] sm:$0xff]
    %v4563 = vld [vmem:[%s4 + $0x10b8] sm:$0xff]
    %v4564 = vld [vmem:[%s4 + $0x10c0] sm:$0xff]
    %v4565 = vld [vmem:[%s4 + $0x10c8] sm:$0xff]
    %v4566 = vld [vmem:[%s4 + $0x10d0] sm:$0xff]
    %v4567 = vld [vmem:[%s4 + $0x10d8] sm:$0xff]
    %v4568 = vld [vmem:[%s4 + $0x10e0] sm:$0xff]
    %v4569 = vld [vmem:[%s4 + $0x10e8] sm:$0xff]
    %v4570 = vld [vmem:[%s4 + $0x10f0] sm:$0xff]
    %v4571 = vld [vmem:[%s4 + $0x10f8] sm:$0xff]
    %v4572 = vld [vmem:[%s4 + $0x1100] sm:$0xff]
    %v4573 = vld [vmem:[%s4 + $0x1108] sm:$0xff]
    %v4574 = vld [vmem:[%s4 + $0x1110] sm:$0xff]
    %v4575 = vld [vmem:[%s4 + $0x1118] sm:$0xff]
    %v4576 = vld [vmem:[%s4 + $0x1120] sm:$0xff]
    %v4577 = vld [vmem:[%s4 + $0x1128] sm:$0xff]
    %v4578 = vld [vmem:[%s4 + $0x1130] sm:$0xff]
    %v4579 = vld [vmem:[%s4 + $0x1138] sm:$0xff]
    %v4580 = vld [vmem:[%s4 + $0x1140] sm:$0xff]
    %v4581 = vld [vmem:[%s4 + $0x1148] sm:$0xff]
    %v4582 = vld [vmem:[%s4 + $0x1150] sm:$0xff]
    %v4583 = vld [vmem:[%s4 + $0x1158] sm:$0xff]
    %v4584 = vld [vmem:[%s4 + $0x1160] sm:$0xff]
    %v4585 = vld [vmem:[%s4 + $0x1168] sm:$0xff]
    %v4586 = vld [vmem:[%s4 + $0x1170] sm:$0xff]
    %v4587 = vld [vmem:[%s4 + $0x1178] sm:$0xff]
    %v4588 = vld [vmem:[%s4 + $0x1180] sm:$0xff]
    %v4589 = vld [vmem:[%s4 + $0x1188] sm:$0xff]
    %v4590 = vld [vmem:[%s4 + $0x1190] sm:$0xff]
    %v4591 = vld [vmem:[%s4 + $0x1198] sm:$0xff]
    %v4592 = vld [vmem:[%s4 + $0x11a0] sm:$0xff]
    %v4593 = vld [vmem:[%s4 + $0x11a8] sm:$0xff]
    %v4594 = vld [vmem:[%s4 + $0x11b0] sm:$0xff]
    %v4595 = vld [vmem:[%s4 + $0x11b8] sm:$0xff]
    %v4596 = vld [vmem:[%s4 + $0x11c0] sm:$0xff]
    %v4597 = vld [vmem:[%s4 + $0x11c8] sm:$0xff]
    %v4598 = vld [vmem:[%s4 + $0x11d0] sm:$0xff]
    %v4599 = vld [vmem:[%s4 + $0x11d8] sm:$0xff]
    %v4600 = vld [vmem:[%s4 + $0x11e0] sm:$0xff]
    %v4601 = vld [vmem:[%s4 + $0x11e8] sm:$0xff]
    %v4602 = vld [vmem:[%s4 + $0x11f0] sm:$0xff]
    %v4603 = vld [vmem:[%s4 + $0x11f8] sm:$0xff]
    %v4604 = vld [vmem:[%s4 + $0x1200] sm:$0xff]
    %v4605 = vld [vmem:[%s4 + $0x1208] sm:$0xff]
    %v4606 = vld [vmem:[%s4 + $0x1210] sm:$0xff]
    %v4607 = vld [vmem:[%s4 + $0x1218] sm:$0xff]
    %v4608 = vld [vmem:[%s4 + $0x1220] sm:$0xff]
    %v4609 = vld [vmem:[%s4 + $0x1228] sm:$0xff]
    %v4610 = vld [vmem:[%s4 + $0x1230] sm:$0xff]
    %v4611 = vld [vmem:[%s4 + $0x1238] sm:$0xff]
    %v4612 = vld [vmem:[%s4 + $0x1240] sm:$0xff]
    %v4613 = vld [vmem:[%s4 + $0x1248] sm:$0xff]
    %v4614 = vld [vmem:[%s4 + $0x1250] sm:$0xff]
    %v4615 = vld [vmem:[%s4 + $0x1258] sm:$0xff]
    %v4616 = vld [vmem:[%s4 + $0x1260] sm:$0xff]
    %v4617 = vld [vmem:[%s4 + $0x1268] sm:$0xff]
    %v4618 = vld [vmem:[%s4 + $0x1270] sm:$0xff]
    %v4619 = vld [vmem:[%s4 + $0x1278] sm:$0xff]
    %v4620 = vld [vmem:[%s4 + $0x1280] sm:$0xff]
    %v4621 = vld [vmem:[%s4 + $0x1288] sm:$0xff]
    %v4622 = vld [vmem:[%s4 + $0x1290] sm:$0xff]
    %v4623 = vld [vmem:[%s4 + $0x1298] sm:$0xff]
    %v4624 = vld [vmem:[%s4 + $0x12a0] sm:$0xff]
    %v4625 = vld [vmem:[%s4 + $0x12a8] sm:$0xff]
    %v4626 = vld [vmem:[%s4 + $0x12b0] sm:$0xff]
    %v4627 = vld [vmem:[%s4 + $0x12b8] sm:$0xff]
    %v4628 = vld [vmem:[%s4 + $0x12c0] sm:$0xff]
    %v4629 = vld [vmem:[%s4 + $0x12c8] sm:$0xff]
    %v4630 = vld [vmem:[%s4 + $0x12d0] sm:$0xff]
    %v4631 = vld [vmem:[%s4 + $0x12d8] sm:$0xff]
    %v4632 = vld [vmem:[%s4 + $0x12e0] sm:$0xff]
    %v4633 = vld [vmem:[%s4 + $0x12e8] sm:$0xff]
    %v4634 = vld [vmem:[%s4 + $0x12f0] sm:$0xff]
    %v4635 = vld [vmem:[%s4 + $0x12f8] sm:$0xff]
    %v4636 = vld [vmem:[%s4 + $0x1300] sm:$0xff]
    %v4637 = vld [vmem:[%s4 + $0x1308] sm:$0xff]
    %v4638 = vld [vmem:[%s4 + $0x1310] sm:$0xff]
    %v4639 = vld [vmem:[%s4 + $0x1318] sm:$0xff]
    %v4640 = vld [vmem:[%s4 + $0x1320] sm:$0xff]
    %v4641 = vld [vmem:[%s4 + $0x1328] sm:$0xff]
    %v4642 = vld [vmem:[%s4 + $0x1330] sm:$0xff]
    %v4643 = vld [vmem:[%s4 + $0x1338] sm:$0xff]
    %v4644 = vld [vmem:[%s4 + $0x1340] sm:$0xff]
    %v4645 = vld [vmem:[%s4 + $0x1348] sm:$0xff]
    %v4646 = vld [vmem:[%s4 + $0x1350] sm:$0xff]
    %v4647 = vld [vmem:[%s4 + $0x1358] sm:$0xff]
    %v4648 = vld [vmem:[%s4 + $0x1360] sm:$0xff]
    %v4649 = vld [vmem:[%s4 + $0x1368] sm:$0xff]
    %v4650 = vld [vmem:[%s4 + $0x1370] sm:$0xff]
    %v4651 = vld [vmem:[%s4 + $0x1378] sm:$0xff]
    %v4652 = vld [vmem:[%s4 + $0x1380] sm:$0xff]
    %v4653 = vld [vmem:[%s4 + $0x1388] sm:$0xff]
    %v4654 = vld [vmem:[%s4 + $0x1390] sm:$0xff]
    %v4655 = vld [vmem:[%s4 + $0x1398] sm:$0xff]
    %v4656 = vld [vmem:[%s4 + $0x13a0] sm:$0xff]
    %v4657 = vld [vmem:[%s4 + $0x13a8] sm:$0xff]
    %v4658 = vld [vmem:[%s4 + $0x13b0] sm:$0xff]
    %v4659 = vld [vmem:[%s4 + $0x13b8] sm:$0xff]
    %v4660 = vld [vmem:[%s4 + $0x13c0] sm:$0xff]
    %v4661 = vld [vmem:[%s4 + $0x13c8] sm:$0xff]
    %v4662 = vld [vmem:[%s4 + $0x13d0] sm:$0xff]
    %v4663 = vld [vmem:[%s4 + $0x13d8] sm:$0xff]
    %v4664 = vld [vmem:[%s4 + $0x13e0] sm:$0xff]
    %v4665 = vld [vmem:[%s4 + $0x13e8] sm:$0xff]
    %v4666 = vld [vmem:[%s4 + $0x13f0] sm:$0xff]
    %v4667 = vld [vmem:[%s4 + $0x13f8] sm:$0xff]
    %v4668 = vld [vmem:[%s4 + $0x1400] sm:$0xff]
    %v4669 = vld [vmem:[%s4 + $0x1408] sm:$0xff]
    %v4670 = vld [vmem:[%s4 + $0x1410] sm:$0xff]
    %v4671 = vld [vmem:[%s4 + $0x1418] sm:$0xff]
    %v4672 = vld [vmem:[%s4 + $0x1420] sm:$0xff]
    %v4673 = vld [vmem:[%s4 + $0x1428] sm:$0xff]
    %v4674 = vld [vmem:[%s4 + $0x1430] sm:$0xff]
    %v4675 = vld [vmem:[%s4 + $0x1438] sm:$0xff]
    %v4676 = vld [vmem:[%s4 + $0x1440] sm:$0xff]
    %v4677 = vld [vmem:[%s4 + $0x1448] sm:$0xff]
    %v4678 = vld [vmem:[%s4 + $0x1450] sm:$0xff]
    %v4679 = vld [vmem:[%s4 + $0x1458] sm:$0xff]
    %v4680 = vld [vmem:[%s4 + $0x1460] sm:$0xff]
    %v4681 = vld [vmem:[%s4 + $0x1468] sm:$0xff]
    %v4682 = vld [vmem:[%s4 + $0x1470] sm:$0xff]
    %v4683 = vld [vmem:[%s4 + $0x1478] sm:$0xff]
    %v4684 = vld [vmem:[%s4 + $0x1480] sm:$0xff]
    %v4685 = vld [vmem:[%s4 + $0x1488] sm:$0xff]
    %v4686 = vld [vmem:[%s4 + $0x1490] sm:$0xff]
    %v4687 = vld [vmem:[%s4 + $0x1498] sm:$0xff]
    %v4688 = vld [vmem:[%s4 + $0x14a0] sm:$0xff]
    %v4689 = vld [vmem:[%s4 + $0x14a8] sm:$0xff]
    %v4690 = vld [vmem:[%s4 + $0x14b0] sm:$0xff]
    %v4691 = vld [vmem:[%s4 + $0x14b8] sm:$0xff]
    %v4692 = vld [vmem:[%s4 + $0x14c0] sm:$0xff]
    %v4693 = vld [vmem:[%s4 + $0x14c8] sm:$0xff]
    %v4694 = vld [vmem:[%s4 + $0x14d0] sm:$0xff]
    %v4695 = vld [vmem:[%s4 + $0x14d8] sm:$0xff]
    %v4696 = vld [vmem:[%s4 + $0x14e0] sm:$0xff]
    %v4697 = vld [vmem:[%s4 + $0x14e8] sm:$0xff]
    %v4698 = vld [vmem:[%s4 + $0x14f0] sm:$0xff]
    %v4699 = vld [vmem:[%s4 + $0x14f8] sm:$0xff]
    %v4700 = vld [vmem:[%s4 + $0x1500] sm:$0xff]
    %v4701 = vld [vmem:[%s4 + $0x1508] sm:$0xff]
    %v4702 = vld [vmem:[%s4 + $0x1510] sm:$0xff]
    %v4703 = vld [vmem:[%s4 + $0x1518] sm:$0xff]
    %v4704 = vld [vmem:[%s4 + $0x1520] sm:$0xff]
    %v4705 = vld [vmem:[%s4 + $0x1528] sm:$0xff]
    %v4706 = vld [vmem:[%s4 + $0x1530] sm:$0xff]
    %v4707 = vld [vmem:[%s4 + $0x1538] sm:$0xff]
    %v4708 = vld [vmem:[%s4 + $0x1540] sm:$0xff]
    %v4709 = vld [vmem:[%s4 + $0x1548] sm:$0xff]
    %v4710 = vld [vmem:[%s4 + $0x1550] sm:$0xff]
    %v4711 = vld [vmem:[%s4 + $0x1558] sm:$0xff]
    %v4712 = vld [vmem:[%s4 + $0x1560] sm:$0xff]
    %v4713 = vld [vmem:[%s4 + $0x1568] sm:$0xff]
    %v4714 = vld [vmem:[%s4 + $0x1570] sm:$0xff]
    %v4715 = vld [vmem:[%s4 + $0x1578] sm:$0xff]
    %v4716 = vld [vmem:[%s4 + $0x1580] sm:$0xff]
    %v4717 = vld [vmem:[%s4 + $0x1588] sm:$0xff]
    %v4718 = vld [vmem:[%s4 + $0x1590] sm:$0xff]
    %v4719 = vld [vmem:[%s4 + $0x1598] sm:$0xff]
    %v4720 = vld [vmem:[%s4 + $0x15a0] sm:$0xff]
    %v4721 = vld [vmem:[%s4 + $0x15a8] sm:$0xff]
    %v4722 = vld [vmem:[%s4 + $0x15b0] sm:$0xff]
    %v4723 = vld [vmem:[%s4 + $0x15b8] sm:$0xff]
    %v4724 = vld [vmem:[%s4 + $0x15c0] sm:$0xff]
    %v4725 = vld [vmem:[%s4 + $0x15c8] sm:$0xff]
    %v4726 = vld [vmem:[%s4 + $0x15d0] sm:$0xff]
    %v4727 = vld [vmem:[%s4 + $0x15d8] sm:$0xff]
    %v4728 = vld [vmem:[%s4 + $0x15e0] sm:$0xff]
    %v4729 = vld [vmem:[%s4 + $0x15e8] sm:$0xff]
    %v4730 = vld [vmem:[%s4 + $0x15f0] sm:$0xff]
    %v4731 = vld [vmem:[%s4 + $0x15f8] sm:$0xff]
    %v4732 = vld [vmem:[%s4 + $0x1600] sm:$0xff]
    %v4733 = vld [vmem:[%s4 + $0x1608] sm:$0xff]
    %v4734 = vld [vmem:[%s4 + $0x1610] sm:$0xff]
    %v4735 = vld [vmem:[%s4 + $0x1618] sm:$0xff]
    %v4736 = vld [vmem:[%s4 + $0x1620] sm:$0xff]
    %v4737 = vld [vmem:[%s4 + $0x1628] sm:$0xff]
    %v4738 = vld [vmem:[%s4 + $0x1630] sm:$0xff]
    %v4739 = vld [vmem:[%s4 + $0x1638] sm:$0xff]
    %v4740 = vld [vmem:[%s4 + $0x1640] sm:$0xff]
    %v4741 = vld [vmem:[%s4 + $0x1648] sm:$0xff]
    %v4742 = vld [vmem:[%s4 + $0x1650] sm:$0xff]
    %v4743 = vld [vmem:[%s4 + $0x1658] sm:$0xff]
    %v4744 = vld [vmem:[%s4 + $0x1660] sm:$0xff]
    %v4745 = vld [vmem:[%s4 + $0x1668] sm:$0xff]
    %v4746 = vld [vmem:[%s4 + $0x1670] sm:$0xff]
    %v4747 = vld [vmem:[%s4 + $0x1678] sm:$0xff]
    %v4748 = vld [vmem:[%s4 + $0x1680] sm:$0xff]
    %v4749 = vld [vmem:[%s4 + $0x1688] sm:$0xff]
    %v4750 = vld [vmem:[%s4 + $0x1690] sm:$0xff]
    %v4751 = vld [vmem:[%s4 + $0x1698] sm:$0xff]
    %v4752 = vld [vmem:[%s4 + $0x16a0] sm:$0xff]
    %v4753 = vld [vmem:[%s4 + $0x16a8] sm:$0xff]
    %v4754 = vld [vmem:[%s4 + $0x16b0] sm:$0xff]
    %v4755 = vld [vmem:[%s4 + $0x16b8] sm:$0xff]
    %v4756 = vld [vmem:[%s4 + $0x16c0] sm:$0xff]
    %v4757 = vld [vmem:[%s4 + $0x16c8] sm:$0xff]
    %v4758 = vld [vmem:[%s4 + $0x16d0] sm:$0xff]
    %v4759 = vld [vmem:[%s4 + $0x16d8] sm:$0xff]
    %v4760 = vld [vmem:[%s4 + $0x16e0] sm:$0xff]
    %v4761 = vld [vmem:[%s4 + $0x16e8] sm:$0xff]
    %v4762 = vld [vmem:[%s4 + $0x16f0] sm:$0xff]
    %v4763 = vld [vmem:[%s4 + $0x16f8] sm:$0xff]
    %v4764 = vld [vmem:[%s4 + $0x1700] sm:$0xff]
    %v4765 = vld [vmem:[%s4 + $0x1708] sm:$0xff]
    %v4766 = vld [vmem:[%s4 + $0x1710] sm:$0xff]
    %v4767 = vld [vmem:[%s4 + $0x1718] sm:$0xff]
    %v4768 = vld [vmem:[%s4 + $0x1720] sm:$0xff]
    %v4769 = vld [vmem:[%s4 + $0x1728] sm:$0xff]
    %v4770 = vld [vmem:[%s4 + $0x1730] sm:$0xff]
    %v4771 = vld [vmem:[%s4 + $0x1738] sm:$0xff]
    %v4772 = vld [vmem:[%s4 + $0x1740] sm:$0xff]
    %v4773 = vld [vmem:[%s4 + $0x1748] sm:$0xff]
    %v4774 = vld [vmem:[%s4 + $0x1750] sm:$0xff]
    %v4775 = vld [vmem:[%s4 + $0x1758] sm:$0xff]
    %v4776 = vld [vmem:[%s4 + $0x1760] sm:$0xff]
    %v4777 = vld [vmem:[%s4 + $0x1768] sm:$0xff]
    %v4778 = vld [vmem:[%s4 + $0x1770] sm:$0xff]
    %v4779 = vld [vmem:[%s4 + $0x1778] sm:$0xff]
    %v4780 = vld [vmem:[%s4 + $0x1780] sm:$0xff]
    %v4781 = vld [vmem:[%s4 + $0x1788] sm:$0xff]
    %v4782 = vld [vmem:[%s4 + $0x1790] sm:$0xff]
    %v4783 = vld [vmem:[%s4 + $0x1798] sm:$0xff]
    %v4784 = vld [vmem:[%s4 + $0x17a0] sm:$0xff]
    %v4785 = vld [vmem:[%s4 + $0x17a8] sm:$0xff]
    %v4786 = vld [vmem:[%s4 + $0x17b0] sm:$0xff]
    %v4787 = vld [vmem:[%s4 + $0x17b8] sm:$0xff]
    %v4788 = vld [vmem:[%s4 + $0x17c0] sm:$0xff]
    %v4789 = vld [vmem:[%s4 + $0x17c8] sm:$0xff]
    %v4790 = vld [vmem:[%s4 + $0x17d0] sm:$0xff]
    %v4791 = vld [vmem:[%s4 + $0x17d8] sm:$0xff]
    %v4792 = vld [vmem:[%s4 + $0x17e0] sm:$0xff]
    %v4793 = vld [vmem:[%s4 + $0x17e8] sm:$0xff]
    %v4794 = vld [vmem:[%s4 + $0x17f0] sm:$0xff]
    %v4795 = vld [vmem:[%s4 + $0x17f8] sm:$0xff]
    %v4796 = vld [vmem:[%s4 + $0x1800] sm:$0xff]
    %v4797 = vld [vmem:[%s4 + $0x1808] sm:$0xff]
    %v4798 = vld [vmem:[%s4 + $0x1810] sm:$0xff]
    %v4799 = vld [vmem:[%s4 + $0x1818] sm:$0xff]
    %v4800 = vld [vmem:[%s4 + $0x1820] sm:$0xff]
    %v4801 = vld [vmem:[%s4 + $0x1828] sm:$0xff]
    %v4802 = vld [vmem:[%s4 + $0x1830] sm:$0xff]
    %v4803 = vld [vmem:[%s4 + $0x1838] sm:$0xff]
    %v4804 = vld [vmem:[%s4 + $0x1840] sm:$0xff]
    %v4805 = vld [vmem:[%s4 + $0x1848] sm:$0xff]
    %v4806 = vld [vmem:[%s4 + $0x1850] sm:$0xff]
    %v4807 = vld [vmem:[%s4 + $0x1858] sm:$0xff]
    %v4808 = vld [vmem:[%s4 + $0x1860] sm:$0xff]
    %v4809 = vld [vmem:[%s4 + $0x1868] sm:$0xff]
    %v4810 = vld [vmem:[%s4 + $0x1870] sm:$0xff]
    %v4811 = vld [vmem:[%s4 + $0x1878] sm:$0xff]
    %v4812 = vld [vmem:[%s4 + $0x1880] sm:$0xff]
    %v4813 = vld [vmem:[%s4 + $0x1888] sm:$0xff]
    %v4814 = vld [vmem:[%s4 + $0x1890] sm:$0xff]
    %v4815 = vld [vmem:[%s4 + $0x1898] sm:$0xff]
    %v4816 = vld [vmem:[%s4 + $0x18a0] sm:$0xff]
    %v4817 = vld [vmem:[%s4 + $0x18a8] sm:$0xff]
    %v4818 = vld [vmem:[%s4 + $0x18b0] sm:$0xff]
    %v4819 = vld [vmem:[%s4 + $0x18b8] sm:$0xff]
    %v4820 = vld [vmem:[%s4 + $0x18c0] sm:$0xff]
    %v4821 = vld [vmem:[%s4 + $0x18c8] sm:$0xff]
    %v4822 = vld [vmem:[%s4 + $0x18d0] sm:$0xff]
    %v4823 = vld [vmem:[%s4 + $0x18d8] sm:$0xff]
    %v4824 = vld [vmem:[%s4 + $0x18e0] sm:$0xff]
    %v4825 = vld [vmem:[%s4 + $0x18e8] sm:$0xff]
    %v4826 = vld [vmem:[%s4 + $0x18f0] sm:$0xff]
    %v4827 = vld [vmem:[%s4 + $0x18f8] sm:$0xff]
    %v4828 = vld [vmem:[%s4 + $0x1900] sm:$0xff]
    %v4829 = vld [vmem:[%s4 + $0x1908] sm:$0xff]
    %v4830 = vld [vmem:[%s4 + $0x1910] sm:$0xff]
    %v4831 = vld [vmem:[%s4 + $0x1918] sm:$0xff]
    %v4832 = vld [vmem:[%s4 + $0x1920] sm:$0xff]
    %v4833 = vld [vmem:[%s4 + $0x1928] sm:$0xff]
    %v4834 = vld [vmem:[%s4 + $0x1930] sm:$0xff]
    %v4835 = vld [vmem:[%s4 + $0x1938] sm:$0xff]
    %v4836 = vld [vmem:[%s4 + $0x1940] sm:$0xff]
    %v4837 = vld [vmem:[%s4 + $0x1948] sm:$0xff]
    %v4838 = vld [vmem:[%s4 + $0x1950] sm:$0xff]
    %v4839 = vld [vmem:[%s4 + $0x1958] sm:$0xff]
    %v4840 = vld [vmem:[%s4 + $0x1960] sm:$0xff]
    %v4841 = vld [vmem:[%s4 + $0x1968] sm:$0xff]
    %v4842 = vld [vmem:[%s4 + $0x1970] sm:$0xff]
    %v4843 = vld [vmem:[%s4 + $0x1978] sm:$0xff]
    %v4844 = vld [vmem:[%s4 + $0x1980] sm:$0xff]
    %v4845 = vld [vmem:[%s4 + $0x1988] sm:$0xff]
    %v4846 = vld [vmem:[%s4 + $0x1990] sm:$0xff]
    %v4847 = vld [vmem:[%s4 + $0x1998] sm:$0xff]
    %v4848 = vld [vmem:[%s4 + $0x19a0] sm:$0xff]
    %v4849 = vld [vmem:[%s4 + $0x19a8] sm:$0xff]
    %v4850 = vld [vmem:[%s4 + $0x19b0] sm:$0xff]
    %v4851 = vld [vmem:[%s4 + $0x19b8] sm:$0xff]
    %v4852 = vld [vmem:[%s4 + $0x19c0] sm:$0xff]
    %v4853 = vld [vmem:[%s4 + $0x19c8] sm:$0xff]
    %v4854 = vld [vmem:[%s4 + $0x19d0] sm:$0xff]
    %v4855 = vld [vmem:[%s4 + $0x19d8] sm:$0xff]
    %v4856 = vld [vmem:[%s4 + $0x19e0] sm:$0xff]
    %v4857 = vld [vmem:[%s4 + $0x19e8] sm:$0xff]
    %v4858 = vld [vmem:[%s4 + $0x19f0] sm:$0xff]
    %v4859 = vld [vmem:[%s4 + $0x19f8] sm:$0xff]
    %v4860 = vld [vmem:[%s4 + $0x1a00] sm:$0xff]
    %v4861 = vld [vmem:[%s4 + $0x1a08] sm:$0xff]
    %v4862 = vld [vmem:[%s4 + $0x1a10] sm:$0xff]
    %v4863 = vld [vmem:[%s4 + $0x1a18] sm:$0xff]
    %v4864 = vld [vmem:[%s4 + $0x1a20] sm:$0xff]
    %v4865 = vld [vmem:[%s4 + $0x1a28] sm:$0xff]
    %v4866 = vld [vmem:[%s4 + $0x1a30] sm:$0xff]
    %v4867 = vld [vmem:[%s4 + $0x1a38] sm:$0xff]
    %v4868 = vld [vmem:[%s4 + $0x1a40] sm:$0xff]
    %v4869 = vld [vmem:[%s4 + $0x1a48] sm:$0xff]
    %v4870 = vld [vmem:[%s4 + $0x1a50] sm:$0xff]
    %v4871 = vld [vmem:[%s4 + $0x1a58] sm:$0xff]
    %v4872 = vld [vmem:[%s4 + $0x1a60] sm:$0xff]
    %v4873 = vld [vmem:[%s4 + $0x1a68] sm:$0xff]
    %v4874 = vld [vmem:[%s4 + $0x1a70] sm:$0xff]
    %v4875 = vld [vmem:[%s4 + $0x1a78] sm:$0xff]
    %v4876 = vld [vmem:[%s4 + $0x1a80] sm:$0xff]
    %v4877 = vld [vmem:[%s4 + $0x1a88] sm:$0xff]
    %v4878 = vld [vmem:[%s4 + $0x1a90] sm:$0xff]
    %v4879 = vld [vmem:[%s4 + $0x1a98] sm:$0xff]
    %v4880 = vld [vmem:[%s4 + $0x1aa0] sm:$0xff]
    %v4881 = vld [vmem:[%s4 + $0x1aa8] sm:$0xff]
    %v4882 = vld [vmem:[%s4 + $0x1ab0] sm:$0xff]
    %v4883 = vld [vmem:[%s4 + $0x1ab8] sm:$0xff]
    %v4884 = vld [vmem:[%s4 + $0x1ac0] sm:$0xff]
    %v4885 = vld [vmem:[%s4 + $0x1ac8] sm:$0xff]
    %v4886 = vld [vmem:[%s4 + $0x1ad0] sm:$0xff]
    %v4887 = vld [vmem:[%s4 + $0x1ad8] sm:$0xff]
    %v4888 = vld [vmem:[%s4 + $0x1ae0] sm:$0xff]
    %v4889 = vld [vmem:[%s4 + $0x1ae8] sm:$0xff]
    %v4890 = vld [vmem:[%s4 + $0x1af0] sm:$0xff]
    %v4891 = vld [vmem:[%s4 + $0x1af8] sm:$0xff]
    %v4892 = vld [vmem:[%s4 + $0x1b00] sm:$0xff]
    %v4893 = vld [vmem:[%s4 + $0x1b08] sm:$0xff]
    %v4894 = vld [vmem:[%s4 + $0x1b10] sm:$0xff]
    %v4895 = vld [vmem:[%s4 + $0x1b18] sm:$0xff]
    %v4896 = vld [vmem:[%s4 + $0x1b20] sm:$0xff]
    %v4897 = vld [vmem:[%s4 + $0x1b28] sm:$0xff]
    %v4898 = vld [vmem:[%s4 + $0x1b30] sm:$0xff]
    %v4899 = vld [vmem:[%s4 + $0x1b38] sm:$0xff]
    %v4900 = vld [vmem:[%s4 + $0x1b40] sm:$0xff]
    %v4901 = vld [vmem:[%s4 + $0x1b48] sm:$0xff]
    %v4902 = vld [vmem:[%s4 + $0x1b50] sm:$0xff]
    %v4903 = vld [vmem:[%s4 + $0x1b58] sm:$0xff]
    %v4904 = vld [vmem:[%s4 + $0x1b60] sm:$0xff]
    %v4905 = vld [vmem:[%s4 + $0x1b68] sm:$0xff]
    %v4906 = vld [vmem:[%s4 + $0x1b70] sm:$0xff]
    %v4907 = vld [vmem:[%s4 + $0x1b78] sm:$0xff]
    %v4908 = vld [vmem:[%s4 + $0x1b80] sm:$0xff]
    %v4909 = vld [vmem:[%s4 + $0x1b88] sm:$0xff]
    %v4910 = vld [vmem:[%s4 + $0x1b90] sm:$0xff]
    %v4911 = vld [vmem:[%s4 + $0x1b98] sm:$0xff]
    %v4912 = vld [vmem:[%s4 + $0x1ba0] sm:$0xff]
    %v4913 = vld [vmem:[%s4 + $0x1ba8] sm:$0xff]
    %v4914 = vld [vmem:[%s4 + $0x1bb0] sm:$0xff]
    %v4915 = vld [vmem:[%s4 + $0x1bb8] sm:$0xff]
    %v4916 = vld [vmem:[%s4 + $0x1bc0] sm:$0xff]
    %v4917 = vld [vmem:[%s4 + $0x1bc8] sm:$0xff]
    %v4918 = vld [vmem:[%s4 + $0x1bd0] sm:$0xff]
    %v4919 = vld [vmem:[%s4 + $0x1bd8] sm:$0xff]
    %v4920 = vld [vmem:[%s4 + $0x1be0] sm:$0xff]
    %v4921 = vld [vmem:[%s4 + $0x1be8] sm:$0xff]
    %v4922 = vld [vmem:[%s4 + $0x1bf0] sm:$0xff]
    %v4923 = vld [vmem:[%s4 + $0x1bf8] sm:$0xff]
    %v4924 = vld [vmem:[%s4 + $0x1c00] sm:$0xff]
    %v4925 = vld [vmem:[%s4 + $0x1c08] sm:$0xff]
    %v4926 = vld [vmem:[%s4 + $0x1c10] sm:$0xff]
    %v4927 = vld [vmem:[%s4 + $0x1c18] sm:$0xff]
    %v4928 = vld [vmem:[%s4 + $0x1c20] sm:$0xff]
    %v4929 = vld [vmem:[%s4 + $0x1c28] sm:$0xff]
    %v4930 = vld [vmem:[%s4 + $0x1c30] sm:$0xff]
    %v4931 = vld [vmem:[%s4 + $0x1c38] sm:$0xff]
    %v4932 = vld [vmem:[%s4 + $0x1c40] sm:$0xff]
    %v4933 = vld [vmem:[%s4 + $0x1c48] sm:$0xff]
    %v4934 = vld [vmem:[%s4 + $0x1c50] sm:$0xff]
    %v4935 = vld [vmem:[%s4 + $0x1c58] sm:$0xff]
    %v4936 = vld [vmem:[%s4 + $0x1c60] sm:$0xff]
    %v4937 = vld [vmem:[%s4 + $0x1c68] sm:$0xff]
    %v4938 = vld [vmem:[%s4 + $0x1c70] sm:$0xff]
    %v4939 = vld [vmem:[%s4 + $0x1c78] sm:$0xff]
    %v4940 = vld [vmem:[%s4 + $0x1c80] sm:$0xff]
    %v4941 = vld [vmem:[%s4 + $0x1c88] sm:$0xff]
    %v4942 = vld [vmem:[%s4 + $0x1c90] sm:$0xff]
    %v4943 = vld [vmem:[%s4 + $0x1c98] sm:$0xff]
    %v4944 = vld [vmem:[%s4 + $0x1ca0] sm:$0xff]
    %v4945 = vld [vmem:[%s4 + $0x1ca8] sm:$0xff]
    %v4946 = vld [vmem:[%s4 + $0x1cb0] sm:$0xff]
    %v4947 = vld [vmem:[%s4 + $0x1cb8] sm:$0xff]
    %v4948 = vld [vmem:[%s4 + $0x1cc0] sm:$0xff]
    %v4949 = vld [vmem:[%s4 + $0x1cc8] sm:$0xff]
    %v4950 = vld [vmem:[%s4 + $0x1cd0] sm:$0xff]
    %v4951 = vld [vmem:[%s4 + $0x1cd8] sm:$0xff]
    %v4952 = vld [vmem:[%s4 + $0x1ce0] sm:$0xff]
    %v4953 = vld [vmem:[%s4 + $0x1ce8] sm:$0xff]
    %v4954 = vld [vmem:[%s4 + $0x1cf0] sm:$0xff]
    %v4955 = vld [vmem:[%s4 + $0x1cf8] sm:$0xff]
    %v4956 = vld [vmem:[%s4 + $0x1d00] sm:$0xff]
    %v4957 = vld [vmem:[%s4 + $0x1d08] sm:$0xff]
    %v4958 = vld [vmem:[%s4 + $0x1d10] sm:$0xff]
    %v4959 = vld [vmem:[%s4 + $0x1d18] sm:$0xff]
    %v4960 = vld [vmem:[%s4 + $0x1d20] sm:$0xff]
    %v4961 = vld [vmem:[%s4 + $0x1d28] sm:$0xff]
    %v4962 = vld [vmem:[%s4 + $0x1d30] sm:$0xff]
    %v4963 = vld [vmem:[%s4 + $0x1d38] sm:$0xff]
    %v4964 = vld [vmem:[%s4 + $0x1d40] sm:$0xff]
    %v4965 = vld [vmem:[%s4 + $0x1d48] sm:$0xff]
    %v4966 = vld [vmem:[%s4 + $0x1d50] sm:$0xff]
    %v4967 = vld [vmem:[%s4 + $0x1d58] sm:$0xff]
    %v4968 = vld [vmem:[%s4 + $0x1d60] sm:$0xff]
    %v4969 = vld [vmem:[%s4 + $0x1d68] sm:$0xff]
    %v4970 = vld [vmem:[%s4 + $0x1d70] sm:$0xff]
    %v4971 = vld [vmem:[%s4 + $0x1d78] sm:$0xff]
    %v4972 = vld [vmem:[%s4 + $0x1d80] sm:$0xff]
    %v4973 = vld [vmem:[%s4 + $0x1d88] sm:$0xff]
    %v4974 = vld [vmem:[%s4 + $0x1d90] sm:$0xff]
    %v4975 = vld [vmem:[%s4 + $0x1d98] sm:$0xff]
    %v4976 = vld [vmem:[%s4 + $0x1da0] sm:$0xff]
    %v4977 = vld [vmem:[%s4 + $0x1da8] sm:$0xff]
    %v4978 = vld [vmem:[%s4 + $0x1db0] sm:$0xff]
    %v4979 = vld [vmem:[%s4 + $0x1db8] sm:$0xff]
    %v4980 = vld [vmem:[%s4 + $0x1dc0] sm:$0xff]
    %v4981 = vld [vmem:[%s4 + $0x1dc8] sm:$0xff]
    %v4982 = vld [vmem:[%s4 + $0x1dd0] sm:$0xff]
    %v4983 = vld [vmem:[%s4 + $0x1dd8] sm:$0xff]
    %v4984 = vld [vmem:[%s4 + $0x1de0] sm:$0xff]
    %v4985 = vld [vmem:[%s4 + $0x1de8] sm:$0xff]
    %v4986 = vld [vmem:[%s4 + $0x1df0] sm:$0xff]
    %v4987 = vld [vmem:[%s4 + $0x1df8] sm:$0xff]
    %v4992 = vlaneseq
    %v4993 = vshrl.u32 %v4992, 7
    %v4994 = vsub.s32 0, %v4993
    %v4995 = vrot.slane %v3964, %v4994
    %v4996 = vlaneseq
    %v4997 = vshrl.u32 %v4996, 7
    %v4998 = vsub.s32 4, %v4997
    %v4999 = vrot.slane %v3964, %v4998
    %v5000 = vlaneseq
    %v5001 = vshrl.u32 %v5000, 7
    %v5002 = vsub.s32 0, %v5001
    %v5003 = vrot.slane %v3965, %v5002
    %v5004 = vlaneseq
    %v5005 = vshrl.u32 %v5004, 7
    %v5006 = vsub.s32 4, %v5005
    %v5007 = vrot.slane %v3965, %v5006
    %v5008 = vlaneseq
    %v5009 = vshrl.u32 %v5008, 7
    %v5010 = vsub.s32 0, %v5009
    %v5011 = vrot.slane %v3966, %v5010
    %v5012 = vlaneseq
    %v5013 = vshrl.u32 %v5012, 7
    %v5014 = vsub.s32 4, %v5013
    %v5015 = vrot.slane %v3966, %v5014
    %v5016 = vlaneseq
    %v5017 = vshrl.u32 %v5016, 7
    %v5018 = vsub.s32 0, %v5017
    %v5019 = vrot.slane %v3967, %v5018
    %v5020 = vlaneseq
    %v5021 = vshrl.u32 %v5020, 7
    %v5022 = vsub.s32 4, %v5021
    %v5023 = vrot.slane %v3967, %v5022
    %v5024 = vsel %vm1928, %v5011, %v4995
    %v5025 = vsel %vm1928, %v5015, %v4999
    %v5026 = vsel %vm1928, %v5019, %v5003
    %v5027 = vsel %vm1928, %v5023, %v5007
    %vm5031 = vcmask 785408
    %v5032 = vsel %vm5031, %v5027, 0
    %5034 = vmatprep.subr.mxu0 0.0
    %5035 = vmatpush1.msra.mxu0 %v4028
    %5036 = vmatprep.subr.mxu0 0.0
    %5037 = vmatpush1.msra.mxu0 %v4029
    %5038 = vmatprep.subr.mxu0 0.0
    %5039 = vmatpush1.msra.mxu0 %v4030
    %5040 = vmatprep.subr.mxu0 0.0
    %5041 = vmatpush1.msra.mxu0 %v4031
    %5042 = vmatprep.subr.mxu0 0.0
    %5043 = vmatpush1.msra.mxu0 %v4032
    %5044 = vmatprep.subr.mxu0 0.0
    %5045 = vmatpush1.msra.mxu0 %v4033
    %5046 = vmatprep.subr.mxu0 0.0
    %5047 = vmatpush1.msra.mxu0 %v4034
    %5048 = vmatprep.subr.mxu0 0.0
    %5049 = vmatpush1.msra.mxu0 %v4035
    %5050 = vmatprep.subr.mxu0 0.0
    %5051 = vmatpush1.msra.mxu0 %v4036
    %5052 = vmatprep.subr.mxu0 0.0
    %5053 = vmatpush1.msra.mxu0 %v4037
    %5054 = vmatprep.subr.mxu0 0.0
    %5055 = vmatpush1.msra.mxu0 %v4038
    %5056 = vmatprep.subr.mxu0 0.0
    %5057 = vmatpush1.msra.mxu0 %v4039
    %5058 = vmatprep.subr.mxu0 0.0
    %5059 = vmatpush1.msra.mxu0 %v4040
    %5060 = vmatprep.subr.mxu0 0.0
    %5061 = vmatpush1.msra.mxu0 %v4041
    %5062 = vmatprep.subr.mxu0 0.0
    %5063 = vmatpush1.msra.mxu0 %v4042
    %5064 = vmatprep.subr.mxu0 0.0
    %5065 = vmatpush1.msra.mxu0 %v4043
    %5066 = vmatprep.subr.mxu0 0.0
    %5067 = vmatpush1.msra.mxu0 %v4044
    %5068 = vmatprep.subr.mxu0 0.0
    %5069 = vmatpush1.msra.mxu0 %v4045
    %5070 = vmatprep.subr.mxu0 0.0
    %5071 = vmatpush1.msra.mxu0 %v4046
    %5072 = vmatprep.subr.mxu0 0.0
    %5073 = vmatpush1.msra.mxu0 %v4047
    %5074 = vmatprep.subr.mxu0 0.0
    %5075 = vmatpush1.msra.mxu0 %v4048
    %5076 = vmatprep.subr.mxu0 0.0
    %5077 = vmatpush1.msra.mxu0 %v4049
    %5078 = vmatprep.subr.mxu0 0.0
    %5079 = vmatpush1.msra.mxu0 %v4050
    %5080 = vmatprep.subr.mxu0 0.0
    %5081 = vmatpush1.msra.mxu0 %v4051
    %5082 = vmatprep.subr.mxu0 0.0
    %5083 = vmatpush1.msra.mxu0 %v4052
    %5084 = vmatprep.subr.mxu0 0.0
    %5085 = vmatpush1.msra.mxu0 %v4053
    %5086 = vmatprep.subr.mxu0 0.0
    %5087 = vmatpush1.msra.mxu0 %v4054
    %5088 = vmatprep.subr.mxu0 0.0
    %5089 = vmatpush1.msra.mxu0 %v4055
    %5090 = vmatprep.subr.mxu0 0.0
    %5091 = vmatpush1.msra.mxu0 %v4056
    %5092 = vmatprep.subr.mxu0 0.0
    %5093 = vmatpush1.msra.mxu0 %v4057
    %5094 = vmatprep.subr.mxu0 0.0
    %5095 = vmatpush1.msra.mxu0 %v4058
    %5096 = vmatprep.subr.mxu0 0.0
    %5097 = vmatpush1.msra.mxu0 %v4059
    %5098 = vmatprep.mubr.f32.mxu0 %v5025
    %5099 = vmatmul.mubr.f32.gmra.mrb[0].mxu0 %v5024
    %v5100 = vpop.f32.mrb[0].mxu0
    %v5101 = vadd.f32 0.0, %v5100
    %v5102 = vpop.f32.mrb[0].mxu0
    %5103 = vdwg.mxu0
    %5104 = vmatprep.subr.mxu0 0.0
    %5105 = vmatpush1.msra.mxu0 %v4060
    %5106 = vmatprep.subr.mxu0 0.0
    %5107 = vmatpush1.msra.mxu0 %v4061
    %5108 = vmatprep.subr.mxu0 0.0
    %5109 = vmatpush1.msra.mxu0 %v4062
    %5110 = vmatprep.subr.mxu0 0.0
    %5111 = vmatpush1.msra.mxu0 %v4063
    %5112 = vmatprep.subr.mxu0 0.0
    %5113 = vmatpush1.msra.mxu0 %v4064
    %5114 = vmatprep.subr.mxu0 0.0
    %5115 = vmatpush1.msra.mxu0 %v4065
    %5116 = vmatprep.subr.mxu0 0.0
    %5117 = vmatpush1.msra.mxu0 %v4066
    %5118 = vmatprep.subr.mxu0 0.0
    %5119 = vmatpush1.msra.mxu0 %v4067
    %5120 = vmatprep.subr.mxu0 0.0
    %5121 = vmatpush1.msra.mxu0 %v4068
    %5122 = vmatprep.subr.mxu0 0.0
    %5123 = vmatpush1.msra.mxu0 %v4069
    %5124 = vmatprep.subr.mxu0 0.0
    %5125 = vmatpush1.msra.mxu0 %v4070
    %5126 = vmatprep.subr.mxu0 0.0
    %5127 = vmatpush1.msra.mxu0 %v4071
    %5128 = vmatprep.subr.mxu0 0.0
    %5129 = vmatpush1.msra.mxu0 %v4072
    %5130 = vmatprep.subr.mxu0 0.0
    %5131 = vmatpush1.msra.mxu0 %v4073
    %5132 = vmatprep.subr.mxu0 0.0
    %5133 = vmatpush1.msra.mxu0 %v4074
    %5134 = vmatprep.subr.mxu0 0.0
    %5135 = vmatpush1.msra.mxu0 %v4075
    %5136 = vmatprep.subr.mxu0 0.0
    %5137 = vmatpush1.msra.mxu0 %v4076
    %5138 = vmatprep.subr.mxu0 0.0
    %5139 = vmatpush1.msra.mxu0 %v4077
    %5140 = vmatprep.subr.mxu0 0.0
    %5141 = vmatpush1.msra.mxu0 %v4078
    %5142 = vmatprep.subr.mxu0 0.0
    %5143 = vmatpush1.msra.mxu0 %v4079
    %5144 = vmatprep.subr.mxu0 0.0
    %5145 = vmatpush1.msra.mxu0 %v4080
    %5146 = vmatprep.subr.mxu0 0.0
    %5147 = vmatpush1.msra.mxu0 %v4081
    %5148 = vmatprep.subr.mxu0 0.0
    %5149 = vmatpush1.msra.mxu0 %v4082
    %5150 = vmatprep.subr.mxu0 0.0
    %5151 = vmatpush1.msra.mxu0 %v4083
    %5152 = vmatprep.subr.mxu0 0.0
    %5153 = vmatpush1.msra.mxu0 %v4084
    %5154 = vmatprep.subr.mxu0 0.0
    %5155 = vmatpush1.msra.mxu0 %v4085
    %5156 = vmatprep.subr.mxu0 0.0
    %5157 = vmatpush1.msra.mxu0 %v4086
    %5158 = vmatprep.subr.mxu0 0.0
    %5159 = vmatpush1.msra.mxu0 %v4087
    %5160 = vmatprep.subr.mxu0 0.0
    %5161 = vmatpush1.msra.mxu0 0.0
    %5162 = vmatprep.subr.mxu0 0.0
    %5163 = vmatpush1.msra.mxu0 0.0
    %5164 = vmatprep.subr.mxu0 0.0
    %5165 = vmatpush1.msra.mxu0 0.0
    %5166 = vmatprep.subr.mxu0 0.0
    %5167 = vmatpush1.msra.mxu0 0.0
    %5168 = vmatprep.mubr.f32.mxu0 %v5032
    %5169 = vmatmul.mubr.f32.gmra.mrb[0].mxu0 %v5026
    %v5170 = vpop.f32.mrb[0].mxu0
    %v5171 = vadd.f32 %v5101, %v5170
    %v5172 = vpop.f32.mrb[0].mxu0
    %5173 = vdwg.mxu0
    %v5178 = vlaneseq
    %v5179 = vshrl.u32 %v5178, 7
    %v5180 = vsub.s32 0, %v5179
    %v5181 = vrot.slane %v3968, %v5180
    %v5182 = vlaneseq
    %v5183 = vshrl.u32 %v5182, 7
    %v5184 = vsub.s32 4, %v5183
    %v5185 = vrot.slane %v3968, %v5184
    %v5186 = vlaneseq
    %v5187 = vshrl.u32 %v5186, 7
    %v5188 = vsub.s32 0, %v5187
    %v5189 = vrot.slane %v3969, %v5188
    %v5190 = vlaneseq
    %v5191 = vshrl.u32 %v5190, 7
    %v5192 = vsub.s32 4, %v5191
    %v5193 = vrot.slane %v3969, %v5192
    %v5194 = vlaneseq
    %v5195 = vshrl.u32 %v5194, 7
    %v5196 = vsub.s32 0, %v5195
    %v5197 = vrot.slane %v3970, %v5196
    %v5198 = vlaneseq
    %v5199 = vshrl.u32 %v5198, 7
    %v5200 = vsub.s32 4, %v5199
    %v5201 = vrot.slane %v3970, %v5200
    %v5202 = vlaneseq
    %v5203 = vshrl.u32 %v5202, 7
    %v5204 = vsub.s32 0, %v5203
    %v5205 = vrot.slane %v3971, %v5204
    %v5206 = vlaneseq
    %v5207 = vshrl.u32 %v5206, 7
    %v5208 = vsub.s32 4, %v5207
    %v5209 = vrot.slane %v3971, %v5208
    %v5210 = vsel %vm1928, %v5197, %v5181
    %v5211 = vsel %vm1928, %v5201, %v5185
    %v5212 = vsel %vm1928, %v5205, %v5189
    %v5213 = vsel %vm1928, %v5209, %v5193
    %v5217 = vsel %vm5031, %v5213, 0
    %5219 = vmatprep.subr.mxu0 0.0
    %5220 = vmatpush1.msra.mxu0 %v4088
    %5221 = vmatprep.subr.mxu0 0.0
    %5222 = vmatpush1.msra.mxu0 %v4089
    %5223 = vmatprep.subr.mxu0 0.0
    %5224 = vmatpush1.msra.mxu0 %v4090
    %5225 = vmatprep.subr.mxu0 0.0
    %5226 = vmatpush1.msra.mxu0 %v4091
    %5227 = vmatprep.subr.mxu0 0.0
    %5228 = vmatpush1.msra.mxu0 %v4092
    %5229 = vmatprep.subr.mxu0 0.0
    %5230 = vmatpush1.msra.mxu0 %v4093
    %5231 = vmatprep.subr.mxu0 0.0
    %5232 = vmatpush1.msra.mxu0 %v4094
    %5233 = vmatprep.subr.mxu0 0.0
    %5234 = vmatpush1.msra.mxu0 %v4095
    %5235 = vmatprep.subr.mxu0 0.0
    %5236 = vmatpush1.msra.mxu0 %v4096
    %5237 = vmatprep.subr.mxu0 0.0
    %5238 = vmatpush1.msra.mxu0 %v4097
    %5239 = vmatprep.subr.mxu0 0.0
    %5240 = vmatpush1.msra.mxu0 %v4098
    %5241 = vmatprep.subr.mxu0 0.0
    %5242 = vmatpush1.msra.mxu0 %v4099
    %5243 = vmatprep.subr.mxu0 0.0
    %5244 = vmatpush1.msra.mxu0 %v4100
    %5245 = vmatprep.subr.mxu0 0.0
    %5246 = vmatpush1.msra.mxu0 %v4101
    %5247 = vmatprep.subr.mxu0 0.0
    %5248 = vmatpush1.msra.mxu0 %v4102
    %5249 = vmatprep.subr.mxu0 0.0
    %5250 = vmatpush1.msra.mxu0 %v4103
    %5251 = vmatprep.subr.mxu0 0.0
    %5252 = vmatpush1.msra.mxu0 %v4104
    %5253 = vmatprep.subr.mxu0 0.0
    %5254 = vmatpush1.msra.mxu0 %v4105
    %5255 = vmatprep.subr.mxu0 0.0
    %5256 = vmatpush1.msra.mxu0 %v4106
    %5257 = vmatprep.subr.mxu0 0.0
    %5258 = vmatpush1.msra.mxu0 %v4107
    %5259 = vmatprep.subr.mxu0 0.0
    %5260 = vmatpush1.msra.mxu0 %v4108
    %5261 = vmatprep.subr.mxu0 0.0
    %5262 = vmatpush1.msra.mxu0 %v4109
    %5263 = vmatprep.subr.mxu0 0.0
    %5264 = vmatpush1.msra.mxu0 %v4110
    %5265 = vmatprep.subr.mxu0 0.0
    %5266 = vmatpush1.msra.mxu0 %v4111
    %5267 = vmatprep.subr.mxu0 0.0
    %5268 = vmatpush1.msra.mxu0 %v4112
    %5269 = vmatprep.subr.mxu0 0.0
    %5270 = vmatpush1.msra.mxu0 %v4113
    %5271 = vmatprep.subr.mxu0 0.0
    %5272 = vmatpush1.msra.mxu0 %v4114
    %5273 = vmatprep.subr.mxu0 0.0
    %5274 = vmatpush1.msra.mxu0 %v4115
    %5275 = vmatprep.subr.mxu0 0.0
    %5276 = vmatpush1.msra.mxu0 %v4116
    %5277 = vmatprep.subr.mxu0 0.0
    %5278 = vmatpush1.msra.mxu0 %v4117
    %5279 = vmatprep.subr.mxu0 0.0
    %5280 = vmatpush1.msra.mxu0 %v4118
    %5281 = vmatprep.subr.mxu0 0.0
    %5282 = vmatpush1.msra.mxu0 %v4119
    %5283 = vmatprep.mubr.f32.mxu0 %v5211
    %5284 = vmatmul.mubr.f32.gmra.mrb[0].mxu0 %v5210
    %v5285 = vpop.f32.mrb[0].mxu0
    %v5286 = vadd.f32 0.0, %v5285
    %v5287 = vpop.f32.mrb[0].mxu0
    %5288 = vdwg.mxu0
    %5289 = vmatprep.subr.mxu0 0.0
    %5290 = vmatpush1.msra.mxu0 %v4120
    %5291 = vmatprep.subr.mxu0 0.0
    %5292 = vmatpush1.msra.mxu0 %v4121
    %5293 = vmatprep.subr.mxu0 0.0
    %5294 = vmatpush1.msra.mxu0 %v4122
    %5295 = vmatprep.subr.mxu0 0.0
    %5296 = vmatpush1.msra.mxu0 %v4123
    %5297 = vmatprep.subr.mxu0 0.0
    %5298 = vmatpush1.msra.mxu0 %v4124
    %5299 = vmatprep.subr.mxu0 0.0
    %5300 = vmatpush1.msra.mxu0 %v4125
    %5301 = vmatprep.subr.mxu0 0.0
    %5302 = vmatpush1.msra.mxu0 %v4126
    %5303 = vmatprep.subr.mxu0 0.0
    %5304 = vmatpush1.msra.mxu0 %v4127
    %5305 = vmatprep.subr.mxu0 0.0
    %5306 = vmatpush1.msra.mxu0 %v4128
    %5307 = vmatprep.subr.mxu0 0.0
    %5308 = vmatpush1.msra.mxu0 %v4129
    %5309 = vmatprep.subr.mxu0 0.0
    %5310 = vmatpush1.msra.mxu0 %v4130
    %5311 = vmatprep.subr.mxu0 0.0
    %5312 = vmatpush1.msra.mxu0 %v4131
    %5313 = vmatprep.subr.mxu0 0.0
    %5314 = vmatpush1.msra.mxu0 %v4132
    %5315 = vmatprep.subr.mxu0 0.0
    %5316 = vmatpush1.msra.mxu0 %v4133
    %5317 = vmatprep.subr.mxu0 0.0
    %5318 = vmatpush1.msra.mxu0 %v4134
    %5319 = vmatprep.subr.mxu0 0.0
    %5320 = vmatpush1.msra.mxu0 %v4135
    %5321 = vmatprep.subr.mxu0 0.0
    %5322 = vmatpush1.msra.mxu0 %v4136
    %5323 = vmatprep.subr.mxu0 0.0
    %5324 = vmatpush1.msra.mxu0 %v4137
    %5325 = vmatprep.subr.mxu0 0.0
    %5326 = vmatpush1.msra.mxu0 %v4138
    %5327 = vmatprep.subr.mxu0 0.0
    %5328 = vmatpush1.msra.mxu0 %v4139
    %5329 = vmatprep.subr.mxu0 0.0
    %5330 = vmatpush1.msra.mxu0 %v4140
    %5331 = vmatprep.subr.mxu0 0.0
    %5332 = vmatpush1.msra.mxu0 %v4141
    %5333 = vmatprep.subr.mxu0 0.0
    %5334 = vmatpush1.msra.mxu0 %v4142
    %5335 = vmatprep.subr.mxu0 0.0
    %5336 = vmatpush1.msra.mxu0 %v4143
    %5337 = vmatprep.subr.mxu0 0.0
    %5338 = vmatpush1.msra.mxu0 %v4144
    %5339 = vmatprep.subr.mxu0 0.0
    %5340 = vmatpush1.msra.mxu0 %v4145
    %5341 = vmatprep.subr.mxu0 0.0
    %5342 = vmatpush1.msra.mxu0 %v4146
    %5343 = vmatprep.subr.mxu0 0.0
    %5344 = vmatpush1.msra.mxu0 %v4147
    %5345 = vmatprep.subr.mxu0 0.0
    %5346 = vmatpush1.msra.mxu0 0.0
    %5347 = vmatprep.subr.mxu0 0.0
    %5348 = vmatpush1.msra.mxu0 0.0
    %5349 = vmatprep.subr.mxu0 0.0
    %5350 = vmatpush1.msra.mxu0 0.0
    %5351 = vmatprep.subr.mxu0 0.0
    %5352 = vmatpush1.msra.mxu0 0.0
    %5353 = vmatprep.mubr.f32.mxu0 %v5217
    %5354 = vmatmul.mubr.f32.gmra.mrb[0].mxu0 %v5212
    %v5355 = vpop.f32.mrb[0].mxu0
    %v5356 = vadd.f32 %v5286, %v5355
    %v5357 = vpop.f32.mrb[0].mxu0
    %5358 = vdwg.mxu0
    %v5363 = vlaneseq
    %v5364 = vshrl.u32 %v5363, 7
    %v5365 = vsub.s32 0, %v5364
    %v5366 = vrot.slane %v3972, %v5365
    %v5367 = vlaneseq
    %v5368 = vshrl.u32 %v5367, 7
    %v5369 = vsub.s32 4, %v5368
    %v5370 = vrot.slane %v3972, %v5369
    %v5371 = vlaneseq
    %v5372 = vshrl.u32 %v5371, 7
    %v5373 = vsub.s32 0, %v5372
    %v5374 = vrot.slane %v3973, %v5373
    %v5375 = vlaneseq
    %v5376 = vshrl.u32 %v5375, 7
    %v5377 = vsub.s32 4, %v5376
    %v5378 = vrot.slane %v3973, %v5377
    %v5379 = vlaneseq
    %v5380 = vshrl.u32 %v5379, 7
    %v5381 = vsub.s32 0, %v5380
    %v5382 = vrot.slane %v3974, %v5381
    %v5383 = vlaneseq
    %v5384 = vshrl.u32 %v5383, 7
    %v5385 = vsub.s32 4, %v5384
    %v5386 = vrot.slane %v3974, %v5385
    %v5387 = vlaneseq
    %v5388 = vshrl.u32 %v5387, 7
    %v5389 = vsub.s32 0, %v5388
    %v5390 = vrot.slane %v3975, %v5389
    %v5391 = vlaneseq
    %v5392 = vshrl.u32 %v5391, 7
    %v5393 = vsub.s32 4, %v5392
    %v5394 = vrot.slane %v3975, %v5393
    %v5395 = vsel %vm1928, %v5382, %v5366
    %v5396 = vsel %vm1928, %v5386, %v5370
    %v5397 = vsel %vm1928, %v5390, %v5374
    %v5398 = vsel %vm1928, %v5394, %v5378
    %v5402 = vsel %vm5031, %v5398, 0
    %5404 = vmatprep.subr.mxu0 0.0
    %5405 = vmatpush1.msra.mxu0 %v4148
    %5406 = vmatprep.subr.mxu0 0.0
    %5407 = vmatpush1.msra.mxu0 %v4149
    %5408 = vmatprep.subr.mxu0 0.0
    %5409 = vmatpush1.msra.mxu0 %v4150
    %5410 = vmatprep.subr.mxu0 0.0
    %5411 = vmatpush1.msra.mxu0 %v4151
    %5412 = vmatprep.subr.mxu0 0.0
    %5413 = vmatpush1.msra.mxu0 %v4152
    %5414 = vmatprep.subr.mxu0 0.0
    %5415 = vmatpush1.msra.mxu0 %v4153
    %5416 = vmatprep.subr.mxu0 0.0
    %5417 = vmatpush1.msra.mxu0 %v4154
    %5418 = vmatprep.subr.mxu0 0.0
    %5419 = vmatpush1.msra.mxu0 %v4155
    %5420 = vmatprep.subr.mxu0 0.0
    %5421 = vmatpush1.msra.mxu0 %v4156
    %5422 = vmatprep.subr.mxu0 0.0
    %5423 = vmatpush1.msra.mxu0 %v4157
    %5424 = vmatprep.subr.mxu0 0.0
    %5425 = vmatpush1.msra.mxu0 %v4158
    %5426 = vmatprep.subr.mxu0 0.0
    %5427 = vmatpush1.msra.mxu0 %v4159
    %5428 = vmatprep.subr.mxu0 0.0
    %5429 = vmatpush1.msra.mxu0 %v4160
    %5430 = vmatprep.subr.mxu0 0.0
    %5431 = vmatpush1.msra.mxu0 %v4161
    %5432 = vmatprep.subr.mxu0 0.0
    %5433 = vmatpush1.msra.mxu0 %v4162
    %5434 = vmatprep.subr.mxu0 0.0
    %5435 = vmatpush1.msra.mxu0 %v4163
    %5436 = vmatprep.subr.mxu0 0.0
    %5437 = vmatpush1.msra.mxu0 %v4164
    %5438 = vmatprep.subr.mxu0 0.0
    %5439 = vmatpush1.msra.mxu0 %v4165
    %5440 = vmatprep.subr.mxu0 0.0
    %5441 = vmatpush1.msra.mxu0 %v4166
    %5442 = vmatprep.subr.mxu0 0.0
    %5443 = vmatpush1.msra.mxu0 %v4167
    %5444 = vmatprep.subr.mxu0 0.0
    %5445 = vmatpush1.msra.mxu0 %v4168
    %5446 = vmatprep.subr.mxu0 0.0
    %5447 = vmatpush1.msra.mxu0 %v4169
    %5448 = vmatprep.subr.mxu0 0.0
    %5449 = vmatpush1.msra.mxu0 %v4170
    %5450 = vmatprep.subr.mxu0 0.0
    %5451 = vmatpush1.msra.mxu0 %v4171
    %5452 = vmatprep.subr.mxu0 0.0
    %5453 = vmatpush1.msra.mxu0 %v4172
    %5454 = vmatprep.subr.mxu0 0.0
    %5455 = vmatpush1.msra.mxu0 %v4173
    %5456 = vmatprep.subr.mxu0 0.0
    %5457 = vmatpush1.msra.mxu0 %v4174
    %5458 = vmatprep.subr.mxu0 0.0
    %5459 = vmatpush1.msra.mxu0 %v4175
    %5460 = vmatprep.subr.mxu0 0.0
    %5461 = vmatpush1.msra.mxu0 %v4176
    %5462 = vmatprep.subr.mxu0 0.0
    %5463 = vmatpush1.msra.mxu0 %v4177
    %5464 = vmatprep.subr.mxu0 0.0
    %5465 = vmatpush1.msra.mxu0 %v4178
    %5466 = vmatprep.subr.mxu0 0.0
    %5467 = vmatpush1.msra.mxu0 %v4179
    %5468 = vmatprep.mubr.f32.mxu0 %v5396
    %5469 = vmatmul.mubr.f32.gmra.mrb[0].mxu0 %v5395
    %v5470 = vpop.f32.mrb[0].mxu0
    %v5471 = vadd.f32 0.0, %v5470
    %v5472 = vpop.f32.mrb[0].mxu0
    %5473 = vdwg.mxu0
    %5474 = vmatprep.subr.mxu0 0.0
    %5475 = vmatpush1.msra.mxu0 %v4180
    %5476 = vmatprep.subr.mxu0 0.0
    %5477 = vmatpush1.msra.mxu0 %v4181
    %5478 = vmatprep.subr.mxu0 0.0
    %5479 = vmatpush1.msra.mxu0 %v4182
    %5480 = vmatprep.subr.mxu0 0.0
    %5481 = vmatpush1.msra.mxu0 %v4183
    %5482 = vmatprep.subr.mxu0 0.0
    %5483 = vmatpush1.msra.mxu0 %v4184
    %5484 = vmatprep.subr.mxu0 0.0
    %5485 = vmatpush1.msra.mxu0 %v4185
    %5486 = vmatprep.subr.mxu0 0.0
    %5487 = vmatpush1.msra.mxu0 %v4186
    %5488 = vmatprep.subr.mxu0 0.0
    %5489 = vmatpush1.msra.mxu0 %v4187
    %5490 = vmatprep.subr.mxu0 0.0
    %5491 = vmatpush1.msra.mxu0 %v4188
    %5492 = vmatprep.subr.mxu0 0.0
    %5493 = vmatpush1.msra.mxu0 %v4189
    %5494 = vmatprep.subr.mxu0 0.0
    %5495 = vmatpush1.msra.mxu0 %v4190
    %5496 = vmatprep.subr.mxu0 0.0
    %5497 = vmatpush1.msra.mxu0 %v4191
    %5498 = vmatprep.subr.mxu0 0.0
    %5499 = vmatpush1.msra.mxu0 %v4192
    %5500 = vmatprep.subr.mxu0 0.0
    %5501 = vmatpush1.msra.mxu0 %v4193
    %5502 = vmatprep.subr.mxu0 0.0
    %5503 = vmatpush1.msra.mxu0 %v4194
    %5504 = vmatprep.subr.mxu0 0.0
    %5505 = vmatpush1.msra.mxu0 %v4195
    %5506 = vmatprep.subr.mxu0 0.0
    %5507 = vmatpush1.msra.mxu0 %v4196
    %5508 = vmatprep.subr.mxu0 0.0
    %5509 = vmatpush1.msra.mxu0 %v4197
    %5510 = vmatprep.subr.mxu0 0.0
    %5511 = vmatpush1.msra.mxu0 %v4198
    %5512 = vmatprep.subr.mxu0 0.0
    %5513 = vmatpush1.msra.mxu0 %v4199
    %5514 = vmatprep.subr.mxu0 0.0
    %5515 = vmatpush1.msra.mxu0 %v4200
    %5516 = vmatprep.subr.mxu0 0.0
    %5517 = vmatpush1.msra.mxu0 %v4201
    %5518 = vmatprep.subr.mxu0 0.0
    %5519 = vmatpush1.msra.mxu0 %v4202
    %5520 = vmatprep.subr.mxu0 0.0
    %5521 = vmatpush1.msra.mxu0 %v4203
    %5522 = vmatprep.subr.mxu0 0.0
    %5523 = vmatpush1.msra.mxu0 %v4204
    %5524 = vmatprep.subr.mxu0 0.0
    %5525 = vmatpush1.msra.mxu0 %v4205
    %5526 = vmatprep.subr.mxu0 0.0
    %5527 = vmatpush1.msra.mxu0 %v4206
    %5528 = vmatprep.subr.mxu0 0.0
    %5529 = vmatpush1.msra.mxu0 %v4207
    %5530 = vmatprep.subr.mxu0 0.0
    %5531 = vmatpush1.msra.mxu0 0.0
    %5532 = vmatprep.subr.mxu0 0.0
    %5533 = vmatpush1.msra.mxu0 0.0
    %5534 = vmatprep.subr.mxu0 0.0
    %5535 = vmatpush1.msra.mxu0 0.0
    %5536 = vmatprep.subr.mxu0 0.0
    %5537 = vmatpush1.msra.mxu0 0.0
    %5538 = vmatprep.mubr.f32.mxu0 %v5402
    %5539 = vmatmul.mubr.f32.gmra.mrb[0].mxu0 %v5397
    %v5540 = vpop.f32.mrb[0].mxu0
    %v5541 = vadd.f32 %v5471, %v5540
    %v5542 = vpop.f32.mrb[0].mxu0
    %5543 = vdwg.mxu0
    %v5548 = vlaneseq
    %v5549 = vshrl.u32 %v5548, 7
    %v5550 = vsub.s32 0, %v5549
    %v5551 = vrot.slane %v3976, %v5550
    %v5552 = vlaneseq
    %v5553 = vshrl.u32 %v5552, 7
    %v5554 = vsub.s32 4, %v5553
    %v5555 = vrot.slane %v3976, %v5554
    %v5556 = vlaneseq
    %v5557 = vshrl.u32 %v5556, 7
    %v5558 = vsub.s32 0, %v5557
    %v5559 = vrot.slane %v3977, %v5558
    %v5560 = vlaneseq
    %v5561 = vshrl.u32 %v5560, 7
    %v5562 = vsub.s32 4, %v5561
    %v5563 = vrot.slane %v3977, %v5562
    %v5564 = vlaneseq
    %v5565 = vshrl.u32 %v5564, 7
    %v5566 = vsub.s32 0, %v5565
    %v5567 = vrot.slane %v3978, %v5566
    %v5568 = vlaneseq
    %v5569 = vshrl.u32 %v5568, 7
    %v5570 = vsub.s32 4, %v5569
    %v5571 = vrot.slane %v3978, %v5570
    %v5572 = vlaneseq
    %v5573 = vshrl.u32 %v5572, 7
    %v5574 = vsub.s32 0, %v5573
    %v5575 = vrot.slane %v3979, %v5574
    %v5576 = vlaneseq
    %v5577 = vshrl.u32 %v5576, 7
    %v5578 = vsub.s32 4, %v5577
    %v5579 = vrot.slane %v3979, %v5578
    %v5580 = vsel %vm1928, %v5567, %v5551
    %v5581 = vsel %vm1928, %v5571, %v5555
    %v5582 = vsel %vm1928, %v5575, %v5559
    %v5583 = vsel %vm1928, %v5579, %v5563
    %v5587 = vsel %vm5031, %v5583, 0
    %5589 = vmatprep.subr.mxu0 0.0
    %5590 = vmatpush1.msra.mxu0 %v4208
    %5591 = vmatprep.subr.mxu0 0.0
    %5592 = vmatpush1.msra.mxu0 %v4209
    %5593 = vmatprep.subr.mxu0 0.0
    %5594 = vmatpush1.msra.mxu0 %v4210
    %5595 = vmatprep.subr.mxu0 0.0
    %5596 = vmatpush1.msra.mxu0 %v4211
    %5597 = vmatprep.subr.mxu0 0.0
    %5598 = vmatpush1.msra.mxu0 %v4212
    %5599 = vmatprep.subr.mxu0 0.0
    %5600 = vmatpush1.msra.mxu0 %v4213
    %5601 = vmatprep.subr.mxu0 0.0
    %5602 = vmatpush1.msra.mxu0 %v4214
    %5603 = vmatprep.subr.mxu0 0.0
    %5604 = vmatpush1.msra.mxu0 %v4215
    %5605 = vmatprep.subr.mxu0 0.0
    %5606 = vmatpush1.msra.mxu0 %v4216
    %5607 = vmatprep.subr.mxu0 0.0
    %5608 = vmatpush1.msra.mxu0 %v4217
    %5609 = vmatprep.subr.mxu0 0.0
    %5610 = vmatpush1.msra.mxu0 %v4218
    %5611 = vmatprep.subr.mxu0 0.0
    %5612 = vmatpush1.msra.mxu0 %v4219
    %5613 = vmatprep.subr.mxu0 0.0
    %5614 = vmatpush1.msra.mxu0 %v4220
    %5615 = vmatprep.subr.mxu0 0.0
    %5616 = vmatpush1.msra.mxu0 %v4221
    %5617 = vmatprep.subr.mxu0 0.0
    %5618 = vmatpush1.msra.mxu0 %v4222
    %5619 = vmatprep.subr.mxu0 0.0
    %5620 = vmatpush1.msra.mxu0 %v4223
    %5621 = vmatprep.subr.mxu0 0.0
    %5622 = vmatpush1.msra.mxu0 %v4224
    %5623 = vmatprep.subr.mxu0 0.0
    %5624 = vmatpush1.msra.mxu0 %v4225
    %5625 = vmatprep.subr.mxu0 0.0
    %5626 = vmatpush1.msra.mxu0 %v4226
    %5627 = vmatprep.subr.mxu0 0.0
    %5628 = vmatpush1.msra.mxu0 %v4227
    %5629 = vmatprep.subr.mxu0 0.0
    %5630 = vmatpush1.msra.mxu0 %v4228
    %5631 = vmatprep.subr.mxu0 0.0
    %5632 = vmatpush1.msra.mxu0 %v4229
    %5633 = vmatprep.subr.mxu0 0.0
    %5634 = vmatpush1.msra.mxu0 %v4230
    %5635 = vmatprep.subr.mxu0 0.0
    %5636 = vmatpush1.msra.mxu0 %v4231
    %5637 = vmatprep.subr.mxu0 0.0
    %5638 = vmatpush1.msra.mxu0 %v4232
    %5639 = vmatprep.subr.mxu0 0.0
    %5640 = vmatpush1.msra.mxu0 %v4233
    %5641 = vmatprep.subr.mxu0 0.0
    %5642 = vmatpush1.msra.mxu0 %v4234
    %5643 = vmatprep.subr.mxu0 0.0
    %5644 = vmatpush1.msra.mxu0 %v4235
    %5645 = vmatprep.subr.mxu0 0.0
    %5646 = vmatpush1.msra.mxu0 %v4236
    %5647 = vmatprep.subr.mxu0 0.0
    %5648 = vmatpush1.msra.mxu0 %v4237
    %5649 = vmatprep.subr.mxu0 0.0
    %5650 = vmatpush1.msra.mxu0 %v4238
    %5651 = vmatprep.subr.mxu0 0.0
    %5652 = vmatpush1.msra.mxu0 %v4239
    %5653 = vmatprep.mubr.f32.mxu0 %v5581
    %5654 = vmatmul.mubr.f32.gmra.mrb[0].mxu0 %v5580
    %v5655 = vpop.f32.mrb[0].mxu0
    %v5656 = vadd.f32 0.0, %v5655
    %v5657 = vpop.f32.mrb[0].mxu0
    %5658 = vdwg.mxu0
    %5659 = vmatprep.subr.mxu0 0.0
    %5660 = vmatpush1.msra.mxu0 %v4240
    %5661 = vmatprep.subr.mxu0 0.0
    %5662 = vmatpush1.msra.mxu0 %v4241
    %5663 = vmatprep.subr.mxu0 0.0
    %5664 = vmatpush1.msra.mxu0 %v4242
    %5665 = vmatprep.subr.mxu0 0.0
    %5666 = vmatpush1.msra.mxu0 %v4243
    %5667 = vmatprep.subr.mxu0 0.0
    %5668 = vmatpush1.msra.mxu0 %v4244
    %5669 = vmatprep.subr.mxu0 0.0
    %5670 = vmatpush1.msra.mxu0 %v4245
    %5671 = vmatprep.subr.mxu0 0.0
    %5672 = vmatpush1.msra.mxu0 %v4246
    %5673 = vmatprep.subr.mxu0 0.0
    %5674 = vmatpush1.msra.mxu0 %v4247
    %5675 = vmatprep.subr.mxu0 0.0
    %5676 = vmatpush1.msra.mxu0 %v4248
    %5677 = vmatprep.subr.mxu0 0.0
    %5678 = vmatpush1.msra.mxu0 %v4249
    %5679 = vmatprep.subr.mxu0 0.0
    %5680 = vmatpush1.msra.mxu0 %v4250
    %5681 = vmatprep.subr.mxu0 0.0
    %5682 = vmatpush1.msra.mxu0 %v4251
    %5683 = vmatprep.subr.mxu0 0.0
    %5684 = vmatpush1.msra.mxu0 %v4252
    %5685 = vmatprep.subr.mxu0 0.0
    %5686 = vmatpush1.msra.mxu0 %v4253
    %5687 = vmatprep.subr.mxu0 0.0
    %5688 = vmatpush1.msra.mxu0 %v4254
    %5689 = vmatprep.subr.mxu0 0.0
    %5690 = vmatpush1.msra.mxu0 %v4255
    %5691 = vmatprep.subr.mxu0 0.0
    %5692 = vmatpush1.msra.mxu0 %v4256
    %5693 = vmatprep.subr.mxu0 0.0
    %5694 = vmatpush1.msra.mxu0 %v4257
    %5695 = vmatprep.subr.mxu0 0.0
    %5696 = vmatpush1.msra.mxu0 %v4258
    %5697 = vmatprep.subr.mxu0 0.0
    %5698 = vmatpush1.msra.mxu0 %v4259
    %5699 = vmatprep.subr.mxu0 0.0
    %5700 = vmatpush1.msra.mxu0 %v4260
    %5701 = vmatprep.subr.mxu0 0.0
    %5702 = vmatpush1.msra.mxu0 %v4261
    %5703 = vmatprep.subr.mxu0 0.0
    %5704 = vmatpush1.msra.mxu0 %v4262
    %5705 = vmatprep.subr.mxu0 0.0
    %5706 = vmatpush1.msra.mxu0 %v4263
    %5707 = vmatprep.subr.mxu0 0.0
    %5708 = vmatpush1.msra.mxu0 %v4264
    %5709 = vmatprep.subr.mxu0 0.0
    %5710 = vmatpush1.msra.mxu0 %v4265
    %5711 = vmatprep.subr.mxu0 0.0
    %5712 = vmatpush1.msra.mxu0 %v4266
    %5713 = vmatprep.subr.mxu0 0.0
    %5714 = vmatpush1.msra.mxu0 %v4267
    %5715 = vmatprep.subr.mxu0 0.0
    %5716 = vmatpush1.msra.mxu0 0.0
    %5717 = vmatprep.subr.mxu0 0.0
    %5718 = vmatpush1.msra.mxu0 0.0
    %5719 = vmatprep.subr.mxu0 0.0
    %5720 = vmatpush1.msra.mxu0 0.0
    %5721 = vmatprep.subr.mxu0 0.0
    %5722 = vmatpush1.msra.mxu0 0.0
    %5723 = vmatprep.mubr.f32.mxu0 %v5587
    %5724 = vmatmul.mubr.f32.gmra.mrb[0].mxu0 %v5582
    %v5725 = vpop.f32.mrb[0].mxu0
    %v5726 = vadd.f32 %v5656, %v5725
    %v5727 = vpop.f32.mrb[0].mxu0
    %5728 = vdwg.mxu0
    %v5733 = vlaneseq
    %v5734 = vshrl.u32 %v5733, 7
    %v5735 = vsub.s32 0, %v5734
    %v5736 = vrot.slane %v3980, %v5735
    %v5737 = vlaneseq
    %v5738 = vshrl.u32 %v5737, 7
    %v5739 = vsub.s32 4, %v5738
    %v5740 = vrot.slane %v3980, %v5739
    %v5741 = vlaneseq
    %v5742 = vshrl.u32 %v5741, 7
    %v5743 = vsub.s32 0, %v5742
    %v5744 = vrot.slane %v3981, %v5743
    %v5745 = vlaneseq
    %v5746 = vshrl.u32 %v5745, 7
    %v5747 = vsub.s32 4, %v5746
    %v5748 = vrot.slane %v3981, %v5747
    %v5749 = vlaneseq
    %v5750 = vshrl.u32 %v5749, 7
    %v5751 = vsub.s32 0, %v5750
    %v5752 = vrot.slane %v3982, %v5751
    %v5753 = vlaneseq
    %v5754 = vshrl.u32 %v5753, 7
    %v5755 = vsub.s32 4, %v5754
    %v5756 = vrot.slane %v3982, %v5755
    %v5757 = vlaneseq
    %v5758 = vshrl.u32 %v5757, 7
    %v5759 = vsub.s32 0, %v5758
    %v5760 = vrot.slane %v3983, %v5759
    %v5761 = vlaneseq
    %v5762 = vshrl.u32 %v5761, 7
    %v5763 = vsub.s32 4, %v5762
    %v5764 = vrot.slane %v3983, %v5763
    %v5765 = vsel %vm1928, %v5752, %v5736
    %v5766 = vsel %vm1928, %v5756, %v5740
    %v5767 = vsel %vm1928, %v5760, %v5744
    %v5768 = vsel %vm1928, %v5764, %v5748
    %v5772 = vsel %vm5031, %v5768, 0
    %5774 = vmatprep.subr.mxu0 0.0
    %5775 = vmatpush1.msra.mxu0 %v4268
    %5776 = vmatprep.subr.mxu0 0.0
    %5777 = vmatpush1.msra.mxu0 %v4269
    %5778 = vmatprep.subr.mxu0 0.0
    %5779 = vmatpush1.msra.mxu0 %v4270
    %5780 = vmatprep.subr.mxu0 0.0
    %5781 = vmatpush1.msra.mxu0 %v4271
    %5782 = vmatprep.subr.mxu0 0.0
    %5783 = vmatpush1.msra.mxu0 %v4272
    %5784 = vmatprep.subr.mxu0 0.0
    %5785 = vmatpush1.msra.mxu0 %v4273
    %5786 = vmatprep.subr.mxu0 0.0
    %5787 = vmatpush1.msra.mxu0 %v4274
    %5788 = vmatprep.subr.mxu0 0.0
    %5789 = vmatpush1.msra.mxu0 %v4275
    %5790 = vmatprep.subr.mxu0 0.0
    %5791 = vmatpush1.msra.mxu0 %v4276
    %5792 = vmatprep.subr.mxu0 0.0
    %5793 = vmatpush1.msra.mxu0 %v4277
    %5794 = vmatprep.subr.mxu0 0.0
    %5795 = vmatpush1.msra.mxu0 %v4278
    %5796 = vmatprep.subr.mxu0 0.0
    %5797 = vmatpush1.msra.mxu0 %v4279
    %5798 = vmatprep.subr.mxu0 0.0
    %5799 = vmatpush1.msra.mxu0 %v4280
    %5800 = vmatprep.subr.mxu0 0.0
    %5801 = vmatpush1.msra.mxu0 %v4281
    %5802 = vmatprep.subr.mxu0 0.0
    %5803 = vmatpush1.msra.mxu0 %v4282
    %5804 = vmatprep.subr.mxu0 0.0
    %5805 = vmatpush1.msra.mxu0 %v4283
    %5806 = vmatprep.subr.mxu0 0.0
    %5807 = vmatpush1.msra.mxu0 %v4284
    %5808 = vmatprep.subr.mxu0 0.0
    %5809 = vmatpush1.msra.mxu0 %v4285
    %5810 = vmatprep.subr.mxu0 0.0
    %5811 = vmatpush1.msra.mxu0 %v4286
    %5812 = vmatprep.subr.mxu0 0.0
    %5813 = vmatpush1.msra.mxu0 %v4287
    %5814 = vmatprep.subr.mxu0 0.0
    %5815 = vmatpush1.msra.mxu0 %v4288
    %5816 = vmatprep.subr.mxu0 0.0
    %5817 = vmatpush1.msra.mxu0 %v4289
    %5818 = vmatprep.subr.mxu0 0.0
    %5819 = vmatpush1.msra.mxu0 %v4290
    %5820 = vmatprep.subr.mxu0 0.0
    %5821 = vmatpush1.msra.mxu0 %v4291
    %5822 = vmatprep.subr.mxu0 0.0
    %5823 = vmatpush1.msra.mxu0 %v4292
    %5824 = vmatprep.subr.mxu0 0.0
    %5825 = vmatpush1.msra.mxu0 %v4293
    %5826 = vmatprep.subr.mxu0 0.0
    %5827 = vmatpush1.msra.mxu0 %v4294
    %5828 = vmatprep.subr.mxu0 0.0
    %5829 = vmatpush1.msra.mxu0 %v4295
    %5830 = vmatprep.subr.mxu0 0.0
    %5831 = vmatpush1.msra.mxu0 %v4296
    %5832 = vmatprep.subr.mxu0 0.0
    %5833 = vmatpush1.msra.mxu0 %v4297
    %5834 = vmatprep.subr.mxu0 0.0
    %5835 = vmatpush1.msra.mxu0 %v4298
    %5836 = vmatprep.subr.mxu0 0.0
    %5837 = vmatpush1.msra.mxu0 %v4299
    %5838 = vmatprep.mubr.f32.mxu0 %v5766
    %5839 = vmatmul.mubr.f32.gmra.mrb[0].mxu0 %v5765
    %v5840 = vpop.f32.mrb[0].mxu0
    %v5841 = vadd.f32 0.0, %v5840
    %v5842 = vpop.f32.mrb[0].mxu0
    %5843 = vdwg.mxu0
    %5844 = vmatprep.subr.mxu0 0.0
    %5845 = vmatpush1.msra.mxu0 %v4300
    %5846 = vmatprep.subr.mxu0 0.0
    %5847 = vmatpush1.msra.mxu0 %v4301
    %5848 = vmatprep.subr.mxu0 0.0
    %5849 = vmatpush1.msra.mxu0 %v4302
    %5850 = vmatprep.subr.mxu0 0.0
    %5851 = vmatpush1.msra.mxu0 %v4303
    %5852 = vmatprep.subr.mxu0 0.0
    %5853 = vmatpush1.msra.mxu0 %v4304
    %5854 = vmatprep.subr.mxu0 0.0
    %5855 = vmatpush1.msra.mxu0 %v4305
    %5856 = vmatprep.subr.mxu0 0.0
    %5857 = vmatpush1.msra.mxu0 %v4306
    %5858 = vmatprep.subr.mxu0 0.0
    %5859 = vmatpush1.msra.mxu0 %v4307
    %5860 = vmatprep.subr.mxu0 0.0
    %5861 = vmatpush1.msra.mxu0 %v4308
    %5862 = vmatprep.subr.mxu0 0.0
    %5863 = vmatpush1.msra.mxu0 %v4309
    %5864 = vmatprep.subr.mxu0 0.0
    %5865 = vmatpush1.msra.mxu0 %v4310
    %5866 = vmatprep.subr.mxu0 0.0
    %5867 = vmatpush1.msra.mxu0 %v4311
    %5868 = vmatprep.subr.mxu0 0.0
    %5869 = vmatpush1.msra.mxu0 %v4312
    %5870 = vmatprep.subr.mxu0 0.0
    %5871 = vmatpush1.msra.mxu0 %v4313
    %5872 = vmatprep.subr.mxu0 0.0
    %5873 = vmatpush1.msra.mxu0 %v4314
    %5874 = vmatprep.subr.mxu0 0.0
    %5875 = vmatpush1.msra.mxu0 %v4315
    %5876 = vmatprep.subr.mxu0 0.0
    %5877 = vmatpush1.msra.mxu0 %v4316
    %5878 = vmatprep.subr.mxu0 0.0
    %5879 = vmatpush1.msra.mxu0 %v4317
    %5880 = vmatprep.subr.mxu0 0.0
    %5881 = vmatpush1.msra.mxu0 %v4318
    %5882 = vmatprep.subr.mxu0 0.0
    %5883 = vmatpush1.msra.mxu0 %v4319
    %5884 = vmatprep.subr.mxu0 0.0
    %5885 = vmatpush1.msra.mxu0 %v4320
    %5886 = vmatprep.subr.mxu0 0.0
    %5887 = vmatpush1.msra.mxu0 %v4321
    %5888 = vmatprep.subr.mxu0 0.0
    %5889 = vmatpush1.msra.mxu0 %v4322
    %5890 = vmatprep.subr.mxu0 0.0
    %5891 = vmatpush1.msra.mxu0 %v4323
    %5892 = vmatprep.subr.mxu0 0.0
    %5893 = vmatpush1.msra.mxu0 %v4324
    %5894 = vmatprep.subr.mxu0 0.0
    %5895 = vmatpush1.msra.mxu0 %v4325
    %5896 = vmatprep.subr.mxu0 0.0
    %5897 = vmatpush1.msra.mxu0 %v4326
    %5898 = vmatprep.subr.mxu0 0.0
    %5899 = vmatpush1.msra.mxu0 %v4327
    %5900 = vmatprep.subr.mxu0 0.0
    %5901 = vmatpush1.msra.mxu0 0.0
    %5902 = vmatprep.subr.mxu0 0.0
    %5903 = vmatpush1.msra.mxu0 0.0
    %5904 = vmatprep.subr.mxu0 0.0
    %5905 = vmatpush1.msra.mxu0 0.0
    %5906 = vmatprep.subr.mxu0 0.0
    %5907 = vmatpush1.msra.mxu0 0.0
    %5908 = vmatprep.mubr.f32.mxu0 %v5772
    %5909 = vmatmul.mubr.f32.gmra.mrb[0].mxu0 %v5767
    %v5910 = vpop.f32.mrb[0].mxu0
    %v5911 = vadd.f32 %v5841, %v5910
    %v5912 = vpop.f32.mrb[0].mxu0
    %5913 = vdwg.mxu0
    %v5918 = vlaneseq
    %v5919 = vshrl.u32 %v5918, 7
    %v5920 = vsub.s32 0, %v5919
    %v5921 = vrot.slane %v3984, %v5920
    %v5922 = vlaneseq
    %v5923 = vshrl.u32 %v5922, 7
    %v5924 = vsub.s32 4, %v5923
    %v5925 = vrot.slane %v3984, %v5924
    %v5926 = vlaneseq
    %v5927 = vshrl.u32 %v5926, 7
    %v5928 = vsub.s32 0, %v5927
    %v5929 = vrot.slane %v3985, %v5928
    %v5930 = vlaneseq
    %v5931 = vshrl.u32 %v5930, 7
    %v5932 = vsub.s32 4, %v5931
    %v5933 = vrot.slane %v3985, %v5932
    %v5934 = vlaneseq
    %v5935 = vshrl.u32 %v5934, 7
    %v5936 = vsub.s32 0, %v5935
    %v5937 = vrot.slane %v3986, %v5936
    %v5938 = vlaneseq
    %v5939 = vshrl.u32 %v5938, 7
    %v5940 = vsub.s32 4, %v5939
    %v5941 = vrot.slane %v3986, %v5940
    %v5942 = vlaneseq
    %v5943 = vshrl.u32 %v5942, 7
    %v5944 = vsub.s32 0, %v5943
    %v5945 = vrot.slane %v3987, %v5944
    %v5946 = vlaneseq
    %v5947 = vshrl.u32 %v5946, 7
    %v5948 = vsub.s32 4, %v5947
    %v5949 = vrot.slane %v3987, %v5948
    %v5950 = vsel %vm1928, %v5937, %v5921
    %v5951 = vsel %vm1928, %v5941, %v5925
    %v5952 = vsel %vm1928, %v5945, %v5929
    %v5953 = vsel %vm1928, %v5949, %v5933
    %v5957 = vsel %vm5031, %v5953, 0
    %5959 = vmatprep.subr.mxu0 0.0
    %5960 = vmatpush1.msra.mxu0 %v4328
    %5961 = vmatprep.subr.mxu0 0.0
    %5962 = vmatpush1.msra.mxu0 %v4329
    %5963 = vmatprep.subr.mxu0 0.0
    %5964 = vmatpush1.msra.mxu0 %v4330
    %5965 = vmatprep.subr.mxu0 0.0
    %5966 = vmatpush1.msra.mxu0 %v4331
    %5967 = vmatprep.subr.mxu0 0.0
    %5968 = vmatpush1.msra.mxu0 %v4332
    %5969 = vmatprep.subr.mxu0 0.0
    %5970 = vmatpush1.msra.mxu0 %v4333
    %5971 = vmatprep.subr.mxu0 0.0
    %5972 = vmatpush1.msra.mxu0 %v4334
    %5973 = vmatprep.subr.mxu0 0.0
    %5974 = vmatpush1.msra.mxu0 %v4335
    %5975 = vmatprep.subr.mxu0 0.0
    %5976 = vmatpush1.msra.mxu0 %v4336
    %5977 = vmatprep.subr.mxu0 0.0
    %5978 = vmatpush1.msra.mxu0 %v4337
    %5979 = vmatprep.subr.mxu0 0.0
    %5980 = vmatpush1.msra.mxu0 %v4338
    %5981 = vmatprep.subr.mxu0 0.0
    %5982 = vmatpush1.msra.mxu0 %v4339
    %5983 = vmatprep.subr.mxu0 0.0
    %5984 = vmatpush1.msra.mxu0 %v4340
    %5985 = vmatprep.subr.mxu0 0.0
    %5986 = vmatpush1.msra.mxu0 %v4341
    %5987 = vmatprep.subr.mxu0 0.0
    %5988 = vmatpush1.msra.mxu0 %v4342
    %5989 = vmatprep.subr.mxu0 0.0
    %5990 = vmatpush1.msra.mxu0 %v4343
    %5991 = vmatprep.subr.mxu0 0.0
    %5992 = vmatpush1.msra.mxu0 %v4344
    %5993 = vmatprep.subr.mxu0 0.0
    %5994 = vmatpush1.msra.mxu0 %v4345
    %5995 = vmatprep.subr.mxu0 0.0
    %5996 = vmatpush1.msra.mxu0 %v4346
    %5997 = vmatprep.subr.mxu0 0.0
    %5998 = vmatpush1.msra.mxu0 %v4347
    %5999 = vmatprep.subr.mxu0 0.0
    %6000 = vmatpush1.msra.mxu0 %v4348
    %6001 = vmatprep.subr.mxu0 0.0
    %6002 = vmatpush1.msra.mxu0 %v4349
    %6003 = vmatprep.subr.mxu0 0.0
    %6004 = vmatpush1.msra.mxu0 %v4350
    %6005 = vmatprep.subr.mxu0 0.0
    %6006 = vmatpush1.msra.mxu0 %v4351
    %6007 = vmatprep.subr.mxu0 0.0
    %6008 = vmatpush1.msra.mxu0 %v4352
    %6009 = vmatprep.subr.mxu0 0.0
    %6010 = vmatpush1.msra.mxu0 %v4353
    %6011 = vmatprep.subr.mxu0 0.0
    %6012 = vmatpush1.msra.mxu0 %v4354
    %6013 = vmatprep.subr.mxu0 0.0
    %6014 = vmatpush1.msra.mxu0 %v4355
    %6015 = vmatprep.subr.mxu0 0.0
    %6016 = vmatpush1.msra.mxu0 %v4356
    %6017 = vmatprep.subr.mxu0 0.0
    %6018 = vmatpush1.msra.mxu0 %v4357
    %6019 = vmatprep.subr.mxu0 0.0
    %6020 = vmatpush1.msra.mxu0 %v4358
    %6021 = vmatprep.subr.mxu0 0.0
    %6022 = vmatpush1.msra.mxu0 %v4359
    %6023 = vmatprep.mubr.f32.mxu0 %v5951
    %6024 = vmatmul.mubr.f32.gmra.mrb[0].mxu0 %v5950
    %v6025 = vpop.f32.mrb[0].mxu0
    %v6026 = vadd.f32 0.0, %v6025
    %v6027 = vpop.f32.mrb[0].mxu0
    %6028 = vdwg.mxu0
    %6029 = vmatprep.subr.mxu0 0.0
    %6030 = vmatpush1.msra.mxu0 %v4360
    %6031 = vmatprep.subr.mxu0 0.0
    %6032 = vmatpush1.msra.mxu0 %v4361
    %6033 = vmatprep.subr.mxu0 0.0
    %6034 = vmatpush1.msra.mxu0 %v4362
    %6035 = vmatprep.subr.mxu0 0.0
    %6036 = vmatpush1.msra.mxu0 %v4363
    %6037 = vmatprep.subr.mxu0 0.0
    %6038 = vmatpush1.msra.mxu0 %v4364
    %6039 = vmatprep.subr.mxu0 0.0
    %6040 = vmatpush1.msra.mxu0 %v4365
    %6041 = vmatprep.subr.mxu0 0.0
    %6042 = vmatpush1.msra.mxu0 %v4366
    %6043 = vmatprep.subr.mxu0 0.0
    %6044 = vmatpush1.msra.mxu0 %v4367
    %6045 = vmatprep.subr.mxu0 0.0
    %6046 = vmatpush1.msra.mxu0 %v4368
    %6047 = vmatprep.subr.mxu0 0.0
    %6048 = vmatpush1.msra.mxu0 %v4369
    %6049 = vmatprep.subr.mxu0 0.0
    %6050 = vmatpush1.msra.mxu0 %v4370
    %6051 = vmatprep.subr.mxu0 0.0
    %6052 = vmatpush1.msra.mxu0 %v4371
    %6053 = vmatprep.subr.mxu0 0.0
    %6054 = vmatpush1.msra.mxu0 %v4372
    %6055 = vmatprep.subr.mxu0 0.0
    %6056 = vmatpush1.msra.mxu0 %v4373
    %6057 = vmatprep.subr.mxu0 0.0
    %6058 = vmatpush1.msra.mxu0 %v4374
    %6059 = vmatprep.subr.mxu0 0.0
    %6060 = vmatpush1.msra.mxu0 %v4375
    %6061 = vmatprep.subr.mxu0 0.0
    %6062 = vmatpush1.msra.mxu0 %v4376
    %6063 = vmatprep.subr.mxu0 0.0
    %6064 = vmatpush1.msra.mxu0 %v4377
    %6065 = vmatprep.subr.mxu0 0.0
    %6066 = vmatpush1.msra.mxu0 %v4378
    %6067 = vmatprep.subr.mxu0 0.0
    %6068 = vmatpush1.msra.mxu0 %v4379
    %6069 = vmatprep.subr.mxu0 0.0
    %6070 = vmatpush1.msra.mxu0 %v4380
    %6071 = vmatprep.subr.mxu0 0.0
    %6072 = vmatpush1.msra.mxu0 %v4381
    %6073 = vmatprep.subr.mxu0 0.0
    %6074 = vmatpush1.msra.mxu0 %v4382
    %6075 = vmatprep.subr.mxu0 0.0
    %6076 = vmatpush1.msra.mxu0 %v4383
    %6077 = vmatprep.subr.mxu0 0.0
    %6078 = vmatpush1.msra.mxu0 %v4384
    %6079 = vmatprep.subr.mxu0 0.0
    %6080 = vmatpush1.msra.mxu0 %v4385
    %6081 = vmatprep.subr.mxu0 0.0
    %6082 = vmatpush1.msra.mxu0 %v4386
    %6083 = vmatprep.subr.mxu0 0.0
    %6084 = vmatpush1.msra.mxu0 %v4387
    %6085 = vmatprep.subr.mxu0 0.0
    %6086 = vmatpush1.msra.mxu0 0.0
    %6087 = vmatprep.subr.mxu0 0.0
    %6088 = vmatpush1.msra.mxu0 0.0
    %6089 = vmatprep.subr.mxu0 0.0
    %6090 = vmatpush1.msra.mxu0 0.0
    %6091 = vmatprep.subr.mxu0 0.0
    %6092 = vmatpush1.msra.mxu0 0.0
    %6093 = vmatprep.mubr.f32.mxu0 %v5957
    %6094 = vmatmul.mubr.f32.gmra.mrb[0].mxu0 %v5952
    %v6095 = vpop.f32.mrb[0].mxu0
    %v6096 = vadd.f32 %v6026, %v6095
    %v6097 = vpop.f32.mrb[0].mxu0
    %6098 = vdwg.mxu0
    %v6103 = vlaneseq
    %v6104 = vshrl.u32 %v6103, 7
    %v6105 = vsub.s32 0, %v6104
    %v6106 = vrot.slane %v3988, %v6105
    %v6107 = vlaneseq
    %v6108 = vshrl.u32 %v6107, 7
    %v6109 = vsub.s32 4, %v6108
    %v6110 = vrot.slane %v3988, %v6109
    %v6111 = vlaneseq
    %v6112 = vshrl.u32 %v6111, 7
    %v6113 = vsub.s32 0, %v6112
    %v6114 = vrot.slane %v3989, %v6113
    %v6115 = vlaneseq
    %v6116 = vshrl.u32 %v6115, 7
    %v6117 = vsub.s32 4, %v6116
    %v6118 = vrot.slane %v3989, %v6117
    %v6119 = vlaneseq
    %v6120 = vshrl.u32 %v6119, 7
    %v6121 = vsub.s32 0, %v6120
    %v6122 = vrot.slane %v3990, %v6121
    %v6123 = vlaneseq
    %v6124 = vshrl.u32 %v6123, 7
    %v6125 = vsub.s32 4, %v6124
    %v6126 = vrot.slane %v3990, %v6125
    %v6127 = vlaneseq
    %v6128 = vshrl.u32 %v6127, 7
    %v6129 = vsub.s32 0, %v6128
    %v6130 = vrot.slane %v3991, %v6129
    %v6131 = vlaneseq
    %v6132 = vshrl.u32 %v6131, 7
    %v6133 = vsub.s32 4, %v6132
    %v6134 = vrot.slane %v3991, %v6133
    %v6135 = vsel %vm1928, %v6122, %v6106
    %v6136 = vsel %vm1928, %v6126, %v6110
    %v6137 = vsel %vm1928, %v6130, %v6114
    %v6138 = vsel %vm1928, %v6134, %v6118
    %v6142 = vsel %vm5031, %v6138, 0
    %6144 = vmatprep.subr.mxu0 0.0
    %6145 = vmatpush1.msra.mxu0 %v4388
    %6146 = vmatprep.subr.mxu0 0.0
    %6147 = vmatpush1.msra.mxu0 %v4389
    %6148 = vmatprep.subr.mxu0 0.0
    %6149 = vmatpush1.msra.mxu0 %v4390
    %6150 = vmatprep.subr.mxu0 0.0
    %6151 = vmatpush1.msra.mxu0 %v4391
    %6152 = vmatprep.subr.mxu0 0.0
    %6153 = vmatpush1.msra.mxu0 %v4392
    %6154 = vmatprep.subr.mxu0 0.0
    %6155 = vmatpush1.msra.mxu0 %v4393
    %6156 = vmatprep.subr.mxu0 0.0
    %6157 = vmatpush1.msra.mxu0 %v4394
    %6158 = vmatprep.subr.mxu0 0.0
    %6159 = vmatpush1.msra.mxu0 %v4395
    %6160 = vmatprep.subr.mxu0 0.0
    %6161 = vmatpush1.msra.mxu0 %v4396
    %6162 = vmatprep.subr.mxu0 0.0
    %6163 = vmatpush1.msra.mxu0 %v4397
    %6164 = vmatprep.subr.mxu0 0.0
    %6165 = vmatpush1.msra.mxu0 %v4398
    %6166 = vmatprep.subr.mxu0 0.0
    %6167 = vmatpush1.msra.mxu0 %v4399
    %6168 = vmatprep.subr.mxu0 0.0
    %6169 = vmatpush1.msra.mxu0 %v4400
    %6170 = vmatprep.subr.mxu0 0.0
    %6171 = vmatpush1.msra.mxu0 %v4401
    %6172 = vmatprep.subr.mxu0 0.0
    %6173 = vmatpush1.msra.mxu0 %v4402
    %6174 = vmatprep.subr.mxu0 0.0
    %6175 = vmatpush1.msra.mxu0 %v4403
    %6176 = vmatprep.subr.mxu0 0.0
    %6177 = vmatpush1.msra.mxu0 %v4404
    %6178 = vmatprep.subr.mxu0 0.0
    %6179 = vmatpush1.msra.mxu0 %v4405
    %6180 = vmatprep.subr.mxu0 0.0
    %6181 = vmatpush1.msra.mxu0 %v4406
    %6182 = vmatprep.subr.mxu0 0.0
    %6183 = vmatpush1.msra.mxu0 %v4407
    %6184 = vmatprep.subr.mxu0 0.0
    %6185 = vmatpush1.msra.mxu0 %v4408
    %6186 = vmatprep.subr.mxu0 0.0
    %6187 = vmatpush1.msra.mxu0 %v4409
    %6188 = vmatprep.subr.mxu0 0.0
    %6189 = vmatpush1.msra.mxu0 %v4410
    %6190 = vmatprep.subr.mxu0 0.0
    %6191 = vmatpush1.msra.mxu0 %v4411
    %6192 = vmatprep.subr.mxu0 0.0
    %6193 = vmatpush1.msra.mxu0 %v4412
    %6194 = vmatprep.subr.mxu0 0.0
    %6195 = vmatpush1.msra.mxu0 %v4413
    %6196 = vmatprep.subr.mxu0 0.0
    %6197 = vmatpush1.msra.mxu0 %v4414
    %6198 = vmatprep.subr.mxu0 0.0
    %6199 = vmatpush1.msra.mxu0 %v4415
    %6200 = vmatprep.subr.mxu0 0.0
    %6201 = vmatpush1.msra.mxu0 %v4416
    %6202 = vmatprep.subr.mxu0 0.0
    %6203 = vmatpush1.msra.mxu0 %v4417
    %6204 = vmatprep.subr.mxu0 0.0
    %6205 = vmatpush1.msra.mxu0 %v4418
    %6206 = vmatprep.subr.mxu0 0.0
    %6207 = vmatpush1.msra.mxu0 %v4419
    %6208 = vmatprep.mubr.f32.mxu0 %v6136
    %6209 = vmatmul.mubr.f32.gmra.mrb[0].mxu0 %v6135
    %v6210 = vpop.f32.mrb[0].mxu0
    %v6211 = vadd.f32 0.0, %v6210
    %v6212 = vpop.f32.mrb[0].mxu0
    %6213 = vdwg.mxu0
    %6214 = vmatprep.subr.mxu0 0.0
    %6215 = vmatpush1.msra.mxu0 %v4420
    %6216 = vmatprep.subr.mxu0 0.0
    %6217 = vmatpush1.msra.mxu0 %v4421
    %6218 = vmatprep.subr.mxu0 0.0
    %6219 = vmatpush1.msra.mxu0 %v4422
    %6220 = vmatprep.subr.mxu0 0.0
    %6221 = vmatpush1.msra.mxu0 %v4423
    %6222 = vmatprep.subr.mxu0 0.0
    %6223 = vmatpush1.msra.mxu0 %v4424
    %6224 = vmatprep.subr.mxu0 0.0
    %6225 = vmatpush1.msra.mxu0 %v4425
    %6226 = vmatprep.subr.mxu0 0.0
    %6227 = vmatpush1.msra.mxu0 %v4426
    %6228 = vmatprep.subr.mxu0 0.0
    %6229 = vmatpush1.msra.mxu0 %v4427
    %6230 = vmatprep.subr.mxu0 0.0
    %6231 = vmatpush1.msra.mxu0 %v4428
    %6232 = vmatprep.subr.mxu0 0.0
    %6233 = vmatpush1.msra.mxu0 %v4429
    %6234 = vmatprep.subr.mxu0 0.0
    %6235 = vmatpush1.msra.mxu0 %v4430
    %6236 = vmatprep.subr.mxu0 0.0
    %6237 = vmatpush1.msra.mxu0 %v4431
    %6238 = vmatprep.subr.mxu0 0.0
    %6239 = vmatpush1.msra.mxu0 %v4432
    %6240 = vmatprep.subr.mxu0 0.0
    %6241 = vmatpush1.msra.mxu0 %v4433
    %6242 = vmatprep.subr.mxu0 0.0
    %6243 = vmatpush1.msra.mxu0 %v4434
    %6244 = vmatprep.subr.mxu0 0.0
    %6245 = vmatpush1.msra.mxu0 %v4435
    %6246 = vmatprep.subr.mxu0 0.0
    %6247 = vmatpush1.msra.mxu0 %v4436
    %6248 = vmatprep.subr.mxu0 0.0
    %6249 = vmatpush1.msra.mxu0 %v4437
    %6250 = vmatprep.subr.mxu0 0.0
    %6251 = vmatpush1.msra.mxu0 %v4438
    %6252 = vmatprep.subr.mxu0 0.0
    %6253 = vmatpush1.msra.mxu0 %v4439
    %6254 = vmatprep.subr.mxu0 0.0
    %6255 = vmatpush1.msra.mxu0 %v4440
    %6256 = vmatprep.subr.mxu0 0.0
    %6257 = vmatpush1.msra.mxu0 %v4441
    %6258 = vmatprep.subr.mxu0 0.0
    %6259 = vmatpush1.msra.mxu0 %v4442
    %6260 = vmatprep.subr.mxu0 0.0
    %6261 = vmatpush1.msra.mxu0 %v4443
    %6262 = vmatprep.subr.mxu0 0.0
    %6263 = vmatpush1.msra.mxu0 %v4444
    %6264 = vmatprep.subr.mxu0 0.0
    %6265 = vmatpush1.msra.mxu0 %v4445
    %6266 = vmatprep.subr.mxu0 0.0
    %6267 = vmatpush1.msra.mxu0 %v4446
    %6268 = vmatprep.subr.mxu0 0.0
    %6269 = vmatpush1.msra.mxu0 %v4447
    %6270 = vmatprep.subr.mxu0 0.0
    %6271 = vmatpush1.msra.mxu0 0.0
    %6272 = vmatprep.subr.mxu0 0.0
    %6273 = vmatpush1.msra.mxu0 0.0
    %6274 = vmatprep.subr.mxu0 0.0
    %6275 = vmatpush1.msra.mxu0 0.0
    %6276 = vmatprep.subr.mxu0 0.0
    %6277 = vmatpush1.msra.mxu0 0.0
    %6278 = vmatprep.mubr.f32.mxu0 %v6142
    %6279 = vmatmul.mubr.f32.gmra.mrb[0].mxu0 %v6137
    %v6280 = vpop.f32.mrb[0].mxu0
    %v6281 = vadd.f32 %v6211, %v6280
    %v6282 = vpop.f32.mrb[0].mxu0
    %6283 = vdwg.mxu0
    %v6288 = vlaneseq
    %v6289 = vshrl.u32 %v6288, 7
    %v6290 = vsub.s32 0, %v6289
    %v6291 = vrot.slane %v3992, %v6290
    %v6292 = vlaneseq
    %v6293 = vshrl.u32 %v6292, 7
    %v6294 = vsub.s32 4, %v6293
    %v6295 = vrot.slane %v3992, %v6294
    %v6296 = vlaneseq
    %v6297 = vshrl.u32 %v6296, 7
    %v6298 = vsub.s32 0, %v6297
    %v6299 = vrot.slane %v3993, %v6298
    %v6300 = vlaneseq
    %v6301 = vshrl.u32 %v6300, 7
    %v6302 = vsub.s32 4, %v6301
    %v6303 = vrot.slane %v3993, %v6302
    %v6304 = vlaneseq
    %v6305 = vshrl.u32 %v6304, 7
    %v6306 = vsub.s32 0, %v6305
    %v6307 = vrot.slane %v3994, %v6306
    %v6308 = vlaneseq
    %v6309 = vshrl.u32 %v6308, 7
    %v6310 = vsub.s32 4, %v6309
    %v6311 = vrot.slane %v3994, %v6310
    %v6312 = vlaneseq
    %v6313 = vshrl.u32 %v6312, 7
    %v6314 = vsub.s32 0, %v6313
    %v6315 = vrot.slane %v3995, %v6314
    %v6316 = vlaneseq
    %v6317 = vshrl.u32 %v6316, 7
    %v6318 = vsub.s32 4, %v6317
    %v6319 = vrot.slane %v3995, %v6318
    %v6320 = vsel %vm1928, %v6307, %v6291
    %v6321 = vsel %vm1928, %v6311, %v6295
    %v6322 = vsel %vm1928, %v6315, %v6299
    %v6323 = vsel %vm1928, %v6319, %v6303
    %v6327 = vsel %vm5031, %v6323, 0
    %6329 = vmatprep.subr.mxu0 0.0
    %6330 = vmatpush1.msra.mxu0 %v4448
    %6331 = vmatprep.subr.mxu0 0.0
    %6332 = vmatpush1.msra.mxu0 %v4449
    %6333 = vmatprep.subr.mxu0 0.0
    %6334 = vmatpush1.msra.mxu0 %v4450
    %6335 = vmatprep.subr.mxu0 0.0
    %6336 = vmatpush1.msra.mxu0 %v4451
    %6337 = vmatprep.subr.mxu0 0.0
    %6338 = vmatpush1.msra.mxu0 %v4452
    %6339 = vmatprep.subr.mxu0 0.0
    %6340 = vmatpush1.msra.mxu0 %v4453
    %6341 = vmatprep.subr.mxu0 0.0
    %6342 = vmatpush1.msra.mxu0 %v4454
    %6343 = vmatprep.subr.mxu0 0.0
    %6344 = vmatpush1.msra.mxu0 %v4455
    %6345 = vmatprep.subr.mxu0 0.0
    %6346 = vmatpush1.msra.mxu0 %v4456
    %6347 = vmatprep.subr.mxu0 0.0
    %6348 = vmatpush1.msra.mxu0 %v4457
    %6349 = vmatprep.subr.mxu0 0.0
    %6350 = vmatpush1.msra.mxu0 %v4458
    %6351 = vmatprep.subr.mxu0 0.0
    %6352 = vmatpush1.msra.mxu0 %v4459
    %6353 = vmatprep.subr.mxu0 0.0
    %6354 = vmatpush1.msra.mxu0 %v4460
    %6355 = vmatprep.subr.mxu0 0.0
    %6356 = vmatpush1.msra.mxu0 %v4461
    %6357 = vmatprep.subr.mxu0 0.0
    %6358 = vmatpush1.msra.mxu0 %v4462
    %6359 = vmatprep.subr.mxu0 0.0
    %6360 = vmatpush1.msra.mxu0 %v4463
    %6361 = vmatprep.subr.mxu0 0.0
    %6362 = vmatpush1.msra.mxu0 %v4464
    %6363 = vmatprep.subr.mxu0 0.0
    %6364 = vmatpush1.msra.mxu0 %v4465
    %6365 = vmatprep.subr.mxu0 0.0
    %6366 = vmatpush1.msra.mxu0 %v4466
    %6367 = vmatprep.subr.mxu0 0.0
    %6368 = vmatpush1.msra.mxu0 %v4467
    %6369 = vmatprep.subr.mxu0 0.0
    %6370 = vmatpush1.msra.mxu0 %v4468
    %6371 = vmatprep.subr.mxu0 0.0
    %6372 = vmatpush1.msra.mxu0 %v4469
    %6373 = vmatprep.subr.mxu0 0.0
    %6374 = vmatpush1.msra.mxu0 %v4470
    %6375 = vmatprep.subr.mxu0 0.0
    %6376 = vmatpush1.msra.mxu0 %v4471
    %6377 = vmatprep.subr.mxu0 0.0
    %6378 = vmatpush1.msra.mxu0 %v4472
    %6379 = vmatprep.subr.mxu0 0.0
    %6380 = vmatpush1.msra.mxu0 %v4473
    %6381 = vmatprep.subr.mxu0 0.0
    %6382 = vmatpush1.msra.mxu0 %v4474
    %6383 = vmatprep.subr.mxu0 0.0
    %6384 = vmatpush1.msra.mxu0 %v4475
    %6385 = vmatprep.subr.mxu0 0.0
    %6386 = vmatpush1.msra.mxu0 %v4476
    %6387 = vmatprep.subr.mxu0 0.0
    %6388 = vmatpush1.msra.mxu0 %v4477
    %6389 = vmatprep.subr.mxu0 0.0
    %6390 = vmatpush1.msra.mxu0 %v4478
    %6391 = vmatprep.subr.mxu0 0.0
    %6392 = vmatpush1.msra.mxu0 %v4479
    %6393 = vmatprep.mubr.f32.mxu0 %v6321
    %6394 = vmatmul.mubr.f32.gmra.mrb[0].mxu0 %v6320
    %v6395 = vpop.f32.mrb[0].mxu0
    %v6396 = vadd.f32 0.0, %v6395
    %v6397 = vpop.f32.mrb[0].mxu0
    %6398 = vdwg.mxu0
    %6399 = vmatprep.subr.mxu0 0.0
    %6400 = vmatpush1.msra.mxu0 %v4480
    %6401 = vmatprep.subr.mxu0 0.0
    %6402 = vmatpush1.msra.mxu0 %v4481
    %6403 = vmatprep.subr.mxu0 0.0
    %6404 = vmatpush1.msra.mxu0 %v4482
    %6405 = vmatprep.subr.mxu0 0.0
    %6406 = vmatpush1.msra.mxu0 %v4483
    %6407 = vmatprep.subr.mxu0 0.0
    %6408 = vmatpush1.msra.mxu0 %v4484
    %6409 = vmatprep.subr.mxu0 0.0
    %6410 = vmatpush1.msra.mxu0 %v4485
    %6411 = vmatprep.subr.mxu0 0.0
    %6412 = vmatpush1.msra.mxu0 %v4486
    %6413 = vmatprep.subr.mxu0 0.0
    %6414 = vmatpush1.msra.mxu0 %v4487
    %6415 = vmatprep.subr.mxu0 0.0
    %6416 = vmatpush1.msra.mxu0 %v4488
    %6417 = vmatprep.subr.mxu0 0.0
    %6418 = vmatpush1.msra.mxu0 %v4489
    %6419 = vmatprep.subr.mxu0 0.0
    %6420 = vmatpush1.msra.mxu0 %v4490
    %6421 = vmatprep.subr.mxu0 0.0
    %6422 = vmatpush1.msra.mxu0 %v4491
    %6423 = vmatprep.subr.mxu0 0.0
    %6424 = vmatpush1.msra.mxu0 %v4492
    %6425 = vmatprep.subr.mxu0 0.0
    %6426 = vmatpush1.msra.mxu0 %v4493
    %6427 = vmatprep.subr.mxu0 0.0
    %6428 = vmatpush1.msra.mxu0 %v4494
    %6429 = vmatprep.subr.mxu0 0.0
    %6430 = vmatpush1.msra.mxu0 %v4495
    %6431 = vmatprep.subr.mxu0 0.0
    %6432 = vmatpush1.msra.mxu0 %v4496
    %6433 = vmatprep.subr.mxu0 0.0
    %6434 = vmatpush1.msra.mxu0 %v4497
    %6435 = vmatprep.subr.mxu0 0.0
    %6436 = vmatpush1.msra.mxu0 %v4498
    %6437 = vmatprep.subr.mxu0 0.0
    %6438 = vmatpush1.msra.mxu0 %v4499
    %6439 = vmatprep.subr.mxu0 0.0
    %6440 = vmatpush1.msra.mxu0 %v4500
    %6441 = vmatprep.subr.mxu0 0.0
    %6442 = vmatpush1.msra.mxu0 %v4501
    %6443 = vmatprep.subr.mxu0 0.0
    %6444 = vmatpush1.msra.mxu0 %v4502
    %6445 = vmatprep.subr.mxu0 0.0
    %6446 = vmatpush1.msra.mxu0 %v4503
    %6447 = vmatprep.subr.mxu0 0.0
    %6448 = vmatpush1.msra.mxu0 %v4504
    %6449 = vmatprep.subr.mxu0 0.0
    %6450 = vmatpush1.msra.mxu0 %v4505
    %6451 = vmatprep.subr.mxu0 0.0
    %6452 = vmatpush1.msra.mxu0 %v4506
    %6453 = vmatprep.subr.mxu0 0.0
    %6454 = vmatpush1.msra.mxu0 %v4507
    %6455 = vmatprep.subr.mxu0 0.0
    %6456 = vmatpush1.msra.mxu0 0.0
    %6457 = vmatprep.subr.mxu0 0.0
    %6458 = vmatpush1.msra.mxu0 0.0
    %6459 = vmatprep.subr.mxu0 0.0
    %6460 = vmatpush1.msra.mxu0 0.0
    %6461 = vmatprep.subr.mxu0 0.0
    %6462 = vmatpush1.msra.mxu0 0.0
    %6463 = vmatprep.mubr.f32.mxu0 %v6327
    %6464 = vmatmul.mubr.f32.gmra.mrb[0].mxu0 %v6322
    %v6465 = vpop.f32.mrb[0].mxu0
    %v6466 = vadd.f32 %v6396, %v6465
    %v6467 = vpop.f32.mrb[0].mxu0
    %6468 = vdwg.mxu0
    %v6473 = vlaneseq
    %v6474 = vshrl.u32 %v6473, 7
    %v6475 = vsub.s32 0, %v6474
    %v6476 = vrot.slane %v3996, %v6475
    %v6477 = vlaneseq
    %v6478 = vshrl.u32 %v6477, 7
    %v6479 = vsub.s32 4, %v6478
    %v6480 = vrot.slane %v3996, %v6479
    %v6481 = vlaneseq
    %v6482 = vshrl.u32 %v6481, 7
    %v6483 = vsub.s32 0, %v6482
    %v6484 = vrot.slane %v3997, %v6483
    %v6485 = vlaneseq
    %v6486 = vshrl.u32 %v6485, 7
    %v6487 = vsub.s32 4, %v6486
    %v6488 = vrot.slane %v3997, %v6487
    %v6489 = vlaneseq
    %v6490 = vshrl.u32 %v6489, 7
    %v6491 = vsub.s32 0, %v6490
    %v6492 = vrot.slane %v3998, %v6491
    %v6493 = vlaneseq
    %v6494 = vshrl.u32 %v6493, 7
    %v6495 = vsub.s32 4, %v6494
    %v6496 = vrot.slane %v3998, %v6495
    %v6497 = vlaneseq
    %v6498 = vshrl.u32 %v6497, 7
    %v6499 = vsub.s32 0, %v6498
    %v6500 = vrot.slane %v3999, %v6499
    %v6501 = vlaneseq
    %v6502 = vshrl.u32 %v6501, 7
    %v6503 = vsub.s32 4, %v6502
    %v6504 = vrot.slane %v3999, %v6503
    %v6505 = vsel %vm1928, %v6492, %v6476
    %v6506 = vsel %vm1928, %v6496, %v6480
    %v6507 = vsel %vm1928, %v6500, %v6484
    %v6508 = vsel %vm1928, %v6504, %v6488
    %v6512 = vsel %vm5031, %v6508, 0
    %6514 = vmatprep.subr.mxu0 0.0
    %6515 = vmatpush1.msra.mxu0 %v4508
    %6516 = vmatprep.subr.mxu0 0.0
    %6517 = vmatpush1.msra.mxu0 %v4509
    %6518 = vmatprep.subr.mxu0 0.0
    %6519 = vmatpush1.msra.mxu0 %v4510
    %6520 = vmatprep.subr.mxu0 0.0
    %6521 = vmatpush1.msra.mxu0 %v4511
    %6522 = vmatprep.subr.mxu0 0.0
    %6523 = vmatpush1.msra.mxu0 %v4512
    %6524 = vmatprep.subr.mxu0 0.0
    %6525 = vmatpush1.msra.mxu0 %v4513
    %6526 = vmatprep.subr.mxu0 0.0
    %6527 = vmatpush1.msra.mxu0 %v4514
    %6528 = vmatprep.subr.mxu0 0.0
    %6529 = vmatpush1.msra.mxu0 %v4515
    %6530 = vmatprep.subr.mxu0 0.0
    %6531 = vmatpush1.msra.mxu0 %v4516
    %6532 = vmatprep.subr.mxu0 0.0
    %6533 = vmatpush1.msra.mxu0 %v4517
    %6534 = vmatprep.subr.mxu0 0.0
    %6535 = vmatpush1.msra.mxu0 %v4518
    %6536 = vmatprep.subr.mxu0 0.0
    %6537 = vmatpush1.msra.mxu0 %v4519
    %6538 = vmatprep.subr.mxu0 0.0
    %6539 = vmatpush1.msra.mxu0 %v4520
    %6540 = vmatprep.subr.mxu0 0.0
    %6541 = vmatpush1.msra.mxu0 %v4521
    %6542 = vmatprep.subr.mxu0 0.0
    %6543 = vmatpush1.msra.mxu0 %v4522
    %6544 = vmatprep.subr.mxu0 0.0
    %6545 = vmatpush1.msra.mxu0 %v4523
    %6546 = vmatprep.subr.mxu0 0.0
    %6547 = vmatpush1.msra.mxu0 %v4524
    %6548 = vmatprep.subr.mxu0 0.0
    %6549 = vmatpush1.msra.mxu0 %v4525
    %6550 = vmatprep.subr.mxu0 0.0
    %6551 = vmatpush1.msra.mxu0 %v4526
    %6552 = vmatprep.subr.mxu0 0.0
    %6553 = vmatpush1.msra.mxu0 %v4527
    %6554 = vmatprep.subr.mxu0 0.0
    %6555 = vmatpush1.msra.mxu0 %v4528
    %6556 = vmatprep.subr.mxu0 0.0
    %6557 = vmatpush1.msra.mxu0 %v4529
    %6558 = vmatprep.subr.mxu0 0.0
    %6559 = vmatpush1.msra.mxu0 %v4530
    %6560 = vmatprep.subr.mxu0 0.0
    %6561 = vmatpush1.msra.mxu0 %v4531
    %6562 = vmatprep.subr.mxu0 0.0
    %6563 = vmatpush1.msra.mxu0 %v4532
    %6564 = vmatprep.subr.mxu0 0.0
    %6565 = vmatpush1.msra.mxu0 %v4533
    %6566 = vmatprep.subr.mxu0 0.0
    %6567 = vmatpush1.msra.mxu0 %v4534
    %6568 = vmatprep.subr.mxu0 0.0
    %6569 = vmatpush1.msra.mxu0 %v4535
    %6570 = vmatprep.subr.mxu0 0.0
    %6571 = vmatpush1.msra.mxu0 %v4536
    %6572 = vmatprep.subr.mxu0 0.0
    %6573 = vmatpush1.msra.mxu0 %v4537
    %6574 = vmatprep.subr.mxu0 0.0
    %6575 = vmatpush1.msra.mxu0 %v4538
    %6576 = vmatprep.subr.mxu0 0.0
    %6577 = vmatpush1.msra.mxu0 %v4539
    %6578 = vmatprep.mubr.f32.mxu0 %v6506
    %6579 = vmatmul.mubr.f32.gmra.mrb[0].mxu0 %v6505
    %v6580 = vpop.f32.mrb[0].mxu0
    %v6581 = vadd.f32 0.0, %v6580
    %v6582 = vpop.f32.mrb[0].mxu0
    %6583 = vdwg.mxu0
    %6584 = vmatprep.subr.mxu0 0.0
    %6585 = vmatpush1.msra.mxu0 %v4540
    %6586 = vmatprep.subr.mxu0 0.0
    %6587 = vmatpush1.msra.mxu0 %v4541
    %6588 = vmatprep.subr.mxu0 0.0
    %6589 = vmatpush1.msra.mxu0 %v4542
    %6590 = vmatprep.subr.mxu0 0.0
    %6591 = vmatpush1.msra.mxu0 %v4543
    %6592 = vmatprep.subr.mxu0 0.0
    %6593 = vmatpush1.msra.mxu0 %v4544
    %6594 = vmatprep.subr.mxu0 0.0
    %6595 = vmatpush1.msra.mxu0 %v4545
    %6596 = vmatprep.subr.mxu0 0.0
    %6597 = vmatpush1.msra.mxu0 %v4546
    %6598 = vmatprep.subr.mxu0 0.0
    %6599 = vmatpush1.msra.mxu0 %v4547
    %6600 = vmatprep.subr.mxu0 0.0
    %6601 = vmatpush1.msra.mxu0 %v4548
    %6602 = vmatprep.subr.mxu0 0.0
    %6603 = vmatpush1.msra.mxu0 %v4549
    %6604 = vmatprep.subr.mxu0 0.0
    %6605 = vmatpush1.msra.mxu0 %v4550
    %6606 = vmatprep.subr.mxu0 0.0
    %6607 = vmatpush1.msra.mxu0 %v4551
    %6608 = vmatprep.subr.mxu0 0.0
    %6609 = vmatpush1.msra.mxu0 %v4552
    %6610 = vmatprep.subr.mxu0 0.0
    %6611 = vmatpush1.msra.mxu0 %v4553
    %6612 = vmatprep.subr.mxu0 0.0
    %6613 = vmatpush1.msra.mxu0 %v4554
    %6614 = vmatprep.subr.mxu0 0.0
    %6615 = vmatpush1.msra.mxu0 %v4555
    %6616 = vmatprep.subr.mxu0 0.0
    %6617 = vmatpush1.msra.mxu0 %v4556
    %6618 = vmatprep.subr.mxu0 0.0
    %6619 = vmatpush1.msra.mxu0 %v4557
    %6620 = vmatprep.subr.mxu0 0.0
    %6621 = vmatpush1.msra.mxu0 %v4558
    %6622 = vmatprep.subr.mxu0 0.0
    %6623 = vmatpush1.msra.mxu0 %v4559
    %6624 = vmatprep.subr.mxu0 0.0
    %6625 = vmatpush1.msra.mxu0 %v4560
    %6626 = vmatprep.subr.mxu0 0.0
    %6627 = vmatpush1.msra.mxu0 %v4561
    %6628 = vmatprep.subr.mxu0 0.0
    %6629 = vmatpush1.msra.mxu0 %v4562
    %6630 = vmatprep.subr.mxu0 0.0
    %6631 = vmatpush1.msra.mxu0 %v4563
    %6632 = vmatprep.subr.mxu0 0.0
    %6633 = vmatpush1.msra.mxu0 %v4564
    %6634 = vmatprep.subr.mxu0 0.0
    %6635 = vmatpush1.msra.mxu0 %v4565
    %6636 = vmatprep.subr.mxu0 0.0
    %6637 = vmatpush1.msra.mxu0 %v4566
    %6638 = vmatprep.subr.mxu0 0.0
    %6639 = vmatpush1.msra.mxu0 %v4567
    %6640 = vmatprep.subr.mxu0 0.0
    %6641 = vmatpush1.msra.mxu0 0.0
    %6642 = vmatprep.subr.mxu0 0.0
    %6643 = vmatpush1.msra.mxu0 0.0
    %6644 = vmatprep.subr.mxu0 0.0
    %6645 = vmatpush1.msra.mxu0 0.0
    %6646 = vmatprep.subr.mxu0 0.0
    %6647 = vmatpush1.msra.mxu0 0.0
    %6648 = vmatprep.mubr.f32.mxu0 %v6512
    %6649 = vmatmul.mubr.f32.gmra.mrb[0].mxu0 %v6507
    %v6650 = vpop.f32.mrb[0].mxu0
    %v6651 = vadd.f32 %v6581, %v6650
    %v6652 = vpop.f32.mrb[0].mxu0
    %6653 = vdwg.mxu0
    %v6658 = vlaneseq
    %v6659 = vshrl.u32 %v6658, 7
    %v6660 = vsub.s32 0, %v6659
    %v6661 = vrot.slane %v4000, %v6660
    %v6662 = vlaneseq
    %v6663 = vshrl.u32 %v6662, 7
    %v6664 = vsub.s32 4, %v6663
    %v6665 = vrot.slane %v4000, %v6664
    %v6666 = vlaneseq
    %v6667 = vshrl.u32 %v6666, 7
    %v6668 = vsub.s32 0, %v6667
    %v6669 = vrot.slane %v4001, %v6668
    %v6670 = vlaneseq
    %v6671 = vshrl.u32 %v6670, 7
    %v6672 = vsub.s32 4, %v6671
    %v6673 = vrot.slane %v4001, %v6672
    %v6674 = vlaneseq
    %v6675 = vshrl.u32 %v6674, 7
    %v6676 = vsub.s32 0, %v6675
    %v6677 = vrot.slane %v4002, %v6676
    %v6678 = vlaneseq
    %v6679 = vshrl.u32 %v6678, 7
    %v6680 = vsub.s32 4, %v6679
    %v6681 = vrot.slane %v4002, %v6680
    %v6682 = vlaneseq
    %v6683 = vshrl.u32 %v6682, 7
    %v6684 = vsub.s32 0, %v6683
    %v6685 = vrot.slane %v4003, %v6684
    %v6686 = vlaneseq
    %v6687 = vshrl.u32 %v6686, 7
    %v6688 = vsub.s32 4, %v6687
    %v6689 = vrot.slane %v4003, %v6688
    %v6690 = vsel %vm1928, %v6677, %v6661
    %v6691 = vsel %vm1928, %v6681, %v6665
    %v6692 = vsel %vm1928, %v6685, %v6669
    %v6693 = vsel %vm1928, %v6689, %v6673
    %v6697 = vsel %vm5031, %v6693, 0
    %6699 = vmatprep.subr.mxu0 0.0
    %6700 = vmatpush1.msra.mxu0 %v4568
    %6701 = vmatprep.subr.mxu0 0.0
    %6702 = vmatpush1.msra.mxu0 %v4569
    %6703 = vmatprep.subr.mxu0 0.0
    %6704 = vmatpush1.msra.mxu0 %v4570
    %6705 = vmatprep.subr.mxu0 0.0
    %6706 = vmatpush1.msra.mxu0 %v4571
    %6707 = vmatprep.subr.mxu0 0.0
    %6708 = vmatpush1.msra.mxu0 %v4572
    %6709 = vmatprep.subr.mxu0 0.0
    %6710 = vmatpush1.msra.mxu0 %v4573
    %6711 = vmatprep.subr.mxu0 0.0
    %6712 = vmatpush1.msra.mxu0 %v4574
    %6713 = vmatprep.subr.mxu0 0.0
    %6714 = vmatpush1.msra.mxu0 %v4575
    %6715 = vmatprep.subr.mxu0 0.0
    %6716 = vmatpush1.msra.mxu0 %v4576
    %6717 = vmatprep.subr.mxu0 0.0
    %6718 = vmatpush1.msra.mxu0 %v4577
    %6719 = vmatprep.subr.mxu0 0.0
    %6720 = vmatpush1.msra.mxu0 %v4578
    %6721 = vmatprep.subr.mxu0 0.0
    %6722 = vmatpush1.msra.mxu0 %v4579
    %6723 = vmatprep.subr.mxu0 0.0
    %6724 = vmatpush1.msra.mxu0 %v4580
    %6725 = vmatprep.subr.mxu0 0.0
    %6726 = vmatpush1.msra.mxu0 %v4581
    %6727 = vmatprep.subr.mxu0 0.0
    %6728 = vmatpush1.msra.mxu0 %v4582
    %6729 = vmatprep.subr.mxu0 0.0
    %6730 = vmatpush1.msra.mxu0 %v4583
    %6731 = vmatprep.subr.mxu0 0.0
    %6732 = vmatpush1.msra.mxu0 %v4584
    %6733 = vmatprep.subr.mxu0 0.0
    %6734 = vmatpush1.msra.mxu0 %v4585
    %6735 = vmatprep.subr.mxu0 0.0
    %6736 = vmatpush1.msra.mxu0 %v4586
    %6737 = vmatprep.subr.mxu0 0.0
    %6738 = vmatpush1.msra.mxu0 %v4587
    %6739 = vmatprep.subr.mxu0 0.0
    %6740 = vmatpush1.msra.mxu0 %v4588
    %6741 = vmatprep.subr.mxu0 0.0
    %6742 = vmatpush1.msra.mxu0 %v4589
    %6743 = vmatprep.subr.mxu0 0.0
    %6744 = vmatpush1.msra.mxu0 %v4590
    %6745 = vmatprep.subr.mxu0 0.0
    %6746 = vmatpush1.msra.mxu0 %v4591
    %6747 = vmatprep.subr.mxu0 0.0
    %6748 = vmatpush1.msra.mxu0 %v4592
    %6749 = vmatprep.subr.mxu0 0.0
    %6750 = vmatpush1.msra.mxu0 %v4593
    %6751 = vmatprep.subr.mxu0 0.0
    %6752 = vmatpush1.msra.mxu0 %v4594
    %6753 = vmatprep.subr.mxu0 0.0
    %6754 = vmatpush1.msra.mxu0 %v4595
    %6755 = vmatprep.subr.mxu0 0.0
    %6756 = vmatpush1.msra.mxu0 %v4596
    %6757 = vmatprep.subr.mxu0 0.0
    %6758 = vmatpush1.msra.mxu0 %v4597
    %6759 = vmatprep.subr.mxu0 0.0
    %6760 = vmatpush1.msra.mxu0 %v4598
    %6761 = vmatprep.subr.mxu0 0.0
    %6762 = vmatpush1.msra.mxu0 %v4599
    %6763 = vmatprep.mubr.f32.mxu0 %v6691
    %6764 = vmatmul.mubr.f32.gmra.mrb[0].mxu0 %v6690
    %v6765 = vpop.f32.mrb[0].mxu0
    %v6766 = vadd.f32 0.0, %v6765
    %v6767 = vpop.f32.mrb[0].mxu0
    %6768 = vdwg.mxu0
    %6769 = vmatprep.subr.mxu0 0.0
    %6770 = vmatpush1.msra.mxu0 %v4600
    %6771 = vmatprep.subr.mxu0 0.0
    %6772 = vmatpush1.msra.mxu0 %v4601
    %6773 = vmatprep.subr.mxu0 0.0
    %6774 = vmatpush1.msra.mxu0 %v4602
    %6775 = vmatprep.subr.mxu0 0.0
    %6776 = vmatpush1.msra.mxu0 %v4603
    %6777 = vmatprep.subr.mxu0 0.0
    %6778 = vmatpush1.msra.mxu0 %v4604
    %6779 = vmatprep.subr.mxu0 0.0
    %6780 = vmatpush1.msra.mxu0 %v4605
    %6781 = vmatprep.subr.mxu0 0.0
    %6782 = vmatpush1.msra.mxu0 %v4606
    %6783 = vmatprep.subr.mxu0 0.0
    %6784 = vmatpush1.msra.mxu0 %v4607
    %6785 = vmatprep.subr.mxu0 0.0
    %6786 = vmatpush1.msra.mxu0 %v4608
    %6787 = vmatprep.subr.mxu0 0.0
    %6788 = vmatpush1.msra.mxu0 %v4609
    %6789 = vmatprep.subr.mxu0 0.0
    %6790 = vmatpush1.msra.mxu0 %v4610
    %6791 = vmatprep.subr.mxu0 0.0
    %6792 = vmatpush1.msra.mxu0 %v4611
    %6793 = vmatprep.subr.mxu0 0.0
    %6794 = vmatpush1.msra.mxu0 %v4612
    %6795 = vmatprep.subr.mxu0 0.0
    %6796 = vmatpush1.msra.mxu0 %v4613
    %6797 = vmatprep.subr.mxu0 0.0
    %6798 = vmatpush1.msra.mxu0 %v4614
    %6799 = vmatprep.subr.mxu0 0.0
    %6800 = vmatpush1.msra.mxu0 %v4615
    %6801 = vmatprep.subr.mxu0 0.0
    %6802 = vmatpush1.msra.mxu0 %v4616
    %6803 = vmatprep.subr.mxu0 0.0
    %6804 = vmatpush1.msra.mxu0 %v4617
    %6805 = vmatprep.subr.mxu0 0.0
    %6806 = vmatpush1.msra.mxu0 %v4618
    %6807 = vmatprep.subr.mxu0 0.0
    %6808 = vmatpush1.msra.mxu0 %v4619
    %6809 = vmatprep.subr.mxu0 0.0
    %6810 = vmatpush1.msra.mxu0 %v4620
    %6811 = vmatprep.subr.mxu0 0.0
    %6812 = vmatpush1.msra.mxu0 %v4621
    %6813 = vmatprep.subr.mxu0 0.0
    %6814 = vmatpush1.msra.mxu0 %v4622
    %6815 = vmatprep.subr.mxu0 0.0
    %6816 = vmatpush1.msra.mxu0 %v4623
    %6817 = vmatprep.subr.mxu0 0.0
    %6818 = vmatpush1.msra.mxu0 %v4624
    %6819 = vmatprep.subr.mxu0 0.0
    %6820 = vmatpush1.msra.mxu0 %v4625
    %6821 = vmatprep.subr.mxu0 0.0
    %6822 = vmatpush1.msra.mxu0 %v4626
    %6823 = vmatprep.subr.mxu0 0.0
    %6824 = vmatpush1.msra.mxu0 %v4627
    %6825 = vmatprep.subr.mxu0 0.0
    %6826 = vmatpush1.msra.mxu0 0.0
    %6827 = vmatprep.subr.mxu0 0.0
    %6828 = vmatpush1.msra.mxu0 0.0
    %6829 = vmatprep.subr.mxu0 0.0
    %6830 = vmatpush1.msra.mxu0 0.0
    %6831 = vmatprep.subr.mxu0 0.0
    %6832 = vmatpush1.msra.mxu0 0.0
    %6833 = vmatprep.mubr.f32.mxu0 %v6697
    %6834 = vmatmul.mubr.f32.gmra.mrb[0].mxu0 %v6692
    %v6835 = vpop.f32.mrb[0].mxu0
    %v6836 = vadd.f32 %v6766, %v6835
    %v6837 = vpop.f32.mrb[0].mxu0
    %6838 = vdwg.mxu0
    %v6843 = vlaneseq
    %v6844 = vshrl.u32 %v6843, 7
    %v6845 = vsub.s32 0, %v6844
    %v6846 = vrot.slane %v4004, %v6845
    %v6847 = vlaneseq
    %v6848 = vshrl.u32 %v6847, 7
    %v6849 = vsub.s32 4, %v6848
    %v6850 = vrot.slane %v4004, %v6849
    %v6851 = vlaneseq
    %v6852 = vshrl.u32 %v6851, 7
    %v6853 = vsub.s32 0, %v6852
    %v6854 = vrot.slane %v4005, %v6853
    %v6855 = vlaneseq
    %v6856 = vshrl.u32 %v6855, 7
    %v6857 = vsub.s32 4, %v6856
    %v6858 = vrot.slane %v4005, %v6857
    %v6859 = vlaneseq
    %v6860 = vshrl.u32 %v6859, 7
    %v6861 = vsub.s32 0, %v6860
    %v6862 = vrot.slane %v4006, %v6861
    %v6863 = vlaneseq
    %v6864 = vshrl.u32 %v6863, 7
    %v6865 = vsub.s32 4, %v6864
    %v6866 = vrot.slane %v4006, %v6865
    %v6867 = vlaneseq
    %v6868 = vshrl.u32 %v6867, 7
    %v6869 = vsub.s32 0, %v6868
    %v6870 = vrot.slane %v4007, %v6869
    %v6871 = vlaneseq
    %v6872 = vshrl.u32 %v6871, 7
    %v6873 = vsub.s32 4, %v6872
    %v6874 = vrot.slane %v4007, %v6873
    %v6875 = vsel %vm1928, %v6862, %v6846
    %v6876 = vsel %vm1928, %v6866, %v6850
    %v6877 = vsel %vm1928, %v6870, %v6854
    %v6878 = vsel %vm1928, %v6874, %v6858
    %v6882 = vsel %vm5031, %v6878, 0
    %6884 = vmatprep.subr.mxu0 0.0
    %6885 = vmatpush1.msra.mxu0 %v4628
    %6886 = vmatprep.subr.mxu0 0.0
    %6887 = vmatpush1.msra.mxu0 %v4629
    %6888 = vmatprep.subr.mxu0 0.0
    %6889 = vmatpush1.msra.mxu0 %v4630
    %6890 = vmatprep.subr.mxu0 0.0
    %6891 = vmatpush1.msra.mxu0 %v4631
    %6892 = vmatprep.subr.mxu0 0.0
    %6893 = vmatpush1.msra.mxu0 %v4632
    %6894 = vmatprep.subr.mxu0 0.0
    %6895 = vmatpush1.msra.mxu0 %v4633
    %6896 = vmatprep.subr.mxu0 0.0
    %6897 = vmatpush1.msra.mxu0 %v4634
    %6898 = vmatprep.subr.mxu0 0.0
    %6899 = vmatpush1.msra.mxu0 %v4635
    %6900 = vmatprep.subr.mxu0 0.0
    %6901 = vmatpush1.msra.mxu0 %v4636
    %6902 = vmatprep.subr.mxu0 0.0
    %6903 = vmatpush1.msra.mxu0 %v4637
    %6904 = vmatprep.subr.mxu0 0.0
    %6905 = vmatpush1.msra.mxu0 %v4638
    %6906 = vmatprep.subr.mxu0 0.0
    %6907 = vmatpush1.msra.mxu0 %v4639
    %6908 = vmatprep.subr.mxu0 0.0
    %6909 = vmatpush1.msra.mxu0 %v4640
    %6910 = vmatprep.subr.mxu0 0.0
    %6911 = vmatpush1.msra.mxu0 %v4641
    %6912 = vmatprep.subr.mxu0 0.0
    %6913 = vmatpush1.msra.mxu0 %v4642
    %6914 = vmatprep.subr.mxu0 0.0
    %6915 = vmatpush1.msra.mxu0 %v4643
    %6916 = vmatprep.subr.mxu0 0.0
    %6917 = vmatpush1.msra.mxu0 %v4644
    %6918 = vmatprep.subr.mxu0 0.0
    %6919 = vmatpush1.msra.mxu0 %v4645
    %6920 = vmatprep.subr.mxu0 0.0
    %6921 = vmatpush1.msra.mxu0 %v4646
    %6922 = vmatprep.subr.mxu0 0.0
    %6923 = vmatpush1.msra.mxu0 %v4647
    %6924 = vmatprep.subr.mxu0 0.0
    %6925 = vmatpush1.msra.mxu0 %v4648
    %6926 = vmatprep.subr.mxu0 0.0
    %6927 = vmatpush1.msra.mxu0 %v4649
    %6928 = vmatprep.subr.mxu0 0.0
    %6929 = vmatpush1.msra.mxu0 %v4650
    %6930 = vmatprep.subr.mxu0 0.0
    %6931 = vmatpush1.msra.mxu0 %v4651
    %6932 = vmatprep.subr.mxu0 0.0
    %6933 = vmatpush1.msra.mxu0 %v4652
    %6934 = vmatprep.subr.mxu0 0.0
    %6935 = vmatpush1.msra.mxu0 %v4653
    %6936 = vmatprep.subr.mxu0 0.0
    %6937 = vmatpush1.msra.mxu0 %v4654
    %6938 = vmatprep.subr.mxu0 0.0
    %6939 = vmatpush1.msra.mxu0 %v4655
    %6940 = vmatprep.subr.mxu0 0.0
    %6941 = vmatpush1.msra.mxu0 %v4656
    %6942 = vmatprep.subr.mxu0 0.0
    %6943 = vmatpush1.msra.mxu0 %v4657
    %6944 = vmatprep.subr.mxu0 0.0
    %6945 = vmatpush1.msra.mxu0 %v4658
    %6946 = vmatprep.subr.mxu0 0.0
    %6947 = vmatpush1.msra.mxu0 %v4659
    %6948 = vmatprep.mubr.f32.mxu0 %v6876
    %6949 = vmatmul.mubr.f32.gmra.mrb[0].mxu0 %v6875
    %v6950 = vpop.f32.mrb[0].mxu0
    %v6951 = vadd.f32 0.0, %v6950
    %v6952 = vpop.f32.mrb[0].mxu0
    %6953 = vdwg.mxu0
    %6954 = vmatprep.subr.mxu0 0.0
    %6955 = vmatpush1.msra.mxu0 %v4660
    %6956 = vmatprep.subr.mxu0 0.0
    %6957 = vmatpush1.msra.mxu0 %v4661
    %6958 = vmatprep.subr.mxu0 0.0
    %6959 = vmatpush1.msra.mxu0 %v4662
    %6960 = vmatprep.subr.mxu0 0.0
    %6961 = vmatpush1.msra.mxu0 %v4663
    %6962 = vmatprep.subr.mxu0 0.0
    %6963 = vmatpush1.msra.mxu0 %v4664
    %6964 = vmatprep.subr.mxu0 0.0
    %6965 = vmatpush1.msra.mxu0 %v4665
    %6966 = vmatprep.subr.mxu0 0.0
    %6967 = vmatpush1.msra.mxu0 %v4666
    %6968 = vmatprep.subr.mxu0 0.0
    %6969 = vmatpush1.msra.mxu0 %v4667
    %6970 = vmatprep.subr.mxu0 0.0
    %6971 = vmatpush1.msra.mxu0 %v4668
    %6972 = vmatprep.subr.mxu0 0.0
    %6973 = vmatpush1.msra.mxu0 %v4669
    %6974 = vmatprep.subr.mxu0 0.0
    %6975 = vmatpush1.msra.mxu0 %v4670
    %6976 = vmatprep.subr.mxu0 0.0
    %6977 = vmatpush1.msra.mxu0 %v4671
    %6978 = vmatprep.subr.mxu0 0.0
    %6979 = vmatpush1.msra.mxu0 %v4672
    %6980 = vmatprep.subr.mxu0 0.0
    %6981 = vmatpush1.msra.mxu0 %v4673
    %6982 = vmatprep.subr.mxu0 0.0
    %6983 = vmatpush1.msra.mxu0 %v4674
    %6984 = vmatprep.subr.mxu0 0.0
    %6985 = vmatpush1.msra.mxu0 %v4675
    %6986 = vmatprep.subr.mxu0 0.0
    %6987 = vmatpush1.msra.mxu0 %v4676
    %6988 = vmatprep.subr.mxu0 0.0
    %6989 = vmatpush1.msra.mxu0 %v4677
    %6990 = vmatprep.subr.mxu0 0.0
    %6991 = vmatpush1.msra.mxu0 %v4678
    %6992 = vmatprep.subr.mxu0 0.0
    %6993 = vmatpush1.msra.mxu0 %v4679
    %6994 = vmatprep.subr.mxu0 0.0
    %6995 = vmatpush1.msra.mxu0 %v4680
    %6996 = vmatprep.subr.mxu0 0.0
    %6997 = vmatpush1.msra.mxu0 %v4681
    %6998 = vmatprep.subr.mxu0 0.0
    %6999 = vmatpush1.msra.mxu0 %v4682
    %7000 = vmatprep.subr.mxu0 0.0
    %7001 = vmatpush1.msra.mxu0 %v4683
    %7002 = vmatprep.subr.mxu0 0.0
    %7003 = vmatpush1.msra.mxu0 %v4684
    %7004 = vmatprep.subr.mxu0 0.0
    %7005 = vmatpush1.msra.mxu0 %v4685
    %7006 = vmatprep.subr.mxu0 0.0
    %7007 = vmatpush1.msra.mxu0 %v4686
    %7008 = vmatprep.subr.mxu0 0.0
    %7009 = vmatpush1.msra.mxu0 %v4687
    %7010 = vmatprep.subr.mxu0 0.0
    %7011 = vmatpush1.msra.mxu0 0.0
    %7012 = vmatprep.subr.mxu0 0.0
    %7013 = vmatpush1.msra.mxu0 0.0
    %7014 = vmatprep.subr.mxu0 0.0
    %7015 = vmatpush1.msra.mxu0 0.0
    %7016 = vmatprep.subr.mxu0 0.0
    %7017 = vmatpush1.msra.mxu0 0.0
    %7018 = vmatprep.mubr.f32.mxu0 %v6882
    %7019 = vmatmul.mubr.f32.gmra.mrb[0].mxu0 %v6877
    %v7020 = vpop.f32.mrb[0].mxu0
    %v7021 = vadd.f32 %v6951, %v7020
    %v7022 = vpop.f32.mrb[0].mxu0
    %7023 = vdwg.mxu0
    %v7028 = vlaneseq
    %v7029 = vshrl.u32 %v7028, 7
    %v7030 = vsub.s32 0, %v7029
    %v7031 = vrot.slane %v4008, %v7030
    %v7032 = vlaneseq
    %v7033 = vshrl.u32 %v7032, 7
    %v7034 = vsub.s32 4, %v7033
    %v7035 = vrot.slane %v4008, %v7034
    %v7036 = vlaneseq
    %v7037 = vshrl.u32 %v7036, 7
    %v7038 = vsub.s32 0, %v7037
    %v7039 = vrot.slane %v4009, %v7038
    %v7040 = vlaneseq
    %v7041 = vshrl.u32 %v7040, 7
    %v7042 = vsub.s32 4, %v7041
    %v7043 = vrot.slane %v4009, %v7042
    %v7044 = vlaneseq
    %v7045 = vshrl.u32 %v7044, 7
    %v7046 = vsub.s32 0, %v7045
    %v7047 = vrot.slane %v4010, %v7046
    %v7048 = vlaneseq
    %v7049 = vshrl.u32 %v7048, 7
    %v7050 = vsub.s32 4, %v7049
    %v7051 = vrot.slane %v4010, %v7050
    %v7052 = vlaneseq
    %v7053 = vshrl.u32 %v7052, 7
    %v7054 = vsub.s32 0, %v7053
    %v7055 = vrot.slane %v4011, %v7054
    %v7056 = vlaneseq
    %v7057 = vshrl.u32 %v7056, 7
    %v7058 = vsub.s32 4, %v7057
    %v7059 = vrot.slane %v4011, %v7058
    %v7060 = vsel %vm1928, %v7047, %v7031
    %v7061 = vsel %vm1928, %v7051, %v7035
    %v7062 = vsel %vm1928, %v7055, %v7039
    %v7063 = vsel %vm1928, %v7059, %v7043
    %v7067 = vsel %vm5031, %v7063, 0
    %7069 = vmatprep.subr.mxu0 0.0
    %7070 = vmatpush1.msra.mxu0 %v4688
    %7071 = vmatprep.subr.mxu0 0.0
    %7072 = vmatpush1.msra.mxu0 %v4689
    %7073 = vmatprep.subr.mxu0 0.0
    %7074 = vmatpush1.msra.mxu0 %v4690
    %7075 = vmatprep.subr.mxu0 0.0
    %7076 = vmatpush1.msra.mxu0 %v4691
    %7077 = vmatprep.subr.mxu0 0.0
    %7078 = vmatpush1.msra.mxu0 %v4692
    %7079 = vmatprep.subr.mxu0 0.0
    %7080 = vmatpush1.msra.mxu0 %v4693
    %7081 = vmatprep.subr.mxu0 0.0
    %7082 = vmatpush1.msra.mxu0 %v4694
    %7083 = vmatprep.subr.mxu0 0.0
    %7084 = vmatpush1.msra.mxu0 %v4695
    %7085 = vmatprep.subr.mxu0 0.0
    %7086 = vmatpush1.msra.mxu0 %v4696
    %7087 = vmatprep.subr.mxu0 0.0
    %7088 = vmatpush1.msra.mxu0 %v4697
    %7089 = vmatprep.subr.mxu0 0.0
    %7090 = vmatpush1.msra.mxu0 %v4698
    %7091 = vmatprep.subr.mxu0 0.0
    %7092 = vmatpush1.msra.mxu0 %v4699
    %7093 = vmatprep.subr.mxu0 0.0
    %7094 = vmatpush1.msra.mxu0 %v4700
    %7095 = vmatprep.subr.mxu0 0.0
    %7096 = vmatpush1.msra.mxu0 %v4701
    %7097 = vmatprep.subr.mxu0 0.0
    %7098 = vmatpush1.msra.mxu0 %v4702
    %7099 = vmatprep.subr.mxu0 0.0
    %7100 = vmatpush1.msra.mxu0 %v4703
    %7101 = vmatprep.subr.mxu0 0.0
    %7102 = vmatpush1.msra.mxu0 %v4704
    %7103 = vmatprep.subr.mxu0 0.0
    %7104 = vmatpush1.msra.mxu0 %v4705
    %7105 = vmatprep.subr.mxu0 0.0
    %7106 = vmatpush1.msra.mxu0 %v4706
    %7107 = vmatprep.subr.mxu0 0.0
    %7108 = vmatpush1.msra.mxu0 %v4707
    %7109 = vmatprep.subr.mxu0 0.0
    %7110 = vmatpush1.msra.mxu0 %v4708
    %7111 = vmatprep.subr.mxu0 0.0
    %7112 = vmatpush1.msra.mxu0 %v4709
    %7113 = vmatprep.subr.mxu0 0.0
    %7114 = vmatpush1.msra.mxu0 %v4710
    %7115 = vmatprep.subr.mxu0 0.0
    %7116 = vmatpush1.msra.mxu0 %v4711
    %7117 = vmatprep.subr.mxu0 0.0
    %7118 = vmatpush1.msra.mxu0 %v4712
    %7119 = vmatprep.subr.mxu0 0.0
    %7120 = vmatpush1.msra.mxu0 %v4713
    %7121 = vmatprep.subr.mxu0 0.0
    %7122 = vmatpush1.msra.mxu0 %v4714
    %7123 = vmatprep.subr.mxu0 0.0
    %7124 = vmatpush1.msra.mxu0 %v4715
    %7125 = vmatprep.subr.mxu0 0.0
    %7126 = vmatpush1.msra.mxu0 %v4716
    %7127 = vmatprep.subr.mxu0 0.0
    %7128 = vmatpush1.msra.mxu0 %v4717
    %7129 = vmatprep.subr.mxu0 0.0
    %7130 = vmatpush1.msra.mxu0 %v4718
    %7131 = vmatprep.subr.mxu0 0.0
    %7132 = vmatpush1.msra.mxu0 %v4719
    %7133 = vmatprep.mubr.f32.mxu0 %v7061
    %7134 = vmatmul.mubr.f32.gmra.mrb[0].mxu0 %v7060
    %v7135 = vpop.f32.mrb[0].mxu0
    %v7136 = vadd.f32 0.0, %v7135
    %v7137 = vpop.f32.mrb[0].mxu0
    %7138 = vdwg.mxu0
    %7139 = vmatprep.subr.mxu0 0.0
    %7140 = vmatpush1.msra.mxu0 %v4720
    %7141 = vmatprep.subr.mxu0 0.0
    %7142 = vmatpush1.msra.mxu0 %v4721
    %7143 = vmatprep.subr.mxu0 0.0
    %7144 = vmatpush1.msra.mxu0 %v4722
    %7145 = vmatprep.subr.mxu0 0.0
    %7146 = vmatpush1.msra.mxu0 %v4723
    %7147 = vmatprep.subr.mxu0 0.0
    %7148 = vmatpush1.msra.mxu0 %v4724
    %7149 = vmatprep.subr.mxu0 0.0
    %7150 = vmatpush1.msra.mxu0 %v4725
    %7151 = vmatprep.subr.mxu0 0.0
    %7152 = vmatpush1.msra.mxu0 %v4726
    %7153 = vmatprep.subr.mxu0 0.0
    %7154 = vmatpush1.msra.mxu0 %v4727
    %7155 = vmatprep.subr.mxu0 0.0
    %7156 = vmatpush1.msra.mxu0 %v4728
    %7157 = vmatprep.subr.mxu0 0.0
    %7158 = vmatpush1.msra.mxu0 %v4729
    %7159 = vmatprep.subr.mxu0 0.0
    %7160 = vmatpush1.msra.mxu0 %v4730
    %7161 = vmatprep.subr.mxu0 0.0
    %7162 = vmatpush1.msra.mxu0 %v4731
    %7163 = vmatprep.subr.mxu0 0.0
    %7164 = vmatpush1.msra.mxu0 %v4732
    %7165 = vmatprep.subr.mxu0 0.0
    %7166 = vmatpush1.msra.mxu0 %v4733
    %7167 = vmatprep.subr.mxu0 0.0
    %7168 = vmatpush1.msra.mxu0 %v4734
    %7169 = vmatprep.subr.mxu0 0.0
    %7170 = vmatpush1.msra.mxu0 %v4735
    %7171 = vmatprep.subr.mxu0 0.0
    %7172 = vmatpush1.msra.mxu0 %v4736
    %7173 = vmatprep.subr.mxu0 0.0
    %7174 = vmatpush1.msra.mxu0 %v4737
    %7175 = vmatprep.subr.mxu0 0.0
    %7176 = vmatpush1.msra.mxu0 %v4738
    %7177 = vmatprep.subr.mxu0 0.0
    %7178 = vmatpush1.msra.mxu0 %v4739
    %7179 = vmatprep.subr.mxu0 0.0
    %7180 = vmatpush1.msra.mxu0 %v4740
    %7181 = vmatprep.subr.mxu0 0.0
    %7182 = vmatpush1.msra.mxu0 %v4741
    %7183 = vmatprep.subr.mxu0 0.0
    %7184 = vmatpush1.msra.mxu0 %v4742
    %7185 = vmatprep.subr.mxu0 0.0
    %7186 = vmatpush1.msra.mxu0 %v4743
    %7187 = vmatprep.subr.mxu0 0.0
    %7188 = vmatpush1.msra.mxu0 %v4744
    %7189 = vmatprep.subr.mxu0 0.0
    %7190 = vmatpush1.msra.mxu0 %v4745
    %7191 = vmatprep.subr.mxu0 0.0
    %7192 = vmatpush1.msra.mxu0 %v4746
    %7193 = vmatprep.subr.mxu0 0.0
    %7194 = vmatpush1.msra.mxu0 %v4747
    %7195 = vmatprep.subr.mxu0 0.0
    %7196 = vmatpush1.msra.mxu0 0.0
    %7197 = vmatprep.subr.mxu0 0.0
    %7198 = vmatpush1.msra.mxu0 0.0
    %7199 = vmatprep.subr.mxu0 0.0
    %7200 = vmatpush1.msra.mxu0 0.0
    %7201 = vmatprep.subr.mxu0 0.0
    %7202 = vmatpush1.msra.mxu0 0.0
    %7203 = vmatprep.mubr.f32.mxu0 %v7067
    %7204 = vmatmul.mubr.f32.gmra.mrb[0].mxu0 %v7062
    %v7205 = vpop.f32.mrb[0].mxu0
    %v7206 = vadd.f32 %v7136, %v7205
    %v7207 = vpop.f32.mrb[0].mxu0
    %7208 = vdwg.mxu0
    %v7213 = vlaneseq
    %v7214 = vshrl.u32 %v7213, 7
    %v7215 = vsub.s32 0, %v7214
    %v7216 = vrot.slane %v4012, %v7215
    %v7217 = vlaneseq
    %v7218 = vshrl.u32 %v7217, 7
    %v7219 = vsub.s32 4, %v7218
    %v7220 = vrot.slane %v4012, %v7219
    %v7221 = vlaneseq
    %v7222 = vshrl.u32 %v7221, 7
    %v7223 = vsub.s32 0, %v7222
    %v7224 = vrot.slane %v4013, %v7223
    %v7225 = vlaneseq
    %v7226 = vshrl.u32 %v7225, 7
    %v7227 = vsub.s32 4, %v7226
    %v7228 = vrot.slane %v4013, %v7227
    %v7229 = vlaneseq
    %v7230 = vshrl.u32 %v7229, 7
    %v7231 = vsub.s32 0, %v7230
    %v7232 = vrot.slane %v4014, %v7231
    %v7233 = vlaneseq
    %v7234 = vshrl.u32 %v7233, 7
    %v7235 = vsub.s32 4, %v7234
    %v7236 = vrot.slane %v4014, %v7235
    %v7237 = vlaneseq
    %v7238 = vshrl.u32 %v7237, 7
    %v7239 = vsub.s32 0, %v7238
    %v7240 = vrot.slane %v4015, %v7239
    %v7241 = vlaneseq
    %v7242 = vshrl.u32 %v7241, 7
    %v7243 = vsub.s32 4, %v7242
    %v7244 = vrot.slane %v4015, %v7243
    %v7245 = vsel %vm1928, %v7232, %v7216
    %v7246 = vsel %vm1928, %v7236, %v7220
    %v7247 = vsel %vm1928, %v7240, %v7224
    %v7248 = vsel %vm1928, %v7244, %v7228
    %v7252 = vsel %vm5031, %v7248, 0
    %7254 = vmatprep.subr.mxu0 0.0
    %7255 = vmatpush1.msra.mxu0 %v4748
    %7256 = vmatprep.subr.mxu0 0.0
    %7257 = vmatpush1.msra.mxu0 %v4749
    %7258 = vmatprep.subr.mxu0 0.0
    %7259 = vmatpush1.msra.mxu0 %v4750
    %7260 = vmatprep.subr.mxu0 0.0
    %7261 = vmatpush1.msra.mxu0 %v4751
    %7262 = vmatprep.subr.mxu0 0.0
    %7263 = vmatpush1.msra.mxu0 %v4752
    %7264 = vmatprep.subr.mxu0 0.0
    %7265 = vmatpush1.msra.mxu0 %v4753
    %7266 = vmatprep.subr.mxu0 0.0
    %7267 = vmatpush1.msra.mxu0 %v4754
    %7268 = vmatprep.subr.mxu0 0.0
    %7269 = vmatpush1.msra.mxu0 %v4755
    %7270 = vmatprep.subr.mxu0 0.0
    %7271 = vmatpush1.msra.mxu0 %v4756
    %7272 = vmatprep.subr.mxu0 0.0
    %7273 = vmatpush1.msra.mxu0 %v4757
    %7274 = vmatprep.subr.mxu0 0.0
    %7275 = vmatpush1.msra.mxu0 %v4758
    %7276 = vmatprep.subr.mxu0 0.0
    %7277 = vmatpush1.msra.mxu0 %v4759
    %7278 = vmatprep.subr.mxu0 0.0
    %7279 = vmatpush1.msra.mxu0 %v4760
    %7280 = vmatprep.subr.mxu0 0.0
    %7281 = vmatpush1.msra.mxu0 %v4761
    %7282 = vmatprep.subr.mxu0 0.0
    %7283 = vmatpush1.msra.mxu0 %v4762
    %7284 = vmatprep.subr.mxu0 0.0
    %7285 = vmatpush1.msra.mxu0 %v4763
    %7286 = vmatprep.subr.mxu0 0.0
    %7287 = vmatpush1.msra.mxu0 %v4764
    %7288 = vmatprep.subr.mxu0 0.0
    %7289 = vmatpush1.msra.mxu0 %v4765
    %7290 = vmatprep.subr.mxu0 0.0
    %7291 = vmatpush1.msra.mxu0 %v4766
    %7292 = vmatprep.subr.mxu0 0.0
    %7293 = vmatpush1.msra.mxu0 %v4767
    %7294 = vmatprep.subr.mxu0 0.0
    %7295 = vmatpush1.msra.mxu0 %v4768
    %7296 = vmatprep.subr.mxu0 0.0
    %7297 = vmatpush1.msra.mxu0 %v4769
    %7298 = vmatprep.subr.mxu0 0.0
    %7299 = vmatpush1.msra.mxu0 %v4770
    %7300 = vmatprep.subr.mxu0 0.0
    %7301 = vmatpush1.msra.mxu0 %v4771
    %7302 = vmatprep.subr.mxu0 0.0
    %7303 = vmatpush1.msra.mxu0 %v4772
    %7304 = vmatprep.subr.mxu0 0.0
    %7305 = vmatpush1.msra.mxu0 %v4773
    %7306 = vmatprep.subr.mxu0 0.0
    %7307 = vmatpush1.msra.mxu0 %v4774
    %7308 = vmatprep.subr.mxu0 0.0
    %7309 = vmatpush1.msra.mxu0 %v4775
    %7310 = vmatprep.subr.mxu0 0.0
    %7311 = vmatpush1.msra.mxu0 %v4776
    %7312 = vmatprep.subr.mxu0 0.0
    %7313 = vmatpush1.msra.mxu0 %v4777
    %7314 = vmatprep.subr.mxu0 0.0
    %7315 = vmatpush1.msra.mxu0 %v4778
    %7316 = vmatprep.subr.mxu0 0.0
    %7317 = vmatpush1.msra.mxu0 %v4779
    %7318 = vmatprep.mubr.f32.mxu0 %v7246
    %7319 = vmatmul.mubr.f32.gmra.mrb[0].mxu0 %v7245
    %v7320 = vpop.f32.mrb[0].mxu0
    %v7321 = vadd.f32 0.0, %v7320
    %v7322 = vpop.f32.mrb[0].mxu0
    %7323 = vdwg.mxu0
    %7324 = vmatprep.subr.mxu0 0.0
    %7325 = vmatpush1.msra.mxu0 %v4780
    %7326 = vmatprep.subr.mxu0 0.0
    %7327 = vmatpush1.msra.mxu0 %v4781
    %7328 = vmatprep.subr.mxu0 0.0
    %7329 = vmatpush1.msra.mxu0 %v4782
    %7330 = vmatprep.subr.mxu0 0.0
    %7331 = vmatpush1.msra.mxu0 %v4783
    %7332 = vmatprep.subr.mxu0 0.0
    %7333 = vmatpush1.msra.mxu0 %v4784
    %7334 = vmatprep.subr.mxu0 0.0
    %7335 = vmatpush1.msra.mxu0 %v4785
    %7336 = vmatprep.subr.mxu0 0.0
    %7337 = vmatpush1.msra.mxu0 %v4786
    %7338 = vmatprep.subr.mxu0 0.0
    %7339 = vmatpush1.msra.mxu0 %v4787
    %7340 = vmatprep.subr.mxu0 0.0
    %7341 = vmatpush1.msra.mxu0 %v4788
    %7342 = vmatprep.subr.mxu0 0.0
    %7343 = vmatpush1.msra.mxu0 %v4789
    %7344 = vmatprep.subr.mxu0 0.0
    %7345 = vmatpush1.msra.mxu0 %v4790
    %7346 = vmatprep.subr.mxu0 0.0
    %7347 = vmatpush1.msra.mxu0 %v4791
    %7348 = vmatprep.subr.mxu0 0.0
    %7349 = vmatpush1.msra.mxu0 %v4792
    %7350 = vmatprep.subr.mxu0 0.0
    %7351 = vmatpush1.msra.mxu0 %v4793
    %7352 = vmatprep.subr.mxu0 0.0
    %7353 = vmatpush1.msra.mxu0 %v4794
    %7354 = vmatprep.subr.mxu0 0.0
    %7355 = vmatpush1.msra.mxu0 %v4795
    %7356 = vmatprep.subr.mxu0 0.0
    %7357 = vmatpush1.msra.mxu0 %v4796
    %7358 = vmatprep.subr.mxu0 0.0
    %7359 = vmatpush1.msra.mxu0 %v4797
    %7360 = vmatprep.subr.mxu0 0.0
    %7361 = vmatpush1.msra.mxu0 %v4798
    %7362 = vmatprep.subr.mxu0 0.0
    %7363 = vmatpush1.msra.mxu0 %v4799
    %7364 = vmatprep.subr.mxu0 0.0
    %7365 = vmatpush1.msra.mxu0 %v4800
    %7366 = vmatprep.subr.mxu0 0.0
    %7367 = vmatpush1.msra.mxu0 %v4801
    %7368 = vmatprep.subr.mxu0 0.0
    %7369 = vmatpush1.msra.mxu0 %v4802
    %7370 = vmatprep.subr.mxu0 0.0
    %7371 = vmatpush1.msra.mxu0 %v4803
    %7372 = vmatprep.subr.mxu0 0.0
    %7373 = vmatpush1.msra.mxu0 %v4804
    %7374 = vmatprep.subr.mxu0 0.0
    %7375 = vmatpush1.msra.mxu0 %v4805
    %7376 = vmatprep.subr.mxu0 0.0
    %7377 = vmatpush1.msra.mxu0 %v4806
    %7378 = vmatprep.subr.mxu0 0.0
    %7379 = vmatpush1.msra.mxu0 %v4807
    %7380 = vmatprep.subr.mxu0 0.0
    %7381 = vmatpush1.msra.mxu0 0.0
    %7382 = vmatprep.subr.mxu0 0.0
    %7383 = vmatpush1.msra.mxu0 0.0
    %7384 = vmatprep.subr.mxu0 0.0
    %7385 = vmatpush1.msra.mxu0 0.0
    %7386 = vmatprep.subr.mxu0 0.0
    %7387 = vmatpush1.msra.mxu0 0.0
    %7388 = vmatprep.mubr.f32.mxu0 %v7252
    %7389 = vmatmul.mubr.f32.gmra.mrb[0].mxu0 %v7247
    %v7390 = vpop.f32.mrb[0].mxu0
    %v7391 = vadd.f32 %v7321, %v7390
    %v7392 = vpop.f32.mrb[0].mxu0
    %7393 = vdwg.mxu0
    %v7398 = vlaneseq
    %v7399 = vshrl.u32 %v7398, 7
    %v7400 = vsub.s32 0, %v7399
    %v7401 = vrot.slane %v4016, %v7400
    %v7402 = vlaneseq
    %v7403 = vshrl.u32 %v7402, 7
    %v7404 = vsub.s32 4, %v7403
    %v7405 = vrot.slane %v4016, %v7404
    %v7406 = vlaneseq
    %v7407 = vshrl.u32 %v7406, 7
    %v7408 = vsub.s32 0, %v7407
    %v7409 = vrot.slane %v4017, %v7408
    %v7410 = vlaneseq
    %v7411 = vshrl.u32 %v7410, 7
    %v7412 = vsub.s32 4, %v7411
    %v7413 = vrot.slane %v4017, %v7412
    %v7414 = vlaneseq
    %v7415 = vshrl.u32 %v7414, 7
    %v7416 = vsub.s32 0, %v7415
    %v7417 = vrot.slane %v4018, %v7416
    %v7418 = vlaneseq
    %v7419 = vshrl.u32 %v7418, 7
    %v7420 = vsub.s32 4, %v7419
    %v7421 = vrot.slane %v4018, %v7420
    %v7422 = vlaneseq
    %v7423 = vshrl.u32 %v7422, 7
    %v7424 = vsub.s32 0, %v7423
    %v7425 = vrot.slane %v4019, %v7424
    %v7426 = vlaneseq
    %v7427 = vshrl.u32 %v7426, 7
    %v7428 = vsub.s32 4, %v7427
    %v7429 = vrot.slane %v4019, %v7428
    %v7430 = vsel %vm1928, %v7417, %v7401
    %v7431 = vsel %vm1928, %v7421, %v7405
    %v7432 = vsel %vm1928, %v7425, %v7409
    %v7433 = vsel %vm1928, %v7429, %v7413
    %v7437 = vsel %vm5031, %v7433, 0
    %7439 = vmatprep.subr.mxu0 0.0
    %7440 = vmatpush1.msra.mxu0 %v4808
    %7441 = vmatprep.subr.mxu0 0.0
    %7442 = vmatpush1.msra.mxu0 %v4809
    %7443 = vmatprep.subr.mxu0 0.0
    %7444 = vmatpush1.msra.mxu0 %v4810
    %7445 = vmatprep.subr.mxu0 0.0
    %7446 = vmatpush1.msra.mxu0 %v4811
    %7447 = vmatprep.subr.mxu0 0.0
    %7448 = vmatpush1.msra.mxu0 %v4812
    %7449 = vmatprep.subr.mxu0 0.0
    %7450 = vmatpush1.msra.mxu0 %v4813
    %7451 = vmatprep.subr.mxu0 0.0
    %7452 = vmatpush1.msra.mxu0 %v4814
    %7453 = vmatprep.subr.mxu0 0.0
    %7454 = vmatpush1.msra.mxu0 %v4815
    %7455 = vmatprep.subr.mxu0 0.0
    %7456 = vmatpush1.msra.mxu0 %v4816
    %7457 = vmatprep.subr.mxu0 0.0
    %7458 = vmatpush1.msra.mxu0 %v4817
    %7459 = vmatprep.subr.mxu0 0.0
    %7460 = vmatpush1.msra.mxu0 %v4818
    %7461 = vmatprep.subr.mxu0 0.0
    %7462 = vmatpush1.msra.mxu0 %v4819
    %7463 = vmatprep.subr.mxu0 0.0
    %7464 = vmatpush1.msra.mxu0 %v4820
    %7465 = vmatprep.subr.mxu0 0.0
    %7466 = vmatpush1.msra.mxu0 %v4821
    %7467 = vmatprep.subr.mxu0 0.0
    %7468 = vmatpush1.msra.mxu0 %v4822
    %7469 = vmatprep.subr.mxu0 0.0
    %7470 = vmatpush1.msra.mxu0 %v4823
    %7471 = vmatprep.subr.mxu0 0.0
    %7472 = vmatpush1.msra.mxu0 %v4824
    %7473 = vmatprep.subr.mxu0 0.0
    %7474 = vmatpush1.msra.mxu0 %v4825
    %7475 = vmatprep.subr.mxu0 0.0
    %7476 = vmatpush1.msra.mxu0 %v4826
    %7477 = vmatprep.subr.mxu0 0.0
    %7478 = vmatpush1.msra.mxu0 %v4827
    %7479 = vmatprep.subr.mxu0 0.0
    %7480 = vmatpush1.msra.mxu0 %v4828
    %7481 = vmatprep.subr.mxu0 0.0
    %7482 = vmatpush1.msra.mxu0 %v4829
    %7483 = vmatprep.subr.mxu0 0.0
    %7484 = vmatpush1.msra.mxu0 %v4830
    %7485 = vmatprep.subr.mxu0 0.0
    %7486 = vmatpush1.msra.mxu0 %v4831
    %7487 = vmatprep.subr.mxu0 0.0
    %7488 = vmatpush1.msra.mxu0 %v4832
    %7489 = vmatprep.subr.mxu0 0.0
    %7490 = vmatpush1.msra.mxu0 %v4833
    %7491 = vmatprep.subr.mxu0 0.0
    %7492 = vmatpush1.msra.mxu0 %v4834
    %7493 = vmatprep.subr.mxu0 0.0
    %7494 = vmatpush1.msra.mxu0 %v4835
    %7495 = vmatprep.subr.mxu0 0.0
    %7496 = vmatpush1.msra.mxu0 %v4836
    %7497 = vmatprep.subr.mxu0 0.0
    %7498 = vmatpush1.msra.mxu0 %v4837
    %7499 = vmatprep.subr.mxu0 0.0
    %7500 = vmatpush1.msra.mxu0 %v4838
    %7501 = vmatprep.subr.mxu0 0.0
    %7502 = vmatpush1.msra.mxu0 %v4839
    %7503 = vmatprep.mubr.f32.mxu0 %v7431
    %7504 = vmatmul.mubr.f32.gmra.mrb[0].mxu0 %v7430
    %v7505 = vpop.f32.mrb[0].mxu0
    %v7506 = vadd.f32 0.0, %v7505
    %v7507 = vpop.f32.mrb[0].mxu0
    %7508 = vdwg.mxu0
    %7509 = vmatprep.subr.mxu0 0.0
    %7510 = vmatpush1.msra.mxu0 %v4840
    %7511 = vmatprep.subr.mxu0 0.0
    %7512 = vmatpush1.msra.mxu0 %v4841
    %7513 = vmatprep.subr.mxu0 0.0
    %7514 = vmatpush1.msra.mxu0 %v4842
    %7515 = vmatprep.subr.mxu0 0.0
    %7516 = vmatpush1.msra.mxu0 %v4843
    %7517 = vmatprep.subr.mxu0 0.0
    %7518 = vmatpush1.msra.mxu0 %v4844
    %7519 = vmatprep.subr.mxu0 0.0
    %7520 = vmatpush1.msra.mxu0 %v4845
    %7521 = vmatprep.subr.mxu0 0.0
    %7522 = vmatpush1.msra.mxu0 %v4846
    %7523 = vmatprep.subr.mxu0 0.0
    %7524 = vmatpush1.msra.mxu0 %v4847
    %7525 = vmatprep.subr.mxu0 0.0
    %7526 = vmatpush1.msra.mxu0 %v4848
    %7527 = vmatprep.subr.mxu0 0.0
    %7528 = vmatpush1.msra.mxu0 %v4849
    %7529 = vmatprep.subr.mxu0 0.0
    %7530 = vmatpush1.msra.mxu0 %v4850
    %7531 = vmatprep.subr.mxu0 0.0
    %7532 = vmatpush1.msra.mxu0 %v4851
    %7533 = vmatprep.subr.mxu0 0.0
    %7534 = vmatpush1.msra.mxu0 %v4852
    %7535 = vmatprep.subr.mxu0 0.0
    %7536 = vmatpush1.msra.mxu0 %v4853
    %7537 = vmatprep.subr.mxu0 0.0
    %7538 = vmatpush1.msra.mxu0 %v4854
    %7539 = vmatprep.subr.mxu0 0.0
    %7540 = vmatpush1.msra.mxu0 %v4855
    %7541 = vmatprep.subr.mxu0 0.0
    %7542 = vmatpush1.msra.mxu0 %v4856
    %7543 = vmatprep.subr.mxu0 0.0
    %7544 = vmatpush1.msra.mxu0 %v4857
    %7545 = vmatprep.subr.mxu0 0.0
    %7546 = vmatpush1.msra.mxu0 %v4858
    %7547 = vmatprep.subr.mxu0 0.0
    %7548 = vmatpush1.msra.mxu0 %v4859
    %7549 = vmatprep.subr.mxu0 0.0
    %7550 = vmatpush1.msra.mxu0 %v4860
    %7551 = vmatprep.subr.mxu0 0.0
    %7552 = vmatpush1.msra.mxu0 %v4861
    %7553 = vmatprep.subr.mxu0 0.0
    %7554 = vmatpush1.msra.mxu0 %v4862
    %7555 = vmatprep.subr.mxu0 0.0
    %7556 = vmatpush1.msra.mxu0 %v4863
    %7557 = vmatprep.subr.mxu0 0.0
    %7558 = vmatpush1.msra.mxu0 %v4864
    %7559 = vmatprep.subr.mxu0 0.0
    %7560 = vmatpush1.msra.mxu0 %v4865
    %7561 = vmatprep.subr.mxu0 0.0
    %7562 = vmatpush1.msra.mxu0 %v4866
    %7563 = vmatprep.subr.mxu0 0.0
    %7564 = vmatpush1.msra.mxu0 %v4867
    %7565 = vmatprep.subr.mxu0 0.0
    %7566 = vmatpush1.msra.mxu0 0.0
    %7567 = vmatprep.subr.mxu0 0.0
    %7568 = vmatpush1.msra.mxu0 0.0
    %7569 = vmatprep.subr.mxu0 0.0
    %7570 = vmatpush1.msra.mxu0 0.0
    %7571 = vmatprep.subr.mxu0 0.0
    %7572 = vmatpush1.msra.mxu0 0.0
    %7573 = vmatprep.mubr.f32.mxu0 %v7437
    %7574 = vmatmul.mubr.f32.gmra.mrb[0].mxu0 %v7432
    %v7575 = vpop.f32.mrb[0].mxu0
    %v7576 = vadd.f32 %v7506, %v7575
    %v7577 = vpop.f32.mrb[0].mxu0
    %7578 = vdwg.mxu0
    %v7583 = vlaneseq
    %v7584 = vshrl.u32 %v7583, 7
    %v7585 = vsub.s32 0, %v7584
    %v7586 = vrot.slane %v4020, %v7585
    %v7587 = vlaneseq
    %v7588 = vshrl.u32 %v7587, 7
    %v7589 = vsub.s32 4, %v7588
    %v7590 = vrot.slane %v4020, %v7589
    %v7591 = vlaneseq
    %v7592 = vshrl.u32 %v7591, 7
    %v7593 = vsub.s32 0, %v7592
    %v7594 = vrot.slane %v4021, %v7593
    %v7595 = vlaneseq
    %v7596 = vshrl.u32 %v7595, 7
    %v7597 = vsub.s32 4, %v7596
    %v7598 = vrot.slane %v4021, %v7597
    %v7599 = vlaneseq
    %v7600 = vshrl.u32 %v7599, 7
    %v7601 = vsub.s32 0, %v7600
    %v7602 = vrot.slane %v4022, %v7601
    %v7603 = vlaneseq
    %v7604 = vshrl.u32 %v7603, 7
    %v7605 = vsub.s32 4, %v7604
    %v7606 = vrot.slane %v4022, %v7605
    %v7607 = vlaneseq
    %v7608 = vshrl.u32 %v7607, 7
    %v7609 = vsub.s32 0, %v7608
    %v7610 = vrot.slane %v4023, %v7609
    %v7611 = vlaneseq
    %v7612 = vshrl.u32 %v7611, 7
    %v7613 = vsub.s32 4, %v7612
    %v7614 = vrot.slane %v4023, %v7613
    %v7615 = vsel %vm1928, %v7602, %v7586
    %v7616 = vsel %vm1928, %v7606, %v7590
    %v7617 = vsel %vm1928, %v7610, %v7594
    %v7618 = vsel %vm1928, %v7614, %v7598
    %v7622 = vsel %vm5031, %v7618, 0
    %7624 = vmatprep.subr.mxu0 0.0
    %7625 = vmatpush1.msra.mxu0 %v4868
    %7626 = vmatprep.subr.mxu0 0.0
    %7627 = vmatpush1.msra.mxu0 %v4869
    %7628 = vmatprep.subr.mxu0 0.0
    %7629 = vmatpush1.msra.mxu0 %v4870
    %7630 = vmatprep.subr.mxu0 0.0
    %7631 = vmatpush1.msra.mxu0 %v4871
    %7632 = vmatprep.subr.mxu0 0.0
    %7633 = vmatpush1.msra.mxu0 %v4872
    %7634 = vmatprep.subr.mxu0 0.0
    %7635 = vmatpush1.msra.mxu0 %v4873
    %7636 = vmatprep.subr.mxu0 0.0
    %7637 = vmatpush1.msra.mxu0 %v4874
    %7638 = vmatprep.subr.mxu0 0.0
    %7639 = vmatpush1.msra.mxu0 %v4875
    %7640 = vmatprep.subr.mxu0 0.0
    %7641 = vmatpush1.msra.mxu0 %v4876
    %7642 = vmatprep.subr.mxu0 0.0
    %7643 = vmatpush1.msra.mxu0 %v4877
    %7644 = vmatprep.subr.mxu0 0.0
    %7645 = vmatpush1.msra.mxu0 %v4878
    %7646 = vmatprep.subr.mxu0 0.0
    %7647 = vmatpush1.msra.mxu0 %v4879
    %7648 = vmatprep.subr.mxu0 0.0
    %7649 = vmatpush1.msra.mxu0 %v4880
    %7650 = vmatprep.subr.mxu0 0.0
    %7651 = vmatpush1.msra.mxu0 %v4881
    %7652 = vmatprep.subr.mxu0 0.0
    %7653 = vmatpush1.msra.mxu0 %v4882
    %7654 = vmatprep.subr.mxu0 0.0
    %7655 = vmatpush1.msra.mxu0 %v4883
    %7656 = vmatprep.subr.mxu0 0.0
    %7657 = vmatpush1.msra.mxu0 %v4884
    %7658 = vmatprep.subr.mxu0 0.0
    %7659 = vmatpush1.msra.mxu0 %v4885
    %7660 = vmatprep.subr.mxu0 0.0
    %7661 = vmatpush1.msra.mxu0 %v4886
    %7662 = vmatprep.subr.mxu0 0.0
    %7663 = vmatpush1.msra.mxu0 %v4887
    %7664 = vmatprep.subr.mxu0 0.0
    %7665 = vmatpush1.msra.mxu0 %v4888
    %7666 = vmatprep.subr.mxu0 0.0
    %7667 = vmatpush1.msra.mxu0 %v4889
    %7668 = vmatprep.subr.mxu0 0.0
    %7669 = vmatpush1.msra.mxu0 %v4890
    %7670 = vmatprep.subr.mxu0 0.0
    %7671 = vmatpush1.msra.mxu0 %v4891
    %7672 = vmatprep.subr.mxu0 0.0
    %7673 = vmatpush1.msra.mxu0 %v4892
    %7674 = vmatprep.subr.mxu0 0.0
    %7675 = vmatpush1.msra.mxu0 %v4893
    %7676 = vmatprep.subr.mxu0 0.0
    %7677 = vmatpush1.msra.mxu0 %v4894
    %7678 = vmatprep.subr.mxu0 0.0
    %7679 = vmatpush1.msra.mxu0 %v4895
    %7680 = vmatprep.subr.mxu0 0.0
    %7681 = vmatpush1.msra.mxu0 %v4896
    %7682 = vmatprep.subr.mxu0 0.0
    %7683 = vmatpush1.msra.mxu0 %v4897
    %7684 = vmatprep.subr.mxu0 0.0
    %7685 = vmatpush1.msra.mxu0 %v4898
    %7686 = vmatprep.subr.mxu0 0.0
    %7687 = vmatpush1.msra.mxu0 %v4899
    %7688 = vmatprep.mubr.f32.mxu0 %v7616
    %7689 = vmatmul.mubr.f32.gmra.mrb[0].mxu0 %v7615
    %v7690 = vpop.f32.mrb[0].mxu0
    %v7691 = vadd.f32 0.0, %v7690
    %v7692 = vpop.f32.mrb[0].mxu0
    %7693 = vdwg.mxu0
    %7694 = vmatprep.subr.mxu0 0.0
    %7695 = vmatpush1.msra.mxu0 %v4900
    %7696 = vmatprep.subr.mxu0 0.0
    %7697 = vmatpush1.msra.mxu0 %v4901
    %7698 = vmatprep.subr.mxu0 0.0
    %7699 = vmatpush1.msra.mxu0 %v4902
    %7700 = vmatprep.subr.mxu0 0.0
    %7701 = vmatpush1.msra.mxu0 %v4903
    %7702 = vmatprep.subr.mxu0 0.0
    %7703 = vmatpush1.msra.mxu0 %v4904
    %7704 = vmatprep.subr.mxu0 0.0
    %7705 = vmatpush1.msra.mxu0 %v4905
    %7706 = vmatprep.subr.mxu0 0.0
    %7707 = vmatpush1.msra.mxu0 %v4906
    %7708 = vmatprep.subr.mxu0 0.0
    %7709 = vmatpush1.msra.mxu0 %v4907
    %7710 = vmatprep.subr.mxu0 0.0
    %7711 = vmatpush1.msra.mxu0 %v4908
    %7712 = vmatprep.subr.mxu0 0.0
    %7713 = vmatpush1.msra.mxu0 %v4909
    %7714 = vmatprep.subr.mxu0 0.0
    %7715 = vmatpush1.msra.mxu0 %v4910
    %7716 = vmatprep.subr.mxu0 0.0
    %7717 = vmatpush1.msra.mxu0 %v4911
    %7718 = vmatprep.subr.mxu0 0.0
    %7719 = vmatpush1.msra.mxu0 %v4912
    %7720 = vmatprep.subr.mxu0 0.0
    %7721 = vmatpush1.msra.mxu0 %v4913
    %7722 = vmatprep.subr.mxu0 0.0
    %7723 = vmatpush1.msra.mxu0 %v4914
    %7724 = vmatprep.subr.mxu0 0.0
    %7725 = vmatpush1.msra.mxu0 %v4915
    %7726 = vmatprep.subr.mxu0 0.0
    %7727 = vmatpush1.msra.mxu0 %v4916
    %7728 = vmatprep.subr.mxu0 0.0
    %7729 = vmatpush1.msra.mxu0 %v4917
    %7730 = vmatprep.subr.mxu0 0.0
    %7731 = vmatpush1.msra.mxu0 %v4918
    %7732 = vmatprep.subr.mxu0 0.0
    %7733 = vmatpush1.msra.mxu0 %v4919
    %7734 = vmatprep.subr.mxu0 0.0
    %7735 = vmatpush1.msra.mxu0 %v4920
    %7736 = vmatprep.subr.mxu0 0.0
    %7737 = vmatpush1.msra.mxu0 %v4921
    %7738 = vmatprep.subr.mxu0 0.0
    %7739 = vmatpush1.msra.mxu0 %v4922
    %7740 = vmatprep.subr.mxu0 0.0
    %7741 = vmatpush1.msra.mxu0 %v4923
    %7742 = vmatprep.subr.mxu0 0.0
    %7743 = vmatpush1.msra.mxu0 %v4924
    %7744 = vmatprep.subr.mxu0 0.0
    %7745 = vmatpush1.msra.mxu0 %v4925
    %7746 = vmatprep.subr.mxu0 0.0
    %7747 = vmatpush1.msra.mxu0 %v4926
    %7748 = vmatprep.subr.mxu0 0.0
    %7749 = vmatpush1.msra.mxu0 %v4927
    %7750 = vmatprep.subr.mxu0 0.0
    %7751 = vmatpush1.msra.mxu0 0.0
    %7752 = vmatprep.subr.mxu0 0.0
    %7753 = vmatpush1.msra.mxu0 0.0
    %7754 = vmatprep.subr.mxu0 0.0
    %7755 = vmatpush1.msra.mxu0 0.0
    %7756 = vmatprep.subr.mxu0 0.0
    %7757 = vmatpush1.msra.mxu0 0.0
    %7758 = vmatprep.mubr.f32.mxu0 %v7622
    %7759 = vmatmul.mubr.f32.gmra.mrb[0].mxu0 %v7617
    %v7760 = vpop.f32.mrb[0].mxu0
    %v7761 = vadd.f32 %v7691, %v7760
    %v7762 = vpop.f32.mrb[0].mxu0
    %7763 = vdwg.mxu0
    %v7768 = vlaneseq
    %v7769 = vshrl.u32 %v7768, 7
    %v7770 = vsub.s32 0, %v7769
    %v7771 = vrot.slane %v4024, %v7770
    %v7772 = vlaneseq
    %v7773 = vshrl.u32 %v7772, 7
    %v7774 = vsub.s32 4, %v7773
    %v7775 = vrot.slane %v4024, %v7774
    %v7776 = vlaneseq
    %v7777 = vshrl.u32 %v7776, 7
    %v7778 = vsub.s32 0, %v7777
    %v7779 = vrot.slane %v4025, %v7778
    %v7780 = vlaneseq
    %v7781 = vshrl.u32 %v7780, 7
    %v7782 = vsub.s32 4, %v7781
    %v7783 = vrot.slane %v4025, %v7782
    %v7784 = vlaneseq
    %v7785 = vshrl.u32 %v7784, 7
    %v7786 = vsub.s32 0, %v7785
    %v7787 = vrot.slane %v4026, %v7786
    %v7788 = vlaneseq
    %v7789 = vshrl.u32 %v7788, 7
    %v7790 = vsub.s32 4, %v7789
    %v7791 = vrot.slane %v4026, %v7790
    %v7792 = vlaneseq
    %v7793 = vshrl.u32 %v7792, 7
    %v7794 = vsub.s32 0, %v7793
    %v7795 = vrot.slane %v4027, %v7794
    %v7796 = vlaneseq
    %v7797 = vshrl.u32 %v7796, 7
    %v7798 = vsub.s32 4, %v7797
    %v7799 = vrot.slane %v4027, %v7798
    %v7800 = vsel %vm1928, %v7787, %v7771
    %v7801 = vsel %vm1928, %v7791, %v7775
    %v7802 = vsel %vm1928, %v7795, %v7779
    %v7803 = vsel %vm1928, %v7799, %v7783
    %v7807 = vsel %vm5031, %v7803, 0
    %7809 = vmatprep.subr.mxu0 0.0
    %7810 = vmatpush1.msra.mxu0 %v4928
    %7811 = vmatprep.subr.mxu0 0.0
    %7812 = vmatpush1.msra.mxu0 %v4929
    %7813 = vmatprep.subr.mxu0 0.0
    %7814 = vmatpush1.msra.mxu0 %v4930
    %7815 = vmatprep.subr.mxu0 0.0
    %7816 = vmatpush1.msra.mxu0 %v4931
    %7817 = vmatprep.subr.mxu0 0.0
    %7818 = vmatpush1.msra.mxu0 %v4932
    %7819 = vmatprep.subr.mxu0 0.0
    %7820 = vmatpush1.msra.mxu0 %v4933
    %7821 = vmatprep.subr.mxu0 0.0
    %7822 = vmatpush1.msra.mxu0 %v4934
    %7823 = vmatprep.subr.mxu0 0.0
    %7824 = vmatpush1.msra.mxu0 %v4935
    %7825 = vmatprep.subr.mxu0 0.0
    %7826 = vmatpush1.msra.mxu0 %v4936
    %7827 = vmatprep.subr.mxu0 0.0
    %7828 = vmatpush1.msra.mxu0 %v4937
    %7829 = vmatprep.subr.mxu0 0.0
    %7830 = vmatpush1.msra.mxu0 %v4938
    %7831 = vmatprep.subr.mxu0 0.0
    %7832 = vmatpush1.msra.mxu0 %v4939
    %7833 = vmatprep.subr.mxu0 0.0
    %7834 = vmatpush1.msra.mxu0 %v4940
    %7835 = vmatprep.subr.mxu0 0.0
    %7836 = vmatpush1.msra.mxu0 %v4941
    %7837 = vmatprep.subr.mxu0 0.0
    %7838 = vmatpush1.msra.mxu0 %v4942
    %7839 = vmatprep.subr.mxu0 0.0
    %7840 = vmatpush1.msra.mxu0 %v4943
    %7841 = vmatprep.subr.mxu0 0.0
    %7842 = vmatpush1.msra.mxu0 %v4944
    %7843 = vmatprep.subr.mxu0 0.0
    %7844 = vmatpush1.msra.mxu0 %v4945
    %7845 = vmatprep.subr.mxu0 0.0
    %7846 = vmatpush1.msra.mxu0 %v4946
    %7847 = vmatprep.subr.mxu0 0.0
    %7848 = vmatpush1.msra.mxu0 %v4947
    %7849 = vmatprep.subr.mxu0 0.0
    %7850 = vmatpush1.msra.mxu0 %v4948
    %7851 = vmatprep.subr.mxu0 0.0
    %7852 = vmatpush1.msra.mxu0 %v4949
    %7853 = vmatprep.subr.mxu0 0.0
    %7854 = vmatpush1.msra.mxu0 %v4950
    %7855 = vmatprep.subr.mxu0 0.0
    %7856 = vmatpush1.msra.mxu0 %v4951
    %7857 = vmatprep.subr.mxu0 0.0
    %7858 = vmatpush1.msra.mxu0 %v4952
    %7859 = vmatprep.subr.mxu0 0.0
    %7860 = vmatpush1.msra.mxu0 %v4953
    %7861 = vmatprep.subr.mxu0 0.0
    %7862 = vmatpush1.msra.mxu0 %v4954
    %7863 = vmatprep.subr.mxu0 0.0
    %7864 = vmatpush1.msra.mxu0 %v4955
    %7865 = vmatprep.subr.mxu0 0.0
    %7866 = vmatpush1.msra.mxu0 %v4956
    %7867 = vmatprep.subr.mxu0 0.0
    %7868 = vmatpush1.msra.mxu0 %v4957
    %7869 = vmatprep.subr.mxu0 0.0
    %7870 = vmatpush1.msra.mxu0 %v4958
    %7871 = vmatprep.subr.mxu0 0.0
    %7872 = vmatpush1.msra.mxu0 %v4959
    %7873 = vmatprep.mubr.f32.mxu0 %v7801
    %7874 = vmatmul.mubr.f32.gmra.mrb[0].mxu0 %v7800
    %v7875 = vpop.f32.mrb[0].mxu0
    %v7876 = vadd.f32 0.0, %v7875
    %v7877 = vpop.f32.mrb[0].mxu0
    %7878 = vdwg.mxu0
    %7879 = vmatprep.subr.mxu0 0.0
    %7880 = vmatpush1.msra.mxu0 %v4960
    %7881 = vmatprep.subr.mxu0 0.0
    %7882 = vmatpush1.msra.mxu0 %v4961
    %7883 = vmatprep.subr.mxu0 0.0
    %7884 = vmatpush1.msra.mxu0 %v4962
    %7885 = vmatprep.subr.mxu0 0.0
    %7886 = vmatpush1.msra.mxu0 %v4963
    %7887 = vmatprep.subr.mxu0 0.0
    %7888 = vmatpush1.msra.mxu0 %v4964
    %7889 = vmatprep.subr.mxu0 0.0
    %7890 = vmatpush1.msra.mxu0 %v4965
    %7891 = vmatprep.subr.mxu0 0.0
    %7892 = vmatpush1.msra.mxu0 %v4966
    %7893 = vmatprep.subr.mxu0 0.0
    %7894 = vmatpush1.msra.mxu0 %v4967
    %7895 = vmatprep.subr.mxu0 0.0
    %7896 = vmatpush1.msra.mxu0 %v4968
    %7897 = vmatprep.subr.mxu0 0.0
    %7898 = vmatpush1.msra.mxu0 %v4969
    %7899 = vmatprep.subr.mxu0 0.0
    %7900 = vmatpush1.msra.mxu0 %v4970
    %7901 = vmatprep.subr.mxu0 0.0
    %7902 = vmatpush1.msra.mxu0 %v4971
    %7903 = vmatprep.subr.mxu0 0.0
    %7904 = vmatpush1.msra.mxu0 %v4972
    %7905 = vmatprep.subr.mxu0 0.0
    %7906 = vmatpush1.msra.mxu0 %v4973
    %7907 = vmatprep.subr.mxu0 0.0
    %7908 = vmatpush1.msra.mxu0 %v4974
    %7909 = vmatprep.subr.mxu0 0.0
    %7910 = vmatpush1.msra.mxu0 %v4975
    %7911 = vmatprep.subr.mxu0 0.0
    %7912 = vmatpush1.msra.mxu0 %v4976
    %7913 = vmatprep.subr.mxu0 0.0
    %7914 = vmatpush1.msra.mxu0 %v4977
    %7915 = vmatprep.subr.mxu0 0.0
    %7916 = vmatpush1.msra.mxu0 %v4978
    %7917 = vmatprep.subr.mxu0 0.0
    %7918 = vmatpush1.msra.mxu0 %v4979
    %7919 = vmatprep.subr.mxu0 0.0
    %7920 = vmatpush1.msra.mxu0 %v4980
    %7921 = vmatprep.subr.mxu0 0.0
    %7922 = vmatpush1.msra.mxu0 %v4981
    %7923 = vmatprep.subr.mxu0 0.0
    %7924 = vmatpush1.msra.mxu0 %v4982
    %7925 = vmatprep.subr.mxu0 0.0
    %7926 = vmatpush1.msra.mxu0 %v4983
    %7927 = vmatprep.subr.mxu0 0.0
    %7928 = vmatpush1.msra.mxu0 %v4984
    %7929 = vmatprep.subr.mxu0 0.0
    %7930 = vmatpush1.msra.mxu0 %v4985
    %7931 = vmatprep.subr.mxu0 0.0
    %7932 = vmatpush1.msra.mxu0 %v4986
    %7933 = vmatprep.subr.mxu0 0.0
    %7934 = vmatpush1.msra.mxu0 %v4987
    %7935 = vmatprep.subr.mxu0 0.0
    %7936 = vmatpush1.msra.mxu0 0.0
    %7937 = vmatprep.subr.mxu0 0.0
    %7938 = vmatpush1.msra.mxu0 0.0
    %7939 = vmatprep.subr.mxu0 0.0
    %7940 = vmatpush1.msra.mxu0 0.0
    %7941 = vmatprep.subr.mxu0 0.0
    %7942 = vmatpush1.msra.mxu0 0.0
    %7943 = vmatprep.mubr.f32.mxu0 %v7807
    %7944 = vmatmul.mubr.f32.gmra.mrb[0].mxu0 %v7802
    %v7945 = vpop.f32.mrb[0].mxu0
    %v7946 = vadd.f32 %v7876, %v7945
    %v7947 = vpop.f32.mrb[0].mxu0
    %7948 = vdwg.mxu0
    %vm7949 = vcmask 517120
    %v7950 = vsel %vm7949, %v5171, 0.0
    %v7951 = vsel %vm7949, %v5356, 0.0
    %v7952 = vadd.f32 %v7950, %v7951
    %v7953 = vsel %vm7949, %v5541, 0.0
    %v7954 = vadd.f32 %v7952, %v7953
    %v7955 = vsel %vm7949, %v5726, 0.0
    %v7956 = vadd.f32 %v7954, %v7955
    %v7957 = vsel %vm7949, %v5911, 0.0
    %v7958 = vadd.f32 %v7956, %v7957
    %v7959 = vsel %vm7949, %v6096, 0.0
    %v7960 = vadd.f32 %v7958, %v7959
    %v7961 = vsel %vm7949, %v6281, 0.0
    %v7962 = vadd.f32 %v7960, %v7961
    %v7963 = vsel %vm7949, %v6466, 0.0
    %v7964 = vadd.f32 %v7962, %v7963
    %v7965 = vsel %vm7949, %v6651, 0.0
    %v7966 = vadd.f32 %v7964, %v7965
    %v7967 = vsel %vm7949, %v6836, 0.0
    %v7968 = vadd.f32 %v7966, %v7967
    %v7969 = vsel %vm7949, %v7021, 0.0
    %v7970 = vadd.f32 %v7968, %v7969
    %v7971 = vsel %vm7949, %v7206, 0.0
    %v7972 = vadd.f32 %v7970, %v7971
    %v7973 = vsel %vm7949, %v7391, 0.0
    %v7974 = vadd.f32 %v7972, %v7973
    %v7975 = vsel %vm7949, %v7576, 0.0
    %v7976 = vadd.f32 %v7974, %v7975
    %v7977 = vsel %vm7949, %v7761, 0.0
    %v7978 = vadd.f32 %v7976, %v7977
    %v7979 = vsel %vm7949, %v7946, 0.0
    %v7980 = vadd.f32 %v7978, %v7979
    %v7981 = vld [vmem:[%s5] sm:$0x1]
    %v7983 = vlaneseq
    %v7984 = vshrl.u32 %v7983, 7
    %v7985 = vsub.s32 0, %v7984
    %v7986 = vrot.slane %v7981, %v7985
    %v7988 = vadd.f32 %v7980, %v7986
    %v7989 = vmax.f32 %v7988, 0.0
    %v7990 = vld [vmem:[%s6] sm:$0xff]
    %v7991 = vld [vmem:[%s6 + $0x8] sm:$0xff]
    %v7992 = vld [vmem:[%s6 + $0x10] sm:$0xff]
    %v7993 = vld [vmem:[%s6 + $0x18] sm:$0xff]
    %v7994 = vld [vmem:[%s6 + $0x20] sm:$0xff]
    %v7995 = vld [vmem:[%s6 + $0x28] sm:$0xff]
    %v7996 = vld [vmem:[%s6 + $0x30] sm:$0xff]
    %v7997 = vld [vmem:[%s6 + $0x38] sm:$0xff]
    %v7998 = vld [vmem:[%s7] sm:$0x1]
    %v8000 = vlaneseq
    %v8001 = vshrl.u32 %v8000, 7
    %v8002 = vsub.s32 0, %v8001
    %v8003 = vrot.slane %v7998, %v8002
    %vm8005 = vcmask 523264
    %v8007 = vsel %vm8005, %v7989, 0
    %8009 = vmatprep.subr.mxu0 0.0
    %8010 = vmatpush1.msra.mxu0 %v7990
    %8011 = vmatprep.subr.mxu0 0.0
    %8012 = vmatpush1.msra.mxu0 %v7991
    %8013 = vmatprep.subr.mxu0 0.0
    %8014 = vmatpush1.msra.mxu0 %v7992
    %8015 = vmatprep.subr.mxu0 0.0
    %8016 = vmatpush1.msra.mxu0 %v7993
    %8017 = vmatprep.subr.mxu0 0.0
    %8018 = vmatpush1.msra.mxu0 %v7994
    %8019 = vmatprep.subr.mxu0 0.0
    %8020 = vmatpush1.msra.mxu0 %v7995
    %8021 = vmatprep.subr.mxu0 0.0
    %8022 = vmatpush1.msra.mxu0 %v7996
    %8023 = vmatprep.subr.mxu0 0.0
    %8024 = vmatpush1.msra.mxu0 %v7997
    %8025 = vmatprep.subr.mxu0 0.0
    %8026 = vmatpush1.msra.mxu0 0.0
    %8027 = vmatprep.subr.mxu0 0.0
    %8028 = vmatpush1.msra.mxu0 0.0
    %8029 = vmatprep.subr.mxu0 0.0
    %8030 = vmatpush1.msra.mxu0 0.0
    %8031 = vmatprep.subr.mxu0 0.0
    %8032 = vmatpush1.msra.mxu0 0.0
    %8033 = vmatprep.subr.mxu0 0.0
    %8034 = vmatpush1.msra.mxu0 0.0
    %8035 = vmatprep.subr.mxu0 0.0
    %8036 = vmatpush1.msra.mxu0 0.0
    %8037 = vmatprep.subr.mxu0 0.0
    %8038 = vmatpush1.msra.mxu0 0.0
    %8039 = vmatprep.subr.mxu0 0.0
    %8040 = vmatpush1.msra.mxu0 0.0
    %8041 = vmatprep.subr.mxu0 0.0
    %8042 = vmatpush1.msra.mxu0 0.0
    %8043 = vmatprep.subr.mxu0 0.0
    %8044 = vmatpush1.msra.mxu0 0.0
    %8045 = vmatprep.subr.mxu0 0.0
    %8046 = vmatpush1.msra.mxu0 0.0
    %8047 = vmatprep.subr.mxu0 0.0
    %8048 = vmatpush1.msra.mxu0 0.0
    %8049 = vmatprep.subr.mxu0 0.0
    %8050 = vmatpush1.msra.mxu0 0.0
    %8051 = vmatprep.subr.mxu0 0.0
    %8052 = vmatpush1.msra.mxu0 0.0
    %8053 = vmatprep.subr.mxu0 0.0
    %8054 = vmatpush1.msra.mxu0 0.0
    %8055 = vmatprep.subr.mxu0 0.0
    %8056 = vmatpush1.msra.mxu0 0.0
    %8057 = vmatprep.subr.mxu0 0.0
    %8058 = vmatpush1.msra.mxu0 0.0
    %8059 = vmatprep.subr.mxu0 0.0
    %8060 = vmatpush1.msra.mxu0 0.0
    %8061 = vmatprep.subr.mxu0 0.0
    %8062 = vmatpush1.msra.mxu0 0.0
    %8063 = vmatprep.subr.mxu0 0.0
    %8064 = vmatpush1.msra.mxu0 0.0
    %8065 = vmatprep.subr.mxu0 0.0
    %8066 = vmatpush1.msra.mxu0 0.0
    %8067 = vmatprep.subr.mxu0 0.0
    %8068 = vmatpush1.msra.mxu0 0.0
    %8069 = vmatprep.subr.mxu0 0.0
    %8070 = vmatpush1.msra.mxu0 0.0
    %8071 = vmatprep.subr.mxu0 0.0
    %8072 = vmatpush1.msra.mxu0 0.0
    %8073 = vmatprep.mubr.f32.mxu0 0.0
    %8074 = vmatmul.mubr.f32.gmra.mrb[0].mxu0 %v8007
    %v8075 = vpop.f32.mrb[0].mxu0
    %v8076 = vadd.f32 %v8003, %v8075
    %v8077 = vpop.f32.mrb[0].mxu0
    %8078 = vdwg.mxu0
    %v8079 = vmax.f32 %v8076, 0.0
    %v8080 = vld [vmem:[%s8] sm:$0xff]
    %v8081 = vld [vmem:[%s8 + $0x8] sm:$0xff]
    %v8082 = vld [vmem:[%s8 + $0x10] sm:$0xff]
    %v8083 = vld [vmem:[%s8 + $0x18] sm:$0xff]
    %v8084 = vld [vmem:[%s9] sm:$0x1]
    %v8086 = vlaneseq
    %v8087 = vshrl.u32 %v8086, 7
    %v8088 = vsub.s32 0, %v8087
    %v8089 = vrot.slane %v8084, %v8088
    %vm8091 = vcmask 261120
    %v8093 = vsel %vm8091, %v8079, 0
    %8095 = vmatprep.subr.mxu0 0.0
    %8096 = vmatpush1.msra.mxu0 %v8080
    %8097 = vmatprep.subr.mxu0 0.0
    %8098 = vmatpush1.msra.mxu0 %v8081
    %8099 = vmatprep.subr.mxu0 0.0
    %8100 = vmatpush1.msra.mxu0 %v8082
    %8101 = vmatprep.subr.mxu0 0.0
    %8102 = vmatpush1.msra.mxu0 %v8083
    %8103 = vmatprep.subr.mxu0 0.0
    %8104 = vmatpush1.msra.mxu0 0.0
    %8105 = vmatprep.subr.mxu0 0.0
    %8106 = vmatpush1.msra.mxu0 0.0
    %8107 = vmatprep.subr.mxu0 0.0
    %8108 = vmatpush1.msra.mxu0 0.0
    %8109 = vmatprep.subr.mxu0 0.0
    %8110 = vmatpush1.msra.mxu0 0.0
    %8111 = vmatprep.subr.mxu0 0.0
    %8112 = vmatpush1.msra.mxu0 0.0
    %8113 = vmatprep.subr.mxu0 0.0
    %8114 = vmatpush1.msra.mxu0 0.0
    %8115 = vmatprep.subr.mxu0 0.0
    %8116 = vmatpush1.msra.mxu0 0.0
    %8117 = vmatprep.subr.mxu0 0.0
    %8118 = vmatpush1.msra.mxu0 0.0
    %8119 = vmatprep.subr.mxu0 0.0
    %8120 = vmatpush1.msra.mxu0 0.0
    %8121 = vmatprep.subr.mxu0 0.0
    %8122 = vmatpush1.msra.mxu0 0.0
    %8123 = vmatprep.subr.mxu0 0.0
    %8124 = vmatpush1.msra.mxu0 0.0
    %8125 = vmatprep.subr.mxu0 0.0
    %8126 = vmatpush1.msra.mxu0 0.0
    %8127 = vmatprep.subr.mxu0 0.0
    %8128 = vmatpush1.msra.mxu0 0.0
    %8129 = vmatprep.subr.mxu0 0.0
    %8130 = vmatpush1.msra.mxu0 0.0
    %8131 = vmatprep.subr.mxu0 0.0
    %8132 = vmatpush1.msra.mxu0 0.0
    %8133 = vmatprep.subr.mxu0 0.0
    %8134 = vmatpush1.msra.mxu0 0.0
    %8135 = vmatprep.subr.mxu0 0.0
    %8136 = vmatpush1.msra.mxu0 0.0
    %8137 = vmatprep.subr.mxu0 0.0
    %8138 = vmatpush1.msra.mxu0 0.0
    %8139 = vmatprep.subr.mxu0 0.0
    %8140 = vmatpush1.msra.mxu0 0.0
    %8141 = vmatprep.subr.mxu0 0.0
    %8142 = vmatpush1.msra.mxu0 0.0
    %8143 = vmatprep.subr.mxu0 0.0
    %8144 = vmatpush1.msra.mxu0 0.0
    %8145 = vmatprep.subr.mxu0 0.0
    %8146 = vmatpush1.msra.mxu0 0.0
    %8147 = vmatprep.subr.mxu0 0.0
    %8148 = vmatpush1.msra.mxu0 0.0
    %8149 = vmatprep.subr.mxu0 0.0
    %8150 = vmatpush1.msra.mxu0 0.0
    %8151 = vmatprep.subr.mxu0 0.0
    %8152 = vmatpush1.msra.mxu0 0.0
    %8153 = vmatprep.subr.mxu0 0.0
    %8154 = vmatpush1.msra.mxu0 0.0
    %8155 = vmatprep.subr.mxu0 0.0
    %8156 = vmatpush1.msra.mxu0 0.0
    %8157 = vmatprep.subr.mxu0 0.0
    %8158 = vmatpush1.msra.mxu0 0.0
    %8159 = vmatprep.mubr.f32.mxu0 0.0
    %8160 = vmatmul.mubr.f32.gmra.mrb[0].mxu0 %v8093
    %v8161 = vpop.f32.mrb[0].mxu0
    %v8162 = vadd.f32 %v8089, %v8161
    %v8163 = vpop.f32.mrb[0].mxu0
    %8164 = vdwg.mxu0
    %vm8165 = vcmask 17408
    %v8166 = vsel %vm8165, %v8162, -inf
    %8167 = vmax.xlane.f32.xlu0 %v8166
    %v8168 = vpop.xlane.xlu0 %8167
    %v8169 = vsub.f32 %v8162, %v8168
    %v8170 = vmul.f32 %v8169, 1.442695
    %v8171 = vpow.pop %v8170
    %v8172 = vsel %vm8165, %v8171, 0.0
    %8173 = vadd.xlane.f32.xlu0 %v8172
    %v8174 = vpop.xlane.xlu0 %8173
    %v8175 = vlog2.pop %v8174
    %v8176 = vmul.f32 %v8175, 0.6931472
    %v8177 = vadd.f32 %v8168, %v8176
    %v8178 = vsub.f32 %v8162, %v8177
    %8179 = vst.msk [vmem:[#allocation2] sm:$0x3] %vm8165, %v8178
    // Predicated region
    $region42: #{pong_forward.1} parent=1 // pred_check
      _
    $region43: #{pong_forward.1} parent=1 // pred_check_branch
      %8181 = sbr.rel (0) target = $region45
    $region44: #{pong_forward.1} parent=1 // pred_region
      %s8183 = ssub.s32 32, 32
      %8184 = vsyncadd [#allocation3], %s8183
      %s8186 = sshll.u32 [#allocation2], 4
      %s8187 = int_to_ptr.vmem [resolvable:$true] %s8186
      %8189 = dma.vmem_to_hbm [thread:$0]  %s8187, 32, %s10, [#allocation3]
    $region45: #{pong_forward.1} parent=1 // pred_fallthru
      _
    // Predicated region
    $region46: #{pong_forward.1} parent=1 // pred_check
      _
    $region47: #{pong_forward.1} parent=1 // pred_check_branch
      %8191 = sbr.rel (0) target = $region49
    $region48: #{pong_forward.1} parent=1 // pred_region
      %8192 = dma.done [#allocation3], 32
    $region49: #{pong_forward.1} parent=1 // pred_fallthru
      _
    %8193 = vsyncpa [#allocation3], 1

</llo_original>
